<compile_context>
chip_gen: v7x
topology: tpu7x:2x2x1
jax: 0.10.0
libtpu: 0.0.40
codegen_flags: <defaults>
</compile_context>

<pallas_src>
import functools

import jax
import jax.numpy as jnp
from jax import lax
from jax.experimental import pallas as pl
from jax.experimental.pallas import tpu as pltpu


def _block_kernel(x_ref, w1_ref, w2_ref, b_ref, mask_ref, o_ref, *, Wp):
    """One batch element per grid step, flat padded layout.

    x_ref   : (1, M0, C)   zero-extended flat padded input,
                           M0 = Hp*Wp + 4*(Wp+1); the padded image starts at
                           flat offset 2*(Wp+1).
    w1_ref  : (9, C, C)    conv1 weights (tap-major HWIO), bn1 scale folded in.
    w2_ref  : (9, C, C)    conv2 weights, bn2 scale folded in.
    b_ref   : (2, C)       folded BN biases (row 0 -> bn1, row 1 -> bn2).
    mask_ref: (M1, 1)      1.0 at real pixels, 0.0 on the conv padding ring /
                           extra margin (M1 = Hp*Wp + 2*(Wp+1)).
    o_ref   : (1, Mimg, C) output in flat padded layout (Mimg = Hp*Wp);
                           border cropped by the wrapper.
    """
    Mimg = o_ref.shape[1]
    M1 = mask_ref.shape[0]
    margin = Wp + 1

    x0 = x_ref[0].astype(jnp.float32)                     # (M0, C)

    # Flat offsets of the 9 taps of a 3x3 / pad-1 convolution.
    taps = [(ky - 1) * Wp + (kx - 1) for ky in range(3) for kx in range(3)]

    # ---- conv1 (+ folded bn1): 9 matmuls on contiguous row-range slices ----
    acc1 = jnp.zeros((M1, x0.shape[1]), jnp.float32)
    for t, d in enumerate(taps):
        a = margin + d                                    # static, in [0, 2*margin]
        acc1 = acc1 + jnp.dot(x0[a:a + M1, :], w1_ref[t],
                              preferred_element_type=jnp.float32)

    # bn1 bias + relu; mask zeroes the padding ring so conv2 sees proper
    # zero padding without any scratch buffer.
    y = jnp.maximum(acc1 + b_ref[0:1, :], 0.0) * mask_ref[...]

    # ---- conv2 (+ folded bn2) over the padded-image domain ----
    acc2 = jnp.zeros((Mimg, x0.shape[1]), jnp.float32)
    for t, d in enumerate(taps):
        a = margin + d
        acc2 = acc2 + jnp.dot(y[a:a + Mimg, :], w2_ref[t],
                              preferred_element_type=jnp.float32)

    # ---- bias + residual + relu (residual added in flat layout; border
    #      positions hold don't-care values and are cropped by the wrapper) --
    residual = x0[2 * margin:2 * margin + Mimg, :]
    z = jnp.maximum(acc2 + b_ref[1:2, :] + residual, 0.0)

    o_ref[0] = z.astype(o_ref.dtype)


@functools.partial(jax.jit, static_argnames=("eps",))
def basic_ds_block1(x_nchw, w1, w2, g1, be1, m1, v1, g2, be2, m2, v2,
                    eps=1e-5):
    """Forward of BasicDsBlock1 (eval mode, stride=1, downsample=None).

    x_nchw: (N, C, H, W) float32, w1/w2: (3, 3, C, C) HWIO.
    Returns (N, C, H, W).
    """
    N, C, H, W = x_nchw.shape
    Hp, Wp = H + 2, W + 2
    Mimg = Hp * Wp
    margin = Wp + 1
    M0 = Mimg + 4 * margin
    M1 = Mimg + 2 * margin

    # NCHW -> NHWC, 1-pixel spatial zero pad, flatten, extend the flat margin
    # so all in-kernel tap slices are contiguous and in-bounds (glue).
    x = jnp.transpose(x_nchw, (0, 2, 3, 1)).astype(jnp.float32)
    xp = jnp.pad(x, ((0, 0), (1, 1), (1, 1), (0, 0)))
    x_flat = xp.reshape(N, Mimg, C)
    x0 = jnp.pad(x_flat, ((0, 0), (2 * margin, 2 * margin), (0, 0)))

    # Fold BN (eval mode) into conv weights (scale on output channel) + bias.
    s1 = g1 / jnp.sqrt(v1 + eps)
    s2 = g2 / jnp.sqrt(v2 + eps)
    b1 = be1 - m1 * s1
    b2 = be2 - m2 * s2
    w1f = (w1 * s1[None, None, None, :]).reshape(9, C, C).astype(jnp.float32)
    w2f = (w2 * s2[None, None, None, :]).reshape(9, C, C).astype(jnp.float32)
    bias = jnp.stack([b1, b2], axis=0).astype(jnp.float32)        # (2, C)

    # Interior (real-pixel) mask over the extended conv1 domain (glue).
    rows = jnp.arange(Hp)
    cols = jnp.arange(Wp)
    interior = (((rows >= 1) & (rows <= H))[:, None]
                & ((cols >= 1) & (cols <= W))[None, :])
    mask = jnp.pad(interior.astype(jnp.float32).reshape(Mimg, 1),
                   ((margin, margin), (0, 0)))                    # (M1, 1)

    kernel = functools.partial(_block_kernel, Wp=Wp)

    out_flat = pl.pallas_call(
        kernel,
        out_shape=jax.ShapeDtypeStruct((N, Mimg, C), jnp.float32),
        grid_spec=pltpu.PrefetchScalarGridSpec(
            num_scalar_prefetch=0,
            grid=(N,),
            in_specs=[
                pl.BlockSpec((1, M0, C), lambda n: (n, 0, 0)),
                # Weights / bias / mask are grid-invariant and tiny here; for
                # large C on v7x they should be single-buffered or DMA'd once.
                pl.BlockSpec((9, C, C), lambda n: (0, 0, 0)),
                pl.BlockSpec((9, C, C), lambda n: (0, 0, 0)),
                pl.BlockSpec((2, C), lambda n: (0, 0)),
                pl.BlockSpec((M1, 1), lambda n: (0, 0)),
            ],
            out_specs=pl.BlockSpec((1, Mimg, C), lambda n: (n, 0, 0)),
        ),
        compiler_params=pltpu.CompilerParams(
            dimension_semantics=("parallel",),
            vmem_limit_bytes=32 * 1024 * 1024),
    )(x0, w1f, w2f, bias, mask)

    # Crop the 1-pixel border and return NCHW (wrapper-side glue keeps the
    # kernel's loads/stores contiguous).
    out = out_flat.reshape(N, Hp, Wp, C)[:, 1:1 + H, 1:1 + W, :]
    return jnp.transpose(out, (0, 3, 1, 2))


def _reference(x_nchw, w1, w2, g1, be1, m1, v1, g2, be2, m2, v2, eps=1e-5):
    """Pure-JAX reference (lax.conv) for correctness check."""
    x = jnp.transpose(x_nchw, (0, 2, 3, 1))
    dn = ("NHWC", "HWIO", "NHWC")

    def conv(a, w):
        return lax.conv_general_dilated(a, w, (1, 1), ((1, 1), (1, 1)),
                                        dimension_numbers=dn)

    def bn(a, g, b, m, v):
        return (a - m) * (g / jnp.sqrt(v + eps)) + b

    y = jnp.maximum(bn(conv(x, w1), g1, be1, m1, v1), 0.0)
    z = bn(conv(y, w2), g2, be2, m2, v2)
    out = jnp.maximum(z + x, 0.0)
    return jnp.transpose(out, (0, 3, 1, 2))


if __name__ == "__main__":
    N, C, H, W = 2, 4, 16, 16  # inplanes == planes (residual add requires it)

    key = jax.random.PRNGKey(0)
    ks = jax.random.split(key, 10)

    x = jax.random.normal(ks[0], (N, C, H, W), jnp.float32)
    # conv weights, HWIO layout (3, 3, Cin, Cout)
    w1 = jax.random.normal(ks[1], (3, 3, C, C), jnp.float32) * 0.1
    w2 = jax.random.normal(ks[2], (3, 3, C, C), jnp.float32) * 0.1
    # BN params / running stats (deterministic, non-trivial)
    g1 = 1.0 + 0.1 * jax.random.normal(ks[3], (C,), jnp.float32)
    be1 = 0.1 * jax.random.normal(ks[4], (C,), jnp.float32)
    m1 = 0.1 * jax.random.normal(ks[5], (C,), jnp.float32)
    v1 = 0.5 + jnp.abs(jax.random.normal(ks[6], (C,), jnp.float32))
    g2 = 1.0 + 0.1 * jax.random.normal(ks[7], (C,), jnp.float32)
    be2 = 0.1 * jax.random.normal(ks[8], (C,), jnp.float32)
    m2 = 0.1 * jax.random.normal(ks[9], (C,), jnp.float32)
    v2 = 0.5 + jnp.abs(jax.random.normal(ks[0], (C,), jnp.float32))

    out = basic_ds_block1(x, w1, w2, g1, be1, m1, v1, g2, be2, m2, v2)
    out = jax.block_until_ready(out)

    ref = _reference(x, w1, w2, g1, be1, m1, v1, g2, be2, m2, v2)
    assert out.shape == (N, C, H, W)
    assert jnp.allclose(out, ref, atol=1e-4, rtol=1e-4), "mismatch vs reference"

    print("KERNEL_OK")
</pallas_src>

<mosaic_0001>
module attributes {stable_mosaic.version = 11 : i64} {
  func.func @_block_kernel(%arg0: i32, %arg1: memref<1x400x4xf32, #tpu.memory_space<vmem>>, %arg2: memref<9x4x4xf32, #tpu.memory_space<vmem>>, %arg3: memref<9x4x4xf32, #tpu.memory_space<vmem>>, %arg4: memref<2x4xf32, #tpu.memory_space<vmem>>, %arg5: memref<362x1xf32, #tpu.memory_space<vmem>>, %arg6: memref<1x324x4xf32, #tpu.memory_space<vmem>>) attributes {dimension_semantics = [#tpu.dimension_semantics<parallel>], iteration_bounds = array<i64: 2>, scalar_prefetch = 0 : i64, scratch_operands = 0 : i64, tpu.core_type = #tpu.core_type<tc>, window_params = [{transform_indices = @transform_0, window_bounds = array<i64: 1, 400, 4>}, {pipeline_mode = #tpu.pipeline_mode<synchronous>, transform_indices = @transform_1, window_bounds = array<i64: 9, 4, 4>}, {pipeline_mode = #tpu.pipeline_mode<synchronous>, transform_indices = @transform_2, window_bounds = array<i64: 9, 4, 4>}, {pipeline_mode = #tpu.pipeline_mode<synchronous>, transform_indices = @transform_3, window_bounds = array<i64: 2, 4>}, {pipeline_mode = #tpu.pipeline_mode<synchronous>, transform_indices = @transform_4, window_bounds = array<i64: 362, 1>}, {transform_indices = @transform_5, window_bounds = array<i64: 1, 324, 4>}]} {
    %c0 = arith.constant 0 : index
    %c0_0 = arith.constant 0 : index
    %c0_1 = arith.constant 0 : index
    %0 = vector.load %arg1[%c0, %c0_0, %c0_1] : memref<1x400x4xf32, #tpu.memory_space<vmem>>, vector<1x400x4xf32>
    %1 = vector.shape_cast %0 : vector<1x400x4xf32> to vector<400x4xf32>
    %cst = arith.constant 0.000000e+00 : f32
    %2 = vector.broadcast %cst : f32 to vector<362x4xf32>
    %3 = vector.extract_strided_slice %1 {offsets = [0, 0], sizes = [362, 4], strides = [1, 1]} : vector<400x4xf32> to vector<362x4xf32>
    %c0_2 = arith.constant 0 : index
    %c0_3 = arith.constant 0 : index
    %c0_4 = arith.constant 0 : index
    %4 = vector.load %arg2[%c0_2, %c0_3, %c0_4] : memref<9x4x4xf32, #tpu.memory_space<vmem>>, vector<1x4x4xf32>
    %5 = vector.shape_cast %4 : vector<1x4x4xf32> to vector<4x4xf32>
    %cst_5 = arith.constant dense<0.000000e+00> : vector<362x4xf32>
    %6 = tpu.matmul %3, %5, %cst_5 {dimension_numbers = #tpu.dot_dimension_numbers<[1], [0], [0], [1], [0, 0, 1, 1], [], []>} : vector<362x4xf32>, vector<4x4xf32>, vector<362x4xf32> -> vector<362x4xf32>
    %7 = arith.addf %2, %6 : vector<362x4xf32>
    %8 = vector.extract_strided_slice %1 {offsets = [1, 0], sizes = [362, 4], strides = [1, 1]} : vector<400x4xf32> to vector<362x4xf32>
    %c1 = arith.constant 1 : index
    %c0_6 = arith.constant 0 : index
    %c0_7 = arith.constant 0 : index
    %9 = vector.load %arg2[%c1, %c0_6, %c0_7] : memref<9x4x4xf32, #tpu.memory_space<vmem>>, vector<1x4x4xf32>
    %10 = vector.shape_cast %9 : vector<1x4x4xf32> to vector<4x4xf32>
    %cst_8 = arith.constant dense<0.000000e+00> : vector<362x4xf32>
    %11 = tpu.matmul %8, %10, %cst_8 {dimension_numbers = #tpu.dot_dimension_numbers<[1], [0], [0], [1], [0, 0, 1, 1], [], []>} : vector<362x4xf32>, vector<4x4xf32>, vector<362x4xf32> -> vector<362x4xf32>
    %12 = arith.addf %7, %11 : vector<362x4xf32>
    %13 = vector.extract_strided_slice %1 {offsets = [2, 0], sizes = [362, 4], strides = [1, 1]} : vector<400x4xf32> to vector<362x4xf32>
    %c2 = arith.constant 2 : index
    %c0_9 = arith.constant 0 : index
    %c0_10 = arith.constant 0 : index
    %14 = vector.load %arg2[%c2, %c0_9, %c0_10] : memref<9x4x4xf32, #tpu.memory_space<vmem>>, vector<1x4x4xf32>
    %15 = vector.shape_cast %14 : vector<1x4x4xf32> to vector<4x4xf32>
    %cst_11 = arith.constant dense<0.000000e+00> : vector<362x4xf32>
    %16 = tpu.matmul %13, %15, %cst_11 {dimension_numbers = #tpu.dot_dimension_numbers<[1], [0], [0], [1], [0, 0, 1, 1], [], []>} : vector<362x4xf32>, vector<4x4xf32>, vector<362x4xf32> -> vector<362x4xf32>
    %17 = arith.addf %12, %16 : vector<362x4xf32>
    %18 = vector.extract_strided_slice %1 {offsets = [18, 0], sizes = [362, 4], strides = [1, 1]} : vector<400x4xf32> to vector<362x4xf32>
    %c3 = arith.constant 3 : index
    %c0_12 = arith.constant 0 : index
    %c0_13 = arith.constant 0 : index
    %19 = vector.load %arg2[%c3, %c0_12, %c0_13] : memref<9x4x4xf32, #tpu.memory_space<vmem>>, vector<1x4x4xf32>
    %20 = vector.shape_cast %19 : vector<1x4x4xf32> to vector<4x4xf32>
    %cst_14 = arith.constant dense<0.000000e+00> : vector<362x4xf32>
    %21 = tpu.matmul %18, %20, %cst_14 {dimension_numbers = #tpu.dot_dimension_numbers<[1], [0], [0], [1], [0, 0, 1, 1], [], []>} : vector<362x4xf32>, vector<4x4xf32>, vector<362x4xf32> -> vector<362x4xf32>
    %22 = arith.addf %17, %21 : vector<362x4xf32>
    %23 = vector.extract_strided_slice %1 {offsets = [19, 0], sizes = [362, 4], strides = [1, 1]} : vector<400x4xf32> to vector<362x4xf32>
    %c4 = arith.constant 4 : index
    %c0_15 = arith.constant 0 : index
    %c0_16 = arith.constant 0 : index
    %24 = vector.load %arg2[%c4, %c0_15, %c0_16] : memref<9x4x4xf32, #tpu.memory_space<vmem>>, vector<1x4x4xf32>
    %25 = vector.shape_cast %24 : vector<1x4x4xf32> to vector<4x4xf32>
    %cst_17 = arith.constant dense<0.000000e+00> : vector<362x4xf32>
    %26 = tpu.matmul %23, %25, %cst_17 {dimension_numbers = #tpu.dot_dimension_numbers<[1], [0], [0], [1], [0, 0, 1, 1], [], []>} : vector<362x4xf32>, vector<4x4xf32>, vector<362x4xf32> -> vector<362x4xf32>
    %27 = arith.addf %22, %26 : vector<362x4xf32>
    %28 = vector.extract_strided_slice %1 {offsets = [20, 0], sizes = [362, 4], strides = [1, 1]} : vector<400x4xf32> to vector<362x4xf32>
    %c5 = arith.constant 5 : index
    %c0_18 = arith.constant 0 : index
    %c0_19 = arith.constant 0 : index
    %29 = vector.load %arg2[%c5, %c0_18, %c0_19] : memref<9x4x4xf32, #tpu.memory_space<vmem>>, vector<1x4x4xf32>
    %30 = vector.shape_cast %29 : vector<1x4x4xf32> to vector<4x4xf32>
    %cst_20 = arith.constant dense<0.000000e+00> : vector<362x4xf32>
    %31 = tpu.matmul %28, %30, %cst_20 {dimension_numbers = #tpu.dot_dimension_numbers<[1], [0], [0], [1], [0, 0, 1, 1], [], []>} : vector<362x4xf32>, vector<4x4xf32>, vector<362x4xf32> -> vector<362x4xf32>
    %32 = arith.addf %27, %31 : vector<362x4xf32>
    %33 = vector.extract_strided_slice %1 {offsets = [36, 0], sizes = [362, 4], strides = [1, 1]} : vector<400x4xf32> to vector<362x4xf32>
    %c6 = arith.constant 6 : index
    %c0_21 = arith.constant 0 : index
    %c0_22 = arith.constant 0 : index
    %34 = vector.load %arg2[%c6, %c0_21, %c0_22] : memref<9x4x4xf32, #tpu.memory_space<vmem>>, vector<1x4x4xf32>
    %35 = vector.shape_cast %34 : vector<1x4x4xf32> to vector<4x4xf32>
    %cst_23 = arith.constant dense<0.000000e+00> : vector<362x4xf32>
    %36 = tpu.matmul %33, %35, %cst_23 {dimension_numbers = #tpu.dot_dimension_numbers<[1], [0], [0], [1], [0, 0, 1, 1], [], []>} : vector<362x4xf32>, vector<4x4xf32>, vector<362x4xf32> -> vector<362x4xf32>
    %37 = arith.addf %32, %36 : vector<362x4xf32>
    %38 = vector.extract_strided_slice %1 {offsets = [37, 0], sizes = [362, 4], strides = [1, 1]} : vector<400x4xf32> to vector<362x4xf32>
    %c7 = arith.constant 7 : index
    %c0_24 = arith.constant 0 : index
    %c0_25 = arith.constant 0 : index
    %39 = vector.load %arg2[%c7, %c0_24, %c0_25] : memref<9x4x4xf32, #tpu.memory_space<vmem>>, vector<1x4x4xf32>
    %40 = vector.shape_cast %39 : vector<1x4x4xf32> to vector<4x4xf32>
    %cst_26 = arith.constant dense<0.000000e+00> : vector<362x4xf32>
    %41 = tpu.matmul %38, %40, %cst_26 {dimension_numbers = #tpu.dot_dimension_numbers<[1], [0], [0], [1], [0, 0, 1, 1], [], []>} : vector<362x4xf32>, vector<4x4xf32>, vector<362x4xf32> -> vector<362x4xf32>
    %42 = arith.addf %37, %41 : vector<362x4xf32>
    %43 = vector.extract_strided_slice %1 {offsets = [38, 0], sizes = [362, 4], strides = [1, 1]} : vector<400x4xf32> to vector<362x4xf32>
    %c8 = arith.constant 8 : index
    %c0_27 = arith.constant 0 : index
    %c0_28 = arith.constant 0 : index
    %44 = vector.load %arg2[%c8, %c0_27, %c0_28] : memref<9x4x4xf32, #tpu.memory_space<vmem>>, vector<1x4x4xf32>
    %45 = vector.shape_cast %44 : vector<1x4x4xf32> to vector<4x4xf32>
    %cst_29 = arith.constant dense<0.000000e+00> : vector<362x4xf32>
    %46 = tpu.matmul %43, %45, %cst_29 {dimension_numbers = #tpu.dot_dimension_numbers<[1], [0], [0], [1], [0, 0, 1, 1], [], []>} : vector<362x4xf32>, vector<4x4xf32>, vector<362x4xf32> -> vector<362x4xf32>
    %47 = arith.addf %42, %46 : vector<362x4xf32>
    %c0_30 = arith.constant 0 : index
    %c0_31 = arith.constant 0 : index
    %48 = vector.load %arg4[%c0_30, %c0_31] : memref<2x4xf32, #tpu.memory_space<vmem>>, vector<1x4xf32>
    %49 = vector.broadcast %48 : vector<1x4xf32> to vector<362x4xf32>
    %50 = arith.addf %47, %49 : vector<362x4xf32>
    %cst_32 = arith.constant 0.000000e+00 : f32
    %51 = vector.broadcast %cst_32 : f32 to vector<362x4xf32>
    %52 = arith.maximumf %50, %51 : vector<362x4xf32>
    %c0_33 = arith.constant 0 : index
    %c0_34 = arith.constant 0 : index
    %53 = vector.load %arg5[%c0_33, %c0_34] : memref<362x1xf32, #tpu.memory_space<vmem>>, vector<362x1xf32>
    %54 = vector.broadcast %53 : vector<362x1xf32> to vector<362x4xf32>
    %55 = arith.mulf %52, %54 : vector<362x4xf32>
    %cst_35 = arith.constant 0.000000e+00 : f32
    %56 = vector.broadcast %cst_35 : f32 to vector<324x4xf32>
    %57 = vector.extract_strided_slice %55 {offsets = [0, 0], sizes = [324, 4], strides = [1, 1]} : vector<362x4xf32> to vector<324x4xf32>
    %c0_36 = arith.constant 0 : index
    %c0_37 = arith.constant 0 : index
    %c0_38 = arith.constant 0 : index
    %58 = vector.load %arg3[%c0_36, %c0_37, %c0_38] : memref<9x4x4xf32, #tpu.memory_space<vmem>>, vector<1x4x4xf32>
    %59 = vector.shape_cast %58 : vector<1x4x4xf32> to vector<4x4xf32>
    %cst_39 = arith.constant dense<0.000000e+00> : vector<324x4xf32>
    %60 = tpu.matmul %57, %59, %cst_39 {dimension_numbers = #tpu.dot_dimension_numbers<[1], [0], [0], [1], [0, 0, 1, 1], [], []>} : vector<324x4xf32>, vector<4x4xf32>, vector<324x4xf32> -> vector<324x4xf32>
    %61 = arith.addf %56, %60 : vector<324x4xf32>
    %62 = vector.extract_strided_slice %55 {offsets = [1, 0], sizes = [324, 4], strides = [1, 1]} : vector<362x4xf32> to vector<324x4xf32>
    %c1_40 = arith.constant 1 : index
    %c0_41 = arith.constant 0 : index
    %c0_42 = arith.constant 0 : index
    %63 = vector.load %arg3[%c1_40, %c0_41, %c0_42] : memref<9x4x4xf32, #tpu.memory_space<vmem>>, vector<1x4x4xf32>
    %64 = vector.shape_cast %63 : vector<1x4x4xf32> to vector<4x4xf32>
    %cst_43 = arith.constant dense<0.000000e+00> : vector<324x4xf32>
    %65 = tpu.matmul %62, %64, %cst_43 {dimension_numbers = #tpu.dot_dimension_numbers<[1], [0], [0], [1], [0, 0, 1, 1], [], []>} : vector<324x4xf32>, vector<4x4xf32>, vector<324x4xf32> -> vector<324x4xf32>
    %66 = arith.addf %61, %65 : vector<324x4xf32>
    %67 = vector.extract_strided_slice %55 {offsets = [2, 0], sizes = [324, 4], strides = [1, 1]} : vector<362x4xf32> to vector<324x4xf32>
    %c2_44 = arith.constant 2 : index
    %c0_45 = arith.constant 0 : index
    %c0_46 = arith.constant 0 : index
    %68 = vector.load %arg3[%c2_44, %c0_45, %c0_46] : memref<9x4x4xf32, #tpu.memory_space<vmem>>, vector<1x4x4xf32>
    %69 = vector.shape_cast %68 : vector<1x4x4xf32> to vector<4x4xf32>
    %cst_47 = arith.constant dense<0.000000e+00> : vector<324x4xf32>
    %70 = tpu.matmul %67, %69, %cst_47 {dimension_numbers = #tpu.dot_dimension_numbers<[1], [0], [0], [1], [0, 0, 1, 1], [], []>} : vector<324x4xf32>, vector<4x4xf32>, vector<324x4xf32> -> vector<324x4xf32>
    %71 = arith.addf %66, %70 : vector<324x4xf32>
    %72 = vector.extract_strided_slice %55 {offsets = [18, 0], sizes = [324, 4], strides = [1, 1]} : vector<362x4xf32> to vector<324x4xf32>
    %c3_48 = arith.constant 3 : index
    %c0_49 = arith.constant 0 : index
    %c0_50 = arith.constant 0 : index
    %73 = vector.load %arg3[%c3_48, %c0_49, %c0_50] : memref<9x4x4xf32, #tpu.memory_space<vmem>>, vector<1x4x4xf32>
    %74 = vector.shape_cast %73 : vector<1x4x4xf32> to vector<4x4xf32>
    %cst_51 = arith.constant dense<0.000000e+00> : vector<324x4xf32>
    %75 = tpu.matmul %72, %74, %cst_51 {dimension_numbers = #tpu.dot_dimension_numbers<[1], [0], [0], [1], [0, 0, 1, 1], [], []>} : vector<324x4xf32>, vector<4x4xf32>, vector<324x4xf32> -> vector<324x4xf32>
    %76 = arith.addf %71, %75 : vector<324x4xf32>
    %77 = vector.extract_strided_slice %55 {offsets = [19, 0], sizes = [324, 4], strides = [1, 1]} : vector<362x4xf32> to vector<324x4xf32>
    %c4_52 = arith.constant 4 : index
    %c0_53 = arith.constant 0 : index
    %c0_54 = arith.constant 0 : index
    %78 = vector.load %arg3[%c4_52, %c0_53, %c0_54] : memref<9x4x4xf32, #tpu.memory_space<vmem>>, vector<1x4x4xf32>
    %79 = vector.shape_cast %78 : vector<1x4x4xf32> to vector<4x4xf32>
    %cst_55 = arith.constant dense<0.000000e+00> : vector<324x4xf32>
    %80 = tpu.matmul %77, %79, %cst_55 {dimension_numbers = #tpu.dot_dimension_numbers<[1], [0], [0], [1], [0, 0, 1, 1], [], []>} : vector<324x4xf32>, vector<4x4xf32>, vector<324x4xf32> -> vector<324x4xf32>
    %81 = arith.addf %76, %80 : vector<324x4xf32>
    %82 = vector.extract_strided_slice %55 {offsets = [20, 0], sizes = [324, 4], strides = [1, 1]} : vector<362x4xf32> to vector<324x4xf32>
    %c5_56 = arith.constant 5 : index
    %c0_57 = arith.constant 0 : index
    %c0_58 = arith.constant 0 : index
    %83 = vector.load %arg3[%c5_56, %c0_57, %c0_58] : memref<9x4x4xf32, #tpu.memory_space<vmem>>, vector<1x4x4xf32>
    %84 = vector.shape_cast %83 : vector<1x4x4xf32> to vector<4x4xf32>
    %cst_59 = arith.constant dense<0.000000e+00> : vector<324x4xf32>
    %85 = tpu.matmul %82, %84, %cst_59 {dimension_numbers = #tpu.dot_dimension_numbers<[1], [0], [0], [1], [0, 0, 1, 1], [], []>} : vector<324x4xf32>, vector<4x4xf32>, vector<324x4xf32> -> vector<324x4xf32>
    %86 = arith.addf %81, %85 : vector<324x4xf32>
    %87 = vector.extract_strided_slice %55 {offsets = [36, 0], sizes = [324, 4], strides = [1, 1]} : vector<362x4xf32> to vector<324x4xf32>
    %c6_60 = arith.constant 6 : index
    %c0_61 = arith.constant 0 : index
    %c0_62 = arith.constant 0 : index
    %88 = vector.load %arg3[%c6_60, %c0_61, %c0_62] : memref<9x4x4xf32, #tpu.memory_space<vmem>>, vector<1x4x4xf32>
    %89 = vector.shape_cast %88 : vector<1x4x4xf32> to vector<4x4xf32>
    %cst_63 = arith.constant dense<0.000000e+00> : vector<324x4xf32>
    %90 = tpu.matmul %87, %89, %cst_63 {dimension_numbers = #tpu.dot_dimension_numbers<[1], [0], [0], [1], [0, 0, 1, 1], [], []>} : vector<324x4xf32>, vector<4x4xf32>, vector<324x4xf32> -> vector<324x4xf32>
    %91 = arith.addf %86, %90 : vector<324x4xf32>
    %92 = vector.extract_strided_slice %55 {offsets = [37, 0], sizes = [324, 4], strides = [1, 1]} : vector<362x4xf32> to vector<324x4xf32>
    %c7_64 = arith.constant 7 : index
    %c0_65 = arith.constant 0 : index
    %c0_66 = arith.constant 0 : index
    %93 = vector.load %arg3[%c7_64, %c0_65, %c0_66] : memref<9x4x4xf32, #tpu.memory_space<vmem>>, vector<1x4x4xf32>
    %94 = vector.shape_cast %93 : vector<1x4x4xf32> to vector<4x4xf32>
    %cst_67 = arith.constant dense<0.000000e+00> : vector<324x4xf32>
    %95 = tpu.matmul %92, %94, %cst_67 {dimension_numbers = #tpu.dot_dimension_numbers<[1], [0], [0], [1], [0, 0, 1, 1], [], []>} : vector<324x4xf32>, vector<4x4xf32>, vector<324x4xf32> -> vector<324x4xf32>
    %96 = arith.addf %91, %95 : vector<324x4xf32>
    %97 = vector.extract_strided_slice %55 {offsets = [38, 0], sizes = [324, 4], strides = [1, 1]} : vector<362x4xf32> to vector<324x4xf32>
    %c8_68 = arith.constant 8 : index
    %c0_69 = arith.constant 0 : index
    %c0_70 = arith.constant 0 : index
    %98 = vector.load %arg3[%c8_68, %c0_69, %c0_70] : memref<9x4x4xf32, #tpu.memory_space<vmem>>, vector<1x4x4xf32>
    %99 = vector.shape_cast %98 : vector<1x4x4xf32> to vector<4x4xf32>
    %cst_71 = arith.constant dense<0.000000e+00> : vector<324x4xf32>
    %100 = tpu.matmul %97, %99, %cst_71 {dimension_numbers = #tpu.dot_dimension_numbers<[1], [0], [0], [1], [0, 0, 1, 1], [], []>} : vector<324x4xf32>, vector<4x4xf32>, vector<324x4xf32> -> vector<324x4xf32>
    %101 = arith.addf %96, %100 : vector<324x4xf32>
    %102 = vector.extract_strided_slice %1 {offsets = [38, 0], sizes = [324, 4], strides = [1, 1]} : vector<400x4xf32> to vector<324x4xf32>
    %c1_72 = arith.constant 1 : index
    %c0_73 = arith.constant 0 : index
    %103 = vector.load %arg4[%c1_72, %c0_73] : memref<2x4xf32, #tpu.memory_space<vmem>>, vector<1x4xf32>
    %104 = vector.broadcast %103 : vector<1x4xf32> to vector<324x4xf32>
    %105 = arith.addf %101, %104 : vector<324x4xf32>
    %106 = arith.addf %105, %102 : vector<324x4xf32>
    %cst_74 = arith.constant 0.000000e+00 : f32
    %107 = vector.broadcast %cst_74 : f32 to vector<324x4xf32>
    %108 = arith.maximumf %106, %107 : vector<324x4xf32>
    %c0_75 = arith.constant 0 : index
    %c0_76 = arith.constant 0 : index
    %c0_77 = arith.constant 0 : index
    %109 = vector.load %arg6[%c0_75, %c0_76, %c0_77] : memref<1x324x4xf32, #tpu.memory_space<vmem>>, vector<1x324x4xf32>
    %110 = vector.shape_cast %109 : vector<1x324x4xf32> to vector<324x4xf32>
    %111 = vector.shape_cast %108 : vector<324x4xf32> to vector<1x324x4xf32>
    tpu.vector_store %arg6[%c0_75, %c0_76, %c0_77], %111 {strides = array<i32>} : memref<1x324x4xf32, #tpu.memory_space<vmem>>, vector<1x324x4xf32>,
    return
  }
  func.func @transform_0(%arg0: i32) -> (i32, i32, i32) {
    %c0_i32 = arith.constant 0 : i32
    %c0_i32_0 = arith.constant 0 : i32
    %c0_i32_1 = arith.constant 0 : i32
    return %arg0, %c0_i32, %c0_i32_0 : i32, i32, i32
  }
  func.func @transform_1(%arg0: i32) -> (i32, i32, i32) {
    %c0_i32 = arith.constant 0 : i32
    %c0_i32_0 = arith.constant 0 : i32
    %c0_i32_1 = arith.constant 0 : i32
    %c0_i32_2 = arith.constant 0 : i32
    return %c0_i32, %c0_i32_0, %c0_i32_1 : i32, i32, i32
  }
  func.func @transform_2(%arg0: i32) -> (i32, i32, i32) {
    %c0_i32 = arith.constant 0 : i32
    %c0_i32_0 = arith.constant 0 : i32
    %c0_i32_1 = arith.constant 0 : i32
    %c0_i32_2 = arith.constant 0 : i32
    return %c0_i32, %c0_i32_0, %c0_i32_1 : i32, i32, i32
  }
  func.func @transform_3(%arg0: i32) -> (i32, i32) {
    %c0_i32 = arith.constant 0 : i32
    %c0_i32_0 = arith.constant 0 : i32
    %c0_i32_1 = arith.constant 0 : i32
    return %c0_i32, %c0_i32_0 : i32, i32
  }
  func.func @transform_4(%arg0: i32) -> (i32, i32) {
    %c0_i32 = arith.constant 0 : i32
    %c0_i32_0 = arith.constant 0 : i32
    %c0_i32_1 = arith.constant 0 : i32
    return %c0_i32, %c0_i32_0 : i32, i32
  }
  func.func @transform_5(%arg0: i32) -> (i32, i32, i32) {
    %c0_i32 = arith.constant 0 : i32
    %c0_i32_0 = arith.constant 0 : i32
    %c0_i32_1 = arith.constant 0 : i32
    return %arg0, %c0_i32, %c0_i32_0 : i32, i32, i32
  }
}

</mosaic_0001>

<llo_original>
// kernel: basic_ds_block1.1
$region0: #{basic_ds_block1.1}
  #allocation0 [shape = 'u32[]', space=smem, size = 0x4, offset = 0x4, fixed_abs, tag = 'smem constant byte address 0x4 - core index']
  #allocation1 [shape = 'u32[144,128]{1,0:T(1,128)}', space=vmem, size = 0x12000, scoped, tag = 'internal scratch']
  %s0 = inlined_call_operand.vmem [shape: f32[2,400,4], index: 0, kind: input, shape index: {}]
  %s1 = inlined_call_operand.vmem [shape: f32[9,4,4], index: 1, kind: input, shape index: {}]
  %s2 = inlined_call_operand.vmem [shape: f32[9,4,4], index: 2, kind: input, shape index: {}]
  %s3 = inlined_call_operand.vmem [shape: f32[2,4], index: 3, kind: input, shape index: {}]
  %s4 = inlined_call_operand.vmem [shape: f32[362,1], index: 4, kind: input, shape index: {}]
  %s5 = inlined_call_operand.vmem [shape: f32[2,324,4], index: 5, kind: output, shape index: {}]
  %s6 = sld [smem:[#allocation0]]
  $region53: #{basic_ds_block1.1} parent=0
    _
  %s8 = ssub.s32 1, %s6
  %s9 = scalar_select 0, %s8, %s6
  loop: start=0, step=1, limit=4
  $region2: #{basic_ds_block1.1} parent=0 // loop_pre_header
    _
  $region3: #{basic_ds_block1.1} parent=0 // loop_header
    %s11 = sphi 0, %s15
    %p12 = scmp.ge.s32.totalorder %s11, 4
    %s21 = sphi 0, %s23
    %s24 = sphi 0, %s21
    %s25 = sphi 0, %s24
    %s41 = sphi 0, %s25
    %s45 = sphi 0, %s45
    %s47 = sphi 0, %s45
    %s48 = sphi 0, %s47
    %s62 = sphi 0, %s48
    %s66 = sphi 0, %s66
    %s68 = sphi 0, %s66
    %s69 = sphi 0, %s68
    %s83 = sphi 0, %s69
    %s87 = sphi 0, %s87
    %s89 = sphi 0, %s87
    %s90 = sphi 0, %s89
    %s104 = sphi 0, %s90
    %s108 = sphi 0, %s108
    %s110 = sphi 0, %s108
    %s111 = sphi 0, %s110
    %s125 = sphi 0, %s111
    %s131 = sphi 0, %s133
    %s134 = sphi 0, %s131
    %s135 = sphi 0, %s134
    %s151 = sphi 0, %s135
  $region4: #{basic_ds_block1.1} parent=0 // loop_header_branch
    %14 = sbr.rel (%p12) target = $region8
  $region5: #{basic_ds_block1.1} parent=0 // loop_body
    %s16 = ssub.s32 %s11, 1
    %s17 = ssub.s32 %s11, 2
    %s18 = sadd.s32 %s11, 1
    %s19 = ssub.s32 %s11, %s18
    %p20 = scmp.eq.s32.totalorder %s19, 0
    %s22 = sadd.s32 %s21, 1
    %s23 = scalar_select %p20, %s21, %s22
    %p26 = pneg %p20
    %p27 = scmp.eq.s32.totalorder %s11, 1
    %p28 = por %p26, %p27
    %p29 = scmp.ne.s32.totalorder %s21, %s24
    %p30 = scmp.eq.s32.totalorder %s11, 0
    %p31 = por %p29, %p30
    %p32 = scmp.ne.s32.totalorder %s21, %s24
    %p33 = scmp.eq.s32.totalorder %s16, 1
    %p34 = por %p32, %p33
    %p35 = scmp.ne.s32.totalorder %s24, %s25
    %p36 = scmp.eq.s32.totalorder %s16, 0
    %p37 = por %p35, %p36
    %p38 = scmp.ne.s32.totalorder %s24, %s25
    %p39 = scmp.eq.s32.totalorder %s17, 1
    %p40 = por %p38, %p39
    %p42 = scmp.ne.s32.totalorder %s25, %s41
    %p43 = scmp.eq.s32.totalorder %s17, 0
    %p44 = por %p42, %p43
    %s46 = sadd.s32 %s45, 1
    %p49 = scmp.eq.s32.totalorder %s11, 1
    %p50 = scmp.ne.s32.totalorder %s45, %s47
    %p51 = scmp.eq.s32.totalorder %s11, 0
    %p52 = por %p50, %p51
    %p53 = scmp.ne.s32.totalorder %s45, %s47
    %p54 = scmp.eq.s32.totalorder %s16, 1
    %p55 = por %p53, %p54
    %p56 = scmp.ne.s32.totalorder %s47, %s48
    %p57 = scmp.eq.s32.totalorder %s16, 0
    %p58 = por %p56, %p57
    %p59 = scmp.ne.s32.totalorder %s47, %s48
    %p60 = scmp.eq.s32.totalorder %s17, 1
    %p61 = por %p59, %p60
    %p63 = scmp.ne.s32.totalorder %s48, %s62
    %p64 = scmp.eq.s32.totalorder %s17, 0
    %p65 = por %p63, %p64
    %s67 = sadd.s32 %s66, 1
    %p70 = scmp.eq.s32.totalorder %s11, 1
    %p71 = scmp.ne.s32.totalorder %s66, %s68
    %p72 = scmp.eq.s32.totalorder %s11, 0
    %p73 = por %p71, %p72
    %p74 = scmp.ne.s32.totalorder %s66, %s68
    %p75 = scmp.eq.s32.totalorder %s16, 1
    %p76 = por %p74, %p75
    %p77 = scmp.ne.s32.totalorder %s68, %s69
    %p78 = scmp.eq.s32.totalorder %s16, 0
    %p79 = por %p77, %p78
    %p80 = scmp.ne.s32.totalorder %s68, %s69
    %p81 = scmp.eq.s32.totalorder %s17, 1
    %p82 = por %p80, %p81
    %p84 = scmp.ne.s32.totalorder %s69, %s83
    %p85 = scmp.eq.s32.totalorder %s17, 0
    %p86 = por %p84, %p85
    %s88 = sadd.s32 %s87, 1
    %p91 = scmp.eq.s32.totalorder %s11, 1
    %p92 = scmp.ne.s32.totalorder %s87, %s89
    %p93 = scmp.eq.s32.totalorder %s11, 0
    %p94 = por %p92, %p93
    %p95 = scmp.ne.s32.totalorder %s87, %s89
    %p96 = scmp.eq.s32.totalorder %s16, 1
    %p97 = por %p95, %p96
    %p98 = scmp.ne.s32.totalorder %s89, %s90
    %p99 = scmp.eq.s32.totalorder %s16, 0
    %p100 = por %p98, %p99
    %p101 = scmp.ne.s32.totalorder %s89, %s90
    %p102 = scmp.eq.s32.totalorder %s17, 1
    %p103 = por %p101, %p102
    %p105 = scmp.ne.s32.totalorder %s90, %s104
    %p106 = scmp.eq.s32.totalorder %s17, 0
    %p107 = por %p105, %p106
    %s109 = sadd.s32 %s108, 1
    %p112 = scmp.eq.s32.totalorder %s11, 1
    %p113 = scmp.ne.s32.totalorder %s108, %s110
    %p114 = scmp.eq.s32.totalorder %s11, 0
    %p115 = por %p113, %p114
    %p116 = scmp.ne.s32.totalorder %s108, %s110
    %p117 = scmp.eq.s32.totalorder %s16, 1
    %p118 = por %p116, %p117
    %p119 = scmp.ne.s32.totalorder %s110, %s111
    %p120 = scmp.eq.s32.totalorder %s16, 0
    %p121 = por %p119, %p120
    %p122 = scmp.ne.s32.totalorder %s110, %s111
    %p123 = scmp.eq.s32.totalorder %s17, 1
    %p124 = por %p122, %p123
    %p126 = scmp.ne.s32.totalorder %s111, %s125
    %p127 = scmp.eq.s32.totalorder %s17, 0
    %p128 = por %p126, %p127
    %s129 = ssub.s32 %s11, %s18
    %p130 = scmp.eq.s32.totalorder %s129, 0
    %s132 = sadd.s32 %s131, 1
    %s133 = scalar_select %p130, %s131, %s132
    %p136 = pneg %p130
    %p137 = scmp.eq.s32.totalorder %s11, 1
    %p138 = por %p136, %p137
    %p139 = scmp.ne.s32.totalorder %s131, %s134
    %p140 = scmp.eq.s32.totalorder %s11, 0
    %p141 = por %p139, %p140
    %p142 = scmp.ne.s32.totalorder %s131, %s134
    %p143 = scmp.eq.s32.totalorder %s16, 1
    %p144 = por %p142, %p143
    %p145 = scmp.ne.s32.totalorder %s134, %s135
    %p146 = scmp.eq.s32.totalorder %s16, 0
    %p147 = por %p145, %p146
    %p148 = scmp.ne.s32.totalorder %s134, %s135
    %p149 = scmp.eq.s32.totalorder %s17, 1
    %p150 = por %p148, %p149
    %p152 = scmp.ne.s32.totalorder %s135, %s151
    %p153 = scmp.eq.s32.totalorder %s17, 0
    %p154 = por %p152, %p153
    %p155 = scmp.le.s32.totalorder 1, %s11
    %p156 = scmp.lt.s32.totalorder %s11, 3
    %p157 = pnand %p155, %p156
    %p158 = pneg %p157
    // Predicated region
    $region9: #{basic_ds_block1.1} parent=5 // pred_check
      _
    $region10: #{basic_ds_block1.1} parent=5 // pred_check_branch
      %160 = sbr.rel (%p157) target = $region12
    $region11: #{basic_ds_block1.1} parent=5 // pred_region
      %s161 = ssub.s32 %s11, 1
      // Predicated region
      $region13: #{basic_ds_block1.1} parent=11 // pred_check
        %p162 = pneg %p58
      $region14: #{basic_ds_block1.1} parent=11 // pred_check_branch
        %164 = sbr.rel (%p162) target = $region16
      $region15: #{basic_ds_block1.1} parent=11 // pred_region
        _
      $region16: #{basic_ds_block1.1} parent=11 // pred_fallthru
        _
      // Predicated region
      $region17: #{basic_ds_block1.1} parent=11 // pred_check
        %p165 = pneg %p79
      $region18: #{basic_ds_block1.1} parent=11 // pred_check_branch
        %167 = sbr.rel (%p165) target = $region20
      $region19: #{basic_ds_block1.1} parent=11 // pred_region
        _
      $region20: #{basic_ds_block1.1} parent=11 // pred_fallthru
        _
      // Predicated region
      $region21: #{basic_ds_block1.1} parent=11 // pred_check
        %p168 = pneg %p100
      $region22: #{basic_ds_block1.1} parent=11 // pred_check_branch
        %170 = sbr.rel (%p168) target = $region24
      $region23: #{basic_ds_block1.1} parent=11 // pred_region
        _
      $region24: #{basic_ds_block1.1} parent=11 // pred_fallthru
        _
      // Predicated region
      $region25: #{basic_ds_block1.1} parent=11 // pred_check
        %p171 = pneg %p121
      $region26: #{basic_ds_block1.1} parent=11 // pred_check_branch
        %173 = sbr.rel (%p171) target = $region28
      $region27: #{basic_ds_block1.1} parent=11 // pred_region
        _
      $region28: #{basic_ds_block1.1} parent=11 // pred_fallthru
        _
    $region12: #{basic_ds_block1.1} parent=5 // pred_fallthru
      _
    %p174 = scmp.lt.s32.totalorder %s11, 2
    // Predicated region
    $region29: #{basic_ds_block1.1} parent=5 // pred_check
      %p175 = pneg %p174
    $region30: #{basic_ds_block1.1} parent=5 // pred_check_branch
      %177 = sbr.rel (%p175) target = $region32
    $region31: #{basic_ds_block1.1} parent=5 // pred_region
      // Predicated region
      $region33: #{basic_ds_block1.1} parent=31 // pred_check
        %p178 = pneg %p31
      $region34: #{basic_ds_block1.1} parent=31 // pred_check_branch
        %180 = sbr.rel (%p178) target = $region36
      $region35: #{basic_ds_block1.1} parent=31 // pred_region
        %p181 = scmp.lt.s32.totalorder %s11, 1
        %s182 = scalar_select %p181, %s11, 1
        %s183 = smul.addr %s182, 50
        %s184 = smul.addr %s183, 8
        %s185 = scalar_lea.vmem %s0, %s184
      $region36: #{basic_ds_block1.1} parent=31 // pred_fallthru
        _
    $region32: #{basic_ds_block1.1} parent=5 // pred_fallthru
      _
    %p186 = scmp.le.s32.totalorder 1, %s11
    %p187 = scmp.lt.s32.totalorder %s11, 3
    %p188 = pnand %p186, %p187
    %p189 = pneg %p188
    // Predicated region
    $region37: #{basic_ds_block1.1} parent=5 // pred_check
      _
    $region38: #{basic_ds_block1.1} parent=5 // pred_check_branch
      %191 = sbr.rel (%p188) target = $region40
    $region39: #{basic_ds_block1.1} parent=5 // pred_region
      %s192 = ssub.s32 %s11, 1
      %p193 = scmp.lt.s32.totalorder %s16, 1
      %s194 = scalar_select %p193, %s16, 1
      %s195 = smul.addr %s194, 50
      %s196 = smul.addr %s195, 8
      %s197 = scalar_lea.vmem %s0, %s196
      %p198 = pneg %p37
      %p199 = pneg %p34
      %p200 = pneg %p58
      %p201 = pneg %p55
      %p202 = pneg %p79
      %p203 = pneg %p76
      %p204 = pneg %p100
      %p205 = pneg %p97
      %p206 = pneg %p121
      %p207 = pneg %p118
      %p208 = pneg %p147
      %p209 = pneg %p144
      %p210 = scmp.lt.s32.totalorder %s16, 1
      %s211 = scalar_select %p210, %s16, 1
      %s212 = smul.addr %s211, 41
      %s213 = smul.addr %s212, 8
      %s214 = scalar_lea.vmem %s5, %s213
      %p215 = scmp.lt.s32.totalorder %s16, 1
      %s216 = scalar_select %p215, %s16, 1
      %s217 = smul.addr %s216, 50
      %s218 = smul.addr %s217, 8
      %s219 = scalar_lea.vmem %s0, %s218
      %p220 = scmp.lt.s32.totalorder %s16, 1
      %s221 = scalar_select %p220, %s16, 1
      %s222 = smul.addr %s221, 41
      %s223 = smul.addr %s222, 8
      %s224 = scalar_lea.vmem %s5, %s223
      %v225 = vld [vmem:[%s219] sm:$0xff]
      %v226 = vld [vmem:[%s219 + $0x8] sm:$0xff]
      %v227 = vld [vmem:[%s219 + $0x10] sm:$0xff]
      %v228 = vld [vmem:[%s219 + $0x18] sm:$0xff]
      %v229 = vld [vmem:[%s219 + $0x20] sm:$0xff]
      %v230 = vld [vmem:[%s219 + $0x28] sm:$0xff]
      %v231 = vld [vmem:[%s219 + $0x30] sm:$0xff]
      %v232 = vld [vmem:[%s219 + $0x38] sm:$0xff]
      %v233 = vld [vmem:[%s219 + $0x40] sm:$0xff]
      %v234 = vld [vmem:[%s219 + $0x48] sm:$0xff]
      %v235 = vld [vmem:[%s219 + $0x50] sm:$0xff]
      %v236 = vld [vmem:[%s219 + $0x58] sm:$0xff]
      %v237 = vld [vmem:[%s219 + $0x60] sm:$0xff]
      %v238 = vld [vmem:[%s219 + $0x68] sm:$0xff]
      %v239 = vld [vmem:[%s219 + $0x70] sm:$0xff]
      %v240 = vld [vmem:[%s219 + $0x78] sm:$0xff]
      %v241 = vld [vmem:[%s219 + $0x80] sm:$0xff]
      %v242 = vld [vmem:[%s219 + $0x88] sm:$0xff]
      %v243 = vld [vmem:[%s219 + $0x90] sm:$0xff]
      %v244 = vld [vmem:[%s219 + $0x98] sm:$0xff]
      %v245 = vld [vmem:[%s219 + $0xa0] sm:$0xff]
      %v246 = vld [vmem:[%s219 + $0xa8] sm:$0xff]
      %v247 = vld [vmem:[%s219 + $0xb0] sm:$0xff]
      %v248 = vld [vmem:[%s219 + $0xb8] sm:$0xff]
      %v249 = vld [vmem:[%s219 + $0xc0] sm:$0xff]
      %v250 = vld [vmem:[%s219 + $0xc8] sm:$0xff]
      %v251 = vld [vmem:[%s219 + $0xd0] sm:$0xff]
      %v252 = vld [vmem:[%s219 + $0xd8] sm:$0xff]
      %v253 = vld [vmem:[%s219 + $0xe0] sm:$0xff]
      %v254 = vld [vmem:[%s219 + $0xe8] sm:$0xff]
      %v255 = vld [vmem:[%s219 + $0xf0] sm:$0xff]
      %v256 = vld [vmem:[%s219 + $0xf8] sm:$0xff]
      %v257 = vld [vmem:[%s219 + $0x100] sm:$0xff]
      %v258 = vld [vmem:[%s219 + $0x108] sm:$0xff]
      %v259 = vld [vmem:[%s219 + $0x110] sm:$0xff]
      %v260 = vld [vmem:[%s219 + $0x118] sm:$0xff]
      %v261 = vld [vmem:[%s219 + $0x120] sm:$0xff]
      %v262 = vld [vmem:[%s219 + $0x128] sm:$0xff]
      %v263 = vld [vmem:[%s219 + $0x130] sm:$0xff]
      %v264 = vld [vmem:[%s219 + $0x138] sm:$0xff]
      %v265 = vld [vmem:[%s219 + $0x140] sm:$0xff]
      %v266 = vld [vmem:[%s219 + $0x148] sm:$0xff]
      %v267 = vld [vmem:[%s219 + $0x150] sm:$0xff]
      %v268 = vld [vmem:[%s219 + $0x158] sm:$0xff]
      %v269 = vld [vmem:[%s219 + $0x160] sm:$0xff]
      %v270 = vld [vmem:[%s219 + $0x168] sm:$0xff]
      %v271 = vld [vmem:[%s219 + $0x170] sm:$0xff]
      %v272 = vld [vmem:[%s219 + $0x178] sm:$0xff]
      %v273 = vld [vmem:[%s219 + $0x180] sm:$0xff]
      %v274 = vld [vmem:[%s219 + $0x188] sm:$0xff]
      %v275 = vld [vmem:[%s1] sm:$0xf]
      %s276 = scalar_lea.vmem %s1, 4
      %v277 = vld [vmem:[%s276] sm:$0xf]
      %vm324 = vcmask 1046528
      %v325 = vrot.slane %v225, 1
      %v326 = vrot.slane %v226, 1
      %v327 = vsel %vm324, %v325, %v326
      %v328 = vrot.slane %v227, 1
      %v329 = vsel %vm324, %v326, %v328
      %v330 = vrot.slane %v228, 1
      %v331 = vsel %vm324, %v328, %v330
      %v332 = vrot.slane %v229, 1
      %v333 = vsel %vm324, %v330, %v332
      %v334 = vrot.slane %v230, 1
      %v335 = vsel %vm324, %v332, %v334
      %v336 = vrot.slane %v231, 1
      %v337 = vsel %vm324, %v334, %v336
      %v338 = vrot.slane %v232, 1
      %v339 = vsel %vm324, %v336, %v338
      %v340 = vrot.slane %v233, 1
      %v341 = vsel %vm324, %v338, %v340
      %v342 = vrot.slane %v234, 1
      %v343 = vsel %vm324, %v340, %v342
      %v344 = vrot.slane %v235, 1
      %v345 = vsel %vm324, %v342, %v344
      %v346 = vrot.slane %v236, 1
      %v347 = vsel %vm324, %v344, %v346
      %v348 = vrot.slane %v237, 1
      %v349 = vsel %vm324, %v346, %v348
      %v350 = vrot.slane %v238, 1
      %v351 = vsel %vm324, %v348, %v350
      %v352 = vrot.slane %v239, 1
      %v353 = vsel %vm324, %v350, %v352
      %v354 = vrot.slane %v240, 1
      %v355 = vsel %vm324, %v352, %v354
      %v356 = vrot.slane %v241, 1
      %v357 = vsel %vm324, %v354, %v356
      %v358 = vrot.slane %v242, 1
      %v359 = vsel %vm324, %v356, %v358
      %v360 = vrot.slane %v243, 1
      %v361 = vsel %vm324, %v358, %v360
      %v362 = vrot.slane %v244, 1
      %v363 = vsel %vm324, %v360, %v362
      %v364 = vrot.slane %v245, 1
      %v365 = vsel %vm324, %v362, %v364
      %v366 = vrot.slane %v246, 1
      %v367 = vsel %vm324, %v364, %v366
      %v368 = vrot.slane %v247, 1
      %v369 = vsel %vm324, %v366, %v368
      %v370 = vrot.slane %v248, 1
      %v371 = vsel %vm324, %v368, %v370
      %v372 = vrot.slane %v249, 1
      %v373 = vsel %vm324, %v370, %v372
      %v374 = vrot.slane %v250, 1
      %v375 = vsel %vm324, %v372, %v374
      %v376 = vrot.slane %v251, 1
      %v377 = vsel %vm324, %v374, %v376
      %v378 = vrot.slane %v252, 1
      %v379 = vsel %vm324, %v376, %v378
      %v380 = vrot.slane %v253, 1
      %v381 = vsel %vm324, %v378, %v380
      %v382 = vrot.slane %v254, 1
      %v383 = vsel %vm324, %v380, %v382
      %v384 = vrot.slane %v255, 1
      %v385 = vsel %vm324, %v382, %v384
      %v386 = vrot.slane %v256, 1
      %v387 = vsel %vm324, %v384, %v386
      %v388 = vrot.slane %v257, 1
      %v389 = vsel %vm324, %v386, %v388
      %v390 = vrot.slane %v258, 1
      %v391 = vsel %vm324, %v388, %v390
      %v392 = vrot.slane %v259, 1
      %v393 = vsel %vm324, %v390, %v392
      %v394 = vrot.slane %v260, 1
      %v395 = vsel %vm324, %v392, %v394
      %v396 = vrot.slane %v261, 1
      %v397 = vsel %vm324, %v394, %v396
      %v398 = vrot.slane %v262, 1
      %v399 = vsel %vm324, %v396, %v398
      %v400 = vrot.slane %v263, 1
      %v401 = vsel %vm324, %v398, %v400
      %v402 = vrot.slane %v264, 1
      %v403 = vsel %vm324, %v400, %v402
      %v404 = vrot.slane %v265, 1
      %v405 = vsel %vm324, %v402, %v404
      %v406 = vrot.slane %v266, 1
      %v407 = vsel %vm324, %v404, %v406
      %v408 = vrot.slane %v267, 1
      %v409 = vsel %vm324, %v406, %v408
      %v410 = vrot.slane %v268, 1
      %v411 = vsel %vm324, %v408, %v410
      %v412 = vrot.slane %v269, 1
      %v413 = vsel %vm324, %v410, %v412
      %v414 = vrot.slane %v270, 1
      %v415 = vsel %vm324, %v412, %v414
      %vm416 = vcmask 31744
      %v417 = vsel %vm416, %v327, 0
      %v419 = vsel %vm416, %v329, 0
      %v421 = vsel %vm416, %v331, 0
      %v423 = vsel %vm416, %v333, 0
      %v425 = vsel %vm416, %v335, 0
      %v427 = vsel %vm416, %v337, 0
      %v429 = vsel %vm416, %v339, 0
      %v431 = vsel %vm416, %v341, 0
      %v433 = vsel %vm416, %v343, 0
      %v435 = vsel %vm416, %v345, 0
      %v437 = vsel %vm416, %v347, 0
      %v439 = vsel %vm416, %v349, 0
      %v441 = vsel %vm416, %v351, 0
      %v443 = vsel %vm416, %v353, 0
      %v445 = vsel %vm416, %v355, 0
      %v447 = vsel %vm416, %v357, 0
      %v449 = vsel %vm416, %v359, 0
      %v451 = vsel %vm416, %v361, 0
      %v453 = vsel %vm416, %v363, 0
      %v455 = vsel %vm416, %v365, 0
      %v457 = vsel %vm416, %v367, 0
      %v459 = vsel %vm416, %v369, 0
      %v461 = vsel %vm416, %v371, 0
      %v463 = vsel %vm416, %v373, 0
      %v465 = vsel %vm416, %v375, 0
      %v467 = vsel %vm416, %v377, 0
      %v469 = vsel %vm416, %v379, 0
      %v471 = vsel %vm416, %v381, 0
      %v473 = vsel %vm416, %v383, 0
      %v475 = vsel %vm416, %v385, 0
      %v477 = vsel %vm416, %v387, 0
      %v479 = vsel %vm416, %v389, 0
      %v481 = vsel %vm416, %v391, 0
      %v483 = vsel %vm416, %v393, 0
      %v485 = vsel %vm416, %v395, 0
      %v487 = vsel %vm416, %v397, 0
      %v489 = vsel %vm416, %v399, 0
      %v491 = vsel %vm416, %v401, 0
      %v493 = vsel %vm416, %v403, 0
      %v495 = vsel %vm416, %v405, 0
      %v497 = vsel %vm416, %v407, 0
      %v499 = vsel %vm416, %v409, 0
      %v501 = vsel %vm416, %v411, 0
      %v503 = vsel %vm416, %v413, 0
      %v505 = vsel %vm416, %v415, 0
      %v507 = vsel %vm416, %v414, 0
      %vm509 = vcmask 1043456
      %v511 = vsel %vm509, %v277, 0
      %513 = vmatprep.subr.mxu0 0.0
      %514 = vmatpush1.msra.mxu0 %v511
      %515 = vmatprep.subr.mxu0 0.0
      %516 = vmatpush1.msra.mxu0 0.0
      %517 = vmatprep.subr.mxu0 0.0
      %518 = vmatpush1.msra.mxu0 0.0
      %519 = vmatprep.subr.mxu0 0.0
      %520 = vmatpush1.msra.mxu0 0.0
      %521 = vmatprep.subr.mxu0 0.0
      %522 = vmatpush1.msra.mxu0 0.0
      %523 = vmatprep.subr.mxu0 0.0
      %524 = vmatpush1.msra.mxu0 0.0
      %525 = vmatprep.subr.mxu0 0.0
      %526 = vmatpush1.msra.mxu0 0.0
      %527 = vmatprep.subr.mxu0 0.0
      %528 = vmatpush1.msra.mxu0 0.0
      %529 = vmatprep.subr.mxu0 0.0
      %530 = vmatpush1.msra.mxu0 0.0
      %531 = vmatprep.subr.mxu0 0.0
      %532 = vmatpush1.msra.mxu0 0.0
      %533 = vmatprep.subr.mxu0 0.0
      %534 = vmatpush1.msra.mxu0 0.0
      %535 = vmatprep.subr.mxu0 0.0
      %536 = vmatpush1.msra.mxu0 0.0
      %537 = vmatprep.subr.mxu0 0.0
      %538 = vmatpush1.msra.mxu0 0.0
      %539 = vmatprep.subr.mxu0 0.0
      %540 = vmatpush1.msra.mxu0 0.0
      %541 = vmatprep.subr.mxu0 0.0
      %542 = vmatpush1.msra.mxu0 0.0
      %543 = vmatprep.subr.mxu0 0.0
      %544 = vmatpush1.msra.mxu0 0.0
      %545 = vmatprep.subr.mxu0 0.0
      %546 = vmatpush1.msra.mxu0 0.0
      %547 = vmatprep.subr.mxu0 0.0
      %548 = vmatpush1.msra.mxu0 0.0
      %549 = vmatprep.subr.mxu0 0.0
      %550 = vmatpush1.msra.mxu0 0.0
      %551 = vmatprep.subr.mxu0 0.0
      %552 = vmatpush1.msra.mxu0 0.0
      %553 = vmatprep.subr.mxu0 0.0
      %554 = vmatpush1.msra.mxu0 0.0
      %555 = vmatprep.subr.mxu0 0.0
      %556 = vmatpush1.msra.mxu0 0.0
      %557 = vmatprep.subr.mxu0 0.0
      %558 = vmatpush1.msra.mxu0 0.0
      %559 = vmatprep.subr.mxu0 0.0
      %560 = vmatpush1.msra.mxu0 0.0
      %561 = vmatprep.subr.mxu0 0.0
      %562 = vmatpush1.msra.mxu0 0.0
      %563 = vmatprep.subr.mxu0 0.0
      %564 = vmatpush1.msra.mxu0 0.0
      %565 = vmatprep.subr.mxu0 0.0
      %566 = vmatpush1.msra.mxu0 0.0
      %567 = vmatprep.subr.mxu0 0.0
      %568 = vmatpush1.msra.mxu0 0.0
      %569 = vmatprep.subr.mxu0 0.0
      %570 = vmatpush1.msra.mxu0 0.0
      %571 = vmatprep.subr.mxu0 0.0
      %572 = vmatpush1.msra.mxu0 0.0
      %573 = vmatprep.subr.mxu0 0.0
      %574 = vmatpush1.msra.mxu0 0.0
      %575 = vmatprep.subr.mxu0 0.0
      %576 = vmatpush1.msra.mxu0 0.0
      %577 = vmatprep.mubr.f32.mxu0 0.0
      %578 = vmatmul.mubr.f32.gmra.mrb[0].mxu0 %v417
      %v579 = vpop.f32.mrb[0].mxu0
      %v580 = vadd.f32 0.0, %v579
      %v581 = vpop.f32.mrb[0].mxu0
      %582 = vmatprep.mubr.f32.mxu0 0.0
      %583 = vmatmul.mubr.f32.gmra.mrb[0].mxu0 %v419
      %v584 = vpop.f32.mrb[0].mxu0
      %v585 = vadd.f32 0.0, %v584
      %v586 = vpop.f32.mrb[0].mxu0
      %587 = vmatprep.mubr.f32.mxu0 0.0
      %588 = vmatmul.mubr.f32.gmra.mrb[0].mxu0 %v421
      %v589 = vpop.f32.mrb[0].mxu0
      %v590 = vadd.f32 0.0, %v589
      %v591 = vpop.f32.mrb[0].mxu0
      %592 = vmatprep.mubr.f32.mxu0 0.0
      %593 = vmatmul.mubr.f32.gmra.mrb[0].mxu0 %v423
      %v594 = vpop.f32.mrb[0].mxu0
      %v595 = vadd.f32 0.0, %v594
      %v596 = vpop.f32.mrb[0].mxu0
      %597 = vmatprep.mubr.f32.mxu0 0.0
      %598 = vmatmul.mubr.f32.gmra.mrb[0].mxu0 %v425
      %v599 = vpop.f32.mrb[0].mxu0
      %v600 = vadd.f32 0.0, %v599
      %v601 = vpop.f32.mrb[0].mxu0
      %602 = vmatprep.mubr.f32.mxu0 0.0
      %603 = vmatmul.mubr.f32.gmra.mrb[0].mxu0 %v427
      %v604 = vpop.f32.mrb[0].mxu0
      %v605 = vadd.f32 0.0, %v604
      %v606 = vpop.f32.mrb[0].mxu0
      %607 = vmatprep.mubr.f32.mxu0 0.0
      %608 = vmatmul.mubr.f32.gmra.mrb[0].mxu0 %v429
      %v609 = vpop.f32.mrb[0].mxu0
      %v610 = vadd.f32 0.0, %v609
      %v611 = vpop.f32.mrb[0].mxu0
      %612 = vmatprep.mubr.f32.mxu0 0.0
      %613 = vmatmul.mubr.f32.gmra.mrb[0].mxu0 %v431
      %v614 = vpop.f32.mrb[0].mxu0
      %v615 = vadd.f32 0.0, %v614
      %v616 = vpop.f32.mrb[0].mxu0
      %617 = vmatprep.mubr.f32.mxu0 0.0
      %618 = vmatmul.mubr.f32.gmra.mrb[0].mxu0 %v433
      %v619 = vpop.f32.mrb[0].mxu0
      %v620 = vadd.f32 0.0, %v619
      %v621 = vpop.f32.mrb[0].mxu0
      %622 = vmatprep.mubr.f32.mxu0 0.0
      %623 = vmatmul.mubr.f32.gmra.mrb[0].mxu0 %v435
      %v624 = vpop.f32.mrb[0].mxu0
      %v625 = vadd.f32 0.0, %v624
      %v626 = vpop.f32.mrb[0].mxu0
      %627 = vmatprep.mubr.f32.mxu0 0.0
      %628 = vmatmul.mubr.f32.gmra.mrb[0].mxu0 %v437
      %v629 = vpop.f32.mrb[0].mxu0
      %v630 = vadd.f32 0.0, %v629
      %v631 = vpop.f32.mrb[0].mxu0
      %632 = vmatprep.mubr.f32.mxu0 0.0
      %633 = vmatmul.mubr.f32.gmra.mrb[0].mxu0 %v439
      %v634 = vpop.f32.mrb[0].mxu0
      %v635 = vadd.f32 0.0, %v634
      %v636 = vpop.f32.mrb[0].mxu0
      %637 = vmatprep.mubr.f32.mxu0 0.0
      %638 = vmatmul.mubr.f32.gmra.mrb[0].mxu0 %v441
      %v639 = vpop.f32.mrb[0].mxu0
      %v640 = vadd.f32 0.0, %v639
      %v641 = vpop.f32.mrb[0].mxu0
      %642 = vmatprep.mubr.f32.mxu0 0.0
      %643 = vmatmul.mubr.f32.gmra.mrb[0].mxu0 %v443
      %v644 = vpop.f32.mrb[0].mxu0
      %v645 = vadd.f32 0.0, %v644
      %v646 = vpop.f32.mrb[0].mxu0
      %647 = vmatprep.mubr.f32.mxu0 0.0
      %648 = vmatmul.mubr.f32.gmra.mrb[0].mxu0 %v445
      %v649 = vpop.f32.mrb[0].mxu0
      %v650 = vadd.f32 0.0, %v649
      %v651 = vpop.f32.mrb[0].mxu0
      %652 = vmatprep.mubr.f32.mxu0 0.0
      %653 = vmatmul.mubr.f32.gmra.mrb[0].mxu0 %v447
      %v654 = vpop.f32.mrb[0].mxu0
      %v655 = vadd.f32 0.0, %v654
      %v656 = vpop.f32.mrb[0].mxu0
      %657 = vmatprep.mubr.f32.mxu0 0.0
      %658 = vmatmul.mubr.f32.gmra.mrb[0].mxu0 %v449
      %v659 = vpop.f32.mrb[0].mxu0
      %v660 = vadd.f32 0.0, %v659
      %v661 = vpop.f32.mrb[0].mxu0
      %662 = vmatprep.mubr.f32.mxu0 0.0
      %663 = vmatmul.mubr.f32.gmra.mrb[0].mxu0 %v451
      %v664 = vpop.f32.mrb[0].mxu0
      %v665 = vadd.f32 0.0, %v664
      %v666 = vpop.f32.mrb[0].mxu0
      %667 = vmatprep.mubr.f32.mxu0 0.0
      %668 = vmatmul.mubr.f32.gmra.mrb[0].mxu0 %v453
      %v669 = vpop.f32.mrb[0].mxu0
      %v670 = vadd.f32 0.0, %v669
      %v671 = vpop.f32.mrb[0].mxu0
      %672 = vmatprep.mubr.f32.mxu0 0.0
      %673 = vmatmul.mubr.f32.gmra.mrb[0].mxu0 %v455
      %v674 = vpop.f32.mrb[0].mxu0
      %v675 = vadd.f32 0.0, %v674
      %v676 = vpop.f32.mrb[0].mxu0
      %677 = vmatprep.mubr.f32.mxu0 0.0
      %678 = vmatmul.mubr.f32.gmra.mrb[0].mxu0 %v457
      %v679 = vpop.f32.mrb[0].mxu0
      %v680 = vadd.f32 0.0, %v679
      %v681 = vpop.f32.mrb[0].mxu0
      %682 = vmatprep.mubr.f32.mxu0 0.0
      %683 = vmatmul.mubr.f32.gmra.mrb[0].mxu0 %v459
      %v684 = vpop.f32.mrb[0].mxu0
      %v685 = vadd.f32 0.0, %v684
      %v686 = vpop.f32.mrb[0].mxu0
      %687 = vmatprep.mubr.f32.mxu0 0.0
      %688 = vmatmul.mubr.f32.gmra.mrb[0].mxu0 %v461
      %v689 = vpop.f32.mrb[0].mxu0
      %v690 = vadd.f32 0.0, %v689
      %v691 = vpop.f32.mrb[0].mxu0
      %692 = vmatprep.mubr.f32.mxu0 0.0
      %693 = vmatmul.mubr.f32.gmra.mrb[0].mxu0 %v463
      %v694 = vpop.f32.mrb[0].mxu0
      %v695 = vadd.f32 0.0, %v694
      %v696 = vpop.f32.mrb[0].mxu0
      %697 = vmatprep.mubr.f32.mxu0 0.0
      %698 = vmatmul.mubr.f32.gmra.mrb[0].mxu0 %v465
      %v699 = vpop.f32.mrb[0].mxu0
      %v700 = vadd.f32 0.0, %v699
      %v701 = vpop.f32.mrb[0].mxu0
      %702 = vmatprep.mubr.f32.mxu0 0.0
      %703 = vmatmul.mubr.f32.gmra.mrb[0].mxu0 %v467
      %v704 = vpop.f32.mrb[0].mxu0
      %v705 = vadd.f32 0.0, %v704
      %v706 = vpop.f32.mrb[0].mxu0
      %707 = vmatprep.mubr.f32.mxu0 0.0
      %708 = vmatmul.mubr.f32.gmra.mrb[0].mxu0 %v469
      %v709 = vpop.f32.mrb[0].mxu0
      %v710 = vadd.f32 0.0, %v709
      %v711 = vpop.f32.mrb[0].mxu0
      %712 = vmatprep.mubr.f32.mxu0 0.0
      %713 = vmatmul.mubr.f32.gmra.mrb[0].mxu0 %v471
      %v714 = vpop.f32.mrb[0].mxu0
      %v715 = vadd.f32 0.0, %v714
      %v716 = vpop.f32.mrb[0].mxu0
      %717 = vmatprep.mubr.f32.mxu0 0.0
      %718 = vmatmul.mubr.f32.gmra.mrb[0].mxu0 %v473
      %v719 = vpop.f32.mrb[0].mxu0
      %v720 = vadd.f32 0.0, %v719
      %v721 = vpop.f32.mrb[0].mxu0
      %722 = vmatprep.mubr.f32.mxu0 0.0
      %723 = vmatmul.mubr.f32.gmra.mrb[0].mxu0 %v475
      %v724 = vpop.f32.mrb[0].mxu0
      %v725 = vadd.f32 0.0, %v724
      %v726 = vpop.f32.mrb[0].mxu0
      %727 = vmatprep.mubr.f32.mxu0 0.0
      %728 = vmatmul.mubr.f32.gmra.mrb[0].mxu0 %v477
      %v729 = vpop.f32.mrb[0].mxu0
      %v730 = vadd.f32 0.0, %v729
      %v731 = vpop.f32.mrb[0].mxu0
      %732 = vmatprep.mubr.f32.mxu0 0.0
      %733 = vmatmul.mubr.f32.gmra.mrb[0].mxu0 %v479
      %v734 = vpop.f32.mrb[0].mxu0
      %v735 = vadd.f32 0.0, %v734
      %v736 = vpop.f32.mrb[0].mxu0
      %737 = vmatprep.mubr.f32.mxu0 0.0
      %738 = vmatmul.mubr.f32.gmra.mrb[0].mxu0 %v481
      %v739 = vpop.f32.mrb[0].mxu0
      %v740 = vadd.f32 0.0, %v739
      %v741 = vpop.f32.mrb[0].mxu0
      %742 = vmatprep.mubr.f32.mxu0 0.0
      %743 = vmatmul.mubr.f32.gmra.mrb[0].mxu0 %v483
      %v744 = vpop.f32.mrb[0].mxu0
      %v745 = vadd.f32 0.0, %v744
      %v746 = vpop.f32.mrb[0].mxu0
      %747 = vmatprep.mubr.f32.mxu0 0.0
      %748 = vmatmul.mubr.f32.gmra.mrb[0].mxu0 %v485
      %v749 = vpop.f32.mrb[0].mxu0
      %v750 = vadd.f32 0.0, %v749
      %v751 = vpop.f32.mrb[0].mxu0
      %752 = vmatprep.mubr.f32.mxu0 0.0
      %753 = vmatmul.mubr.f32.gmra.mrb[0].mxu0 %v487
      %v754 = vpop.f32.mrb[0].mxu0
      %v755 = vadd.f32 0.0, %v754
      %v756 = vpop.f32.mrb[0].mxu0
      %757 = vmatprep.mubr.f32.mxu0 0.0
      %758 = vmatmul.mubr.f32.gmra.mrb[0].mxu0 %v489
      %v759 = vpop.f32.mrb[0].mxu0
      %v760 = vadd.f32 0.0, %v759
      %v761 = vpop.f32.mrb[0].mxu0
      %762 = vmatprep.mubr.f32.mxu0 0.0
      %763 = vmatmul.mubr.f32.gmra.mrb[0].mxu0 %v491
      %v764 = vpop.f32.mrb[0].mxu0
      %v765 = vadd.f32 0.0, %v764
      %v766 = vpop.f32.mrb[0].mxu0
      %767 = vmatprep.mubr.f32.mxu0 0.0
      %768 = vmatmul.mubr.f32.gmra.mrb[0].mxu0 %v493
      %v769 = vpop.f32.mrb[0].mxu0
      %v770 = vadd.f32 0.0, %v769
      %v771 = vpop.f32.mrb[0].mxu0
      %772 = vmatprep.mubr.f32.mxu0 0.0
      %773 = vmatmul.mubr.f32.gmra.mrb[0].mxu0 %v495
      %v774 = vpop.f32.mrb[0].mxu0
      %v775 = vadd.f32 0.0, %v774
      %v776 = vpop.f32.mrb[0].mxu0
      %777 = vmatprep.mubr.f32.mxu0 0.0
      %778 = vmatmul.mubr.f32.gmra.mrb[0].mxu0 %v497
      %v779 = vpop.f32.mrb[0].mxu0
      %v780 = vadd.f32 0.0, %v779
      %v781 = vpop.f32.mrb[0].mxu0
      %782 = vmatprep.mubr.f32.mxu0 0.0
      %783 = vmatmul.mubr.f32.gmra.mrb[0].mxu0 %v499
      %v784 = vpop.f32.mrb[0].mxu0
      %v785 = vadd.f32 0.0, %v784
      %v786 = vpop.f32.mrb[0].mxu0
      %787 = vmatprep.mubr.f32.mxu0 0.0
      %788 = vmatmul.mubr.f32.gmra.mrb[0].mxu0 %v501
      %v789 = vpop.f32.mrb[0].mxu0
      %v790 = vadd.f32 0.0, %v789
      %v791 = vpop.f32.mrb[0].mxu0
      %792 = vmatprep.mubr.f32.mxu0 0.0
      %793 = vmatmul.mubr.f32.gmra.mrb[0].mxu0 %v503
      %v794 = vpop.f32.mrb[0].mxu0
      %v795 = vadd.f32 0.0, %v794
      %v796 = vpop.f32.mrb[0].mxu0
      %797 = vmatprep.mubr.f32.mxu0 0.0
      %798 = vmatmul.mubr.f32.gmra.mrb[0].mxu0 %v505
      %v799 = vpop.f32.mrb[0].mxu0
      %v800 = vadd.f32 0.0, %v799
      %v801 = vpop.f32.mrb[0].mxu0
      %802 = vmatprep.mubr.f32.mxu0 0.0
      %803 = vmatmul.mubr.f32.gmra.mrb[0].mxu0 %v507
      %v804 = vpop.f32.mrb[0].mxu0
      %v805 = vadd.f32 0.0, %v804
      %v806 = vpop.f32.mrb[0].mxu0
      %807 = vdwg.mxu0
      %v808 = vsel %vm416, %v225, 0
      %v810 = vsel %vm416, %v226, 0
      %v812 = vsel %vm416, %v227, 0
      %v814 = vsel %vm416, %v228, 0
      %v816 = vsel %vm416, %v229, 0
      %v818 = vsel %vm416, %v230, 0
      %v820 = vsel %vm416, %v231, 0
      %v822 = vsel %vm416, %v232, 0
      %v824 = vsel %vm416, %v233, 0
      %v826 = vsel %vm416, %v234, 0
      %v828 = vsel %vm416, %v235, 0
      %v830 = vsel %vm416, %v236, 0
      %v832 = vsel %vm416, %v237, 0
      %v834 = vsel %vm416, %v238, 0
      %v836 = vsel %vm416, %v239, 0
      %v838 = vsel %vm416, %v240, 0
      %v840 = vsel %vm416, %v241, 0
      %v842 = vsel %vm416, %v242, 0
      %v844 = vsel %vm416, %v243, 0
      %v846 = vsel %vm416, %v244, 0
      %v848 = vsel %vm416, %v245, 0
      %v850 = vsel %vm416, %v246, 0
      %v852 = vsel %vm416, %v247, 0
      %v854 = vsel %vm416, %v248, 0
      %v856 = vsel %vm416, %v249, 0
      %v858 = vsel %vm416, %v250, 0
      %v860 = vsel %vm416, %v251, 0
      %v862 = vsel %vm416, %v252, 0
      %v864 = vsel %vm416, %v253, 0
      %v866 = vsel %vm416, %v254, 0
      %v868 = vsel %vm416, %v255, 0
      %v870 = vsel %vm416, %v256, 0
      %v872 = vsel %vm416, %v257, 0
      %v874 = vsel %vm416, %v258, 0
      %v876 = vsel %vm416, %v259, 0
      %v878 = vsel %vm416, %v260, 0
      %v880 = vsel %vm416, %v261, 0
      %v882 = vsel %vm416, %v262, 0
      %v884 = vsel %vm416, %v263, 0
      %v886 = vsel %vm416, %v264, 0
      %v888 = vsel %vm416, %v265, 0
      %v890 = vsel %vm416, %v266, 0
      %v892 = vsel %vm416, %v267, 0
      %v894 = vsel %vm416, %v268, 0
      %v896 = vsel %vm416, %v269, 0
      %v898 = vsel %vm416, %v270, 0
      %v901 = vsel %vm509, %v275, 0
      %903 = vmatprep.subr.mxu0 0.0
      %904 = vmatpush1.msra.mxu0 %v901
      %905 = vmatprep.subr.mxu0 0.0
      %906 = vmatpush1.msra.mxu0 0.0
      %907 = vmatprep.subr.mxu0 0.0
      %908 = vmatpush1.msra.mxu0 0.0
      %909 = vmatprep.subr.mxu0 0.0
      %910 = vmatpush1.msra.mxu0 0.0
      %911 = vmatprep.subr.mxu0 0.0
      %912 = vmatpush1.msra.mxu0 0.0
      %913 = vmatprep.subr.mxu0 0.0
      %914 = vmatpush1.msra.mxu0 0.0
      %915 = vmatprep.subr.mxu0 0.0
      %916 = vmatpush1.msra.mxu0 0.0
      %917 = vmatprep.subr.mxu0 0.0
      %918 = vmatpush1.msra.mxu0 0.0
      %919 = vmatprep.subr.mxu0 0.0
      %920 = vmatpush1.msra.mxu0 0.0
      %921 = vmatprep.subr.mxu0 0.0
      %922 = vmatpush1.msra.mxu0 0.0
      %923 = vmatprep.subr.mxu0 0.0
      %924 = vmatpush1.msra.mxu0 0.0
      %925 = vmatprep.subr.mxu0 0.0
      %926 = vmatpush1.msra.mxu0 0.0
      %927 = vmatprep.subr.mxu0 0.0
      %928 = vmatpush1.msra.mxu0 0.0
      %929 = vmatprep.subr.mxu0 0.0
      %930 = vmatpush1.msra.mxu0 0.0
      %931 = vmatprep.subr.mxu0 0.0
      %932 = vmatpush1.msra.mxu0 0.0
      %933 = vmatprep.subr.mxu0 0.0
      %934 = vmatpush1.msra.mxu0 0.0
      %935 = vmatprep.subr.mxu0 0.0
      %936 = vmatpush1.msra.mxu0 0.0
      %937 = vmatprep.subr.mxu0 0.0
      %938 = vmatpush1.msra.mxu0 0.0
      %939 = vmatprep.subr.mxu0 0.0
      %940 = vmatpush1.msra.mxu0 0.0
      %941 = vmatprep.subr.mxu0 0.0
      %942 = vmatpush1.msra.mxu0 0.0
      %943 = vmatprep.subr.mxu0 0.0
      %944 = vmatpush1.msra.mxu0 0.0
      %945 = vmatprep.subr.mxu0 0.0
      %946 = vmatpush1.msra.mxu0 0.0
      %947 = vmatprep.subr.mxu0 0.0
      %948 = vmatpush1.msra.mxu0 0.0
      %949 = vmatprep.subr.mxu0 0.0
      %950 = vmatpush1.msra.mxu0 0.0
      %951 = vmatprep.subr.mxu0 0.0
      %952 = vmatpush1.msra.mxu0 0.0
      %953 = vmatprep.subr.mxu0 0.0
      %954 = vmatpush1.msra.mxu0 0.0
      %955 = vmatprep.subr.mxu0 0.0
      %956 = vmatpush1.msra.mxu0 0.0
      %957 = vmatprep.subr.mxu0 0.0
      %958 = vmatpush1.msra.mxu0 0.0
      %959 = vmatprep.subr.mxu0 0.0
      %960 = vmatpush1.msra.mxu0 0.0
      %961 = vmatprep.subr.mxu0 0.0
      %962 = vmatpush1.msra.mxu0 0.0
      %963 = vmatprep.subr.mxu0 0.0
      %964 = vmatpush1.msra.mxu0 0.0
      %965 = vmatprep.subr.mxu0 0.0
      %966 = vmatpush1.msra.mxu0 0.0
      %967 = vmatprep.mubr.f32.mxu0 0.0
      %968 = vmatmul.mubr.f32.gmra.mrb[0].mxu0 %v808
      %v969 = vpop.f32.mrb[0].mxu0
      %v970 = vadd.f32 %v580, %v969
      %v971 = vpop.f32.mrb[0].mxu0
      %972 = vmatprep.mubr.f32.mxu0 0.0
      %973 = vmatmul.mubr.f32.gmra.mrb[0].mxu0 %v810
      %v974 = vpop.f32.mrb[0].mxu0
      %v975 = vadd.f32 %v585, %v974
      %v976 = vpop.f32.mrb[0].mxu0
      %977 = vmatprep.mubr.f32.mxu0 0.0
      %978 = vmatmul.mubr.f32.gmra.mrb[0].mxu0 %v812
      %v979 = vpop.f32.mrb[0].mxu0
      %v980 = vadd.f32 %v590, %v979
      %v981 = vpop.f32.mrb[0].mxu0
      %982 = vmatprep.mubr.f32.mxu0 0.0
      %983 = vmatmul.mubr.f32.gmra.mrb[0].mxu0 %v814
      %v984 = vpop.f32.mrb[0].mxu0
      %v985 = vadd.f32 %v595, %v984
      %v986 = vpop.f32.mrb[0].mxu0
      %987 = vmatprep.mubr.f32.mxu0 0.0
      %988 = vmatmul.mubr.f32.gmra.mrb[0].mxu0 %v816
      %v989 = vpop.f32.mrb[0].mxu0
      %v990 = vadd.f32 %v600, %v989
      %v991 = vpop.f32.mrb[0].mxu0
      %992 = vmatprep.mubr.f32.mxu0 0.0
      %993 = vmatmul.mubr.f32.gmra.mrb[0].mxu0 %v818
      %v994 = vpop.f32.mrb[0].mxu0
      %v995 = vadd.f32 %v605, %v994
      %v996 = vpop.f32.mrb[0].mxu0
      %997 = vmatprep.mubr.f32.mxu0 0.0
      %998 = vmatmul.mubr.f32.gmra.mrb[0].mxu0 %v820
      %v999 = vpop.f32.mrb[0].mxu0
      %v1000 = vadd.f32 %v610, %v999
      %v1001 = vpop.f32.mrb[0].mxu0
      %1002 = vmatprep.mubr.f32.mxu0 0.0
      %1003 = vmatmul.mubr.f32.gmra.mrb[0].mxu0 %v822
      %v1004 = vpop.f32.mrb[0].mxu0
      %v1005 = vadd.f32 %v615, %v1004
      %v1006 = vpop.f32.mrb[0].mxu0
      %1007 = vmatprep.mubr.f32.mxu0 0.0
      %1008 = vmatmul.mubr.f32.gmra.mrb[0].mxu0 %v824
      %v1009 = vpop.f32.mrb[0].mxu0
      %v1010 = vadd.f32 %v620, %v1009
      %v1011 = vpop.f32.mrb[0].mxu0
      %1012 = vmatprep.mubr.f32.mxu0 0.0
      %1013 = vmatmul.mubr.f32.gmra.mrb[0].mxu0 %v826
      %v1014 = vpop.f32.mrb[0].mxu0
      %v1015 = vadd.f32 %v625, %v1014
      %v1016 = vpop.f32.mrb[0].mxu0
      %1017 = vmatprep.mubr.f32.mxu0 0.0
      %1018 = vmatmul.mubr.f32.gmra.mrb[0].mxu0 %v828
      %v1019 = vpop.f32.mrb[0].mxu0
      %v1020 = vadd.f32 %v630, %v1019
      %v1021 = vpop.f32.mrb[0].mxu0
      %1022 = vmatprep.mubr.f32.mxu0 0.0
      %1023 = vmatmul.mubr.f32.gmra.mrb[0].mxu0 %v830
      %v1024 = vpop.f32.mrb[0].mxu0
      %v1025 = vadd.f32 %v635, %v1024
      %v1026 = vpop.f32.mrb[0].mxu0
      %1027 = vmatprep.mubr.f32.mxu0 0.0
      %1028 = vmatmul.mubr.f32.gmra.mrb[0].mxu0 %v832
      %v1029 = vpop.f32.mrb[0].mxu0
      %v1030 = vadd.f32 %v640, %v1029
      %v1031 = vpop.f32.mrb[0].mxu0
      %1032 = vmatprep.mubr.f32.mxu0 0.0
      %1033 = vmatmul.mubr.f32.gmra.mrb[0].mxu0 %v834
      %v1034 = vpop.f32.mrb[0].mxu0
      %v1035 = vadd.f32 %v645, %v1034
      %v1036 = vpop.f32.mrb[0].mxu0
      %1037 = vmatprep.mubr.f32.mxu0 0.0
      %1038 = vmatmul.mubr.f32.gmra.mrb[0].mxu0 %v836
      %v1039 = vpop.f32.mrb[0].mxu0
      %v1040 = vadd.f32 %v650, %v1039
      %v1041 = vpop.f32.mrb[0].mxu0
      %1042 = vmatprep.mubr.f32.mxu0 0.0
      %1043 = vmatmul.mubr.f32.gmra.mrb[0].mxu0 %v838
      %v1044 = vpop.f32.mrb[0].mxu0
      %v1045 = vadd.f32 %v655, %v1044
      %v1046 = vpop.f32.mrb[0].mxu0
      %1047 = vmatprep.mubr.f32.mxu0 0.0
      %1048 = vmatmul.mubr.f32.gmra.mrb[0].mxu0 %v840
      %v1049 = vpop.f32.mrb[0].mxu0
      %v1050 = vadd.f32 %v660, %v1049
      %v1051 = vpop.f32.mrb[0].mxu0
      %1052 = vmatprep.mubr.f32.mxu0 0.0
      %1053 = vmatmul.mubr.f32.gmra.mrb[0].mxu0 %v842
      %v1054 = vpop.f32.mrb[0].mxu0
      %v1055 = vadd.f32 %v665, %v1054
      %v1056 = vpop.f32.mrb[0].mxu0
      %1057 = vmatprep.mubr.f32.mxu0 0.0
      %1058 = vmatmul.mubr.f32.gmra.mrb[0].mxu0 %v844
      %v1059 = vpop.f32.mrb[0].mxu0
      %v1060 = vadd.f32 %v670, %v1059
      %v1061 = vpop.f32.mrb[0].mxu0
      %1062 = vmatprep.mubr.f32.mxu0 0.0
      %1063 = vmatmul.mubr.f32.gmra.mrb[0].mxu0 %v846
      %v1064 = vpop.f32.mrb[0].mxu0
      %v1065 = vadd.f32 %v675, %v1064
      %v1066 = vpop.f32.mrb[0].mxu0
      %1067 = vmatprep.mubr.f32.mxu0 0.0
      %1068 = vmatmul.mubr.f32.gmra.mrb[0].mxu0 %v848
      %v1069 = vpop.f32.mrb[0].mxu0
      %v1070 = vadd.f32 %v680, %v1069
      %v1071 = vpop.f32.mrb[0].mxu0
      %1072 = vmatprep.mubr.f32.mxu0 0.0
      %1073 = vmatmul.mubr.f32.gmra.mrb[0].mxu0 %v850
      %v1074 = vpop.f32.mrb[0].mxu0
      %v1075 = vadd.f32 %v685, %v1074
      %v1076 = vpop.f32.mrb[0].mxu0
      %1077 = vmatprep.mubr.f32.mxu0 0.0
      %1078 = vmatmul.mubr.f32.gmra.mrb[0].mxu0 %v852
      %v1079 = vpop.f32.mrb[0].mxu0
      %v1080 = vadd.f32 %v690, %v1079
      %v1081 = vpop.f32.mrb[0].mxu0
      %1082 = vmatprep.mubr.f32.mxu0 0.0
      %1083 = vmatmul.mubr.f32.gmra.mrb[0].mxu0 %v854
      %v1084 = vpop.f32.mrb[0].mxu0
      %v1085 = vadd.f32 %v695, %v1084
      %v1086 = vpop.f32.mrb[0].mxu0
      %1087 = vmatprep.mubr.f32.mxu0 0.0
      %1088 = vmatmul.mubr.f32.gmra.mrb[0].mxu0 %v856
      %v1089 = vpop.f32.mrb[0].mxu0
      %v1090 = vadd.f32 %v700, %v1089
      %v1091 = vpop.f32.mrb[0].mxu0
      %1092 = vmatprep.mubr.f32.mxu0 0.0
      %1093 = vmatmul.mubr.f32.gmra.mrb[0].mxu0 %v858
      %v1094 = vpop.f32.mrb[0].mxu0
      %v1095 = vadd.f32 %v705, %v1094
      %v1096 = vpop.f32.mrb[0].mxu0
      %1097 = vmatprep.mubr.f32.mxu0 0.0
      %1098 = vmatmul.mubr.f32.gmra.mrb[0].mxu0 %v860
      %v1099 = vpop.f32.mrb[0].mxu0
      %v1100 = vadd.f32 %v710, %v1099
      %v1101 = vpop.f32.mrb[0].mxu0
      %1102 = vmatprep.mubr.f32.mxu0 0.0
      %1103 = vmatmul.mubr.f32.gmra.mrb[0].mxu0 %v862
      %v1104 = vpop.f32.mrb[0].mxu0
      %v1105 = vadd.f32 %v715, %v1104
      %v1106 = vpop.f32.mrb[0].mxu0
      %1107 = vmatprep.mubr.f32.mxu0 0.0
      %1108 = vmatmul.mubr.f32.gmra.mrb[0].mxu0 %v864
      %v1109 = vpop.f32.mrb[0].mxu0
      %v1110 = vadd.f32 %v720, %v1109
      %v1111 = vpop.f32.mrb[0].mxu0
      %1112 = vmatprep.mubr.f32.mxu0 0.0
      %1113 = vmatmul.mubr.f32.gmra.mrb[0].mxu0 %v866
      %v1114 = vpop.f32.mrb[0].mxu0
      %v1115 = vadd.f32 %v725, %v1114
      %v1116 = vpop.f32.mrb[0].mxu0
      %1117 = vmatprep.mubr.f32.mxu0 0.0
      %1118 = vmatmul.mubr.f32.gmra.mrb[0].mxu0 %v868
      %v1119 = vpop.f32.mrb[0].mxu0
      %v1120 = vadd.f32 %v730, %v1119
      %v1121 = vpop.f32.mrb[0].mxu0
      %1122 = vmatprep.mubr.f32.mxu0 0.0
      %1123 = vmatmul.mubr.f32.gmra.mrb[0].mxu0 %v870
      %v1124 = vpop.f32.mrb[0].mxu0
      %v1125 = vadd.f32 %v735, %v1124
      %v1126 = vpop.f32.mrb[0].mxu0
      %1127 = vmatprep.mubr.f32.mxu0 0.0
      %1128 = vmatmul.mubr.f32.gmra.mrb[0].mxu0 %v872
      %v1129 = vpop.f32.mrb[0].mxu0
      %v1130 = vadd.f32 %v740, %v1129
      %v1131 = vpop.f32.mrb[0].mxu0
      %1132 = vmatprep.mubr.f32.mxu0 0.0
      %1133 = vmatmul.mubr.f32.gmra.mrb[0].mxu0 %v874
      %v1134 = vpop.f32.mrb[0].mxu0
      %v1135 = vadd.f32 %v745, %v1134
      %v1136 = vpop.f32.mrb[0].mxu0
      %1137 = vmatprep.mubr.f32.mxu0 0.0
      %1138 = vmatmul.mubr.f32.gmra.mrb[0].mxu0 %v876
      %v1139 = vpop.f32.mrb[0].mxu0
      %v1140 = vadd.f32 %v750, %v1139
      %v1141 = vpop.f32.mrb[0].mxu0
      %1142 = vmatprep.mubr.f32.mxu0 0.0
      %1143 = vmatmul.mubr.f32.gmra.mrb[0].mxu0 %v878
      %v1144 = vpop.f32.mrb[0].mxu0
      %v1145 = vadd.f32 %v755, %v1144
      %v1146 = vpop.f32.mrb[0].mxu0
      %1147 = vmatprep.mubr.f32.mxu0 0.0
      %1148 = vmatmul.mubr.f32.gmra.mrb[0].mxu0 %v880
      %v1149 = vpop.f32.mrb[0].mxu0
      %v1150 = vadd.f32 %v760, %v1149
      %v1151 = vpop.f32.mrb[0].mxu0
      %1152 = vmatprep.mubr.f32.mxu0 0.0
      %1153 = vmatmul.mubr.f32.gmra.mrb[0].mxu0 %v882
      %v1154 = vpop.f32.mrb[0].mxu0
      %v1155 = vadd.f32 %v765, %v1154
      %v1156 = vpop.f32.mrb[0].mxu0
      %1157 = vmatprep.mubr.f32.mxu0 0.0
      %1158 = vmatmul.mubr.f32.gmra.mrb[0].mxu0 %v884
      %v1159 = vpop.f32.mrb[0].mxu0
      %v1160 = vadd.f32 %v770, %v1159
      %v1161 = vpop.f32.mrb[0].mxu0
      %1162 = vmatprep.mubr.f32.mxu0 0.0
      %1163 = vmatmul.mubr.f32.gmra.mrb[0].mxu0 %v886
      %v1164 = vpop.f32.mrb[0].mxu0
      %v1165 = vadd.f32 %v775, %v1164
      %v1166 = vpop.f32.mrb[0].mxu0
      %1167 = vmatprep.mubr.f32.mxu0 0.0
      %1168 = vmatmul.mubr.f32.gmra.mrb[0].mxu0 %v888
      %v1169 = vpop.f32.mrb[0].mxu0
      %v1170 = vadd.f32 %v780, %v1169
      %v1171 = vpop.f32.mrb[0].mxu0
      %1172 = vmatprep.mubr.f32.mxu0 0.0
      %1173 = vmatmul.mubr.f32.gmra.mrb[0].mxu0 %v890
      %v1174 = vpop.f32.mrb[0].mxu0
      %v1175 = vadd.f32 %v785, %v1174
      %v1176 = vpop.f32.mrb[0].mxu0
      %1177 = vmatprep.mubr.f32.mxu0 0.0
      %1178 = vmatmul.mubr.f32.gmra.mrb[0].mxu0 %v892
      %v1179 = vpop.f32.mrb[0].mxu0
      %v1180 = vadd.f32 %v790, %v1179
      %v1181 = vpop.f32.mrb[0].mxu0
      %1182 = vmatprep.mubr.f32.mxu0 0.0
      %1183 = vmatmul.mubr.f32.gmra.mrb[0].mxu0 %v894
      %v1184 = vpop.f32.mrb[0].mxu0
      %v1185 = vadd.f32 %v795, %v1184
      %v1186 = vpop.f32.mrb[0].mxu0
      %1187 = vmatprep.mubr.f32.mxu0 0.0
      %1188 = vmatmul.mubr.f32.gmra.mrb[0].mxu0 %v896
      %v1189 = vpop.f32.mrb[0].mxu0
      %v1190 = vadd.f32 %v800, %v1189
      %v1191 = vpop.f32.mrb[0].mxu0
      %1192 = vmatprep.mubr.f32.mxu0 0.0
      %1193 = vmatmul.mubr.f32.gmra.mrb[0].mxu0 %v898
      %v1194 = vpop.f32.mrb[0].mxu0
      %v1195 = vadd.f32 %v805, %v1194
      %v1196 = vpop.f32.mrb[0].mxu0
      %1197 = vdwg.mxu0
      %s1198 = scalar_lea.vmem %s1, 8
      %v1199 = vld [vmem:[%s1198] sm:$0xf]
      %vm1200 = vcmask 1045504
      %v1201 = vrot.slane %v225, 2
      %v1202 = vrot.slane %v226, 2
      %v1203 = vsel %vm1200, %v1201, %v1202
      %v1204 = vrot.slane %v227, 2
      %v1205 = vsel %vm1200, %v1202, %v1204
      %v1206 = vrot.slane %v228, 2
      %v1207 = vsel %vm1200, %v1204, %v1206
      %v1208 = vrot.slane %v229, 2
      %v1209 = vsel %vm1200, %v1206, %v1208
      %v1210 = vrot.slane %v230, 2
      %v1211 = vsel %vm1200, %v1208, %v1210
      %v1212 = vrot.slane %v231, 2
      %v1213 = vsel %vm1200, %v1210, %v1212
      %v1214 = vrot.slane %v232, 2
      %v1215 = vsel %vm1200, %v1212, %v1214
      %v1216 = vrot.slane %v233, 2
      %v1217 = vsel %vm1200, %v1214, %v1216
      %v1218 = vrot.slane %v234, 2
      %v1219 = vsel %vm1200, %v1216, %v1218
      %v1220 = vrot.slane %v235, 2
      %v1221 = vsel %vm1200, %v1218, %v1220
      %v1222 = vrot.slane %v236, 2
      %v1223 = vsel %vm1200, %v1220, %v1222
      %v1224 = vrot.slane %v237, 2
      %v1225 = vsel %vm1200, %v1222, %v1224
      %v1226 = vrot.slane %v238, 2
      %v1227 = vsel %vm1200, %v1224, %v1226
      %v1228 = vrot.slane %v239, 2
      %v1229 = vsel %vm1200, %v1226, %v1228
      %v1230 = vrot.slane %v240, 2
      %v1231 = vsel %vm1200, %v1228, %v1230
      %v1232 = vrot.slane %v241, 2
      %v1233 = vsel %vm1200, %v1230, %v1232
      %v1234 = vrot.slane %v242, 2
      %v1235 = vsel %vm1200, %v1232, %v1234
      %v1236 = vrot.slane %v243, 2
      %v1237 = vsel %vm1200, %v1234, %v1236
      %v1238 = vrot.slane %v244, 2
      %v1239 = vsel %vm1200, %v1236, %v1238
      %v1240 = vrot.slane %v245, 2
      %v1241 = vsel %vm1200, %v1238, %v1240
      %v1242 = vrot.slane %v246, 2
      %v1243 = vsel %vm1200, %v1240, %v1242
      %v1244 = vrot.slane %v247, 2
      %v1245 = vsel %vm1200, %v1242, %v1244
      %v1246 = vrot.slane %v248, 2
      %v1247 = vsel %vm1200, %v1244, %v1246
      %v1248 = vrot.slane %v249, 2
      %v1249 = vsel %vm1200, %v1246, %v1248
      %v1250 = vrot.slane %v250, 2
      %v1251 = vsel %vm1200, %v1248, %v1250
      %v1252 = vrot.slane %v251, 2
      %v1253 = vsel %vm1200, %v1250, %v1252
      %v1254 = vrot.slane %v252, 2
      %v1255 = vsel %vm1200, %v1252, %v1254
      %v1256 = vrot.slane %v253, 2
      %v1257 = vsel %vm1200, %v1254, %v1256
      %v1258 = vrot.slane %v254, 2
      %v1259 = vsel %vm1200, %v1256, %v1258
      %v1260 = vrot.slane %v255, 2
      %v1261 = vsel %vm1200, %v1258, %v1260
      %v1262 = vrot.slane %v256, 2
      %v1263 = vsel %vm1200, %v1260, %v1262
      %v1264 = vrot.slane %v257, 2
      %v1265 = vsel %vm1200, %v1262, %v1264
      %v1266 = vrot.slane %v258, 2
      %v1267 = vsel %vm1200, %v1264, %v1266
      %v1268 = vrot.slane %v259, 2
      %v1269 = vsel %vm1200, %v1266, %v1268
      %v1270 = vrot.slane %v260, 2
      %v1271 = vsel %vm1200, %v1268, %v1270
      %v1272 = vrot.slane %v261, 2
      %v1273 = vsel %vm1200, %v1270, %v1272
      %v1274 = vrot.slane %v262, 2
      %v1275 = vsel %vm1200, %v1272, %v1274
      %v1276 = vrot.slane %v263, 2
      %v1277 = vsel %vm1200, %v1274, %v1276
      %v1278 = vrot.slane %v264, 2
      %v1279 = vsel %vm1200, %v1276, %v1278
      %v1280 = vrot.slane %v265, 2
      %v1281 = vsel %vm1200, %v1278, %v1280
      %v1282 = vrot.slane %v266, 2
      %v1283 = vsel %vm1200, %v1280, %v1282
      %v1284 = vrot.slane %v267, 2
      %v1285 = vsel %vm1200, %v1282, %v1284
      %v1286 = vrot.slane %v268, 2
      %v1287 = vsel %vm1200, %v1284, %v1286
      %v1288 = vrot.slane %v269, 2
      %v1289 = vsel %vm1200, %v1286, %v1288
      %v1290 = vrot.slane %v270, 2
      %v1291 = vsel %vm1200, %v1288, %v1290
      %v1292 = vsel %vm416, %v1203, 0
      %v1294 = vsel %vm416, %v1205, 0
      %v1296 = vsel %vm416, %v1207, 0
      %v1298 = vsel %vm416, %v1209, 0
      %v1300 = vsel %vm416, %v1211, 0
      %v1302 = vsel %vm416, %v1213, 0
      %v1304 = vsel %vm416, %v1215, 0
      %v1306 = vsel %vm416, %v1217, 0
      %v1308 = vsel %vm416, %v1219, 0
      %v1310 = vsel %vm416, %v1221, 0
      %v1312 = vsel %vm416, %v1223, 0
      %v1314 = vsel %vm416, %v1225, 0
      %v1316 = vsel %vm416, %v1227, 0
      %v1318 = vsel %vm416, %v1229, 0
      %v1320 = vsel %vm416, %v1231, 0
      %v1322 = vsel %vm416, %v1233, 0
      %v1324 = vsel %vm416, %v1235, 0
      %v1326 = vsel %vm416, %v1237, 0
      %v1328 = vsel %vm416, %v1239, 0
      %v1330 = vsel %vm416, %v1241, 0
      %v1332 = vsel %vm416, %v1243, 0
      %v1334 = vsel %vm416, %v1245, 0
      %v1336 = vsel %vm416, %v1247, 0
      %v1338 = vsel %vm416, %v1249, 0
      %v1340 = vsel %vm416, %v1251, 0
      %v1342 = vsel %vm416, %v1253, 0
      %v1344 = vsel %vm416, %v1255, 0
      %v1346 = vsel %vm416, %v1257, 0
      %v1348 = vsel %vm416, %v1259, 0
      %v1350 = vsel %vm416, %v1261, 0
      %v1352 = vsel %vm416, %v1263, 0
      %v1354 = vsel %vm416, %v1265, 0
      %v1356 = vsel %vm416, %v1267, 0
      %v1358 = vsel %vm416, %v1269, 0
      %v1360 = vsel %vm416, %v1271, 0
      %v1362 = vsel %vm416, %v1273, 0
      %v1364 = vsel %vm416, %v1275, 0
      %v1366 = vsel %vm416, %v1277, 0
      %v1368 = vsel %vm416, %v1279, 0
      %v1370 = vsel %vm416, %v1281, 0
      %v1372 = vsel %vm416, %v1283, 0
      %v1374 = vsel %vm416, %v1285, 0
      %v1376 = vsel %vm416, %v1287, 0
      %v1378 = vsel %vm416, %v1289, 0
      %v1380 = vsel %vm416, %v1291, 0
      %v1382 = vsel %vm416, %v1290, 0
      %v1385 = vsel %vm509, %v1199, 0
      %1387 = vmatprep.subr.mxu0 0.0
      %1388 = vmatpush1.msra.mxu0 %v1385
      %1389 = vmatprep.subr.mxu0 0.0
      %1390 = vmatpush1.msra.mxu0 0.0
      %1391 = vmatprep.subr.mxu0 0.0
      %1392 = vmatpush1.msra.mxu0 0.0
      %1393 = vmatprep.subr.mxu0 0.0
      %1394 = vmatpush1.msra.mxu0 0.0
      %1395 = vmatprep.subr.mxu0 0.0
      %1396 = vmatpush1.msra.mxu0 0.0
      %1397 = vmatprep.subr.mxu0 0.0
      %1398 = vmatpush1.msra.mxu0 0.0
      %1399 = vmatprep.subr.mxu0 0.0
      %1400 = vmatpush1.msra.mxu0 0.0
      %1401 = vmatprep.subr.mxu0 0.0
      %1402 = vmatpush1.msra.mxu0 0.0
      %1403 = vmatprep.subr.mxu0 0.0
      %1404 = vmatpush1.msra.mxu0 0.0
      %1405 = vmatprep.subr.mxu0 0.0
      %1406 = vmatpush1.msra.mxu0 0.0
      %1407 = vmatprep.subr.mxu0 0.0
      %1408 = vmatpush1.msra.mxu0 0.0
      %1409 = vmatprep.subr.mxu0 0.0
      %1410 = vmatpush1.msra.mxu0 0.0
      %1411 = vmatprep.subr.mxu0 0.0
      %1412 = vmatpush1.msra.mxu0 0.0
      %1413 = vmatprep.subr.mxu0 0.0
      %1414 = vmatpush1.msra.mxu0 0.0
      %1415 = vmatprep.subr.mxu0 0.0
      %1416 = vmatpush1.msra.mxu0 0.0
      %1417 = vmatprep.subr.mxu0 0.0
      %1418 = vmatpush1.msra.mxu0 0.0
      %1419 = vmatprep.subr.mxu0 0.0
      %1420 = vmatpush1.msra.mxu0 0.0
      %1421 = vmatprep.subr.mxu0 0.0
      %1422 = vmatpush1.msra.mxu0 0.0
      %1423 = vmatprep.subr.mxu0 0.0
      %1424 = vmatpush1.msra.mxu0 0.0
      %1425 = vmatprep.subr.mxu0 0.0
      %1426 = vmatpush1.msra.mxu0 0.0
      %1427 = vmatprep.subr.mxu0 0.0
      %1428 = vmatpush1.msra.mxu0 0.0
      %1429 = vmatprep.subr.mxu0 0.0
      %1430 = vmatpush1.msra.mxu0 0.0
      %1431 = vmatprep.subr.mxu0 0.0
      %1432 = vmatpush1.msra.mxu0 0.0
      %1433 = vmatprep.subr.mxu0 0.0
      %1434 = vmatpush1.msra.mxu0 0.0
      %1435 = vmatprep.subr.mxu0 0.0
      %1436 = vmatpush1.msra.mxu0 0.0
      %1437 = vmatprep.subr.mxu0 0.0
      %1438 = vmatpush1.msra.mxu0 0.0
      %1439 = vmatprep.subr.mxu0 0.0
      %1440 = vmatpush1.msra.mxu0 0.0
      %1441 = vmatprep.subr.mxu0 0.0
      %1442 = vmatpush1.msra.mxu0 0.0
      %1443 = vmatprep.subr.mxu0 0.0
      %1444 = vmatpush1.msra.mxu0 0.0
      %1445 = vmatprep.subr.mxu0 0.0
      %1446 = vmatpush1.msra.mxu0 0.0
      %1447 = vmatprep.subr.mxu0 0.0
      %1448 = vmatpush1.msra.mxu0 0.0
      %1449 = vmatprep.subr.mxu0 0.0
      %1450 = vmatpush1.msra.mxu0 0.0
      %1451 = vmatprep.mubr.f32.mxu0 0.0
      %1452 = vmatmul.mubr.f32.gmra.mrb[0].mxu0 %v1292
      %v1453 = vpop.f32.mrb[0].mxu0
      %v1454 = vadd.f32 0.0, %v1453
      %v1455 = vpop.f32.mrb[0].mxu0
      %1456 = vmatprep.mubr.f32.mxu0 0.0
      %1457 = vmatmul.mubr.f32.gmra.mrb[0].mxu0 %v1294
      %v1458 = vpop.f32.mrb[0].mxu0
      %v1459 = vadd.f32 0.0, %v1458
      %v1460 = vpop.f32.mrb[0].mxu0
      %1461 = vmatprep.mubr.f32.mxu0 0.0
      %1462 = vmatmul.mubr.f32.gmra.mrb[0].mxu0 %v1296
      %v1463 = vpop.f32.mrb[0].mxu0
      %v1464 = vadd.f32 0.0, %v1463
      %v1465 = vpop.f32.mrb[0].mxu0
      %1466 = vmatprep.mubr.f32.mxu0 0.0
      %1467 = vmatmul.mubr.f32.gmra.mrb[0].mxu0 %v1298
      %v1468 = vpop.f32.mrb[0].mxu0
      %v1469 = vadd.f32 0.0, %v1468
      %v1470 = vpop.f32.mrb[0].mxu0
      %1471 = vmatprep.mubr.f32.mxu0 0.0
      %1472 = vmatmul.mubr.f32.gmra.mrb[0].mxu0 %v1300
      %v1473 = vpop.f32.mrb[0].mxu0
      %v1474 = vadd.f32 0.0, %v1473
      %v1475 = vpop.f32.mrb[0].mxu0
      %1476 = vmatprep.mubr.f32.mxu0 0.0
      %1477 = vmatmul.mubr.f32.gmra.mrb[0].mxu0 %v1302
      %v1478 = vpop.f32.mrb[0].mxu0
      %v1479 = vadd.f32 0.0, %v1478
      %v1480 = vpop.f32.mrb[0].mxu0
      %1481 = vmatprep.mubr.f32.mxu0 0.0
      %1482 = vmatmul.mubr.f32.gmra.mrb[0].mxu0 %v1304
      %v1483 = vpop.f32.mrb[0].mxu0
      %v1484 = vadd.f32 0.0, %v1483
      %v1485 = vpop.f32.mrb[0].mxu0
      %1486 = vmatprep.mubr.f32.mxu0 0.0
      %1487 = vmatmul.mubr.f32.gmra.mrb[0].mxu0 %v1306
      %v1488 = vpop.f32.mrb[0].mxu0
      %v1489 = vadd.f32 0.0, %v1488
      %v1490 = vpop.f32.mrb[0].mxu0
      %1491 = vmatprep.mubr.f32.mxu0 0.0
      %1492 = vmatmul.mubr.f32.gmra.mrb[0].mxu0 %v1308
      %v1493 = vpop.f32.mrb[0].mxu0
      %v1494 = vadd.f32 0.0, %v1493
      %v1495 = vpop.f32.mrb[0].mxu0
      %1496 = vmatprep.mubr.f32.mxu0 0.0
      %1497 = vmatmul.mubr.f32.gmra.mrb[0].mxu0 %v1310
      %v1498 = vpop.f32.mrb[0].mxu0
      %v1499 = vadd.f32 0.0, %v1498
      %v1500 = vpop.f32.mrb[0].mxu0
      %1501 = vmatprep.mubr.f32.mxu0 0.0
      %1502 = vmatmul.mubr.f32.gmra.mrb[0].mxu0 %v1312
      %v1503 = vpop.f32.mrb[0].mxu0
      %v1504 = vadd.f32 0.0, %v1503
      %v1505 = vpop.f32.mrb[0].mxu0
      %1506 = vmatprep.mubr.f32.mxu0 0.0
      %1507 = vmatmul.mubr.f32.gmra.mrb[0].mxu0 %v1314
      %v1508 = vpop.f32.mrb[0].mxu0
      %v1509 = vadd.f32 0.0, %v1508
      %v1510 = vpop.f32.mrb[0].mxu0
      %1511 = vmatprep.mubr.f32.mxu0 0.0
      %1512 = vmatmul.mubr.f32.gmra.mrb[0].mxu0 %v1316
      %v1513 = vpop.f32.mrb[0].mxu0
      %v1514 = vadd.f32 0.0, %v1513
      %v1515 = vpop.f32.mrb[0].mxu0
      %1516 = vmatprep.mubr.f32.mxu0 0.0
      %1517 = vmatmul.mubr.f32.gmra.mrb[0].mxu0 %v1318
      %v1518 = vpop.f32.mrb[0].mxu0
      %v1519 = vadd.f32 0.0, %v1518
      %v1520 = vpop.f32.mrb[0].mxu0
      %1521 = vmatprep.mubr.f32.mxu0 0.0
      %1522 = vmatmul.mubr.f32.gmra.mrb[0].mxu0 %v1320
      %v1523 = vpop.f32.mrb[0].mxu0
      %v1524 = vadd.f32 0.0, %v1523
      %v1525 = vpop.f32.mrb[0].mxu0
      %1526 = vmatprep.mubr.f32.mxu0 0.0
      %1527 = vmatmul.mubr.f32.gmra.mrb[0].mxu0 %v1322
      %v1528 = vpop.f32.mrb[0].mxu0
      %v1529 = vadd.f32 0.0, %v1528
      %v1530 = vpop.f32.mrb[0].mxu0
      %1531 = vmatprep.mubr.f32.mxu0 0.0
      %1532 = vmatmul.mubr.f32.gmra.mrb[0].mxu0 %v1324
      %v1533 = vpop.f32.mrb[0].mxu0
      %v1534 = vadd.f32 0.0, %v1533
      %v1535 = vpop.f32.mrb[0].mxu0
      %1536 = vmatprep.mubr.f32.mxu0 0.0
      %1537 = vmatmul.mubr.f32.gmra.mrb[0].mxu0 %v1326
      %v1538 = vpop.f32.mrb[0].mxu0
      %v1539 = vadd.f32 0.0, %v1538
      %v1540 = vpop.f32.mrb[0].mxu0
      %1541 = vmatprep.mubr.f32.mxu0 0.0
      %1542 = vmatmul.mubr.f32.gmra.mrb[0].mxu0 %v1328
      %v1543 = vpop.f32.mrb[0].mxu0
      %v1544 = vadd.f32 0.0, %v1543
      %v1545 = vpop.f32.mrb[0].mxu0
      %1546 = vmatprep.mubr.f32.mxu0 0.0
      %1547 = vmatmul.mubr.f32.gmra.mrb[0].mxu0 %v1330
      %v1548 = vpop.f32.mrb[0].mxu0
      %v1549 = vadd.f32 0.0, %v1548
      %v1550 = vpop.f32.mrb[0].mxu0
      %1551 = vmatprep.mubr.f32.mxu0 0.0
      %1552 = vmatmul.mubr.f32.gmra.mrb[0].mxu0 %v1332
      %v1553 = vpop.f32.mrb[0].mxu0
      %v1554 = vadd.f32 0.0, %v1553
      %v1555 = vpop.f32.mrb[0].mxu0
      %1556 = vmatprep.mubr.f32.mxu0 0.0
      %1557 = vmatmul.mubr.f32.gmra.mrb[0].mxu0 %v1334
      %v1558 = vpop.f32.mrb[0].mxu0
      %v1559 = vadd.f32 0.0, %v1558
      %v1560 = vpop.f32.mrb[0].mxu0
      %1561 = vmatprep.mubr.f32.mxu0 0.0
      %1562 = vmatmul.mubr.f32.gmra.mrb[0].mxu0 %v1336
      %v1563 = vpop.f32.mrb[0].mxu0
      %v1564 = vadd.f32 0.0, %v1563
      %v1565 = vpop.f32.mrb[0].mxu0
      %1566 = vmatprep.mubr.f32.mxu0 0.0
      %1567 = vmatmul.mubr.f32.gmra.mrb[0].mxu0 %v1338
      %v1568 = vpop.f32.mrb[0].mxu0
      %v1569 = vadd.f32 0.0, %v1568
      %v1570 = vpop.f32.mrb[0].mxu0
      %1571 = vmatprep.mubr.f32.mxu0 0.0
      %1572 = vmatmul.mubr.f32.gmra.mrb[0].mxu0 %v1340
      %v1573 = vpop.f32.mrb[0].mxu0
      %v1574 = vadd.f32 0.0, %v1573
      %v1575 = vpop.f32.mrb[0].mxu0
      %1576 = vmatprep.mubr.f32.mxu0 0.0
      %1577 = vmatmul.mubr.f32.gmra.mrb[0].mxu0 %v1342
      %v1578 = vpop.f32.mrb[0].mxu0
      %v1579 = vadd.f32 0.0, %v1578
      %v1580 = vpop.f32.mrb[0].mxu0
      %1581 = vmatprep.mubr.f32.mxu0 0.0
      %1582 = vmatmul.mubr.f32.gmra.mrb[0].mxu0 %v1344
      %v1583 = vpop.f32.mrb[0].mxu0
      %v1584 = vadd.f32 0.0, %v1583
      %v1585 = vpop.f32.mrb[0].mxu0
      %1586 = vmatprep.mubr.f32.mxu0 0.0
      %1587 = vmatmul.mubr.f32.gmra.mrb[0].mxu0 %v1346
      %v1588 = vpop.f32.mrb[0].mxu0
      %v1589 = vadd.f32 0.0, %v1588
      %v1590 = vpop.f32.mrb[0].mxu0
      %1591 = vmatprep.mubr.f32.mxu0 0.0
      %1592 = vmatmul.mubr.f32.gmra.mrb[0].mxu0 %v1348
      %v1593 = vpop.f32.mrb[0].mxu0
      %v1594 = vadd.f32 0.0, %v1593
      %v1595 = vpop.f32.mrb[0].mxu0
      %1596 = vmatprep.mubr.f32.mxu0 0.0
      %1597 = vmatmul.mubr.f32.gmra.mrb[0].mxu0 %v1350
      %v1598 = vpop.f32.mrb[0].mxu0
      %v1599 = vadd.f32 0.0, %v1598
      %v1600 = vpop.f32.mrb[0].mxu0
      %1601 = vmatprep.mubr.f32.mxu0 0.0
      %1602 = vmatmul.mubr.f32.gmra.mrb[0].mxu0 %v1352
      %v1603 = vpop.f32.mrb[0].mxu0
      %v1604 = vadd.f32 0.0, %v1603
      %v1605 = vpop.f32.mrb[0].mxu0
      %1606 = vmatprep.mubr.f32.mxu0 0.0
      %1607 = vmatmul.mubr.f32.gmra.mrb[0].mxu0 %v1354
      %v1608 = vpop.f32.mrb[0].mxu0
      %v1609 = vadd.f32 0.0, %v1608
      %v1610 = vpop.f32.mrb[0].mxu0
      %1611 = vmatprep.mubr.f32.mxu0 0.0
      %1612 = vmatmul.mubr.f32.gmra.mrb[0].mxu0 %v1356
      %v1613 = vpop.f32.mrb[0].mxu0
      %v1614 = vadd.f32 0.0, %v1613
      %v1615 = vpop.f32.mrb[0].mxu0
      %1616 = vmatprep.mubr.f32.mxu0 0.0
      %1617 = vmatmul.mubr.f32.gmra.mrb[0].mxu0 %v1358
      %v1618 = vpop.f32.mrb[0].mxu0
      %v1619 = vadd.f32 0.0, %v1618
      %v1620 = vpop.f32.mrb[0].mxu0
      %1621 = vmatprep.mubr.f32.mxu0 0.0
      %1622 = vmatmul.mubr.f32.gmra.mrb[0].mxu0 %v1360
      %v1623 = vpop.f32.mrb[0].mxu0
      %v1624 = vadd.f32 0.0, %v1623
      %v1625 = vpop.f32.mrb[0].mxu0
      %1626 = vmatprep.mubr.f32.mxu0 0.0
      %1627 = vmatmul.mubr.f32.gmra.mrb[0].mxu0 %v1362
      %v1628 = vpop.f32.mrb[0].mxu0
      %v1629 = vadd.f32 0.0, %v1628
      %v1630 = vpop.f32.mrb[0].mxu0
      %1631 = vmatprep.mubr.f32.mxu0 0.0
      %1632 = vmatmul.mubr.f32.gmra.mrb[0].mxu0 %v1364
      %v1633 = vpop.f32.mrb[0].mxu0
      %v1634 = vadd.f32 0.0, %v1633
      %v1635 = vpop.f32.mrb[0].mxu0
      %1636 = vmatprep.mubr.f32.mxu0 0.0
      %1637 = vmatmul.mubr.f32.gmra.mrb[0].mxu0 %v1366
      %v1638 = vpop.f32.mrb[0].mxu0
      %v1639 = vadd.f32 0.0, %v1638
      %v1640 = vpop.f32.mrb[0].mxu0
      %1641 = vmatprep.mubr.f32.mxu0 0.0
      %1642 = vmatmul.mubr.f32.gmra.mrb[0].mxu0 %v1368
      %v1643 = vpop.f32.mrb[0].mxu0
      %v1644 = vadd.f32 0.0, %v1643
      %v1645 = vpop.f32.mrb[0].mxu0
      %1646 = vmatprep.mubr.f32.mxu0 0.0
      %1647 = vmatmul.mubr.f32.gmra.mrb[0].mxu0 %v1370
      %v1648 = vpop.f32.mrb[0].mxu0
      %v1649 = vadd.f32 0.0, %v1648
      %v1650 = vpop.f32.mrb[0].mxu0
      %1651 = vmatprep.mubr.f32.mxu0 0.0
      %1652 = vmatmul.mubr.f32.gmra.mrb[0].mxu0 %v1372
      %v1653 = vpop.f32.mrb[0].mxu0
      %v1654 = vadd.f32 0.0, %v1653
      %v1655 = vpop.f32.mrb[0].mxu0
      %1656 = vmatprep.mubr.f32.mxu0 0.0
      %1657 = vmatmul.mubr.f32.gmra.mrb[0].mxu0 %v1374
      %v1658 = vpop.f32.mrb[0].mxu0
      %v1659 = vadd.f32 0.0, %v1658
      %v1660 = vpop.f32.mrb[0].mxu0
      %1661 = vmatprep.mubr.f32.mxu0 0.0
      %1662 = vmatmul.mubr.f32.gmra.mrb[0].mxu0 %v1376
      %v1663 = vpop.f32.mrb[0].mxu0
      %v1664 = vadd.f32 0.0, %v1663
      %v1665 = vpop.f32.mrb[0].mxu0
      %1666 = vmatprep.mubr.f32.mxu0 0.0
      %1667 = vmatmul.mubr.f32.gmra.mrb[0].mxu0 %v1378
      %v1668 = vpop.f32.mrb[0].mxu0
      %v1669 = vadd.f32 0.0, %v1668
      %v1670 = vpop.f32.mrb[0].mxu0
      %1671 = vmatprep.mubr.f32.mxu0 0.0
      %1672 = vmatmul.mubr.f32.gmra.mrb[0].mxu0 %v1380
      %v1673 = vpop.f32.mrb[0].mxu0
      %v1674 = vadd.f32 0.0, %v1673
      %v1675 = vpop.f32.mrb[0].mxu0
      %1676 = vmatprep.mubr.f32.mxu0 0.0
      %1677 = vmatmul.mubr.f32.gmra.mrb[0].mxu0 %v1382
      %v1678 = vpop.f32.mrb[0].mxu0
      %v1679 = vadd.f32 0.0, %v1678
      %v1680 = vpop.f32.mrb[0].mxu0
      %1681 = vdwg.mxu0
      %v1682 = vadd.f32 %v970, %v1454
      %v1683 = vadd.f32 %v975, %v1459
      %v1684 = vadd.f32 %v980, %v1464
      %v1685 = vadd.f32 %v985, %v1469
      %v1686 = vadd.f32 %v990, %v1474
      %v1687 = vadd.f32 %v995, %v1479
      %v1688 = vadd.f32 %v1000, %v1484
      %v1689 = vadd.f32 %v1005, %v1489
      %v1690 = vadd.f32 %v1010, %v1494
      %v1691 = vadd.f32 %v1015, %v1499
      %v1692 = vadd.f32 %v1020, %v1504
      %v1693 = vadd.f32 %v1025, %v1509
      %v1694 = vadd.f32 %v1030, %v1514
      %v1695 = vadd.f32 %v1035, %v1519
      %v1696 = vadd.f32 %v1040, %v1524
      %v1697 = vadd.f32 %v1045, %v1529
      %v1698 = vadd.f32 %v1050, %v1534
      %v1699 = vadd.f32 %v1055, %v1539
      %v1700 = vadd.f32 %v1060, %v1544
      %v1701 = vadd.f32 %v1065, %v1549
      %v1702 = vadd.f32 %v1070, %v1554
      %v1703 = vadd.f32 %v1075, %v1559
      %v1704 = vadd.f32 %v1080, %v1564
      %v1705 = vadd.f32 %v1085, %v1569
      %v1706 = vadd.f32 %v1090, %v1574
      %v1707 = vadd.f32 %v1095, %v1579
      %v1708 = vadd.f32 %v1100, %v1584
      %v1709 = vadd.f32 %v1105, %v1589
      %v1710 = vadd.f32 %v1110, %v1594
      %v1711 = vadd.f32 %v1115, %v1599
      %v1712 = vadd.f32 %v1120, %v1604
      %v1713 = vadd.f32 %v1125, %v1609
      %v1714 = vadd.f32 %v1130, %v1614
      %v1715 = vadd.f32 %v1135, %v1619
      %v1716 = vadd.f32 %v1140, %v1624
      %v1717 = vadd.f32 %v1145, %v1629
      %v1718 = vadd.f32 %v1150, %v1634
      %v1719 = vadd.f32 %v1155, %v1639
      %v1720 = vadd.f32 %v1160, %v1644
      %v1721 = vadd.f32 %v1165, %v1649
      %v1722 = vadd.f32 %v1170, %v1654
      %v1723 = vadd.f32 %v1175, %v1659
      %v1724 = vadd.f32 %v1180, %v1664
      %v1725 = vadd.f32 %v1185, %v1669
      %v1726 = vadd.f32 %v1190, %v1674
      %v1727 = vadd.f32 %v1195, %v1679
      %s1728 = scalar_lea.vmem %s1, 12
      %v1729 = vld [vmem:[%s1728] sm:$0xf]
      %v1732 = vrot.slane %v271, 2
      %v1733 = vsel %vm1200, %v1290, %v1732
      %v1734 = vrot.slane %v272, 2
      %v1735 = vsel %vm1200, %v1732, %v1734
      %v1736 = vsel %vm416, %v1733, 0
      %v1738 = vsel %vm416, %v1735, 0
      %v1740 = vsel %vm416, %v1734, 0
      %v1743 = vsel %vm509, %v1729, 0
      %1745 = vmatprep.subr.mxu0 0.0
      %1746 = vmatpush1.msra.mxu0 %v1743
      %1747 = vmatprep.subr.mxu0 0.0
      %1748 = vmatpush1.msra.mxu0 0.0
      %1749 = vmatprep.subr.mxu0 0.0
      %1750 = vmatpush1.msra.mxu0 0.0
      %1751 = vmatprep.subr.mxu0 0.0
      %1752 = vmatpush1.msra.mxu0 0.0
      %1753 = vmatprep.subr.mxu0 0.0
      %1754 = vmatpush1.msra.mxu0 0.0
      %1755 = vmatprep.subr.mxu0 0.0
      %1756 = vmatpush1.msra.mxu0 0.0
      %1757 = vmatprep.subr.mxu0 0.0
      %1758 = vmatpush1.msra.mxu0 0.0
      %1759 = vmatprep.subr.mxu0 0.0
      %1760 = vmatpush1.msra.mxu0 0.0
      %1761 = vmatprep.subr.mxu0 0.0
      %1762 = vmatpush1.msra.mxu0 0.0
      %1763 = vmatprep.subr.mxu0 0.0
      %1764 = vmatpush1.msra.mxu0 0.0
      %1765 = vmatprep.subr.mxu0 0.0
      %1766 = vmatpush1.msra.mxu0 0.0
      %1767 = vmatprep.subr.mxu0 0.0
      %1768 = vmatpush1.msra.mxu0 0.0
      %1769 = vmatprep.subr.mxu0 0.0
      %1770 = vmatpush1.msra.mxu0 0.0
      %1771 = vmatprep.subr.mxu0 0.0
      %1772 = vmatpush1.msra.mxu0 0.0
      %1773 = vmatprep.subr.mxu0 0.0
      %1774 = vmatpush1.msra.mxu0 0.0
      %1775 = vmatprep.subr.mxu0 0.0
      %1776 = vmatpush1.msra.mxu0 0.0
      %1777 = vmatprep.subr.mxu0 0.0
      %1778 = vmatpush1.msra.mxu0 0.0
      %1779 = vmatprep.subr.mxu0 0.0
      %1780 = vmatpush1.msra.mxu0 0.0
      %1781 = vmatprep.subr.mxu0 0.0
      %1782 = vmatpush1.msra.mxu0 0.0
      %1783 = vmatprep.subr.mxu0 0.0
      %1784 = vmatpush1.msra.mxu0 0.0
      %1785 = vmatprep.subr.mxu0 0.0
      %1786 = vmatpush1.msra.mxu0 0.0
      %1787 = vmatprep.subr.mxu0 0.0
      %1788 = vmatpush1.msra.mxu0 0.0
      %1789 = vmatprep.subr.mxu0 0.0
      %1790 = vmatpush1.msra.mxu0 0.0
      %1791 = vmatprep.subr.mxu0 0.0
      %1792 = vmatpush1.msra.mxu0 0.0
      %1793 = vmatprep.subr.mxu0 0.0
      %1794 = vmatpush1.msra.mxu0 0.0
      %1795 = vmatprep.subr.mxu0 0.0
      %1796 = vmatpush1.msra.mxu0 0.0
      %1797 = vmatprep.subr.mxu0 0.0
      %1798 = vmatpush1.msra.mxu0 0.0
      %1799 = vmatprep.subr.mxu0 0.0
      %1800 = vmatpush1.msra.mxu0 0.0
      %1801 = vmatprep.subr.mxu0 0.0
      %1802 = vmatpush1.msra.mxu0 0.0
      %1803 = vmatprep.subr.mxu0 0.0
      %1804 = vmatpush1.msra.mxu0 0.0
      %1805 = vmatprep.subr.mxu0 0.0
      %1806 = vmatpush1.msra.mxu0 0.0
      %1807 = vmatprep.subr.mxu0 0.0
      %1808 = vmatpush1.msra.mxu0 0.0
      %1809 = vmatprep.mubr.f32.mxu0 0.0
      %1810 = vmatmul.mubr.f32.gmra.mrb[0].mxu0 %v1296
      %v1811 = vpop.f32.mrb[0].mxu0
      %v1812 = vadd.f32 0.0, %v1811
      %v1813 = vpop.f32.mrb[0].mxu0
      %1814 = vmatprep.mubr.f32.mxu0 0.0
      %1815 = vmatmul.mubr.f32.gmra.mrb[0].mxu0 %v1298
      %v1816 = vpop.f32.mrb[0].mxu0
      %v1817 = vadd.f32 0.0, %v1816
      %v1818 = vpop.f32.mrb[0].mxu0
      %1819 = vmatprep.mubr.f32.mxu0 0.0
      %1820 = vmatmul.mubr.f32.gmra.mrb[0].mxu0 %v1300
      %v1821 = vpop.f32.mrb[0].mxu0
      %v1822 = vadd.f32 0.0, %v1821
      %v1823 = vpop.f32.mrb[0].mxu0
      %1824 = vmatprep.mubr.f32.mxu0 0.0
      %1825 = vmatmul.mubr.f32.gmra.mrb[0].mxu0 %v1302
      %v1826 = vpop.f32.mrb[0].mxu0
      %v1827 = vadd.f32 0.0, %v1826
      %v1828 = vpop.f32.mrb[0].mxu0
      %1829 = vmatprep.mubr.f32.mxu0 0.0
      %1830 = vmatmul.mubr.f32.gmra.mrb[0].mxu0 %v1304
      %v1831 = vpop.f32.mrb[0].mxu0
      %v1832 = vadd.f32 0.0, %v1831
      %v1833 = vpop.f32.mrb[0].mxu0
      %1834 = vmatprep.mubr.f32.mxu0 0.0
      %1835 = vmatmul.mubr.f32.gmra.mrb[0].mxu0 %v1306
      %v1836 = vpop.f32.mrb[0].mxu0
      %v1837 = vadd.f32 0.0, %v1836
      %v1838 = vpop.f32.mrb[0].mxu0
      %1839 = vmatprep.mubr.f32.mxu0 0.0
      %1840 = vmatmul.mubr.f32.gmra.mrb[0].mxu0 %v1308
      %v1841 = vpop.f32.mrb[0].mxu0
      %v1842 = vadd.f32 0.0, %v1841
      %v1843 = vpop.f32.mrb[0].mxu0
      %1844 = vmatprep.mubr.f32.mxu0 0.0
      %1845 = vmatmul.mubr.f32.gmra.mrb[0].mxu0 %v1310
      %v1846 = vpop.f32.mrb[0].mxu0
      %v1847 = vadd.f32 0.0, %v1846
      %v1848 = vpop.f32.mrb[0].mxu0
      %1849 = vmatprep.mubr.f32.mxu0 0.0
      %1850 = vmatmul.mubr.f32.gmra.mrb[0].mxu0 %v1312
      %v1851 = vpop.f32.mrb[0].mxu0
      %v1852 = vadd.f32 0.0, %v1851
      %v1853 = vpop.f32.mrb[0].mxu0
      %1854 = vmatprep.mubr.f32.mxu0 0.0
      %1855 = vmatmul.mubr.f32.gmra.mrb[0].mxu0 %v1314
      %v1856 = vpop.f32.mrb[0].mxu0
      %v1857 = vadd.f32 0.0, %v1856
      %v1858 = vpop.f32.mrb[0].mxu0
      %1859 = vmatprep.mubr.f32.mxu0 0.0
      %1860 = vmatmul.mubr.f32.gmra.mrb[0].mxu0 %v1316
      %v1861 = vpop.f32.mrb[0].mxu0
      %v1862 = vadd.f32 0.0, %v1861
      %v1863 = vpop.f32.mrb[0].mxu0
      %1864 = vmatprep.mubr.f32.mxu0 0.0
      %1865 = vmatmul.mubr.f32.gmra.mrb[0].mxu0 %v1318
      %v1866 = vpop.f32.mrb[0].mxu0
      %v1867 = vadd.f32 0.0, %v1866
      %v1868 = vpop.f32.mrb[0].mxu0
      %1869 = vmatprep.mubr.f32.mxu0 0.0
      %1870 = vmatmul.mubr.f32.gmra.mrb[0].mxu0 %v1320
      %v1871 = vpop.f32.mrb[0].mxu0
      %v1872 = vadd.f32 0.0, %v1871
      %v1873 = vpop.f32.mrb[0].mxu0
      %1874 = vmatprep.mubr.f32.mxu0 0.0
      %1875 = vmatmul.mubr.f32.gmra.mrb[0].mxu0 %v1322
      %v1876 = vpop.f32.mrb[0].mxu0
      %v1877 = vadd.f32 0.0, %v1876
      %v1878 = vpop.f32.mrb[0].mxu0
      %1879 = vmatprep.mubr.f32.mxu0 0.0
      %1880 = vmatmul.mubr.f32.gmra.mrb[0].mxu0 %v1324
      %v1881 = vpop.f32.mrb[0].mxu0
      %v1882 = vadd.f32 0.0, %v1881
      %v1883 = vpop.f32.mrb[0].mxu0
      %1884 = vmatprep.mubr.f32.mxu0 0.0
      %1885 = vmatmul.mubr.f32.gmra.mrb[0].mxu0 %v1326
      %v1886 = vpop.f32.mrb[0].mxu0
      %v1887 = vadd.f32 0.0, %v1886
      %v1888 = vpop.f32.mrb[0].mxu0
      %1889 = vmatprep.mubr.f32.mxu0 0.0
      %1890 = vmatmul.mubr.f32.gmra.mrb[0].mxu0 %v1328
      %v1891 = vpop.f32.mrb[0].mxu0
      %v1892 = vadd.f32 0.0, %v1891
      %v1893 = vpop.f32.mrb[0].mxu0
      %1894 = vmatprep.mubr.f32.mxu0 0.0
      %1895 = vmatmul.mubr.f32.gmra.mrb[0].mxu0 %v1330
      %v1896 = vpop.f32.mrb[0].mxu0
      %v1897 = vadd.f32 0.0, %v1896
      %v1898 = vpop.f32.mrb[0].mxu0
      %1899 = vmatprep.mubr.f32.mxu0 0.0
      %1900 = vmatmul.mubr.f32.gmra.mrb[0].mxu0 %v1332
      %v1901 = vpop.f32.mrb[0].mxu0
      %v1902 = vadd.f32 0.0, %v1901
      %v1903 = vpop.f32.mrb[0].mxu0
      %1904 = vmatprep.mubr.f32.mxu0 0.0
      %1905 = vmatmul.mubr.f32.gmra.mrb[0].mxu0 %v1334
      %v1906 = vpop.f32.mrb[0].mxu0
      %v1907 = vadd.f32 0.0, %v1906
      %v1908 = vpop.f32.mrb[0].mxu0
      %1909 = vmatprep.mubr.f32.mxu0 0.0
      %1910 = vmatmul.mubr.f32.gmra.mrb[0].mxu0 %v1336
      %v1911 = vpop.f32.mrb[0].mxu0
      %v1912 = vadd.f32 0.0, %v1911
      %v1913 = vpop.f32.mrb[0].mxu0
      %1914 = vmatprep.mubr.f32.mxu0 0.0
      %1915 = vmatmul.mubr.f32.gmra.mrb[0].mxu0 %v1338
      %v1916 = vpop.f32.mrb[0].mxu0
      %v1917 = vadd.f32 0.0, %v1916
      %v1918 = vpop.f32.mrb[0].mxu0
      %1919 = vmatprep.mubr.f32.mxu0 0.0
      %1920 = vmatmul.mubr.f32.gmra.mrb[0].mxu0 %v1340
      %v1921 = vpop.f32.mrb[0].mxu0
      %v1922 = vadd.f32 0.0, %v1921
      %v1923 = vpop.f32.mrb[0].mxu0
      %1924 = vmatprep.mubr.f32.mxu0 0.0
      %1925 = vmatmul.mubr.f32.gmra.mrb[0].mxu0 %v1342
      %v1926 = vpop.f32.mrb[0].mxu0
      %v1927 = vadd.f32 0.0, %v1926
      %v1928 = vpop.f32.mrb[0].mxu0
      %1929 = vmatprep.mubr.f32.mxu0 0.0
      %1930 = vmatmul.mubr.f32.gmra.mrb[0].mxu0 %v1344
      %v1931 = vpop.f32.mrb[0].mxu0
      %v1932 = vadd.f32 0.0, %v1931
      %v1933 = vpop.f32.mrb[0].mxu0
      %1934 = vmatprep.mubr.f32.mxu0 0.0
      %1935 = vmatmul.mubr.f32.gmra.mrb[0].mxu0 %v1346
      %v1936 = vpop.f32.mrb[0].mxu0
      %v1937 = vadd.f32 0.0, %v1936
      %v1938 = vpop.f32.mrb[0].mxu0
      %1939 = vmatprep.mubr.f32.mxu0 0.0
      %1940 = vmatmul.mubr.f32.gmra.mrb[0].mxu0 %v1348
      %v1941 = vpop.f32.mrb[0].mxu0
      %v1942 = vadd.f32 0.0, %v1941
      %v1943 = vpop.f32.mrb[0].mxu0
      %1944 = vmatprep.mubr.f32.mxu0 0.0
      %1945 = vmatmul.mubr.f32.gmra.mrb[0].mxu0 %v1350
      %v1946 = vpop.f32.mrb[0].mxu0
      %v1947 = vadd.f32 0.0, %v1946
      %v1948 = vpop.f32.mrb[0].mxu0
      %1949 = vmatprep.mubr.f32.mxu0 0.0
      %1950 = vmatmul.mubr.f32.gmra.mrb[0].mxu0 %v1352
      %v1951 = vpop.f32.mrb[0].mxu0
      %v1952 = vadd.f32 0.0, %v1951
      %v1953 = vpop.f32.mrb[0].mxu0
      %1954 = vmatprep.mubr.f32.mxu0 0.0
      %1955 = vmatmul.mubr.f32.gmra.mrb[0].mxu0 %v1354
      %v1956 = vpop.f32.mrb[0].mxu0
      %v1957 = vadd.f32 0.0, %v1956
      %v1958 = vpop.f32.mrb[0].mxu0
      %1959 = vmatprep.mubr.f32.mxu0 0.0
      %1960 = vmatmul.mubr.f32.gmra.mrb[0].mxu0 %v1356
      %v1961 = vpop.f32.mrb[0].mxu0
      %v1962 = vadd.f32 0.0, %v1961
      %v1963 = vpop.f32.mrb[0].mxu0
      %1964 = vmatprep.mubr.f32.mxu0 0.0
      %1965 = vmatmul.mubr.f32.gmra.mrb[0].mxu0 %v1358
      %v1966 = vpop.f32.mrb[0].mxu0
      %v1967 = vadd.f32 0.0, %v1966
      %v1968 = vpop.f32.mrb[0].mxu0
      %1969 = vmatprep.mubr.f32.mxu0 0.0
      %1970 = vmatmul.mubr.f32.gmra.mrb[0].mxu0 %v1360
      %v1971 = vpop.f32.mrb[0].mxu0
      %v1972 = vadd.f32 0.0, %v1971
      %v1973 = vpop.f32.mrb[0].mxu0
      %1974 = vmatprep.mubr.f32.mxu0 0.0
      %1975 = vmatmul.mubr.f32.gmra.mrb[0].mxu0 %v1362
      %v1976 = vpop.f32.mrb[0].mxu0
      %v1977 = vadd.f32 0.0, %v1976
      %v1978 = vpop.f32.mrb[0].mxu0
      %1979 = vmatprep.mubr.f32.mxu0 0.0
      %1980 = vmatmul.mubr.f32.gmra.mrb[0].mxu0 %v1364
      %v1981 = vpop.f32.mrb[0].mxu0
      %v1982 = vadd.f32 0.0, %v1981
      %v1983 = vpop.f32.mrb[0].mxu0
      %1984 = vmatprep.mubr.f32.mxu0 0.0
      %1985 = vmatmul.mubr.f32.gmra.mrb[0].mxu0 %v1366
      %v1986 = vpop.f32.mrb[0].mxu0
      %v1987 = vadd.f32 0.0, %v1986
      %v1988 = vpop.f32.mrb[0].mxu0
      %1989 = vmatprep.mubr.f32.mxu0 0.0
      %1990 = vmatmul.mubr.f32.gmra.mrb[0].mxu0 %v1368
      %v1991 = vpop.f32.mrb[0].mxu0
      %v1992 = vadd.f32 0.0, %v1991
      %v1993 = vpop.f32.mrb[0].mxu0
      %1994 = vmatprep.mubr.f32.mxu0 0.0
      %1995 = vmatmul.mubr.f32.gmra.mrb[0].mxu0 %v1370
      %v1996 = vpop.f32.mrb[0].mxu0
      %v1997 = vadd.f32 0.0, %v1996
      %v1998 = vpop.f32.mrb[0].mxu0
      %1999 = vmatprep.mubr.f32.mxu0 0.0
      %2000 = vmatmul.mubr.f32.gmra.mrb[0].mxu0 %v1372
      %v2001 = vpop.f32.mrb[0].mxu0
      %v2002 = vadd.f32 0.0, %v2001
      %v2003 = vpop.f32.mrb[0].mxu0
      %2004 = vmatprep.mubr.f32.mxu0 0.0
      %2005 = vmatmul.mubr.f32.gmra.mrb[0].mxu0 %v1374
      %v2006 = vpop.f32.mrb[0].mxu0
      %v2007 = vadd.f32 0.0, %v2006
      %v2008 = vpop.f32.mrb[0].mxu0
      %2009 = vmatprep.mubr.f32.mxu0 0.0
      %2010 = vmatmul.mubr.f32.gmra.mrb[0].mxu0 %v1376
      %v2011 = vpop.f32.mrb[0].mxu0
      %v2012 = vadd.f32 0.0, %v2011
      %v2013 = vpop.f32.mrb[0].mxu0
      %2014 = vmatprep.mubr.f32.mxu0 0.0
      %2015 = vmatmul.mubr.f32.gmra.mrb[0].mxu0 %v1378
      %v2016 = vpop.f32.mrb[0].mxu0
      %v2017 = vadd.f32 0.0, %v2016
      %v2018 = vpop.f32.mrb[0].mxu0
      %2019 = vmatprep.mubr.f32.mxu0 0.0
      %2020 = vmatmul.mubr.f32.gmra.mrb[0].mxu0 %v1380
      %v2021 = vpop.f32.mrb[0].mxu0
      %v2022 = vadd.f32 0.0, %v2021
      %v2023 = vpop.f32.mrb[0].mxu0
      %2024 = vmatprep.mubr.f32.mxu0 0.0
      %2025 = vmatmul.mubr.f32.gmra.mrb[0].mxu0 %v1736
      %v2026 = vpop.f32.mrb[0].mxu0
      %v2027 = vadd.f32 0.0, %v2026
      %v2028 = vpop.f32.mrb[0].mxu0
      %2029 = vmatprep.mubr.f32.mxu0 0.0
      %2030 = vmatmul.mubr.f32.gmra.mrb[0].mxu0 %v1738
      %v2031 = vpop.f32.mrb[0].mxu0
      %v2032 = vadd.f32 0.0, %v2031
      %v2033 = vpop.f32.mrb[0].mxu0
      %2034 = vmatprep.mubr.f32.mxu0 0.0
      %2035 = vmatmul.mubr.f32.gmra.mrb[0].mxu0 %v1740
      %v2036 = vpop.f32.mrb[0].mxu0
      %v2037 = vadd.f32 0.0, %v2036
      %v2038 = vpop.f32.mrb[0].mxu0
      %2039 = vdwg.mxu0
      %v2040 = vadd.f32 %v1682, %v1812
      %v2041 = vadd.f32 %v1683, %v1817
      %v2042 = vadd.f32 %v1684, %v1822
      %v2043 = vadd.f32 %v1685, %v1827
      %v2044 = vadd.f32 %v1686, %v1832
      %v2045 = vadd.f32 %v1687, %v1837
      %v2046 = vadd.f32 %v1688, %v1842
      %v2047 = vadd.f32 %v1689, %v1847
      %v2048 = vadd.f32 %v1690, %v1852
      %v2049 = vadd.f32 %v1691, %v1857
      %v2050 = vadd.f32 %v1692, %v1862
      %v2051 = vadd.f32 %v1693, %v1867
      %v2052 = vadd.f32 %v1694, %v1872
      %v2053 = vadd.f32 %v1695, %v1877
      %v2054 = vadd.f32 %v1696, %v1882
      %v2055 = vadd.f32 %v1697, %v1887
      %v2056 = vadd.f32 %v1698, %v1892
      %v2057 = vadd.f32 %v1699, %v1897
      %v2058 = vadd.f32 %v1700, %v1902
      %v2059 = vadd.f32 %v1701, %v1907
      %v2060 = vadd.f32 %v1702, %v1912
      %v2061 = vadd.f32 %v1703, %v1917
      %v2062 = vadd.f32 %v1704, %v1922
      %v2063 = vadd.f32 %v1705, %v1927
      %v2064 = vadd.f32 %v1706, %v1932
      %v2065 = vadd.f32 %v1707, %v1937
      %v2066 = vadd.f32 %v1708, %v1942
      %v2067 = vadd.f32 %v1709, %v1947
      %v2068 = vadd.f32 %v1710, %v1952
      %v2069 = vadd.f32 %v1711, %v1957
      %v2070 = vadd.f32 %v1712, %v1962
      %v2071 = vadd.f32 %v1713, %v1967
      %v2072 = vadd.f32 %v1714, %v1972
      %v2073 = vadd.f32 %v1715, %v1977
      %v2074 = vadd.f32 %v1716, %v1982
      %v2075 = vadd.f32 %v1717, %v1987
      %v2076 = vadd.f32 %v1718, %v1992
      %v2077 = vadd.f32 %v1719, %v1997
      %v2078 = vadd.f32 %v1720, %v2002
      %v2079 = vadd.f32 %v1721, %v2007
      %v2080 = vadd.f32 %v1722, %v2012
      %v2081 = vadd.f32 %v1723, %v2017
      %v2082 = vadd.f32 %v1724, %v2022
      %v2083 = vadd.f32 %v1725, %v2027
      %v2084 = vadd.f32 %v1726, %v2032
      %v2085 = vadd.f32 %v1727, %v2037
      %s2086 = scalar_lea.vmem %s1, 16
      %v2087 = vld [vmem:[%s2086] sm:$0xf]
      %vm2088 = vcmask 1044480
      %v2089 = vrot.slane %v227, 3
      %v2090 = vrot.slane %v228, 3
      %v2091 = vsel %vm2088, %v2089, %v2090
      %v2092 = vrot.slane %v229, 3
      %v2093 = vsel %vm2088, %v2090, %v2092
      %v2094 = vrot.slane %v230, 3
      %v2095 = vsel %vm2088, %v2092, %v2094
      %v2096 = vrot.slane %v231, 3
      %v2097 = vsel %vm2088, %v2094, %v2096
      %v2098 = vrot.slane %v232, 3
      %v2099 = vsel %vm2088, %v2096, %v2098
      %v2100 = vrot.slane %v233, 3
      %v2101 = vsel %vm2088, %v2098, %v2100
      %v2102 = vrot.slane %v234, 3
      %v2103 = vsel %vm2088, %v2100, %v2102
      %v2104 = vrot.slane %v235, 3
      %v2105 = vsel %vm2088, %v2102, %v2104
      %v2106 = vrot.slane %v236, 3
      %v2107 = vsel %vm2088, %v2104, %v2106
      %v2108 = vrot.slane %v237, 3
      %v2109 = vsel %vm2088, %v2106, %v2108
      %v2110 = vrot.slane %v238, 3
      %v2111 = vsel %vm2088, %v2108, %v2110
      %v2112 = vrot.slane %v239, 3
      %v2113 = vsel %vm2088, %v2110, %v2112
      %v2114 = vrot.slane %v240, 3
      %v2115 = vsel %vm2088, %v2112, %v2114
      %v2116 = vrot.slane %v241, 3
      %v2117 = vsel %vm2088, %v2114, %v2116
      %v2118 = vrot.slane %v242, 3
      %v2119 = vsel %vm2088, %v2116, %v2118
      %v2120 = vrot.slane %v243, 3
      %v2121 = vsel %vm2088, %v2118, %v2120
      %v2122 = vrot.slane %v244, 3
      %v2123 = vsel %vm2088, %v2120, %v2122
      %v2124 = vrot.slane %v245, 3
      %v2125 = vsel %vm2088, %v2122, %v2124
      %v2126 = vrot.slane %v246, 3
      %v2127 = vsel %vm2088, %v2124, %v2126
      %v2128 = vrot.slane %v247, 3
      %v2129 = vsel %vm2088, %v2126, %v2128
      %v2130 = vrot.slane %v248, 3
      %v2131 = vsel %vm2088, %v2128, %v2130
      %v2132 = vrot.slane %v249, 3
      %v2133 = vsel %vm2088, %v2130, %v2132
      %v2134 = vrot.slane %v250, 3
      %v2135 = vsel %vm2088, %v2132, %v2134
      %v2136 = vrot.slane %v251, 3
      %v2137 = vsel %vm2088, %v2134, %v2136
      %v2138 = vrot.slane %v252, 3
      %v2139 = vsel %vm2088, %v2136, %v2138
      %v2140 = vrot.slane %v253, 3
      %v2141 = vsel %vm2088, %v2138, %v2140
      %v2142 = vrot.slane %v254, 3
      %v2143 = vsel %vm2088, %v2140, %v2142
      %v2144 = vrot.slane %v255, 3
      %v2145 = vsel %vm2088, %v2142, %v2144
      %v2146 = vrot.slane %v256, 3
      %v2147 = vsel %vm2088, %v2144, %v2146
      %v2148 = vrot.slane %v257, 3
      %v2149 = vsel %vm2088, %v2146, %v2148
      %v2150 = vrot.slane %v258, 3
      %v2151 = vsel %vm2088, %v2148, %v2150
      %v2152 = vrot.slane %v259, 3
      %v2153 = vsel %vm2088, %v2150, %v2152
      %v2154 = vrot.slane %v260, 3
      %v2155 = vsel %vm2088, %v2152, %v2154
      %v2156 = vrot.slane %v261, 3
      %v2157 = vsel %vm2088, %v2154, %v2156
      %v2158 = vrot.slane %v262, 3
      %v2159 = vsel %vm2088, %v2156, %v2158
      %v2160 = vrot.slane %v263, 3
      %v2161 = vsel %vm2088, %v2158, %v2160
      %v2162 = vrot.slane %v264, 3
      %v2163 = vsel %vm2088, %v2160, %v2162
      %v2164 = vrot.slane %v265, 3
      %v2165 = vsel %vm2088, %v2162, %v2164
      %v2166 = vrot.slane %v266, 3
      %v2167 = vsel %vm2088, %v2164, %v2166
      %v2168 = vrot.slane %v267, 3
      %v2169 = vsel %vm2088, %v2166, %v2168
      %v2170 = vrot.slane %v268, 3
      %v2171 = vsel %vm2088, %v2168, %v2170
      %v2172 = vrot.slane %v269, 3
      %v2173 = vsel %vm2088, %v2170, %v2172
      %v2174 = vrot.slane %v270, 3
      %v2175 = vsel %vm2088, %v2172, %v2174
      %v2176 = vrot.slane %v271, 3
      %v2177 = vsel %vm2088, %v2174, %v2176
      %v2178 = vrot.slane %v272, 3
      %v2179 = vsel %vm2088, %v2176, %v2178
      %v2180 = vsel %vm416, %v2091, 0
      %v2182 = vsel %vm416, %v2093, 0
      %v2184 = vsel %vm416, %v2095, 0
      %v2186 = vsel %vm416, %v2097, 0
      %v2188 = vsel %vm416, %v2099, 0
      %v2190 = vsel %vm416, %v2101, 0
      %v2192 = vsel %vm416, %v2103, 0
      %v2194 = vsel %vm416, %v2105, 0
      %v2196 = vsel %vm416, %v2107, 0
      %v2198 = vsel %vm416, %v2109, 0
      %v2200 = vsel %vm416, %v2111, 0
      %v2202 = vsel %vm416, %v2113, 0
      %v2204 = vsel %vm416, %v2115, 0
      %v2206 = vsel %vm416, %v2117, 0
      %v2208 = vsel %vm416, %v2119, 0
      %v2210 = vsel %vm416, %v2121, 0
      %v2212 = vsel %vm416, %v2123, 0
      %v2214 = vsel %vm416, %v2125, 0
      %v2216 = vsel %vm416, %v2127, 0
      %v2218 = vsel %vm416, %v2129, 0
      %v2220 = vsel %vm416, %v2131, 0
      %v2222 = vsel %vm416, %v2133, 0
      %v2224 = vsel %vm416, %v2135, 0
      %v2226 = vsel %vm416, %v2137, 0
      %v2228 = vsel %vm416, %v2139, 0
      %v2230 = vsel %vm416, %v2141, 0
      %v2232 = vsel %vm416, %v2143, 0
      %v2234 = vsel %vm416, %v2145, 0
      %v2236 = vsel %vm416, %v2147, 0
      %v2238 = vsel %vm416, %v2149, 0
      %v2240 = vsel %vm416, %v2151, 0
      %v2242 = vsel %vm416, %v2153, 0
      %v2244 = vsel %vm416, %v2155, 0
      %v2246 = vsel %vm416, %v2157, 0
      %v2248 = vsel %vm416, %v2159, 0
      %v2250 = vsel %vm416, %v2161, 0
      %v2252 = vsel %vm416, %v2163, 0
      %v2254 = vsel %vm416, %v2165, 0
      %v2256 = vsel %vm416, %v2167, 0
      %v2258 = vsel %vm416, %v2169, 0
      %v2260 = vsel %vm416, %v2171, 0
      %v2262 = vsel %vm416, %v2173, 0
      %v2264 = vsel %vm416, %v2175, 0
      %v2266 = vsel %vm416, %v2177, 0
      %v2268 = vsel %vm416, %v2179, 0
      %v2270 = vsel %vm416, %v2178, 0
      %v2273 = vsel %vm509, %v2087, 0
      %2275 = vmatprep.subr.mxu0 0.0
      %2276 = vmatpush1.msra.mxu0 %v2273
      %2277 = vmatprep.subr.mxu0 0.0
      %2278 = vmatpush1.msra.mxu0 0.0
      %2279 = vmatprep.subr.mxu0 0.0
      %2280 = vmatpush1.msra.mxu0 0.0
      %2281 = vmatprep.subr.mxu0 0.0
      %2282 = vmatpush1.msra.mxu0 0.0
      %2283 = vmatprep.subr.mxu0 0.0
      %2284 = vmatpush1.msra.mxu0 0.0
      %2285 = vmatprep.subr.mxu0 0.0
      %2286 = vmatpush1.msra.mxu0 0.0
      %2287 = vmatprep.subr.mxu0 0.0
      %2288 = vmatpush1.msra.mxu0 0.0
      %2289 = vmatprep.subr.mxu0 0.0
      %2290 = vmatpush1.msra.mxu0 0.0
      %2291 = vmatprep.subr.mxu0 0.0
      %2292 = vmatpush1.msra.mxu0 0.0
      %2293 = vmatprep.subr.mxu0 0.0
      %2294 = vmatpush1.msra.mxu0 0.0
      %2295 = vmatprep.subr.mxu0 0.0
      %2296 = vmatpush1.msra.mxu0 0.0
      %2297 = vmatprep.subr.mxu0 0.0
      %2298 = vmatpush1.msra.mxu0 0.0
      %2299 = vmatprep.subr.mxu0 0.0
      %2300 = vmatpush1.msra.mxu0 0.0
      %2301 = vmatprep.subr.mxu0 0.0
      %2302 = vmatpush1.msra.mxu0 0.0
      %2303 = vmatprep.subr.mxu0 0.0
      %2304 = vmatpush1.msra.mxu0 0.0
      %2305 = vmatprep.subr.mxu0 0.0
      %2306 = vmatpush1.msra.mxu0 0.0
      %2307 = vmatprep.subr.mxu0 0.0
      %2308 = vmatpush1.msra.mxu0 0.0
      %2309 = vmatprep.subr.mxu0 0.0
      %2310 = vmatpush1.msra.mxu0 0.0
      %2311 = vmatprep.subr.mxu0 0.0
      %2312 = vmatpush1.msra.mxu0 0.0
      %2313 = vmatprep.subr.mxu0 0.0
      %2314 = vmatpush1.msra.mxu0 0.0
      %2315 = vmatprep.subr.mxu0 0.0
      %2316 = vmatpush1.msra.mxu0 0.0
      %2317 = vmatprep.subr.mxu0 0.0
      %2318 = vmatpush1.msra.mxu0 0.0
      %2319 = vmatprep.subr.mxu0 0.0
      %2320 = vmatpush1.msra.mxu0 0.0
      %2321 = vmatprep.subr.mxu0 0.0
      %2322 = vmatpush1.msra.mxu0 0.0
      %2323 = vmatprep.subr.mxu0 0.0
      %2324 = vmatpush1.msra.mxu0 0.0
      %2325 = vmatprep.subr.mxu0 0.0
      %2326 = vmatpush1.msra.mxu0 0.0
      %2327 = vmatprep.subr.mxu0 0.0
      %2328 = vmatpush1.msra.mxu0 0.0
      %2329 = vmatprep.subr.mxu0 0.0
      %2330 = vmatpush1.msra.mxu0 0.0
      %2331 = vmatprep.subr.mxu0 0.0
      %2332 = vmatpush1.msra.mxu0 0.0
      %2333 = vmatprep.subr.mxu0 0.0
      %2334 = vmatpush1.msra.mxu0 0.0
      %2335 = vmatprep.subr.mxu0 0.0
      %2336 = vmatpush1.msra.mxu0 0.0
      %2337 = vmatprep.subr.mxu0 0.0
      %2338 = vmatpush1.msra.mxu0 0.0
      %2339 = vmatprep.mubr.f32.mxu0 0.0
      %2340 = vmatmul.mubr.f32.gmra.mrb[0].mxu0 %v2180
      %v2341 = vpop.f32.mrb[0].mxu0
      %v2342 = vadd.f32 0.0, %v2341
      %v2343 = vpop.f32.mrb[0].mxu0
      %2344 = vmatprep.mubr.f32.mxu0 0.0
      %2345 = vmatmul.mubr.f32.gmra.mrb[0].mxu0 %v2182
      %v2346 = vpop.f32.mrb[0].mxu0
      %v2347 = vadd.f32 0.0, %v2346
      %v2348 = vpop.f32.mrb[0].mxu0
      %2349 = vmatprep.mubr.f32.mxu0 0.0
      %2350 = vmatmul.mubr.f32.gmra.mrb[0].mxu0 %v2184
      %v2351 = vpop.f32.mrb[0].mxu0
      %v2352 = vadd.f32 0.0, %v2351
      %v2353 = vpop.f32.mrb[0].mxu0
      %2354 = vmatprep.mubr.f32.mxu0 0.0
      %2355 = vmatmul.mubr.f32.gmra.mrb[0].mxu0 %v2186
      %v2356 = vpop.f32.mrb[0].mxu0
      %v2357 = vadd.f32 0.0, %v2356
      %v2358 = vpop.f32.mrb[0].mxu0
      %2359 = vmatprep.mubr.f32.mxu0 0.0
      %2360 = vmatmul.mubr.f32.gmra.mrb[0].mxu0 %v2188
      %v2361 = vpop.f32.mrb[0].mxu0
      %v2362 = vadd.f32 0.0, %v2361
      %v2363 = vpop.f32.mrb[0].mxu0
      %2364 = vmatprep.mubr.f32.mxu0 0.0
      %2365 = vmatmul.mubr.f32.gmra.mrb[0].mxu0 %v2190
      %v2366 = vpop.f32.mrb[0].mxu0
      %v2367 = vadd.f32 0.0, %v2366
      %v2368 = vpop.f32.mrb[0].mxu0
      %2369 = vmatprep.mubr.f32.mxu0 0.0
      %2370 = vmatmul.mubr.f32.gmra.mrb[0].mxu0 %v2192
      %v2371 = vpop.f32.mrb[0].mxu0
      %v2372 = vadd.f32 0.0, %v2371
      %v2373 = vpop.f32.mrb[0].mxu0
      %2374 = vmatprep.mubr.f32.mxu0 0.0
      %2375 = vmatmul.mubr.f32.gmra.mrb[0].mxu0 %v2194
      %v2376 = vpop.f32.mrb[0].mxu0
      %v2377 = vadd.f32 0.0, %v2376
      %v2378 = vpop.f32.mrb[0].mxu0
      %2379 = vmatprep.mubr.f32.mxu0 0.0
      %2380 = vmatmul.mubr.f32.gmra.mrb[0].mxu0 %v2196
      %v2381 = vpop.f32.mrb[0].mxu0
      %v2382 = vadd.f32 0.0, %v2381
      %v2383 = vpop.f32.mrb[0].mxu0
      %2384 = vmatprep.mubr.f32.mxu0 0.0
      %2385 = vmatmul.mubr.f32.gmra.mrb[0].mxu0 %v2198
      %v2386 = vpop.f32.mrb[0].mxu0
      %v2387 = vadd.f32 0.0, %v2386
      %v2388 = vpop.f32.mrb[0].mxu0
      %2389 = vmatprep.mubr.f32.mxu0 0.0
      %2390 = vmatmul.mubr.f32.gmra.mrb[0].mxu0 %v2200
      %v2391 = vpop.f32.mrb[0].mxu0
      %v2392 = vadd.f32 0.0, %v2391
      %v2393 = vpop.f32.mrb[0].mxu0
      %2394 = vmatprep.mubr.f32.mxu0 0.0
      %2395 = vmatmul.mubr.f32.gmra.mrb[0].mxu0 %v2202
      %v2396 = vpop.f32.mrb[0].mxu0
      %v2397 = vadd.f32 0.0, %v2396
      %v2398 = vpop.f32.mrb[0].mxu0
      %2399 = vmatprep.mubr.f32.mxu0 0.0
      %2400 = vmatmul.mubr.f32.gmra.mrb[0].mxu0 %v2204
      %v2401 = vpop.f32.mrb[0].mxu0
      %v2402 = vadd.f32 0.0, %v2401
      %v2403 = vpop.f32.mrb[0].mxu0
      %2404 = vmatprep.mubr.f32.mxu0 0.0
      %2405 = vmatmul.mubr.f32.gmra.mrb[0].mxu0 %v2206
      %v2406 = vpop.f32.mrb[0].mxu0
      %v2407 = vadd.f32 0.0, %v2406
      %v2408 = vpop.f32.mrb[0].mxu0
      %2409 = vmatprep.mubr.f32.mxu0 0.0
      %2410 = vmatmul.mubr.f32.gmra.mrb[0].mxu0 %v2208
      %v2411 = vpop.f32.mrb[0].mxu0
      %v2412 = vadd.f32 0.0, %v2411
      %v2413 = vpop.f32.mrb[0].mxu0
      %2414 = vmatprep.mubr.f32.mxu0 0.0
      %2415 = vmatmul.mubr.f32.gmra.mrb[0].mxu0 %v2210
      %v2416 = vpop.f32.mrb[0].mxu0
      %v2417 = vadd.f32 0.0, %v2416
      %v2418 = vpop.f32.mrb[0].mxu0
      %2419 = vmatprep.mubr.f32.mxu0 0.0
      %2420 = vmatmul.mubr.f32.gmra.mrb[0].mxu0 %v2212
      %v2421 = vpop.f32.mrb[0].mxu0
      %v2422 = vadd.f32 0.0, %v2421
      %v2423 = vpop.f32.mrb[0].mxu0
      %2424 = vmatprep.mubr.f32.mxu0 0.0
      %2425 = vmatmul.mubr.f32.gmra.mrb[0].mxu0 %v2214
      %v2426 = vpop.f32.mrb[0].mxu0
      %v2427 = vadd.f32 0.0, %v2426
      %v2428 = vpop.f32.mrb[0].mxu0
      %2429 = vmatprep.mubr.f32.mxu0 0.0
      %2430 = vmatmul.mubr.f32.gmra.mrb[0].mxu0 %v2216
      %v2431 = vpop.f32.mrb[0].mxu0
      %v2432 = vadd.f32 0.0, %v2431
      %v2433 = vpop.f32.mrb[0].mxu0
      %2434 = vmatprep.mubr.f32.mxu0 0.0
      %2435 = vmatmul.mubr.f32.gmra.mrb[0].mxu0 %v2218
      %v2436 = vpop.f32.mrb[0].mxu0
      %v2437 = vadd.f32 0.0, %v2436
      %v2438 = vpop.f32.mrb[0].mxu0
      %2439 = vmatprep.mubr.f32.mxu0 0.0
      %2440 = vmatmul.mubr.f32.gmra.mrb[0].mxu0 %v2220
      %v2441 = vpop.f32.mrb[0].mxu0
      %v2442 = vadd.f32 0.0, %v2441
      %v2443 = vpop.f32.mrb[0].mxu0
      %2444 = vmatprep.mubr.f32.mxu0 0.0
      %2445 = vmatmul.mubr.f32.gmra.mrb[0].mxu0 %v2222
      %v2446 = vpop.f32.mrb[0].mxu0
      %v2447 = vadd.f32 0.0, %v2446
      %v2448 = vpop.f32.mrb[0].mxu0
      %2449 = vmatprep.mubr.f32.mxu0 0.0
      %2450 = vmatmul.mubr.f32.gmra.mrb[0].mxu0 %v2224
      %v2451 = vpop.f32.mrb[0].mxu0
      %v2452 = vadd.f32 0.0, %v2451
      %v2453 = vpop.f32.mrb[0].mxu0
      %2454 = vmatprep.mubr.f32.mxu0 0.0
      %2455 = vmatmul.mubr.f32.gmra.mrb[0].mxu0 %v2226
      %v2456 = vpop.f32.mrb[0].mxu0
      %v2457 = vadd.f32 0.0, %v2456
      %v2458 = vpop.f32.mrb[0].mxu0
      %2459 = vmatprep.mubr.f32.mxu0 0.0
      %2460 = vmatmul.mubr.f32.gmra.mrb[0].mxu0 %v2228
      %v2461 = vpop.f32.mrb[0].mxu0
      %v2462 = vadd.f32 0.0, %v2461
      %v2463 = vpop.f32.mrb[0].mxu0
      %2464 = vmatprep.mubr.f32.mxu0 0.0
      %2465 = vmatmul.mubr.f32.gmra.mrb[0].mxu0 %v2230
      %v2466 = vpop.f32.mrb[0].mxu0
      %v2467 = vadd.f32 0.0, %v2466
      %v2468 = vpop.f32.mrb[0].mxu0
      %2469 = vmatprep.mubr.f32.mxu0 0.0
      %2470 = vmatmul.mubr.f32.gmra.mrb[0].mxu0 %v2232
      %v2471 = vpop.f32.mrb[0].mxu0
      %v2472 = vadd.f32 0.0, %v2471
      %v2473 = vpop.f32.mrb[0].mxu0
      %2474 = vmatprep.mubr.f32.mxu0 0.0
      %2475 = vmatmul.mubr.f32.gmra.mrb[0].mxu0 %v2234
      %v2476 = vpop.f32.mrb[0].mxu0
      %v2477 = vadd.f32 0.0, %v2476
      %v2478 = vpop.f32.mrb[0].mxu0
      %2479 = vmatprep.mubr.f32.mxu0 0.0
      %2480 = vmatmul.mubr.f32.gmra.mrb[0].mxu0 %v2236
      %v2481 = vpop.f32.mrb[0].mxu0
      %v2482 = vadd.f32 0.0, %v2481
      %v2483 = vpop.f32.mrb[0].mxu0
      %2484 = vmatprep.mubr.f32.mxu0 0.0
      %2485 = vmatmul.mubr.f32.gmra.mrb[0].mxu0 %v2238
      %v2486 = vpop.f32.mrb[0].mxu0
      %v2487 = vadd.f32 0.0, %v2486
      %v2488 = vpop.f32.mrb[0].mxu0
      %2489 = vmatprep.mubr.f32.mxu0 0.0
      %2490 = vmatmul.mubr.f32.gmra.mrb[0].mxu0 %v2240
      %v2491 = vpop.f32.mrb[0].mxu0
      %v2492 = vadd.f32 0.0, %v2491
      %v2493 = vpop.f32.mrb[0].mxu0
      %2494 = vmatprep.mubr.f32.mxu0 0.0
      %2495 = vmatmul.mubr.f32.gmra.mrb[0].mxu0 %v2242
      %v2496 = vpop.f32.mrb[0].mxu0
      %v2497 = vadd.f32 0.0, %v2496
      %v2498 = vpop.f32.mrb[0].mxu0
      %2499 = vmatprep.mubr.f32.mxu0 0.0
      %2500 = vmatmul.mubr.f32.gmra.mrb[0].mxu0 %v2244
      %v2501 = vpop.f32.mrb[0].mxu0
      %v2502 = vadd.f32 0.0, %v2501
      %v2503 = vpop.f32.mrb[0].mxu0
      %2504 = vmatprep.mubr.f32.mxu0 0.0
      %2505 = vmatmul.mubr.f32.gmra.mrb[0].mxu0 %v2246
      %v2506 = vpop.f32.mrb[0].mxu0
      %v2507 = vadd.f32 0.0, %v2506
      %v2508 = vpop.f32.mrb[0].mxu0
      %2509 = vmatprep.mubr.f32.mxu0 0.0
      %2510 = vmatmul.mubr.f32.gmra.mrb[0].mxu0 %v2248
      %v2511 = vpop.f32.mrb[0].mxu0
      %v2512 = vadd.f32 0.0, %v2511
      %v2513 = vpop.f32.mrb[0].mxu0
      %2514 = vmatprep.mubr.f32.mxu0 0.0
      %2515 = vmatmul.mubr.f32.gmra.mrb[0].mxu0 %v2250
      %v2516 = vpop.f32.mrb[0].mxu0
      %v2517 = vadd.f32 0.0, %v2516
      %v2518 = vpop.f32.mrb[0].mxu0
      %2519 = vmatprep.mubr.f32.mxu0 0.0
      %2520 = vmatmul.mubr.f32.gmra.mrb[0].mxu0 %v2252
      %v2521 = vpop.f32.mrb[0].mxu0
      %v2522 = vadd.f32 0.0, %v2521
      %v2523 = vpop.f32.mrb[0].mxu0
      %2524 = vmatprep.mubr.f32.mxu0 0.0
      %2525 = vmatmul.mubr.f32.gmra.mrb[0].mxu0 %v2254
      %v2526 = vpop.f32.mrb[0].mxu0
      %v2527 = vadd.f32 0.0, %v2526
      %v2528 = vpop.f32.mrb[0].mxu0
      %2529 = vmatprep.mubr.f32.mxu0 0.0
      %2530 = vmatmul.mubr.f32.gmra.mrb[0].mxu0 %v2256
      %v2531 = vpop.f32.mrb[0].mxu0
      %v2532 = vadd.f32 0.0, %v2531
      %v2533 = vpop.f32.mrb[0].mxu0
      %2534 = vmatprep.mubr.f32.mxu0 0.0
      %2535 = vmatmul.mubr.f32.gmra.mrb[0].mxu0 %v2258
      %v2536 = vpop.f32.mrb[0].mxu0
      %v2537 = vadd.f32 0.0, %v2536
      %v2538 = vpop.f32.mrb[0].mxu0
      %2539 = vmatprep.mubr.f32.mxu0 0.0
      %2540 = vmatmul.mubr.f32.gmra.mrb[0].mxu0 %v2260
      %v2541 = vpop.f32.mrb[0].mxu0
      %v2542 = vadd.f32 0.0, %v2541
      %v2543 = vpop.f32.mrb[0].mxu0
      %2544 = vmatprep.mubr.f32.mxu0 0.0
      %2545 = vmatmul.mubr.f32.gmra.mrb[0].mxu0 %v2262
      %v2546 = vpop.f32.mrb[0].mxu0
      %v2547 = vadd.f32 0.0, %v2546
      %v2548 = vpop.f32.mrb[0].mxu0
      %2549 = vmatprep.mubr.f32.mxu0 0.0
      %2550 = vmatmul.mubr.f32.gmra.mrb[0].mxu0 %v2264
      %v2551 = vpop.f32.mrb[0].mxu0
      %v2552 = vadd.f32 0.0, %v2551
      %v2553 = vpop.f32.mrb[0].mxu0
      %2554 = vmatprep.mubr.f32.mxu0 0.0
      %2555 = vmatmul.mubr.f32.gmra.mrb[0].mxu0 %v2266
      %v2556 = vpop.f32.mrb[0].mxu0
      %v2557 = vadd.f32 0.0, %v2556
      %v2558 = vpop.f32.mrb[0].mxu0
      %2559 = vmatprep.mubr.f32.mxu0 0.0
      %2560 = vmatmul.mubr.f32.gmra.mrb[0].mxu0 %v2268
      %v2561 = vpop.f32.mrb[0].mxu0
      %v2562 = vadd.f32 0.0, %v2561
      %v2563 = vpop.f32.mrb[0].mxu0
      %2564 = vmatprep.mubr.f32.mxu0 0.0
      %2565 = vmatmul.mubr.f32.gmra.mrb[0].mxu0 %v2270
      %v2566 = vpop.f32.mrb[0].mxu0
      %v2567 = vadd.f32 0.0, %v2566
      %v2568 = vpop.f32.mrb[0].mxu0
      %2569 = vdwg.mxu0
      %v2570 = vadd.f32 %v2040, %v2342
      %v2571 = vadd.f32 %v2041, %v2347
      %v2572 = vadd.f32 %v2042, %v2352
      %v2573 = vadd.f32 %v2043, %v2357
      %v2574 = vadd.f32 %v2044, %v2362
      %v2575 = vadd.f32 %v2045, %v2367
      %v2576 = vadd.f32 %v2046, %v2372
      %v2577 = vadd.f32 %v2047, %v2377
      %v2578 = vadd.f32 %v2048, %v2382
      %v2579 = vadd.f32 %v2049, %v2387
      %v2580 = vadd.f32 %v2050, %v2392
      %v2581 = vadd.f32 %v2051, %v2397
      %v2582 = vadd.f32 %v2052, %v2402
      %v2583 = vadd.f32 %v2053, %v2407
      %v2584 = vadd.f32 %v2054, %v2412
      %v2585 = vadd.f32 %v2055, %v2417
      %v2586 = vadd.f32 %v2056, %v2422
      %v2587 = vadd.f32 %v2057, %v2427
      %v2588 = vadd.f32 %v2058, %v2432
      %v2589 = vadd.f32 %v2059, %v2437
      %v2590 = vadd.f32 %v2060, %v2442
      %v2591 = vadd.f32 %v2061, %v2447
      %v2592 = vadd.f32 %v2062, %v2452
      %v2593 = vadd.f32 %v2063, %v2457
      %v2594 = vadd.f32 %v2064, %v2462
      %v2595 = vadd.f32 %v2065, %v2467
      %v2596 = vadd.f32 %v2066, %v2472
      %v2597 = vadd.f32 %v2067, %v2477
      %v2598 = vadd.f32 %v2068, %v2482
      %v2599 = vadd.f32 %v2069, %v2487
      %v2600 = vadd.f32 %v2070, %v2492
      %v2601 = vadd.f32 %v2071, %v2497
      %v2602 = vadd.f32 %v2072, %v2502
      %v2603 = vadd.f32 %v2073, %v2507
      %v2604 = vadd.f32 %v2074, %v2512
      %v2605 = vadd.f32 %v2075, %v2517
      %v2606 = vadd.f32 %v2076, %v2522
      %v2607 = vadd.f32 %v2077, %v2527
      %v2608 = vadd.f32 %v2078, %v2532
      %v2609 = vadd.f32 %v2079, %v2537
      %v2610 = vadd.f32 %v2080, %v2542
      %v2611 = vadd.f32 %v2081, %v2547
      %v2612 = vadd.f32 %v2082, %v2552
      %v2613 = vadd.f32 %v2083, %v2557
      %v2614 = vadd.f32 %v2084, %v2562
      %v2615 = vadd.f32 %v2085, %v2567
      %s2616 = scalar_lea.vmem %s1, 20
      %v2617 = vld [vmem:[%s2616] sm:$0xf]
      %v2618 = vrot.slane %v227, 4
      %v2619 = vrot.slane %v228, 4
      %v2620 = vsel %vm509, %v2618, %v2619
      %v2621 = vrot.slane %v229, 4
      %v2622 = vsel %vm509, %v2619, %v2621
      %v2623 = vrot.slane %v230, 4
      %v2624 = vsel %vm509, %v2621, %v2623
      %v2625 = vrot.slane %v231, 4
      %v2626 = vsel %vm509, %v2623, %v2625
      %v2627 = vrot.slane %v232, 4
      %v2628 = vsel %vm509, %v2625, %v2627
      %v2629 = vrot.slane %v233, 4
      %v2630 = vsel %vm509, %v2627, %v2629
      %v2631 = vrot.slane %v234, 4
      %v2632 = vsel %vm509, %v2629, %v2631
      %v2633 = vrot.slane %v235, 4
      %v2634 = vsel %vm509, %v2631, %v2633
      %v2635 = vrot.slane %v236, 4
      %v2636 = vsel %vm509, %v2633, %v2635
      %v2637 = vrot.slane %v237, 4
      %v2638 = vsel %vm509, %v2635, %v2637
      %v2639 = vrot.slane %v238, 4
      %v2640 = vsel %vm509, %v2637, %v2639
      %v2641 = vrot.slane %v239, 4
      %v2642 = vsel %vm509, %v2639, %v2641
      %v2643 = vrot.slane %v240, 4
      %v2644 = vsel %vm509, %v2641, %v2643
      %v2645 = vrot.slane %v241, 4
      %v2646 = vsel %vm509, %v2643, %v2645
      %v2647 = vrot.slane %v242, 4
      %v2648 = vsel %vm509, %v2645, %v2647
      %v2649 = vrot.slane %v243, 4
      %v2650 = vsel %vm509, %v2647, %v2649
      %v2651 = vrot.slane %v244, 4
      %v2652 = vsel %vm509, %v2649, %v2651
      %v2653 = vrot.slane %v245, 4
      %v2654 = vsel %vm509, %v2651, %v2653
      %v2655 = vrot.slane %v246, 4
      %v2656 = vsel %vm509, %v2653, %v2655
      %v2657 = vrot.slane %v247, 4
      %v2658 = vsel %vm509, %v2655, %v2657
      %v2659 = vrot.slane %v248, 4
      %v2660 = vsel %vm509, %v2657, %v2659
      %v2661 = vrot.slane %v249, 4
      %v2662 = vsel %vm509, %v2659, %v2661
      %v2663 = vrot.slane %v250, 4
      %v2664 = vsel %vm509, %v2661, %v2663
      %v2665 = vrot.slane %v251, 4
      %v2666 = vsel %vm509, %v2663, %v2665
      %v2667 = vrot.slane %v252, 4
      %v2668 = vsel %vm509, %v2665, %v2667
      %v2669 = vrot.slane %v253, 4
      %v2670 = vsel %vm509, %v2667, %v2669
      %v2671 = vrot.slane %v254, 4
      %v2672 = vsel %vm509, %v2669, %v2671
      %v2673 = vrot.slane %v255, 4
      %v2674 = vsel %vm509, %v2671, %v2673
      %v2675 = vrot.slane %v256, 4
      %v2676 = vsel %vm509, %v2673, %v2675
      %v2677 = vrot.slane %v257, 4
      %v2678 = vsel %vm509, %v2675, %v2677
      %v2679 = vrot.slane %v258, 4
      %v2680 = vsel %vm509, %v2677, %v2679
      %v2681 = vrot.slane %v259, 4
      %v2682 = vsel %vm509, %v2679, %v2681
      %v2683 = vrot.slane %v260, 4
      %v2684 = vsel %vm509, %v2681, %v2683
      %v2685 = vrot.slane %v261, 4
      %v2686 = vsel %vm509, %v2683, %v2685
      %v2687 = vrot.slane %v262, 4
      %v2688 = vsel %vm509, %v2685, %v2687
      %v2689 = vrot.slane %v263, 4
      %v2690 = vsel %vm509, %v2687, %v2689
      %v2691 = vrot.slane %v264, 4
      %v2692 = vsel %vm509, %v2689, %v2691
      %v2693 = vrot.slane %v265, 4
      %v2694 = vsel %vm509, %v2691, %v2693
      %v2695 = vrot.slane %v266, 4
      %v2696 = vsel %vm509, %v2693, %v2695
      %v2697 = vrot.slane %v267, 4
      %v2698 = vsel %vm509, %v2695, %v2697
      %v2699 = vrot.slane %v268, 4
      %v2700 = vsel %vm509, %v2697, %v2699
      %v2701 = vrot.slane %v269, 4
      %v2702 = vsel %vm509, %v2699, %v2701
      %v2703 = vrot.slane %v270, 4
      %v2704 = vsel %vm509, %v2701, %v2703
      %v2705 = vrot.slane %v271, 4
      %v2706 = vsel %vm509, %v2703, %v2705
      %v2707 = vrot.slane %v272, 4
      %v2708 = vsel %vm509, %v2705, %v2707
      %v2709 = vsel %vm416, %v2620, 0
      %v2711 = vsel %vm416, %v2622, 0
      %v2713 = vsel %vm416, %v2624, 0
      %v2715 = vsel %vm416, %v2626, 0
      %v2717 = vsel %vm416, %v2628, 0
      %v2719 = vsel %vm416, %v2630, 0
      %v2721 = vsel %vm416, %v2632, 0
      %v2723 = vsel %vm416, %v2634, 0
      %v2725 = vsel %vm416, %v2636, 0
      %v2727 = vsel %vm416, %v2638, 0
      %v2729 = vsel %vm416, %v2640, 0
      %v2731 = vsel %vm416, %v2642, 0
      %v2733 = vsel %vm416, %v2644, 0
      %v2735 = vsel %vm416, %v2646, 0
      %v2737 = vsel %vm416, %v2648, 0
      %v2739 = vsel %vm416, %v2650, 0
      %v2741 = vsel %vm416, %v2652, 0
      %v2743 = vsel %vm416, %v2654, 0
      %v2745 = vsel %vm416, %v2656, 0
      %v2747 = vsel %vm416, %v2658, 0
      %v2749 = vsel %vm416, %v2660, 0
      %v2751 = vsel %vm416, %v2662, 0
      %v2753 = vsel %vm416, %v2664, 0
      %v2755 = vsel %vm416, %v2666, 0
      %v2757 = vsel %vm416, %v2668, 0
      %v2759 = vsel %vm416, %v2670, 0
      %v2761 = vsel %vm416, %v2672, 0
      %v2763 = vsel %vm416, %v2674, 0
      %v2765 = vsel %vm416, %v2676, 0
      %v2767 = vsel %vm416, %v2678, 0
      %v2769 = vsel %vm416, %v2680, 0
      %v2771 = vsel %vm416, %v2682, 0
      %v2773 = vsel %vm416, %v2684, 0
      %v2775 = vsel %vm416, %v2686, 0
      %v2777 = vsel %vm416, %v2688, 0
      %v2779 = vsel %vm416, %v2690, 0
      %v2781 = vsel %vm416, %v2692, 0
      %v2783 = vsel %vm416, %v2694, 0
      %v2785 = vsel %vm416, %v2696, 0
      %v2787 = vsel %vm416, %v2698, 0
      %v2789 = vsel %vm416, %v2700, 0
      %v2791 = vsel %vm416, %v2702, 0
      %v2793 = vsel %vm416, %v2704, 0
      %v2795 = vsel %vm416, %v2706, 0
      %v2797 = vsel %vm416, %v2708, 0
      %v2799 = vsel %vm416, %v2707, 0
      %v2802 = vsel %vm509, %v2617, 0
      %2804 = vmatprep.subr.mxu0 0.0
      %2805 = vmatpush1.msra.mxu0 %v2802
      %2806 = vmatprep.subr.mxu0 0.0
      %2807 = vmatpush1.msra.mxu0 0.0
      %2808 = vmatprep.subr.mxu0 0.0
      %2809 = vmatpush1.msra.mxu0 0.0
      %2810 = vmatprep.subr.mxu0 0.0
      %2811 = vmatpush1.msra.mxu0 0.0
      %2812 = vmatprep.subr.mxu0 0.0
      %2813 = vmatpush1.msra.mxu0 0.0
      %2814 = vmatprep.subr.mxu0 0.0
      %2815 = vmatpush1.msra.mxu0 0.0
      %2816 = vmatprep.subr.mxu0 0.0
      %2817 = vmatpush1.msra.mxu0 0.0
      %2818 = vmatprep.subr.mxu0 0.0
      %2819 = vmatpush1.msra.mxu0 0.0
      %2820 = vmatprep.subr.mxu0 0.0
      %2821 = vmatpush1.msra.mxu0 0.0
      %2822 = vmatprep.subr.mxu0 0.0
      %2823 = vmatpush1.msra.mxu0 0.0
      %2824 = vmatprep.subr.mxu0 0.0
      %2825 = vmatpush1.msra.mxu0 0.0
      %2826 = vmatprep.subr.mxu0 0.0
      %2827 = vmatpush1.msra.mxu0 0.0
      %2828 = vmatprep.subr.mxu0 0.0
      %2829 = vmatpush1.msra.mxu0 0.0
      %2830 = vmatprep.subr.mxu0 0.0
      %2831 = vmatpush1.msra.mxu0 0.0
      %2832 = vmatprep.subr.mxu0 0.0
      %2833 = vmatpush1.msra.mxu0 0.0
      %2834 = vmatprep.subr.mxu0 0.0
      %2835 = vmatpush1.msra.mxu0 0.0
      %2836 = vmatprep.subr.mxu0 0.0
      %2837 = vmatpush1.msra.mxu0 0.0
      %2838 = vmatprep.subr.mxu0 0.0
      %2839 = vmatpush1.msra.mxu0 0.0
      %2840 = vmatprep.subr.mxu0 0.0
      %2841 = vmatpush1.msra.mxu0 0.0
      %2842 = vmatprep.subr.mxu0 0.0
      %2843 = vmatpush1.msra.mxu0 0.0
      %2844 = vmatprep.subr.mxu0 0.0
      %2845 = vmatpush1.msra.mxu0 0.0
      %2846 = vmatprep.subr.mxu0 0.0
      %2847 = vmatpush1.msra.mxu0 0.0
      %2848 = vmatprep.subr.mxu0 0.0
      %2849 = vmatpush1.msra.mxu0 0.0
      %2850 = vmatprep.subr.mxu0 0.0
      %2851 = vmatpush1.msra.mxu0 0.0
      %2852 = vmatprep.subr.mxu0 0.0
      %2853 = vmatpush1.msra.mxu0 0.0
      %2854 = vmatprep.subr.mxu0 0.0
      %2855 = vmatpush1.msra.mxu0 0.0
      %2856 = vmatprep.subr.mxu0 0.0
      %2857 = vmatpush1.msra.mxu0 0.0
      %2858 = vmatprep.subr.mxu0 0.0
      %2859 = vmatpush1.msra.mxu0 0.0
      %2860 = vmatprep.subr.mxu0 0.0
      %2861 = vmatpush1.msra.mxu0 0.0
      %2862 = vmatprep.subr.mxu0 0.0
      %2863 = vmatpush1.msra.mxu0 0.0
      %2864 = vmatprep.subr.mxu0 0.0
      %2865 = vmatpush1.msra.mxu0 0.0
      %2866 = vmatprep.subr.mxu0 0.0
      %2867 = vmatpush1.msra.mxu0 0.0
      %2868 = vmatprep.mubr.f32.mxu0 0.0
      %2869 = vmatmul.mubr.f32.gmra.mrb[0].mxu0 %v2709
      %v2870 = vpop.f32.mrb[0].mxu0
      %v2871 = vadd.f32 0.0, %v2870
      %v2872 = vpop.f32.mrb[0].mxu0
      %2873 = vmatprep.mubr.f32.mxu0 0.0
      %2874 = vmatmul.mubr.f32.gmra.mrb[0].mxu0 %v2711
      %v2875 = vpop.f32.mrb[0].mxu0
      %v2876 = vadd.f32 0.0, %v2875
      %v2877 = vpop.f32.mrb[0].mxu0
      %2878 = vmatprep.mubr.f32.mxu0 0.0
      %2879 = vmatmul.mubr.f32.gmra.mrb[0].mxu0 %v2713
      %v2880 = vpop.f32.mrb[0].mxu0
      %v2881 = vadd.f32 0.0, %v2880
      %v2882 = vpop.f32.mrb[0].mxu0
      %2883 = vmatprep.mubr.f32.mxu0 0.0
      %2884 = vmatmul.mubr.f32.gmra.mrb[0].mxu0 %v2715
      %v2885 = vpop.f32.mrb[0].mxu0
      %v2886 = vadd.f32 0.0, %v2885
      %v2887 = vpop.f32.mrb[0].mxu0
      %2888 = vmatprep.mubr.f32.mxu0 0.0
      %2889 = vmatmul.mubr.f32.gmra.mrb[0].mxu0 %v2717
      %v2890 = vpop.f32.mrb[0].mxu0
      %v2891 = vadd.f32 0.0, %v2890
      %v2892 = vpop.f32.mrb[0].mxu0
      %2893 = vmatprep.mubr.f32.mxu0 0.0
      %2894 = vmatmul.mubr.f32.gmra.mrb[0].mxu0 %v2719
      %v2895 = vpop.f32.mrb[0].mxu0
      %v2896 = vadd.f32 0.0, %v2895
      %v2897 = vpop.f32.mrb[0].mxu0
      %2898 = vmatprep.mubr.f32.mxu0 0.0
      %2899 = vmatmul.mubr.f32.gmra.mrb[0].mxu0 %v2721
      %v2900 = vpop.f32.mrb[0].mxu0
      %v2901 = vadd.f32 0.0, %v2900
      %v2902 = vpop.f32.mrb[0].mxu0
      %2903 = vmatprep.mubr.f32.mxu0 0.0
      %2904 = vmatmul.mubr.f32.gmra.mrb[0].mxu0 %v2723
      %v2905 = vpop.f32.mrb[0].mxu0
      %v2906 = vadd.f32 0.0, %v2905
      %v2907 = vpop.f32.mrb[0].mxu0
      %2908 = vmatprep.mubr.f32.mxu0 0.0
      %2909 = vmatmul.mubr.f32.gmra.mrb[0].mxu0 %v2725
      %v2910 = vpop.f32.mrb[0].mxu0
      %v2911 = vadd.f32 0.0, %v2910
      %v2912 = vpop.f32.mrb[0].mxu0
      %2913 = vmatprep.mubr.f32.mxu0 0.0
      %2914 = vmatmul.mubr.f32.gmra.mrb[0].mxu0 %v2727
      %v2915 = vpop.f32.mrb[0].mxu0
      %v2916 = vadd.f32 0.0, %v2915
      %v2917 = vpop.f32.mrb[0].mxu0
      %2918 = vmatprep.mubr.f32.mxu0 0.0
      %2919 = vmatmul.mubr.f32.gmra.mrb[0].mxu0 %v2729
      %v2920 = vpop.f32.mrb[0].mxu0
      %v2921 = vadd.f32 0.0, %v2920
      %v2922 = vpop.f32.mrb[0].mxu0
      %2923 = vmatprep.mubr.f32.mxu0 0.0
      %2924 = vmatmul.mubr.f32.gmra.mrb[0].mxu0 %v2731
      %v2925 = vpop.f32.mrb[0].mxu0
      %v2926 = vadd.f32 0.0, %v2925
      %v2927 = vpop.f32.mrb[0].mxu0
      %2928 = vmatprep.mubr.f32.mxu0 0.0
      %2929 = vmatmul.mubr.f32.gmra.mrb[0].mxu0 %v2733
      %v2930 = vpop.f32.mrb[0].mxu0
      %v2931 = vadd.f32 0.0, %v2930
      %v2932 = vpop.f32.mrb[0].mxu0
      %2933 = vmatprep.mubr.f32.mxu0 0.0
      %2934 = vmatmul.mubr.f32.gmra.mrb[0].mxu0 %v2735
      %v2935 = vpop.f32.mrb[0].mxu0
      %v2936 = vadd.f32 0.0, %v2935
      %v2937 = vpop.f32.mrb[0].mxu0
      %2938 = vmatprep.mubr.f32.mxu0 0.0
      %2939 = vmatmul.mubr.f32.gmra.mrb[0].mxu0 %v2737
      %v2940 = vpop.f32.mrb[0].mxu0
      %v2941 = vadd.f32 0.0, %v2940
      %v2942 = vpop.f32.mrb[0].mxu0
      %2943 = vmatprep.mubr.f32.mxu0 0.0
      %2944 = vmatmul.mubr.f32.gmra.mrb[0].mxu0 %v2739
      %v2945 = vpop.f32.mrb[0].mxu0
      %v2946 = vadd.f32 0.0, %v2945
      %v2947 = vpop.f32.mrb[0].mxu0
      %2948 = vmatprep.mubr.f32.mxu0 0.0
      %2949 = vmatmul.mubr.f32.gmra.mrb[0].mxu0 %v2741
      %v2950 = vpop.f32.mrb[0].mxu0
      %v2951 = vadd.f32 0.0, %v2950
      %v2952 = vpop.f32.mrb[0].mxu0
      %2953 = vmatprep.mubr.f32.mxu0 0.0
      %2954 = vmatmul.mubr.f32.gmra.mrb[0].mxu0 %v2743
      %v2955 = vpop.f32.mrb[0].mxu0
      %v2956 = vadd.f32 0.0, %v2955
      %v2957 = vpop.f32.mrb[0].mxu0
      %2958 = vmatprep.mubr.f32.mxu0 0.0
      %2959 = vmatmul.mubr.f32.gmra.mrb[0].mxu0 %v2745
      %v2960 = vpop.f32.mrb[0].mxu0
      %v2961 = vadd.f32 0.0, %v2960
      %v2962 = vpop.f32.mrb[0].mxu0
      %2963 = vmatprep.mubr.f32.mxu0 0.0
      %2964 = vmatmul.mubr.f32.gmra.mrb[0].mxu0 %v2747
      %v2965 = vpop.f32.mrb[0].mxu0
      %v2966 = vadd.f32 0.0, %v2965
      %v2967 = vpop.f32.mrb[0].mxu0
      %2968 = vmatprep.mubr.f32.mxu0 0.0
      %2969 = vmatmul.mubr.f32.gmra.mrb[0].mxu0 %v2749
      %v2970 = vpop.f32.mrb[0].mxu0
      %v2971 = vadd.f32 0.0, %v2970
      %v2972 = vpop.f32.mrb[0].mxu0
      %2973 = vmatprep.mubr.f32.mxu0 0.0
      %2974 = vmatmul.mubr.f32.gmra.mrb[0].mxu0 %v2751
      %v2975 = vpop.f32.mrb[0].mxu0
      %v2976 = vadd.f32 0.0, %v2975
      %v2977 = vpop.f32.mrb[0].mxu0
      %2978 = vmatprep.mubr.f32.mxu0 0.0
      %2979 = vmatmul.mubr.f32.gmra.mrb[0].mxu0 %v2753
      %v2980 = vpop.f32.mrb[0].mxu0
      %v2981 = vadd.f32 0.0, %v2980
      %v2982 = vpop.f32.mrb[0].mxu0
      %2983 = vmatprep.mubr.f32.mxu0 0.0
      %2984 = vmatmul.mubr.f32.gmra.mrb[0].mxu0 %v2755
      %v2985 = vpop.f32.mrb[0].mxu0
      %v2986 = vadd.f32 0.0, %v2985
      %v2987 = vpop.f32.mrb[0].mxu0
      %2988 = vmatprep.mubr.f32.mxu0 0.0
      %2989 = vmatmul.mubr.f32.gmra.mrb[0].mxu0 %v2757
      %v2990 = vpop.f32.mrb[0].mxu0
      %v2991 = vadd.f32 0.0, %v2990
      %v2992 = vpop.f32.mrb[0].mxu0
      %2993 = vmatprep.mubr.f32.mxu0 0.0
      %2994 = vmatmul.mubr.f32.gmra.mrb[0].mxu0 %v2759
      %v2995 = vpop.f32.mrb[0].mxu0
      %v2996 = vadd.f32 0.0, %v2995
      %v2997 = vpop.f32.mrb[0].mxu0
      %2998 = vmatprep.mubr.f32.mxu0 0.0
      %2999 = vmatmul.mubr.f32.gmra.mrb[0].mxu0 %v2761
      %v3000 = vpop.f32.mrb[0].mxu0
      %v3001 = vadd.f32 0.0, %v3000
      %v3002 = vpop.f32.mrb[0].mxu0
      %3003 = vmatprep.mubr.f32.mxu0 0.0
      %3004 = vmatmul.mubr.f32.gmra.mrb[0].mxu0 %v2763
      %v3005 = vpop.f32.mrb[0].mxu0
      %v3006 = vadd.f32 0.0, %v3005
      %v3007 = vpop.f32.mrb[0].mxu0
      %3008 = vmatprep.mubr.f32.mxu0 0.0
      %3009 = vmatmul.mubr.f32.gmra.mrb[0].mxu0 %v2765
      %v3010 = vpop.f32.mrb[0].mxu0
      %v3011 = vadd.f32 0.0, %v3010
      %v3012 = vpop.f32.mrb[0].mxu0
      %3013 = vmatprep.mubr.f32.mxu0 0.0
      %3014 = vmatmul.mubr.f32.gmra.mrb[0].mxu0 %v2767
      %v3015 = vpop.f32.mrb[0].mxu0
      %v3016 = vadd.f32 0.0, %v3015
      %v3017 = vpop.f32.mrb[0].mxu0
      %3018 = vmatprep.mubr.f32.mxu0 0.0
      %3019 = vmatmul.mubr.f32.gmra.mrb[0].mxu0 %v2769
      %v3020 = vpop.f32.mrb[0].mxu0
      %v3021 = vadd.f32 0.0, %v3020
      %v3022 = vpop.f32.mrb[0].mxu0
      %3023 = vmatprep.mubr.f32.mxu0 0.0
      %3024 = vmatmul.mubr.f32.gmra.mrb[0].mxu0 %v2771
      %v3025 = vpop.f32.mrb[0].mxu0
      %v3026 = vadd.f32 0.0, %v3025
      %v3027 = vpop.f32.mrb[0].mxu0
      %3028 = vmatprep.mubr.f32.mxu0 0.0
      %3029 = vmatmul.mubr.f32.gmra.mrb[0].mxu0 %v2773
      %v3030 = vpop.f32.mrb[0].mxu0
      %v3031 = vadd.f32 0.0, %v3030
      %v3032 = vpop.f32.mrb[0].mxu0
      %3033 = vmatprep.mubr.f32.mxu0 0.0
      %3034 = vmatmul.mubr.f32.gmra.mrb[0].mxu0 %v2775
      %v3035 = vpop.f32.mrb[0].mxu0
      %v3036 = vadd.f32 0.0, %v3035
      %v3037 = vpop.f32.mrb[0].mxu0
      %3038 = vmatprep.mubr.f32.mxu0 0.0
      %3039 = vmatmul.mubr.f32.gmra.mrb[0].mxu0 %v2777
      %v3040 = vpop.f32.mrb[0].mxu0
      %v3041 = vadd.f32 0.0, %v3040
      %v3042 = vpop.f32.mrb[0].mxu0
      %3043 = vmatprep.mubr.f32.mxu0 0.0
      %3044 = vmatmul.mubr.f32.gmra.mrb[0].mxu0 %v2779
      %v3045 = vpop.f32.mrb[0].mxu0
      %v3046 = vadd.f32 0.0, %v3045
      %v3047 = vpop.f32.mrb[0].mxu0
      %3048 = vmatprep.mubr.f32.mxu0 0.0
      %3049 = vmatmul.mubr.f32.gmra.mrb[0].mxu0 %v2781
      %v3050 = vpop.f32.mrb[0].mxu0
      %v3051 = vadd.f32 0.0, %v3050
      %v3052 = vpop.f32.mrb[0].mxu0
      %3053 = vmatprep.mubr.f32.mxu0 0.0
      %3054 = vmatmul.mubr.f32.gmra.mrb[0].mxu0 %v2783
      %v3055 = vpop.f32.mrb[0].mxu0
      %v3056 = vadd.f32 0.0, %v3055
      %v3057 = vpop.f32.mrb[0].mxu0
      %3058 = vmatprep.mubr.f32.mxu0 0.0
      %3059 = vmatmul.mubr.f32.gmra.mrb[0].mxu0 %v2785
      %v3060 = vpop.f32.mrb[0].mxu0
      %v3061 = vadd.f32 0.0, %v3060
      %v3062 = vpop.f32.mrb[0].mxu0
      %3063 = vmatprep.mubr.f32.mxu0 0.0
      %3064 = vmatmul.mubr.f32.gmra.mrb[0].mxu0 %v2787
      %v3065 = vpop.f32.mrb[0].mxu0
      %v3066 = vadd.f32 0.0, %v3065
      %v3067 = vpop.f32.mrb[0].mxu0
      %3068 = vmatprep.mubr.f32.mxu0 0.0
      %3069 = vmatmul.mubr.f32.gmra.mrb[0].mxu0 %v2789
      %v3070 = vpop.f32.mrb[0].mxu0
      %v3071 = vadd.f32 0.0, %v3070
      %v3072 = vpop.f32.mrb[0].mxu0
      %3073 = vmatprep.mubr.f32.mxu0 0.0
      %3074 = vmatmul.mubr.f32.gmra.mrb[0].mxu0 %v2791
      %v3075 = vpop.f32.mrb[0].mxu0
      %v3076 = vadd.f32 0.0, %v3075
      %v3077 = vpop.f32.mrb[0].mxu0
      %3078 = vmatprep.mubr.f32.mxu0 0.0
      %3079 = vmatmul.mubr.f32.gmra.mrb[0].mxu0 %v2793
      %v3080 = vpop.f32.mrb[0].mxu0
      %v3081 = vadd.f32 0.0, %v3080
      %v3082 = vpop.f32.mrb[0].mxu0
      %3083 = vmatprep.mubr.f32.mxu0 0.0
      %3084 = vmatmul.mubr.f32.gmra.mrb[0].mxu0 %v2795
      %v3085 = vpop.f32.mrb[0].mxu0
      %v3086 = vadd.f32 0.0, %v3085
      %v3087 = vpop.f32.mrb[0].mxu0
      %3088 = vmatprep.mubr.f32.mxu0 0.0
      %3089 = vmatmul.mubr.f32.gmra.mrb[0].mxu0 %v2797
      %v3090 = vpop.f32.mrb[0].mxu0
      %v3091 = vadd.f32 0.0, %v3090
      %v3092 = vpop.f32.mrb[0].mxu0
      %3093 = vmatprep.mubr.f32.mxu0 0.0
      %3094 = vmatmul.mubr.f32.gmra.mrb[0].mxu0 %v2799
      %v3095 = vpop.f32.mrb[0].mxu0
      %v3096 = vadd.f32 0.0, %v3095
      %v3097 = vpop.f32.mrb[0].mxu0
      %3098 = vdwg.mxu0
      %v3099 = vadd.f32 %v2570, %v2871
      %v3100 = vadd.f32 %v2571, %v2876
      %v3101 = vadd.f32 %v2572, %v2881
      %v3102 = vadd.f32 %v2573, %v2886
      %v3103 = vadd.f32 %v2574, %v2891
      %v3104 = vadd.f32 %v2575, %v2896
      %v3105 = vadd.f32 %v2576, %v2901
      %v3106 = vadd.f32 %v2577, %v2906
      %v3107 = vadd.f32 %v2578, %v2911
      %v3108 = vadd.f32 %v2579, %v2916
      %v3109 = vadd.f32 %v2580, %v2921
      %v3110 = vadd.f32 %v2581, %v2926
      %v3111 = vadd.f32 %v2582, %v2931
      %v3112 = vadd.f32 %v2583, %v2936
      %v3113 = vadd.f32 %v2584, %v2941
      %v3114 = vadd.f32 %v2585, %v2946
      %v3115 = vadd.f32 %v2586, %v2951
      %v3116 = vadd.f32 %v2587, %v2956
      %v3117 = vadd.f32 %v2588, %v2961
      %v3118 = vadd.f32 %v2589, %v2966
      %v3119 = vadd.f32 %v2590, %v2971
      %v3120 = vadd.f32 %v2591, %v2976
      %v3121 = vadd.f32 %v2592, %v2981
      %v3122 = vadd.f32 %v2593, %v2986
      %v3123 = vadd.f32 %v2594, %v2991
      %v3124 = vadd.f32 %v2595, %v2996
      %v3125 = vadd.f32 %v2596, %v3001
      %v3126 = vadd.f32 %v2597, %v3006
      %v3127 = vadd.f32 %v2598, %v3011
      %v3128 = vadd.f32 %v2599, %v3016
      %v3129 = vadd.f32 %v2600, %v3021
      %v3130 = vadd.f32 %v2601, %v3026
      %v3131 = vadd.f32 %v2602, %v3031
      %v3132 = vadd.f32 %v2603, %v3036
      %v3133 = vadd.f32 %v2604, %v3041
      %v3134 = vadd.f32 %v2605, %v3046
      %v3135 = vadd.f32 %v2606, %v3051
      %v3136 = vadd.f32 %v2607, %v3056
      %v3137 = vadd.f32 %v2608, %v3061
      %v3138 = vadd.f32 %v2609, %v3066
      %v3139 = vadd.f32 %v2610, %v3071
      %v3140 = vadd.f32 %v2611, %v3076
      %v3141 = vadd.f32 %v2612, %v3081
      %v3142 = vadd.f32 %v2613, %v3086
      %v3143 = vadd.f32 %v2614, %v3091
      %v3144 = vadd.f32 %v2615, %v3096
      %s3145 = scalar_lea.vmem %s1, 24
      %v3146 = vld [vmem:[%s3145] sm:$0xf]
      %v3149 = vrot.slane %v273, 4
      %v3150 = vsel %vm509, %v2707, %v3149
      %v3151 = vrot.slane %v274, 4
      %v3152 = vsel %vm509, %v3149, %v3151
      %v3153 = vsel %vm416, %v3150, 0
      %v3155 = vsel %vm416, %v3152, 0
      %v3157 = vsel %vm416, %v3151, 0
      %v3160 = vsel %vm509, %v3146, 0
      %3162 = vmatprep.subr.mxu0 0.0
      %3163 = vmatpush1.msra.mxu0 %v3160
      %3164 = vmatprep.subr.mxu0 0.0
      %3165 = vmatpush1.msra.mxu0 0.0
      %3166 = vmatprep.subr.mxu0 0.0
      %3167 = vmatpush1.msra.mxu0 0.0
      %3168 = vmatprep.subr.mxu0 0.0
      %3169 = vmatpush1.msra.mxu0 0.0
      %3170 = vmatprep.subr.mxu0 0.0
      %3171 = vmatpush1.msra.mxu0 0.0
      %3172 = vmatprep.subr.mxu0 0.0
      %3173 = vmatpush1.msra.mxu0 0.0
      %3174 = vmatprep.subr.mxu0 0.0
      %3175 = vmatpush1.msra.mxu0 0.0
      %3176 = vmatprep.subr.mxu0 0.0
      %3177 = vmatpush1.msra.mxu0 0.0
      %3178 = vmatprep.subr.mxu0 0.0
      %3179 = vmatpush1.msra.mxu0 0.0
      %3180 = vmatprep.subr.mxu0 0.0
      %3181 = vmatpush1.msra.mxu0 0.0
      %3182 = vmatprep.subr.mxu0 0.0
      %3183 = vmatpush1.msra.mxu0 0.0
      %3184 = vmatprep.subr.mxu0 0.0
      %3185 = vmatpush1.msra.mxu0 0.0
      %3186 = vmatprep.subr.mxu0 0.0
      %3187 = vmatpush1.msra.mxu0 0.0
      %3188 = vmatprep.subr.mxu0 0.0
      %3189 = vmatpush1.msra.mxu0 0.0
      %3190 = vmatprep.subr.mxu0 0.0
      %3191 = vmatpush1.msra.mxu0 0.0
      %3192 = vmatprep.subr.mxu0 0.0
      %3193 = vmatpush1.msra.mxu0 0.0
      %3194 = vmatprep.subr.mxu0 0.0
      %3195 = vmatpush1.msra.mxu0 0.0
      %3196 = vmatprep.subr.mxu0 0.0
      %3197 = vmatpush1.msra.mxu0 0.0
      %3198 = vmatprep.subr.mxu0 0.0
      %3199 = vmatpush1.msra.mxu0 0.0
      %3200 = vmatprep.subr.mxu0 0.0
      %3201 = vmatpush1.msra.mxu0 0.0
      %3202 = vmatprep.subr.mxu0 0.0
      %3203 = vmatpush1.msra.mxu0 0.0
      %3204 = vmatprep.subr.mxu0 0.0
      %3205 = vmatpush1.msra.mxu0 0.0
      %3206 = vmatprep.subr.mxu0 0.0
      %3207 = vmatpush1.msra.mxu0 0.0
      %3208 = vmatprep.subr.mxu0 0.0
      %3209 = vmatpush1.msra.mxu0 0.0
      %3210 = vmatprep.subr.mxu0 0.0
      %3211 = vmatpush1.msra.mxu0 0.0
      %3212 = vmatprep.subr.mxu0 0.0
      %3213 = vmatpush1.msra.mxu0 0.0
      %3214 = vmatprep.subr.mxu0 0.0
      %3215 = vmatpush1.msra.mxu0 0.0
      %3216 = vmatprep.subr.mxu0 0.0
      %3217 = vmatpush1.msra.mxu0 0.0
      %3218 = vmatprep.subr.mxu0 0.0
      %3219 = vmatpush1.msra.mxu0 0.0
      %3220 = vmatprep.subr.mxu0 0.0
      %3221 = vmatpush1.msra.mxu0 0.0
      %3222 = vmatprep.subr.mxu0 0.0
      %3223 = vmatpush1.msra.mxu0 0.0
      %3224 = vmatprep.subr.mxu0 0.0
      %3225 = vmatpush1.msra.mxu0 0.0
      %3226 = vmatprep.mubr.f32.mxu0 0.0
      %3227 = vmatmul.mubr.f32.gmra.mrb[0].mxu0 %v2713
      %v3228 = vpop.f32.mrb[0].mxu0
      %v3229 = vadd.f32 0.0, %v3228
      %v3230 = vpop.f32.mrb[0].mxu0
      %3231 = vmatprep.mubr.f32.mxu0 0.0
      %3232 = vmatmul.mubr.f32.gmra.mrb[0].mxu0 %v2715
      %v3233 = vpop.f32.mrb[0].mxu0
      %v3234 = vadd.f32 0.0, %v3233
      %v3235 = vpop.f32.mrb[0].mxu0
      %3236 = vmatprep.mubr.f32.mxu0 0.0
      %3237 = vmatmul.mubr.f32.gmra.mrb[0].mxu0 %v2717
      %v3238 = vpop.f32.mrb[0].mxu0
      %v3239 = vadd.f32 0.0, %v3238
      %v3240 = vpop.f32.mrb[0].mxu0
      %3241 = vmatprep.mubr.f32.mxu0 0.0
      %3242 = vmatmul.mubr.f32.gmra.mrb[0].mxu0 %v2719
      %v3243 = vpop.f32.mrb[0].mxu0
      %v3244 = vadd.f32 0.0, %v3243
      %v3245 = vpop.f32.mrb[0].mxu0
      %3246 = vmatprep.mubr.f32.mxu0 0.0
      %3247 = vmatmul.mubr.f32.gmra.mrb[0].mxu0 %v2721
      %v3248 = vpop.f32.mrb[0].mxu0
      %v3249 = vadd.f32 0.0, %v3248
      %v3250 = vpop.f32.mrb[0].mxu0
      %3251 = vmatprep.mubr.f32.mxu0 0.0
      %3252 = vmatmul.mubr.f32.gmra.mrb[0].mxu0 %v2723
      %v3253 = vpop.f32.mrb[0].mxu0
      %v3254 = vadd.f32 0.0, %v3253
      %v3255 = vpop.f32.mrb[0].mxu0
      %3256 = vmatprep.mubr.f32.mxu0 0.0
      %3257 = vmatmul.mubr.f32.gmra.mrb[0].mxu0 %v2725
      %v3258 = vpop.f32.mrb[0].mxu0
      %v3259 = vadd.f32 0.0, %v3258
      %v3260 = vpop.f32.mrb[0].mxu0
      %3261 = vmatprep.mubr.f32.mxu0 0.0
      %3262 = vmatmul.mubr.f32.gmra.mrb[0].mxu0 %v2727
      %v3263 = vpop.f32.mrb[0].mxu0
      %v3264 = vadd.f32 0.0, %v3263
      %v3265 = vpop.f32.mrb[0].mxu0
      %3266 = vmatprep.mubr.f32.mxu0 0.0
      %3267 = vmatmul.mubr.f32.gmra.mrb[0].mxu0 %v2729
      %v3268 = vpop.f32.mrb[0].mxu0
      %v3269 = vadd.f32 0.0, %v3268
      %v3270 = vpop.f32.mrb[0].mxu0
      %3271 = vmatprep.mubr.f32.mxu0 0.0
      %3272 = vmatmul.mubr.f32.gmra.mrb[0].mxu0 %v2731
      %v3273 = vpop.f32.mrb[0].mxu0
      %v3274 = vadd.f32 0.0, %v3273
      %v3275 = vpop.f32.mrb[0].mxu0
      %3276 = vmatprep.mubr.f32.mxu0 0.0
      %3277 = vmatmul.mubr.f32.gmra.mrb[0].mxu0 %v2733
      %v3278 = vpop.f32.mrb[0].mxu0
      %v3279 = vadd.f32 0.0, %v3278
      %v3280 = vpop.f32.mrb[0].mxu0
      %3281 = vmatprep.mubr.f32.mxu0 0.0
      %3282 = vmatmul.mubr.f32.gmra.mrb[0].mxu0 %v2735
      %v3283 = vpop.f32.mrb[0].mxu0
      %v3284 = vadd.f32 0.0, %v3283
      %v3285 = vpop.f32.mrb[0].mxu0
      %3286 = vmatprep.mubr.f32.mxu0 0.0
      %3287 = vmatmul.mubr.f32.gmra.mrb[0].mxu0 %v2737
      %v3288 = vpop.f32.mrb[0].mxu0
      %v3289 = vadd.f32 0.0, %v3288
      %v3290 = vpop.f32.mrb[0].mxu0
      %3291 = vmatprep.mubr.f32.mxu0 0.0
      %3292 = vmatmul.mubr.f32.gmra.mrb[0].mxu0 %v2739
      %v3293 = vpop.f32.mrb[0].mxu0
      %v3294 = vadd.f32 0.0, %v3293
      %v3295 = vpop.f32.mrb[0].mxu0
      %3296 = vmatprep.mubr.f32.mxu0 0.0
      %3297 = vmatmul.mubr.f32.gmra.mrb[0].mxu0 %v2741
      %v3298 = vpop.f32.mrb[0].mxu0
      %v3299 = vadd.f32 0.0, %v3298
      %v3300 = vpop.f32.mrb[0].mxu0
      %3301 = vmatprep.mubr.f32.mxu0 0.0
      %3302 = vmatmul.mubr.f32.gmra.mrb[0].mxu0 %v2743
      %v3303 = vpop.f32.mrb[0].mxu0
      %v3304 = vadd.f32 0.0, %v3303
      %v3305 = vpop.f32.mrb[0].mxu0
      %3306 = vmatprep.mubr.f32.mxu0 0.0
      %3307 = vmatmul.mubr.f32.gmra.mrb[0].mxu0 %v2745
      %v3308 = vpop.f32.mrb[0].mxu0
      %v3309 = vadd.f32 0.0, %v3308
      %v3310 = vpop.f32.mrb[0].mxu0
      %3311 = vmatprep.mubr.f32.mxu0 0.0
      %3312 = vmatmul.mubr.f32.gmra.mrb[0].mxu0 %v2747
      %v3313 = vpop.f32.mrb[0].mxu0
      %v3314 = vadd.f32 0.0, %v3313
      %v3315 = vpop.f32.mrb[0].mxu0
      %3316 = vmatprep.mubr.f32.mxu0 0.0
      %3317 = vmatmul.mubr.f32.gmra.mrb[0].mxu0 %v2749
      %v3318 = vpop.f32.mrb[0].mxu0
      %v3319 = vadd.f32 0.0, %v3318
      %v3320 = vpop.f32.mrb[0].mxu0
      %3321 = vmatprep.mubr.f32.mxu0 0.0
      %3322 = vmatmul.mubr.f32.gmra.mrb[0].mxu0 %v2751
      %v3323 = vpop.f32.mrb[0].mxu0
      %v3324 = vadd.f32 0.0, %v3323
      %v3325 = vpop.f32.mrb[0].mxu0
      %3326 = vmatprep.mubr.f32.mxu0 0.0
      %3327 = vmatmul.mubr.f32.gmra.mrb[0].mxu0 %v2753
      %v3328 = vpop.f32.mrb[0].mxu0
      %v3329 = vadd.f32 0.0, %v3328
      %v3330 = vpop.f32.mrb[0].mxu0
      %3331 = vmatprep.mubr.f32.mxu0 0.0
      %3332 = vmatmul.mubr.f32.gmra.mrb[0].mxu0 %v2755
      %v3333 = vpop.f32.mrb[0].mxu0
      %v3334 = vadd.f32 0.0, %v3333
      %v3335 = vpop.f32.mrb[0].mxu0
      %3336 = vmatprep.mubr.f32.mxu0 0.0
      %3337 = vmatmul.mubr.f32.gmra.mrb[0].mxu0 %v2757
      %v3338 = vpop.f32.mrb[0].mxu0
      %v3339 = vadd.f32 0.0, %v3338
      %v3340 = vpop.f32.mrb[0].mxu0
      %3341 = vmatprep.mubr.f32.mxu0 0.0
      %3342 = vmatmul.mubr.f32.gmra.mrb[0].mxu0 %v2759
      %v3343 = vpop.f32.mrb[0].mxu0
      %v3344 = vadd.f32 0.0, %v3343
      %v3345 = vpop.f32.mrb[0].mxu0
      %3346 = vmatprep.mubr.f32.mxu0 0.0
      %3347 = vmatmul.mubr.f32.gmra.mrb[0].mxu0 %v2761
      %v3348 = vpop.f32.mrb[0].mxu0
      %v3349 = vadd.f32 0.0, %v3348
      %v3350 = vpop.f32.mrb[0].mxu0
      %3351 = vmatprep.mubr.f32.mxu0 0.0
      %3352 = vmatmul.mubr.f32.gmra.mrb[0].mxu0 %v2763
      %v3353 = vpop.f32.mrb[0].mxu0
      %v3354 = vadd.f32 0.0, %v3353
      %v3355 = vpop.f32.mrb[0].mxu0
      %3356 = vmatprep.mubr.f32.mxu0 0.0
      %3357 = vmatmul.mubr.f32.gmra.mrb[0].mxu0 %v2765
      %v3358 = vpop.f32.mrb[0].mxu0
      %v3359 = vadd.f32 0.0, %v3358
      %v3360 = vpop.f32.mrb[0].mxu0
      %3361 = vmatprep.mubr.f32.mxu0 0.0
      %3362 = vmatmul.mubr.f32.gmra.mrb[0].mxu0 %v2767
      %v3363 = vpop.f32.mrb[0].mxu0
      %v3364 = vadd.f32 0.0, %v3363
      %v3365 = vpop.f32.mrb[0].mxu0
      %3366 = vmatprep.mubr.f32.mxu0 0.0
      %3367 = vmatmul.mubr.f32.gmra.mrb[0].mxu0 %v2769
      %v3368 = vpop.f32.mrb[0].mxu0
      %v3369 = vadd.f32 0.0, %v3368
      %v3370 = vpop.f32.mrb[0].mxu0
      %3371 = vmatprep.mubr.f32.mxu0 0.0
      %3372 = vmatmul.mubr.f32.gmra.mrb[0].mxu0 %v2771
      %v3373 = vpop.f32.mrb[0].mxu0
      %v3374 = vadd.f32 0.0, %v3373
      %v3375 = vpop.f32.mrb[0].mxu0
      %3376 = vmatprep.mubr.f32.mxu0 0.0
      %3377 = vmatmul.mubr.f32.gmra.mrb[0].mxu0 %v2773
      %v3378 = vpop.f32.mrb[0].mxu0
      %v3379 = vadd.f32 0.0, %v3378
      %v3380 = vpop.f32.mrb[0].mxu0
      %3381 = vmatprep.mubr.f32.mxu0 0.0
      %3382 = vmatmul.mubr.f32.gmra.mrb[0].mxu0 %v2775
      %v3383 = vpop.f32.mrb[0].mxu0
      %v3384 = vadd.f32 0.0, %v3383
      %v3385 = vpop.f32.mrb[0].mxu0
      %3386 = vmatprep.mubr.f32.mxu0 0.0
      %3387 = vmatmul.mubr.f32.gmra.mrb[0].mxu0 %v2777
      %v3388 = vpop.f32.mrb[0].mxu0
      %v3389 = vadd.f32 0.0, %v3388
      %v3390 = vpop.f32.mrb[0].mxu0
      %3391 = vmatprep.mubr.f32.mxu0 0.0
      %3392 = vmatmul.mubr.f32.gmra.mrb[0].mxu0 %v2779
      %v3393 = vpop.f32.mrb[0].mxu0
      %v3394 = vadd.f32 0.0, %v3393
      %v3395 = vpop.f32.mrb[0].mxu0
      %3396 = vmatprep.mubr.f32.mxu0 0.0
      %3397 = vmatmul.mubr.f32.gmra.mrb[0].mxu0 %v2781
      %v3398 = vpop.f32.mrb[0].mxu0
      %v3399 = vadd.f32 0.0, %v3398
      %v3400 = vpop.f32.mrb[0].mxu0
      %3401 = vmatprep.mubr.f32.mxu0 0.0
      %3402 = vmatmul.mubr.f32.gmra.mrb[0].mxu0 %v2783
      %v3403 = vpop.f32.mrb[0].mxu0
      %v3404 = vadd.f32 0.0, %v3403
      %v3405 = vpop.f32.mrb[0].mxu0
      %3406 = vmatprep.mubr.f32.mxu0 0.0
      %3407 = vmatmul.mubr.f32.gmra.mrb[0].mxu0 %v2785
      %v3408 = vpop.f32.mrb[0].mxu0
      %v3409 = vadd.f32 0.0, %v3408
      %v3410 = vpop.f32.mrb[0].mxu0
      %3411 = vmatprep.mubr.f32.mxu0 0.0
      %3412 = vmatmul.mubr.f32.gmra.mrb[0].mxu0 %v2787
      %v3413 = vpop.f32.mrb[0].mxu0
      %v3414 = vadd.f32 0.0, %v3413
      %v3415 = vpop.f32.mrb[0].mxu0
      %3416 = vmatprep.mubr.f32.mxu0 0.0
      %3417 = vmatmul.mubr.f32.gmra.mrb[0].mxu0 %v2789
      %v3418 = vpop.f32.mrb[0].mxu0
      %v3419 = vadd.f32 0.0, %v3418
      %v3420 = vpop.f32.mrb[0].mxu0
      %3421 = vmatprep.mubr.f32.mxu0 0.0
      %3422 = vmatmul.mubr.f32.gmra.mrb[0].mxu0 %v2791
      %v3423 = vpop.f32.mrb[0].mxu0
      %v3424 = vadd.f32 0.0, %v3423
      %v3425 = vpop.f32.mrb[0].mxu0
      %3426 = vmatprep.mubr.f32.mxu0 0.0
      %3427 = vmatmul.mubr.f32.gmra.mrb[0].mxu0 %v2793
      %v3428 = vpop.f32.mrb[0].mxu0
      %v3429 = vadd.f32 0.0, %v3428
      %v3430 = vpop.f32.mrb[0].mxu0
      %3431 = vmatprep.mubr.f32.mxu0 0.0
      %3432 = vmatmul.mubr.f32.gmra.mrb[0].mxu0 %v2795
      %v3433 = vpop.f32.mrb[0].mxu0
      %v3434 = vadd.f32 0.0, %v3433
      %v3435 = vpop.f32.mrb[0].mxu0
      %3436 = vmatprep.mubr.f32.mxu0 0.0
      %3437 = vmatmul.mubr.f32.gmra.mrb[0].mxu0 %v2797
      %v3438 = vpop.f32.mrb[0].mxu0
      %v3439 = vadd.f32 0.0, %v3438
      %v3440 = vpop.f32.mrb[0].mxu0
      %3441 = vmatprep.mubr.f32.mxu0 0.0
      %3442 = vmatmul.mubr.f32.gmra.mrb[0].mxu0 %v3153
      %v3443 = vpop.f32.mrb[0].mxu0
      %v3444 = vadd.f32 0.0, %v3443
      %v3445 = vpop.f32.mrb[0].mxu0
      %3446 = vmatprep.mubr.f32.mxu0 0.0
      %3447 = vmatmul.mubr.f32.gmra.mrb[0].mxu0 %v3155
      %v3448 = vpop.f32.mrb[0].mxu0
      %v3449 = vadd.f32 0.0, %v3448
      %v3450 = vpop.f32.mrb[0].mxu0
      %3451 = vmatprep.mubr.f32.mxu0 0.0
      %3452 = vmatmul.mubr.f32.gmra.mrb[0].mxu0 %v3157
      %v3453 = vpop.f32.mrb[0].mxu0
      %v3454 = vadd.f32 0.0, %v3453
      %v3455 = vpop.f32.mrb[0].mxu0
      %3456 = vdwg.mxu0
      %v3457 = vadd.f32 %v3099, %v3229
      %v3458 = vadd.f32 %v3100, %v3234
      %v3459 = vadd.f32 %v3101, %v3239
      %v3460 = vadd.f32 %v3102, %v3244
      %v3461 = vadd.f32 %v3103, %v3249
      %v3462 = vadd.f32 %v3104, %v3254
      %v3463 = vadd.f32 %v3105, %v3259
      %v3464 = vadd.f32 %v3106, %v3264
      %v3465 = vadd.f32 %v3107, %v3269
      %v3466 = vadd.f32 %v3108, %v3274
      %v3467 = vadd.f32 %v3109, %v3279
      %v3468 = vadd.f32 %v3110, %v3284
      %v3469 = vadd.f32 %v3111, %v3289
      %v3470 = vadd.f32 %v3112, %v3294
      %v3471 = vadd.f32 %v3113, %v3299
      %v3472 = vadd.f32 %v3114, %v3304
      %v3473 = vadd.f32 %v3115, %v3309
      %v3474 = vadd.f32 %v3116, %v3314
      %v3475 = vadd.f32 %v3117, %v3319
      %v3476 = vadd.f32 %v3118, %v3324
      %v3477 = vadd.f32 %v3119, %v3329
      %v3478 = vadd.f32 %v3120, %v3334
      %v3479 = vadd.f32 %v3121, %v3339
      %v3480 = vadd.f32 %v3122, %v3344
      %v3481 = vadd.f32 %v3123, %v3349
      %v3482 = vadd.f32 %v3124, %v3354
      %v3483 = vadd.f32 %v3125, %v3359
      %v3484 = vadd.f32 %v3126, %v3364
      %v3485 = vadd.f32 %v3127, %v3369
      %v3486 = vadd.f32 %v3128, %v3374
      %v3487 = vadd.f32 %v3129, %v3379
      %v3488 = vadd.f32 %v3130, %v3384
      %v3489 = vadd.f32 %v3131, %v3389
      %v3490 = vadd.f32 %v3132, %v3394
      %v3491 = vadd.f32 %v3133, %v3399
      %v3492 = vadd.f32 %v3134, %v3404
      %v3493 = vadd.f32 %v3135, %v3409
      %v3494 = vadd.f32 %v3136, %v3414
      %v3495 = vadd.f32 %v3137, %v3419
      %v3496 = vadd.f32 %v3138, %v3424
      %v3497 = vadd.f32 %v3139, %v3429
      %v3498 = vadd.f32 %v3140, %v3434
      %v3499 = vadd.f32 %v3141, %v3439
      %v3500 = vadd.f32 %v3142, %v3444
      %v3501 = vadd.f32 %v3143, %v3449
      %v3502 = vadd.f32 %v3144, %v3454
      %s3503 = scalar_lea.vmem %s1, 28
      %v3504 = vld [vmem:[%s3503] sm:$0xf]
      %vm3505 = vcmask 1042432
      %v3506 = vrot.slane %v229, 5
      %v3507 = vrot.slane %v230, 5
      %v3508 = vsel %vm3505, %v3506, %v3507
      %v3509 = vrot.slane %v231, 5
      %v3510 = vsel %vm3505, %v3507, %v3509
      %v3511 = vrot.slane %v232, 5
      %v3512 = vsel %vm3505, %v3509, %v3511
      %v3513 = vrot.slane %v233, 5
      %v3514 = vsel %vm3505, %v3511, %v3513
      %v3515 = vrot.slane %v234, 5
      %v3516 = vsel %vm3505, %v3513, %v3515
      %v3517 = vrot.slane %v235, 5
      %v3518 = vsel %vm3505, %v3515, %v3517
      %v3519 = vrot.slane %v236, 5
      %v3520 = vsel %vm3505, %v3517, %v3519
      %v3521 = vrot.slane %v237, 5
      %v3522 = vsel %vm3505, %v3519, %v3521
      %v3523 = vrot.slane %v238, 5
      %v3524 = vsel %vm3505, %v3521, %v3523
      %v3525 = vrot.slane %v239, 5
      %v3526 = vsel %vm3505, %v3523, %v3525
      %v3527 = vrot.slane %v240, 5
      %v3528 = vsel %vm3505, %v3525, %v3527
      %v3529 = vrot.slane %v241, 5
      %v3530 = vsel %vm3505, %v3527, %v3529
      %v3531 = vrot.slane %v242, 5
      %v3532 = vsel %vm3505, %v3529, %v3531
      %v3533 = vrot.slane %v243, 5
      %v3534 = vsel %vm3505, %v3531, %v3533
      %v3535 = vrot.slane %v244, 5
      %v3536 = vsel %vm3505, %v3533, %v3535
      %v3537 = vrot.slane %v245, 5
      %v3538 = vsel %vm3505, %v3535, %v3537
      %v3539 = vrot.slane %v246, 5
      %v3540 = vsel %vm3505, %v3537, %v3539
      %v3541 = vrot.slane %v247, 5
      %v3542 = vsel %vm3505, %v3539, %v3541
      %v3543 = vrot.slane %v248, 5
      %v3544 = vsel %vm3505, %v3541, %v3543
      %v3545 = vrot.slane %v249, 5
      %v3546 = vsel %vm3505, %v3543, %v3545
      %v3547 = vrot.slane %v250, 5
      %v3548 = vsel %vm3505, %v3545, %v3547
      %v3549 = vrot.slane %v251, 5
      %v3550 = vsel %vm3505, %v3547, %v3549
      %v3551 = vrot.slane %v252, 5
      %v3552 = vsel %vm3505, %v3549, %v3551
      %v3553 = vrot.slane %v253, 5
      %v3554 = vsel %vm3505, %v3551, %v3553
      %v3555 = vrot.slane %v254, 5
      %v3556 = vsel %vm3505, %v3553, %v3555
      %v3557 = vrot.slane %v255, 5
      %v3558 = vsel %vm3505, %v3555, %v3557
      %v3559 = vrot.slane %v256, 5
      %v3560 = vsel %vm3505, %v3557, %v3559
      %v3561 = vrot.slane %v257, 5
      %v3562 = vsel %vm3505, %v3559, %v3561
      %v3563 = vrot.slane %v258, 5
      %v3564 = vsel %vm3505, %v3561, %v3563
      %v3565 = vrot.slane %v259, 5
      %v3566 = vsel %vm3505, %v3563, %v3565
      %v3567 = vrot.slane %v260, 5
      %v3568 = vsel %vm3505, %v3565, %v3567
      %v3569 = vrot.slane %v261, 5
      %v3570 = vsel %vm3505, %v3567, %v3569
      %v3571 = vrot.slane %v262, 5
      %v3572 = vsel %vm3505, %v3569, %v3571
      %v3573 = vrot.slane %v263, 5
      %v3574 = vsel %vm3505, %v3571, %v3573
      %v3575 = vrot.slane %v264, 5
      %v3576 = vsel %vm3505, %v3573, %v3575
      %v3577 = vrot.slane %v265, 5
      %v3578 = vsel %vm3505, %v3575, %v3577
      %v3579 = vrot.slane %v266, 5
      %v3580 = vsel %vm3505, %v3577, %v3579
      %v3581 = vrot.slane %v267, 5
      %v3582 = vsel %vm3505, %v3579, %v3581
      %v3583 = vrot.slane %v268, 5
      %v3584 = vsel %vm3505, %v3581, %v3583
      %v3585 = vrot.slane %v269, 5
      %v3586 = vsel %vm3505, %v3583, %v3585
      %v3587 = vrot.slane %v270, 5
      %v3588 = vsel %vm3505, %v3585, %v3587
      %v3589 = vrot.slane %v271, 5
      %v3590 = vsel %vm3505, %v3587, %v3589
      %v3591 = vrot.slane %v272, 5
      %v3592 = vsel %vm3505, %v3589, %v3591
      %v3593 = vrot.slane %v273, 5
      %v3594 = vsel %vm3505, %v3591, %v3593
      %v3595 = vrot.slane %v274, 5
      %v3596 = vsel %vm3505, %v3593, %v3595
      %v3597 = vsel %vm416, %v3508, 0
      %v3599 = vsel %vm416, %v3510, 0
      %v3601 = vsel %vm416, %v3512, 0
      %v3603 = vsel %vm416, %v3514, 0
      %v3605 = vsel %vm416, %v3516, 0
      %v3607 = vsel %vm416, %v3518, 0
      %v3609 = vsel %vm416, %v3520, 0
      %v3611 = vsel %vm416, %v3522, 0
      %v3613 = vsel %vm416, %v3524, 0
      %v3615 = vsel %vm416, %v3526, 0
      %v3617 = vsel %vm416, %v3528, 0
      %v3619 = vsel %vm416, %v3530, 0
      %v3621 = vsel %vm416, %v3532, 0
      %v3623 = vsel %vm416, %v3534, 0
      %v3625 = vsel %vm416, %v3536, 0
      %v3627 = vsel %vm416, %v3538, 0
      %v3629 = vsel %vm416, %v3540, 0
      %v3631 = vsel %vm416, %v3542, 0
      %v3633 = vsel %vm416, %v3544, 0
      %v3635 = vsel %vm416, %v3546, 0
      %v3637 = vsel %vm416, %v3548, 0
      %v3639 = vsel %vm416, %v3550, 0
      %v3641 = vsel %vm416, %v3552, 0
      %v3643 = vsel %vm416, %v3554, 0
      %v3645 = vsel %vm416, %v3556, 0
      %v3647 = vsel %vm416, %v3558, 0
      %v3649 = vsel %vm416, %v3560, 0
      %v3651 = vsel %vm416, %v3562, 0
      %v3653 = vsel %vm416, %v3564, 0
      %v3655 = vsel %vm416, %v3566, 0
      %v3657 = vsel %vm416, %v3568, 0
      %v3659 = vsel %vm416, %v3570, 0
      %v3661 = vsel %vm416, %v3572, 0
      %v3663 = vsel %vm416, %v3574, 0
      %v3665 = vsel %vm416, %v3576, 0
      %v3667 = vsel %vm416, %v3578, 0
      %v3669 = vsel %vm416, %v3580, 0
      %v3671 = vsel %vm416, %v3582, 0
      %v3673 = vsel %vm416, %v3584, 0
      %v3675 = vsel %vm416, %v3586, 0
      %v3677 = vsel %vm416, %v3588, 0
      %v3679 = vsel %vm416, %v3590, 0
      %v3681 = vsel %vm416, %v3592, 0
      %v3683 = vsel %vm416, %v3594, 0
      %v3685 = vsel %vm416, %v3596, 0
      %v3687 = vsel %vm416, %v3595, 0
      %v3690 = vsel %vm509, %v3504, 0
      %3692 = vmatprep.subr.mxu0 0.0
      %3693 = vmatpush1.msra.mxu0 %v3690
      %3694 = vmatprep.subr.mxu0 0.0
      %3695 = vmatpush1.msra.mxu0 0.0
      %3696 = vmatprep.subr.mxu0 0.0
      %3697 = vmatpush1.msra.mxu0 0.0
      %3698 = vmatprep.subr.mxu0 0.0
      %3699 = vmatpush1.msra.mxu0 0.0
      %3700 = vmatprep.subr.mxu0 0.0
      %3701 = vmatpush1.msra.mxu0 0.0
      %3702 = vmatprep.subr.mxu0 0.0
      %3703 = vmatpush1.msra.mxu0 0.0
      %3704 = vmatprep.subr.mxu0 0.0
      %3705 = vmatpush1.msra.mxu0 0.0
      %3706 = vmatprep.subr.mxu0 0.0
      %3707 = vmatpush1.msra.mxu0 0.0
      %3708 = vmatprep.subr.mxu0 0.0
      %3709 = vmatpush1.msra.mxu0 0.0
      %3710 = vmatprep.subr.mxu0 0.0
      %3711 = vmatpush1.msra.mxu0 0.0
      %3712 = vmatprep.subr.mxu0 0.0
      %3713 = vmatpush1.msra.mxu0 0.0
      %3714 = vmatprep.subr.mxu0 0.0
      %3715 = vmatpush1.msra.mxu0 0.0
      %3716 = vmatprep.subr.mxu0 0.0
      %3717 = vmatpush1.msra.mxu0 0.0
      %3718 = vmatprep.subr.mxu0 0.0
      %3719 = vmatpush1.msra.mxu0 0.0
      %3720 = vmatprep.subr.mxu0 0.0
      %3721 = vmatpush1.msra.mxu0 0.0
      %3722 = vmatprep.subr.mxu0 0.0
      %3723 = vmatpush1.msra.mxu0 0.0
      %3724 = vmatprep.subr.mxu0 0.0
      %3725 = vmatpush1.msra.mxu0 0.0
      %3726 = vmatprep.subr.mxu0 0.0
      %3727 = vmatpush1.msra.mxu0 0.0
      %3728 = vmatprep.subr.mxu0 0.0
      %3729 = vmatpush1.msra.mxu0 0.0
      %3730 = vmatprep.subr.mxu0 0.0
      %3731 = vmatpush1.msra.mxu0 0.0
      %3732 = vmatprep.subr.mxu0 0.0
      %3733 = vmatpush1.msra.mxu0 0.0
      %3734 = vmatprep.subr.mxu0 0.0
      %3735 = vmatpush1.msra.mxu0 0.0
      %3736 = vmatprep.subr.mxu0 0.0
      %3737 = vmatpush1.msra.mxu0 0.0
      %3738 = vmatprep.subr.mxu0 0.0
      %3739 = vmatpush1.msra.mxu0 0.0
      %3740 = vmatprep.subr.mxu0 0.0
      %3741 = vmatpush1.msra.mxu0 0.0
      %3742 = vmatprep.subr.mxu0 0.0
      %3743 = vmatpush1.msra.mxu0 0.0
      %3744 = vmatprep.subr.mxu0 0.0
      %3745 = vmatpush1.msra.mxu0 0.0
      %3746 = vmatprep.subr.mxu0 0.0
      %3747 = vmatpush1.msra.mxu0 0.0
      %3748 = vmatprep.subr.mxu0 0.0
      %3749 = vmatpush1.msra.mxu0 0.0
      %3750 = vmatprep.subr.mxu0 0.0
      %3751 = vmatpush1.msra.mxu0 0.0
      %3752 = vmatprep.subr.mxu0 0.0
      %3753 = vmatpush1.msra.mxu0 0.0
      %3754 = vmatprep.subr.mxu0 0.0
      %3755 = vmatpush1.msra.mxu0 0.0
      %3756 = vmatprep.mubr.f32.mxu0 0.0
      %3757 = vmatmul.mubr.f32.gmra.mrb[0].mxu0 %v3597
      %v3758 = vpop.f32.mrb[0].mxu0
      %v3759 = vadd.f32 0.0, %v3758
      %v3760 = vpop.f32.mrb[0].mxu0
      %3761 = vmatprep.mubr.f32.mxu0 0.0
      %3762 = vmatmul.mubr.f32.gmra.mrb[0].mxu0 %v3599
      %v3763 = vpop.f32.mrb[0].mxu0
      %v3764 = vadd.f32 0.0, %v3763
      %v3765 = vpop.f32.mrb[0].mxu0
      %3766 = vmatprep.mubr.f32.mxu0 0.0
      %3767 = vmatmul.mubr.f32.gmra.mrb[0].mxu0 %v3601
      %v3768 = vpop.f32.mrb[0].mxu0
      %v3769 = vadd.f32 0.0, %v3768
      %v3770 = vpop.f32.mrb[0].mxu0
      %3771 = vmatprep.mubr.f32.mxu0 0.0
      %3772 = vmatmul.mubr.f32.gmra.mrb[0].mxu0 %v3603
      %v3773 = vpop.f32.mrb[0].mxu0
      %v3774 = vadd.f32 0.0, %v3773
      %v3775 = vpop.f32.mrb[0].mxu0
      %3776 = vmatprep.mubr.f32.mxu0 0.0
      %3777 = vmatmul.mubr.f32.gmra.mrb[0].mxu0 %v3605
      %v3778 = vpop.f32.mrb[0].mxu0
      %v3779 = vadd.f32 0.0, %v3778
      %v3780 = vpop.f32.mrb[0].mxu0
      %3781 = vmatprep.mubr.f32.mxu0 0.0
      %3782 = vmatmul.mubr.f32.gmra.mrb[0].mxu0 %v3607
      %v3783 = vpop.f32.mrb[0].mxu0
      %v3784 = vadd.f32 0.0, %v3783
      %v3785 = vpop.f32.mrb[0].mxu0
      %3786 = vmatprep.mubr.f32.mxu0 0.0
      %3787 = vmatmul.mubr.f32.gmra.mrb[0].mxu0 %v3609
      %v3788 = vpop.f32.mrb[0].mxu0
      %v3789 = vadd.f32 0.0, %v3788
      %v3790 = vpop.f32.mrb[0].mxu0
      %3791 = vmatprep.mubr.f32.mxu0 0.0
      %3792 = vmatmul.mubr.f32.gmra.mrb[0].mxu0 %v3611
      %v3793 = vpop.f32.mrb[0].mxu0
      %v3794 = vadd.f32 0.0, %v3793
      %v3795 = vpop.f32.mrb[0].mxu0
      %3796 = vmatprep.mubr.f32.mxu0 0.0
      %3797 = vmatmul.mubr.f32.gmra.mrb[0].mxu0 %v3613
      %v3798 = vpop.f32.mrb[0].mxu0
      %v3799 = vadd.f32 0.0, %v3798
      %v3800 = vpop.f32.mrb[0].mxu0
      %3801 = vmatprep.mubr.f32.mxu0 0.0
      %3802 = vmatmul.mubr.f32.gmra.mrb[0].mxu0 %v3615
      %v3803 = vpop.f32.mrb[0].mxu0
      %v3804 = vadd.f32 0.0, %v3803
      %v3805 = vpop.f32.mrb[0].mxu0
      %3806 = vmatprep.mubr.f32.mxu0 0.0
      %3807 = vmatmul.mubr.f32.gmra.mrb[0].mxu0 %v3617
      %v3808 = vpop.f32.mrb[0].mxu0
      %v3809 = vadd.f32 0.0, %v3808
      %v3810 = vpop.f32.mrb[0].mxu0
      %3811 = vmatprep.mubr.f32.mxu0 0.0
      %3812 = vmatmul.mubr.f32.gmra.mrb[0].mxu0 %v3619
      %v3813 = vpop.f32.mrb[0].mxu0
      %v3814 = vadd.f32 0.0, %v3813
      %v3815 = vpop.f32.mrb[0].mxu0
      %3816 = vmatprep.mubr.f32.mxu0 0.0
      %3817 = vmatmul.mubr.f32.gmra.mrb[0].mxu0 %v3621
      %v3818 = vpop.f32.mrb[0].mxu0
      %v3819 = vadd.f32 0.0, %v3818
      %v3820 = vpop.f32.mrb[0].mxu0
      %3821 = vmatprep.mubr.f32.mxu0 0.0
      %3822 = vmatmul.mubr.f32.gmra.mrb[0].mxu0 %v3623
      %v3823 = vpop.f32.mrb[0].mxu0
      %v3824 = vadd.f32 0.0, %v3823
      %v3825 = vpop.f32.mrb[0].mxu0
      %3826 = vmatprep.mubr.f32.mxu0 0.0
      %3827 = vmatmul.mubr.f32.gmra.mrb[0].mxu0 %v3625
      %v3828 = vpop.f32.mrb[0].mxu0
      %v3829 = vadd.f32 0.0, %v3828
      %v3830 = vpop.f32.mrb[0].mxu0
      %3831 = vmatprep.mubr.f32.mxu0 0.0
      %3832 = vmatmul.mubr.f32.gmra.mrb[0].mxu0 %v3627
      %v3833 = vpop.f32.mrb[0].mxu0
      %v3834 = vadd.f32 0.0, %v3833
      %v3835 = vpop.f32.mrb[0].mxu0
      %3836 = vmatprep.mubr.f32.mxu0 0.0
      %3837 = vmatmul.mubr.f32.gmra.mrb[0].mxu0 %v3629
      %v3838 = vpop.f32.mrb[0].mxu0
      %v3839 = vadd.f32 0.0, %v3838
      %v3840 = vpop.f32.mrb[0].mxu0
      %3841 = vmatprep.mubr.f32.mxu0 0.0
      %3842 = vmatmul.mubr.f32.gmra.mrb[0].mxu0 %v3631
      %v3843 = vpop.f32.mrb[0].mxu0
      %v3844 = vadd.f32 0.0, %v3843
      %v3845 = vpop.f32.mrb[0].mxu0
      %3846 = vmatprep.mubr.f32.mxu0 0.0
      %3847 = vmatmul.mubr.f32.gmra.mrb[0].mxu0 %v3633
      %v3848 = vpop.f32.mrb[0].mxu0
      %v3849 = vadd.f32 0.0, %v3848
      %v3850 = vpop.f32.mrb[0].mxu0
      %3851 = vmatprep.mubr.f32.mxu0 0.0
      %3852 = vmatmul.mubr.f32.gmra.mrb[0].mxu0 %v3635
      %v3853 = vpop.f32.mrb[0].mxu0
      %v3854 = vadd.f32 0.0, %v3853
      %v3855 = vpop.f32.mrb[0].mxu0
      %3856 = vmatprep.mubr.f32.mxu0 0.0
      %3857 = vmatmul.mubr.f32.gmra.mrb[0].mxu0 %v3637
      %v3858 = vpop.f32.mrb[0].mxu0
      %v3859 = vadd.f32 0.0, %v3858
      %v3860 = vpop.f32.mrb[0].mxu0
      %3861 = vmatprep.mubr.f32.mxu0 0.0
      %3862 = vmatmul.mubr.f32.gmra.mrb[0].mxu0 %v3639
      %v3863 = vpop.f32.mrb[0].mxu0
      %v3864 = vadd.f32 0.0, %v3863
      %v3865 = vpop.f32.mrb[0].mxu0
      %3866 = vmatprep.mubr.f32.mxu0 0.0
      %3867 = vmatmul.mubr.f32.gmra.mrb[0].mxu0 %v3641
      %v3868 = vpop.f32.mrb[0].mxu0
      %v3869 = vadd.f32 0.0, %v3868
      %v3870 = vpop.f32.mrb[0].mxu0
      %3871 = vmatprep.mubr.f32.mxu0 0.0
      %3872 = vmatmul.mubr.f32.gmra.mrb[0].mxu0 %v3643
      %v3873 = vpop.f32.mrb[0].mxu0
      %v3874 = vadd.f32 0.0, %v3873
      %v3875 = vpop.f32.mrb[0].mxu0
      %3876 = vmatprep.mubr.f32.mxu0 0.0
      %3877 = vmatmul.mubr.f32.gmra.mrb[0].mxu0 %v3645
      %v3878 = vpop.f32.mrb[0].mxu0
      %v3879 = vadd.f32 0.0, %v3878
      %v3880 = vpop.f32.mrb[0].mxu0
      %3881 = vmatprep.mubr.f32.mxu0 0.0
      %3882 = vmatmul.mubr.f32.gmra.mrb[0].mxu0 %v3647
      %v3883 = vpop.f32.mrb[0].mxu0
      %v3884 = vadd.f32 0.0, %v3883
      %v3885 = vpop.f32.mrb[0].mxu0
      %3886 = vmatprep.mubr.f32.mxu0 0.0
      %3887 = vmatmul.mubr.f32.gmra.mrb[0].mxu0 %v3649
      %v3888 = vpop.f32.mrb[0].mxu0
      %v3889 = vadd.f32 0.0, %v3888
      %v3890 = vpop.f32.mrb[0].mxu0
      %3891 = vmatprep.mubr.f32.mxu0 0.0
      %3892 = vmatmul.mubr.f32.gmra.mrb[0].mxu0 %v3651
      %v3893 = vpop.f32.mrb[0].mxu0
      %v3894 = vadd.f32 0.0, %v3893
      %v3895 = vpop.f32.mrb[0].mxu0
      %3896 = vmatprep.mubr.f32.mxu0 0.0
      %3897 = vmatmul.mubr.f32.gmra.mrb[0].mxu0 %v3653
      %v3898 = vpop.f32.mrb[0].mxu0
      %v3899 = vadd.f32 0.0, %v3898
      %v3900 = vpop.f32.mrb[0].mxu0
      %3901 = vmatprep.mubr.f32.mxu0 0.0
      %3902 = vmatmul.mubr.f32.gmra.mrb[0].mxu0 %v3655
      %v3903 = vpop.f32.mrb[0].mxu0
      %v3904 = vadd.f32 0.0, %v3903
      %v3905 = vpop.f32.mrb[0].mxu0
      %3906 = vmatprep.mubr.f32.mxu0 0.0
      %3907 = vmatmul.mubr.f32.gmra.mrb[0].mxu0 %v3657
      %v3908 = vpop.f32.mrb[0].mxu0
      %v3909 = vadd.f32 0.0, %v3908
      %v3910 = vpop.f32.mrb[0].mxu0
      %3911 = vmatprep.mubr.f32.mxu0 0.0
      %3912 = vmatmul.mubr.f32.gmra.mrb[0].mxu0 %v3659
      %v3913 = vpop.f32.mrb[0].mxu0
      %v3914 = vadd.f32 0.0, %v3913
      %v3915 = vpop.f32.mrb[0].mxu0
      %3916 = vmatprep.mubr.f32.mxu0 0.0
      %3917 = vmatmul.mubr.f32.gmra.mrb[0].mxu0 %v3661
      %v3918 = vpop.f32.mrb[0].mxu0
      %v3919 = vadd.f32 0.0, %v3918
      %v3920 = vpop.f32.mrb[0].mxu0
      %3921 = vmatprep.mubr.f32.mxu0 0.0
      %3922 = vmatmul.mubr.f32.gmra.mrb[0].mxu0 %v3663
      %v3923 = vpop.f32.mrb[0].mxu0
      %v3924 = vadd.f32 0.0, %v3923
      %v3925 = vpop.f32.mrb[0].mxu0
      %3926 = vmatprep.mubr.f32.mxu0 0.0
      %3927 = vmatmul.mubr.f32.gmra.mrb[0].mxu0 %v3665
      %v3928 = vpop.f32.mrb[0].mxu0
      %v3929 = vadd.f32 0.0, %v3928
      %v3930 = vpop.f32.mrb[0].mxu0
      %3931 = vmatprep.mubr.f32.mxu0 0.0
      %3932 = vmatmul.mubr.f32.gmra.mrb[0].mxu0 %v3667
      %v3933 = vpop.f32.mrb[0].mxu0
      %v3934 = vadd.f32 0.0, %v3933
      %v3935 = vpop.f32.mrb[0].mxu0
      %3936 = vmatprep.mubr.f32.mxu0 0.0
      %3937 = vmatmul.mubr.f32.gmra.mrb[0].mxu0 %v3669
      %v3938 = vpop.f32.mrb[0].mxu0
      %v3939 = vadd.f32 0.0, %v3938
      %v3940 = vpop.f32.mrb[0].mxu0
      %3941 = vmatprep.mubr.f32.mxu0 0.0
      %3942 = vmatmul.mubr.f32.gmra.mrb[0].mxu0 %v3671
      %v3943 = vpop.f32.mrb[0].mxu0
      %v3944 = vadd.f32 0.0, %v3943
      %v3945 = vpop.f32.mrb[0].mxu0
      %3946 = vmatprep.mubr.f32.mxu0 0.0
      %3947 = vmatmul.mubr.f32.gmra.mrb[0].mxu0 %v3673
      %v3948 = vpop.f32.mrb[0].mxu0
      %v3949 = vadd.f32 0.0, %v3948
      %v3950 = vpop.f32.mrb[0].mxu0
      %3951 = vmatprep.mubr.f32.mxu0 0.0
      %3952 = vmatmul.mubr.f32.gmra.mrb[0].mxu0 %v3675
      %v3953 = vpop.f32.mrb[0].mxu0
      %v3954 = vadd.f32 0.0, %v3953
      %v3955 = vpop.f32.mrb[0].mxu0
      %3956 = vmatprep.mubr.f32.mxu0 0.0
      %3957 = vmatmul.mubr.f32.gmra.mrb[0].mxu0 %v3677
      %v3958 = vpop.f32.mrb[0].mxu0
      %v3959 = vadd.f32 0.0, %v3958
      %v3960 = vpop.f32.mrb[0].mxu0
      %3961 = vmatprep.mubr.f32.mxu0 0.0
      %3962 = vmatmul.mubr.f32.gmra.mrb[0].mxu0 %v3679
      %v3963 = vpop.f32.mrb[0].mxu0
      %v3964 = vadd.f32 0.0, %v3963
      %v3965 = vpop.f32.mrb[0].mxu0
      %3966 = vmatprep.mubr.f32.mxu0 0.0
      %3967 = vmatmul.mubr.f32.gmra.mrb[0].mxu0 %v3681
      %v3968 = vpop.f32.mrb[0].mxu0
      %v3969 = vadd.f32 0.0, %v3968
      %v3970 = vpop.f32.mrb[0].mxu0
      %3971 = vmatprep.mubr.f32.mxu0 0.0
      %3972 = vmatmul.mubr.f32.gmra.mrb[0].mxu0 %v3683
      %v3973 = vpop.f32.mrb[0].mxu0
      %v3974 = vadd.f32 0.0, %v3973
      %v3975 = vpop.f32.mrb[0].mxu0
      %3976 = vmatprep.mubr.f32.mxu0 0.0
      %3977 = vmatmul.mubr.f32.gmra.mrb[0].mxu0 %v3685
      %v3978 = vpop.f32.mrb[0].mxu0
      %v3979 = vadd.f32 0.0, %v3978
      %v3980 = vpop.f32.mrb[0].mxu0
      %3981 = vmatprep.mubr.f32.mxu0 0.0
      %3982 = vmatmul.mubr.f32.gmra.mrb[0].mxu0 %v3687
      %v3983 = vpop.f32.mrb[0].mxu0
      %v3984 = vadd.f32 0.0, %v3983
      %v3985 = vpop.f32.mrb[0].mxu0
      %3986 = vdwg.mxu0
      %v3987 = vadd.f32 %v3457, %v3759
      %v3988 = vadd.f32 %v3458, %v3764
      %v3989 = vadd.f32 %v3459, %v3769
      %v3990 = vadd.f32 %v3460, %v3774
      %v3991 = vadd.f32 %v3461, %v3779
      %v3992 = vadd.f32 %v3462, %v3784
      %v3993 = vadd.f32 %v3463, %v3789
      %v3994 = vadd.f32 %v3464, %v3794
      %v3995 = vadd.f32 %v3465, %v3799
      %v3996 = vadd.f32 %v3466, %v3804
      %v3997 = vadd.f32 %v3467, %v3809
      %v3998 = vadd.f32 %v3468, %v3814
      %v3999 = vadd.f32 %v3469, %v3819
      %v4000 = vadd.f32 %v3470, %v3824
      %v4001 = vadd.f32 %v3471, %v3829
      %v4002 = vadd.f32 %v3472, %v3834
      %v4003 = vadd.f32 %v3473, %v3839
      %v4004 = vadd.f32 %v3474, %v3844
      %v4005 = vadd.f32 %v3475, %v3849
      %v4006 = vadd.f32 %v3476, %v3854
      %v4007 = vadd.f32 %v3477, %v3859
      %v4008 = vadd.f32 %v3478, %v3864
      %v4009 = vadd.f32 %v3479, %v3869
      %v4010 = vadd.f32 %v3480, %v3874
      %v4011 = vadd.f32 %v3481, %v3879
      %v4012 = vadd.f32 %v3482, %v3884
      %v4013 = vadd.f32 %v3483, %v3889
      %v4014 = vadd.f32 %v3484, %v3894
      %v4015 = vadd.f32 %v3485, %v3899
      %v4016 = vadd.f32 %v3486, %v3904
      %v4017 = vadd.f32 %v3487, %v3909
      %v4018 = vadd.f32 %v3488, %v3914
      %v4019 = vadd.f32 %v3489, %v3919
      %v4020 = vadd.f32 %v3490, %v3924
      %v4021 = vadd.f32 %v3491, %v3929
      %v4022 = vadd.f32 %v3492, %v3934
      %v4023 = vadd.f32 %v3493, %v3939
      %v4024 = vadd.f32 %v3494, %v3944
      %v4025 = vadd.f32 %v3495, %v3949
      %v4026 = vadd.f32 %v3496, %v3954
      %v4027 = vadd.f32 %v3497, %v3959
      %v4028 = vadd.f32 %v3498, %v3964
      %v4029 = vadd.f32 %v3499, %v3969
      %v4030 = vadd.f32 %v3500, %v3974
      %v4031 = vadd.f32 %v3501, %v3979
      %v4032 = vadd.f32 %v3502, %v3984
      %s4033 = scalar_lea.vmem %s1, 32
      %v4034 = vld [vmem:[%s4033] sm:$0xf]
      %vm4035 = vcmask 1041408
      %v4036 = vrot.slane %v229, 6
      %v4037 = vrot.slane %v230, 6
      %v4038 = vsel %vm4035, %v4036, %v4037
      %v4039 = vrot.slane %v231, 6
      %v4040 = vsel %vm4035, %v4037, %v4039
      %v4041 = vrot.slane %v232, 6
      %v4042 = vsel %vm4035, %v4039, %v4041
      %v4043 = vrot.slane %v233, 6
      %v4044 = vsel %vm4035, %v4041, %v4043
      %v4045 = vrot.slane %v234, 6
      %v4046 = vsel %vm4035, %v4043, %v4045
      %v4047 = vrot.slane %v235, 6
      %v4048 = vsel %vm4035, %v4045, %v4047
      %v4049 = vrot.slane %v236, 6
      %v4050 = vsel %vm4035, %v4047, %v4049
      %v4051 = vrot.slane %v237, 6
      %v4052 = vsel %vm4035, %v4049, %v4051
      %v4053 = vrot.slane %v238, 6
      %v4054 = vsel %vm4035, %v4051, %v4053
      %v4055 = vrot.slane %v239, 6
      %v4056 = vsel %vm4035, %v4053, %v4055
      %v4057 = vrot.slane %v240, 6
      %v4058 = vsel %vm4035, %v4055, %v4057
      %v4059 = vrot.slane %v241, 6
      %v4060 = vsel %vm4035, %v4057, %v4059
      %v4061 = vrot.slane %v242, 6
      %v4062 = vsel %vm4035, %v4059, %v4061
      %v4063 = vrot.slane %v243, 6
      %v4064 = vsel %vm4035, %v4061, %v4063
      %v4065 = vrot.slane %v244, 6
      %v4066 = vsel %vm4035, %v4063, %v4065
      %v4067 = vrot.slane %v245, 6
      %v4068 = vsel %vm4035, %v4065, %v4067
      %v4069 = vrot.slane %v246, 6
      %v4070 = vsel %vm4035, %v4067, %v4069
      %v4071 = vrot.slane %v247, 6
      %v4072 = vsel %vm4035, %v4069, %v4071
      %v4073 = vrot.slane %v248, 6
      %v4074 = vsel %vm4035, %v4071, %v4073
      %v4075 = vrot.slane %v249, 6
      %v4076 = vsel %vm4035, %v4073, %v4075
      %v4077 = vrot.slane %v250, 6
      %v4078 = vsel %vm4035, %v4075, %v4077
      %v4079 = vrot.slane %v251, 6
      %v4080 = vsel %vm4035, %v4077, %v4079
      %v4081 = vrot.slane %v252, 6
      %v4082 = vsel %vm4035, %v4079, %v4081
      %v4083 = vrot.slane %v253, 6
      %v4084 = vsel %vm4035, %v4081, %v4083
      %v4085 = vrot.slane %v254, 6
      %v4086 = vsel %vm4035, %v4083, %v4085
      %v4087 = vrot.slane %v255, 6
      %v4088 = vsel %vm4035, %v4085, %v4087
      %v4089 = vrot.slane %v256, 6
      %v4090 = vsel %vm4035, %v4087, %v4089
      %v4091 = vrot.slane %v257, 6
      %v4092 = vsel %vm4035, %v4089, %v4091
      %v4093 = vrot.slane %v258, 6
      %v4094 = vsel %vm4035, %v4091, %v4093
      %v4095 = vrot.slane %v259, 6
      %v4096 = vsel %vm4035, %v4093, %v4095
      %v4097 = vrot.slane %v260, 6
      %v4098 = vsel %vm4035, %v4095, %v4097
      %v4099 = vrot.slane %v261, 6
      %v4100 = vsel %vm4035, %v4097, %v4099
      %v4101 = vrot.slane %v262, 6
      %v4102 = vsel %vm4035, %v4099, %v4101
      %v4103 = vrot.slane %v263, 6
      %v4104 = vsel %vm4035, %v4101, %v4103
      %v4105 = vrot.slane %v264, 6
      %v4106 = vsel %vm4035, %v4103, %v4105
      %v4107 = vrot.slane %v265, 6
      %v4108 = vsel %vm4035, %v4105, %v4107
      %v4109 = vrot.slane %v266, 6
      %v4110 = vsel %vm4035, %v4107, %v4109
      %v4111 = vrot.slane %v267, 6
      %v4112 = vsel %vm4035, %v4109, %v4111
      %v4113 = vrot.slane %v268, 6
      %v4114 = vsel %vm4035, %v4111, %v4113
      %v4115 = vrot.slane %v269, 6
      %v4116 = vsel %vm4035, %v4113, %v4115
      %v4117 = vrot.slane %v270, 6
      %v4118 = vsel %vm4035, %v4115, %v4117
      %v4119 = vrot.slane %v271, 6
      %v4120 = vsel %vm4035, %v4117, %v4119
      %v4121 = vrot.slane %v272, 6
      %v4122 = vsel %vm4035, %v4119, %v4121
      %v4123 = vrot.slane %v273, 6
      %v4124 = vsel %vm4035, %v4121, %v4123
      %v4125 = vrot.slane %v274, 6
      %v4126 = vsel %vm4035, %v4123, %v4125
      %v4127 = vsel %vm416, %v4038, 0
      %v4129 = vsel %vm416, %v4040, 0
      %v4131 = vsel %vm416, %v4042, 0
      %v4133 = vsel %vm416, %v4044, 0
      %v4135 = vsel %vm416, %v4046, 0
      %v4137 = vsel %vm416, %v4048, 0
      %v4139 = vsel %vm416, %v4050, 0
      %v4141 = vsel %vm416, %v4052, 0
      %v4143 = vsel %vm416, %v4054, 0
      %v4145 = vsel %vm416, %v4056, 0
      %v4147 = vsel %vm416, %v4058, 0
      %v4149 = vsel %vm416, %v4060, 0
      %v4151 = vsel %vm416, %v4062, 0
      %v4153 = vsel %vm416, %v4064, 0
      %v4155 = vsel %vm416, %v4066, 0
      %v4157 = vsel %vm416, %v4068, 0
      %v4159 = vsel %vm416, %v4070, 0
      %v4161 = vsel %vm416, %v4072, 0
      %v4163 = vsel %vm416, %v4074, 0
      %v4165 = vsel %vm416, %v4076, 0
      %v4167 = vsel %vm416, %v4078, 0
      %v4169 = vsel %vm416, %v4080, 0
      %v4171 = vsel %vm416, %v4082, 0
      %v4173 = vsel %vm416, %v4084, 0
      %v4175 = vsel %vm416, %v4086, 0
      %v4177 = vsel %vm416, %v4088, 0
      %v4179 = vsel %vm416, %v4090, 0
      %v4181 = vsel %vm416, %v4092, 0
      %v4183 = vsel %vm416, %v4094, 0
      %v4185 = vsel %vm416, %v4096, 0
      %v4187 = vsel %vm416, %v4098, 0
      %v4189 = vsel %vm416, %v4100, 0
      %v4191 = vsel %vm416, %v4102, 0
      %v4193 = vsel %vm416, %v4104, 0
      %v4195 = vsel %vm416, %v4106, 0
      %v4197 = vsel %vm416, %v4108, 0
      %v4199 = vsel %vm416, %v4110, 0
      %v4201 = vsel %vm416, %v4112, 0
      %v4203 = vsel %vm416, %v4114, 0
      %v4205 = vsel %vm416, %v4116, 0
      %v4207 = vsel %vm416, %v4118, 0
      %v4209 = vsel %vm416, %v4120, 0
      %v4211 = vsel %vm416, %v4122, 0
      %v4213 = vsel %vm416, %v4124, 0
      %v4215 = vsel %vm416, %v4126, 0
      %v4217 = vsel %vm416, %v4125, 0
      %v4220 = vsel %vm509, %v4034, 0
      %4222 = vmatprep.subr.mxu0 0.0
      %4223 = vmatpush1.msra.mxu0 %v4220
      %4224 = vmatprep.subr.mxu0 0.0
      %4225 = vmatpush1.msra.mxu0 0.0
      %4226 = vmatprep.subr.mxu0 0.0
      %4227 = vmatpush1.msra.mxu0 0.0
      %4228 = vmatprep.subr.mxu0 0.0
      %4229 = vmatpush1.msra.mxu0 0.0
      %4230 = vmatprep.subr.mxu0 0.0
      %4231 = vmatpush1.msra.mxu0 0.0
      %4232 = vmatprep.subr.mxu0 0.0
      %4233 = vmatpush1.msra.mxu0 0.0
      %4234 = vmatprep.subr.mxu0 0.0
      %4235 = vmatpush1.msra.mxu0 0.0
      %4236 = vmatprep.subr.mxu0 0.0
      %4237 = vmatpush1.msra.mxu0 0.0
      %4238 = vmatprep.subr.mxu0 0.0
      %4239 = vmatpush1.msra.mxu0 0.0
      %4240 = vmatprep.subr.mxu0 0.0
      %4241 = vmatpush1.msra.mxu0 0.0
      %4242 = vmatprep.subr.mxu0 0.0
      %4243 = vmatpush1.msra.mxu0 0.0
      %4244 = vmatprep.subr.mxu0 0.0
      %4245 = vmatpush1.msra.mxu0 0.0
      %4246 = vmatprep.subr.mxu0 0.0
      %4247 = vmatpush1.msra.mxu0 0.0
      %4248 = vmatprep.subr.mxu0 0.0
      %4249 = vmatpush1.msra.mxu0 0.0
      %4250 = vmatprep.subr.mxu0 0.0
      %4251 = vmatpush1.msra.mxu0 0.0
      %4252 = vmatprep.subr.mxu0 0.0
      %4253 = vmatpush1.msra.mxu0 0.0
      %4254 = vmatprep.subr.mxu0 0.0
      %4255 = vmatpush1.msra.mxu0 0.0
      %4256 = vmatprep.subr.mxu0 0.0
      %4257 = vmatpush1.msra.mxu0 0.0
      %4258 = vmatprep.subr.mxu0 0.0
      %4259 = vmatpush1.msra.mxu0 0.0
      %4260 = vmatprep.subr.mxu0 0.0
      %4261 = vmatpush1.msra.mxu0 0.0
      %4262 = vmatprep.subr.mxu0 0.0
      %4263 = vmatpush1.msra.mxu0 0.0
      %4264 = vmatprep.subr.mxu0 0.0
      %4265 = vmatpush1.msra.mxu0 0.0
      %4266 = vmatprep.subr.mxu0 0.0
      %4267 = vmatpush1.msra.mxu0 0.0
      %4268 = vmatprep.subr.mxu0 0.0
      %4269 = vmatpush1.msra.mxu0 0.0
      %4270 = vmatprep.subr.mxu0 0.0
      %4271 = vmatpush1.msra.mxu0 0.0
      %4272 = vmatprep.subr.mxu0 0.0
      %4273 = vmatpush1.msra.mxu0 0.0
      %4274 = vmatprep.subr.mxu0 0.0
      %4275 = vmatpush1.msra.mxu0 0.0
      %4276 = vmatprep.subr.mxu0 0.0
      %4277 = vmatpush1.msra.mxu0 0.0
      %4278 = vmatprep.subr.mxu0 0.0
      %4279 = vmatpush1.msra.mxu0 0.0
      %4280 = vmatprep.subr.mxu0 0.0
      %4281 = vmatpush1.msra.mxu0 0.0
      %4282 = vmatprep.subr.mxu0 0.0
      %4283 = vmatpush1.msra.mxu0 0.0
      %4284 = vmatprep.subr.mxu0 0.0
      %4285 = vmatpush1.msra.mxu0 0.0
      %4286 = vmatprep.mubr.f32.mxu0 0.0
      %4287 = vmatmul.mubr.f32.gmra.mrb[0].mxu0 %v4127
      %v4288 = vpop.f32.mrb[0].mxu0
      %v4289 = vadd.f32 0.0, %v4288
      %v4290 = vpop.f32.mrb[0].mxu0
      %4291 = vmatprep.mubr.f32.mxu0 0.0
      %4292 = vmatmul.mubr.f32.gmra.mrb[0].mxu0 %v4129
      %v4293 = vpop.f32.mrb[0].mxu0
      %v4294 = vadd.f32 0.0, %v4293
      %v4295 = vpop.f32.mrb[0].mxu0
      %4296 = vmatprep.mubr.f32.mxu0 0.0
      %4297 = vmatmul.mubr.f32.gmra.mrb[0].mxu0 %v4131
      %v4298 = vpop.f32.mrb[0].mxu0
      %v4299 = vadd.f32 0.0, %v4298
      %v4300 = vpop.f32.mrb[0].mxu0
      %4301 = vmatprep.mubr.f32.mxu0 0.0
      %4302 = vmatmul.mubr.f32.gmra.mrb[0].mxu0 %v4133
      %v4303 = vpop.f32.mrb[0].mxu0
      %v4304 = vadd.f32 0.0, %v4303
      %v4305 = vpop.f32.mrb[0].mxu0
      %4306 = vmatprep.mubr.f32.mxu0 0.0
      %4307 = vmatmul.mubr.f32.gmra.mrb[0].mxu0 %v4135
      %v4308 = vpop.f32.mrb[0].mxu0
      %v4309 = vadd.f32 0.0, %v4308
      %v4310 = vpop.f32.mrb[0].mxu0
      %4311 = vmatprep.mubr.f32.mxu0 0.0
      %4312 = vmatmul.mubr.f32.gmra.mrb[0].mxu0 %v4137
      %v4313 = vpop.f32.mrb[0].mxu0
      %v4314 = vadd.f32 0.0, %v4313
      %v4315 = vpop.f32.mrb[0].mxu0
      %4316 = vmatprep.mubr.f32.mxu0 0.0
      %4317 = vmatmul.mubr.f32.gmra.mrb[0].mxu0 %v4139
      %v4318 = vpop.f32.mrb[0].mxu0
      %v4319 = vadd.f32 0.0, %v4318
      %v4320 = vpop.f32.mrb[0].mxu0
      %4321 = vmatprep.mubr.f32.mxu0 0.0
      %4322 = vmatmul.mubr.f32.gmra.mrb[0].mxu0 %v4141
      %v4323 = vpop.f32.mrb[0].mxu0
      %v4324 = vadd.f32 0.0, %v4323
      %v4325 = vpop.f32.mrb[0].mxu0
      %4326 = vmatprep.mubr.f32.mxu0 0.0
      %4327 = vmatmul.mubr.f32.gmra.mrb[0].mxu0 %v4143
      %v4328 = vpop.f32.mrb[0].mxu0
      %v4329 = vadd.f32 0.0, %v4328
      %v4330 = vpop.f32.mrb[0].mxu0
      %4331 = vmatprep.mubr.f32.mxu0 0.0
      %4332 = vmatmul.mubr.f32.gmra.mrb[0].mxu0 %v4145
      %v4333 = vpop.f32.mrb[0].mxu0
      %v4334 = vadd.f32 0.0, %v4333
      %v4335 = vpop.f32.mrb[0].mxu0
      %4336 = vmatprep.mubr.f32.mxu0 0.0
      %4337 = vmatmul.mubr.f32.gmra.mrb[0].mxu0 %v4147
      %v4338 = vpop.f32.mrb[0].mxu0
      %v4339 = vadd.f32 0.0, %v4338
      %v4340 = vpop.f32.mrb[0].mxu0
      %4341 = vmatprep.mubr.f32.mxu0 0.0
      %4342 = vmatmul.mubr.f32.gmra.mrb[0].mxu0 %v4149
      %v4343 = vpop.f32.mrb[0].mxu0
      %v4344 = vadd.f32 0.0, %v4343
      %v4345 = vpop.f32.mrb[0].mxu0
      %4346 = vmatprep.mubr.f32.mxu0 0.0
      %4347 = vmatmul.mubr.f32.gmra.mrb[0].mxu0 %v4151
      %v4348 = vpop.f32.mrb[0].mxu0
      %v4349 = vadd.f32 0.0, %v4348
      %v4350 = vpop.f32.mrb[0].mxu0
      %4351 = vmatprep.mubr.f32.mxu0 0.0
      %4352 = vmatmul.mubr.f32.gmra.mrb[0].mxu0 %v4153
      %v4353 = vpop.f32.mrb[0].mxu0
      %v4354 = vadd.f32 0.0, %v4353
      %v4355 = vpop.f32.mrb[0].mxu0
      %4356 = vmatprep.mubr.f32.mxu0 0.0
      %4357 = vmatmul.mubr.f32.gmra.mrb[0].mxu0 %v4155
      %v4358 = vpop.f32.mrb[0].mxu0
      %v4359 = vadd.f32 0.0, %v4358
      %v4360 = vpop.f32.mrb[0].mxu0
      %4361 = vmatprep.mubr.f32.mxu0 0.0
      %4362 = vmatmul.mubr.f32.gmra.mrb[0].mxu0 %v4157
      %v4363 = vpop.f32.mrb[0].mxu0
      %v4364 = vadd.f32 0.0, %v4363
      %v4365 = vpop.f32.mrb[0].mxu0
      %4366 = vmatprep.mubr.f32.mxu0 0.0
      %4367 = vmatmul.mubr.f32.gmra.mrb[0].mxu0 %v4159
      %v4368 = vpop.f32.mrb[0].mxu0
      %v4369 = vadd.f32 0.0, %v4368
      %v4370 = vpop.f32.mrb[0].mxu0
      %4371 = vmatprep.mubr.f32.mxu0 0.0
      %4372 = vmatmul.mubr.f32.gmra.mrb[0].mxu0 %v4161
      %v4373 = vpop.f32.mrb[0].mxu0
      %v4374 = vadd.f32 0.0, %v4373
      %v4375 = vpop.f32.mrb[0].mxu0
      %4376 = vmatprep.mubr.f32.mxu0 0.0
      %4377 = vmatmul.mubr.f32.gmra.mrb[0].mxu0 %v4163
      %v4378 = vpop.f32.mrb[0].mxu0
      %v4379 = vadd.f32 0.0, %v4378
      %v4380 = vpop.f32.mrb[0].mxu0
      %4381 = vmatprep.mubr.f32.mxu0 0.0
      %4382 = vmatmul.mubr.f32.gmra.mrb[0].mxu0 %v4165
      %v4383 = vpop.f32.mrb[0].mxu0
      %v4384 = vadd.f32 0.0, %v4383
      %v4385 = vpop.f32.mrb[0].mxu0
      %4386 = vmatprep.mubr.f32.mxu0 0.0
      %4387 = vmatmul.mubr.f32.gmra.mrb[0].mxu0 %v4167
      %v4388 = vpop.f32.mrb[0].mxu0
      %v4389 = vadd.f32 0.0, %v4388
      %v4390 = vpop.f32.mrb[0].mxu0
      %4391 = vmatprep.mubr.f32.mxu0 0.0
      %4392 = vmatmul.mubr.f32.gmra.mrb[0].mxu0 %v4169
      %v4393 = vpop.f32.mrb[0].mxu0
      %v4394 = vadd.f32 0.0, %v4393
      %v4395 = vpop.f32.mrb[0].mxu0
      %4396 = vmatprep.mubr.f32.mxu0 0.0
      %4397 = vmatmul.mubr.f32.gmra.mrb[0].mxu0 %v4171
      %v4398 = vpop.f32.mrb[0].mxu0
      %v4399 = vadd.f32 0.0, %v4398
      %v4400 = vpop.f32.mrb[0].mxu0
      %4401 = vmatprep.mubr.f32.mxu0 0.0
      %4402 = vmatmul.mubr.f32.gmra.mrb[0].mxu0 %v4173
      %v4403 = vpop.f32.mrb[0].mxu0
      %v4404 = vadd.f32 0.0, %v4403
      %v4405 = vpop.f32.mrb[0].mxu0
      %4406 = vmatprep.mubr.f32.mxu0 0.0
      %4407 = vmatmul.mubr.f32.gmra.mrb[0].mxu0 %v4175
      %v4408 = vpop.f32.mrb[0].mxu0
      %v4409 = vadd.f32 0.0, %v4408
      %v4410 = vpop.f32.mrb[0].mxu0
      %4411 = vmatprep.mubr.f32.mxu0 0.0
      %4412 = vmatmul.mubr.f32.gmra.mrb[0].mxu0 %v4177
      %v4413 = vpop.f32.mrb[0].mxu0
      %v4414 = vadd.f32 0.0, %v4413
      %v4415 = vpop.f32.mrb[0].mxu0
      %4416 = vmatprep.mubr.f32.mxu0 0.0
      %4417 = vmatmul.mubr.f32.gmra.mrb[0].mxu0 %v4179
      %v4418 = vpop.f32.mrb[0].mxu0
      %v4419 = vadd.f32 0.0, %v4418
      %v4420 = vpop.f32.mrb[0].mxu0
      %4421 = vmatprep.mubr.f32.mxu0 0.0
      %4422 = vmatmul.mubr.f32.gmra.mrb[0].mxu0 %v4181
      %v4423 = vpop.f32.mrb[0].mxu0
      %v4424 = vadd.f32 0.0, %v4423
      %v4425 = vpop.f32.mrb[0].mxu0
      %4426 = vmatprep.mubr.f32.mxu0 0.0
      %4427 = vmatmul.mubr.f32.gmra.mrb[0].mxu0 %v4183
      %v4428 = vpop.f32.mrb[0].mxu0
      %v4429 = vadd.f32 0.0, %v4428
      %v4430 = vpop.f32.mrb[0].mxu0
      %4431 = vmatprep.mubr.f32.mxu0 0.0
      %4432 = vmatmul.mubr.f32.gmra.mrb[0].mxu0 %v4185
      %v4433 = vpop.f32.mrb[0].mxu0
      %v4434 = vadd.f32 0.0, %v4433
      %v4435 = vpop.f32.mrb[0].mxu0
      %4436 = vmatprep.mubr.f32.mxu0 0.0
      %4437 = vmatmul.mubr.f32.gmra.mrb[0].mxu0 %v4187
      %v4438 = vpop.f32.mrb[0].mxu0
      %v4439 = vadd.f32 0.0, %v4438
      %v4440 = vpop.f32.mrb[0].mxu0
      %4441 = vmatprep.mubr.f32.mxu0 0.0
      %4442 = vmatmul.mubr.f32.gmra.mrb[0].mxu0 %v4189
      %v4443 = vpop.f32.mrb[0].mxu0
      %v4444 = vadd.f32 0.0, %v4443
      %v4445 = vpop.f32.mrb[0].mxu0
      %4446 = vmatprep.mubr.f32.mxu0 0.0
      %4447 = vmatmul.mubr.f32.gmra.mrb[0].mxu0 %v4191
      %v4448 = vpop.f32.mrb[0].mxu0
      %v4449 = vadd.f32 0.0, %v4448
      %v4450 = vpop.f32.mrb[0].mxu0
      %4451 = vmatprep.mubr.f32.mxu0 0.0
      %4452 = vmatmul.mubr.f32.gmra.mrb[0].mxu0 %v4193
      %v4453 = vpop.f32.mrb[0].mxu0
      %v4454 = vadd.f32 0.0, %v4453
      %v4455 = vpop.f32.mrb[0].mxu0
      %4456 = vmatprep.mubr.f32.mxu0 0.0
      %4457 = vmatmul.mubr.f32.gmra.mrb[0].mxu0 %v4195
      %v4458 = vpop.f32.mrb[0].mxu0
      %v4459 = vadd.f32 0.0, %v4458
      %v4460 = vpop.f32.mrb[0].mxu0
      %4461 = vmatprep.mubr.f32.mxu0 0.0
      %4462 = vmatmul.mubr.f32.gmra.mrb[0].mxu0 %v4197
      %v4463 = vpop.f32.mrb[0].mxu0
      %v4464 = vadd.f32 0.0, %v4463
      %v4465 = vpop.f32.mrb[0].mxu0
      %4466 = vmatprep.mubr.f32.mxu0 0.0
      %4467 = vmatmul.mubr.f32.gmra.mrb[0].mxu0 %v4199
      %v4468 = vpop.f32.mrb[0].mxu0
      %v4469 = vadd.f32 0.0, %v4468
      %v4470 = vpop.f32.mrb[0].mxu0
      %4471 = vmatprep.mubr.f32.mxu0 0.0
      %4472 = vmatmul.mubr.f32.gmra.mrb[0].mxu0 %v4201
      %v4473 = vpop.f32.mrb[0].mxu0
      %v4474 = vadd.f32 0.0, %v4473
      %v4475 = vpop.f32.mrb[0].mxu0
      %4476 = vmatprep.mubr.f32.mxu0 0.0
      %4477 = vmatmul.mubr.f32.gmra.mrb[0].mxu0 %v4203
      %v4478 = vpop.f32.mrb[0].mxu0
      %v4479 = vadd.f32 0.0, %v4478
      %v4480 = vpop.f32.mrb[0].mxu0
      %4481 = vmatprep.mubr.f32.mxu0 0.0
      %4482 = vmatmul.mubr.f32.gmra.mrb[0].mxu0 %v4205
      %v4483 = vpop.f32.mrb[0].mxu0
      %v4484 = vadd.f32 0.0, %v4483
      %v4485 = vpop.f32.mrb[0].mxu0
      %4486 = vmatprep.mubr.f32.mxu0 0.0
      %4487 = vmatmul.mubr.f32.gmra.mrb[0].mxu0 %v4207
      %v4488 = vpop.f32.mrb[0].mxu0
      %v4489 = vadd.f32 0.0, %v4488
      %v4490 = vpop.f32.mrb[0].mxu0
      %4491 = vmatprep.mubr.f32.mxu0 0.0
      %4492 = vmatmul.mubr.f32.gmra.mrb[0].mxu0 %v4209
      %v4493 = vpop.f32.mrb[0].mxu0
      %v4494 = vadd.f32 0.0, %v4493
      %v4495 = vpop.f32.mrb[0].mxu0
      %4496 = vmatprep.mubr.f32.mxu0 0.0
      %4497 = vmatmul.mubr.f32.gmra.mrb[0].mxu0 %v4211
      %v4498 = vpop.f32.mrb[0].mxu0
      %v4499 = vadd.f32 0.0, %v4498
      %v4500 = vpop.f32.mrb[0].mxu0
      %4501 = vmatprep.mubr.f32.mxu0 0.0
      %4502 = vmatmul.mubr.f32.gmra.mrb[0].mxu0 %v4213
      %v4503 = vpop.f32.mrb[0].mxu0
      %v4504 = vadd.f32 0.0, %v4503
      %v4505 = vpop.f32.mrb[0].mxu0
      %4506 = vmatprep.mubr.f32.mxu0 0.0
      %4507 = vmatmul.mubr.f32.gmra.mrb[0].mxu0 %v4215
      %v4508 = vpop.f32.mrb[0].mxu0
      %v4509 = vadd.f32 0.0, %v4508
      %v4510 = vpop.f32.mrb[0].mxu0
      %4511 = vmatprep.mubr.f32.mxu0 0.0
      %4512 = vmatmul.mubr.f32.gmra.mrb[0].mxu0 %v4217
      %v4513 = vpop.f32.mrb[0].mxu0
      %v4514 = vadd.f32 0.0, %v4513
      %v4515 = vpop.f32.mrb[0].mxu0
      %4516 = vdwg.mxu0
      %v4517 = vadd.f32 %v3987, %v4289
      %v4518 = vadd.f32 %v3988, %v4294
      %v4519 = vadd.f32 %v3989, %v4299
      %v4520 = vadd.f32 %v3990, %v4304
      %v4521 = vadd.f32 %v3991, %v4309
      %v4522 = vadd.f32 %v3992, %v4314
      %v4523 = vadd.f32 %v3993, %v4319
      %v4524 = vadd.f32 %v3994, %v4324
      %v4525 = vadd.f32 %v3995, %v4329
      %v4526 = vadd.f32 %v3996, %v4334
      %v4527 = vadd.f32 %v3997, %v4339
      %v4528 = vadd.f32 %v3998, %v4344
      %v4529 = vadd.f32 %v3999, %v4349
      %v4530 = vadd.f32 %v4000, %v4354
      %v4531 = vadd.f32 %v4001, %v4359
      %v4532 = vadd.f32 %v4002, %v4364
      %v4533 = vadd.f32 %v4003, %v4369
      %v4534 = vadd.f32 %v4004, %v4374
      %v4535 = vadd.f32 %v4005, %v4379
      %v4536 = vadd.f32 %v4006, %v4384
      %v4537 = vadd.f32 %v4007, %v4389
      %v4538 = vadd.f32 %v4008, %v4394
      %v4539 = vadd.f32 %v4009, %v4399
      %v4540 = vadd.f32 %v4010, %v4404
      %v4541 = vadd.f32 %v4011, %v4409
      %v4542 = vadd.f32 %v4012, %v4414
      %v4543 = vadd.f32 %v4013, %v4419
      %v4544 = vadd.f32 %v4014, %v4424
      %v4545 = vadd.f32 %v4015, %v4429
      %v4546 = vadd.f32 %v4016, %v4434
      %v4547 = vadd.f32 %v4017, %v4439
      %v4548 = vadd.f32 %v4018, %v4444
      %v4549 = vadd.f32 %v4019, %v4449
      %v4550 = vadd.f32 %v4020, %v4454
      %v4551 = vadd.f32 %v4021, %v4459
      %v4552 = vadd.f32 %v4022, %v4464
      %v4553 = vadd.f32 %v4023, %v4469
      %v4554 = vadd.f32 %v4024, %v4474
      %v4555 = vadd.f32 %v4025, %v4479
      %v4556 = vadd.f32 %v4026, %v4484
      %v4557 = vadd.f32 %v4027, %v4489
      %v4558 = vadd.f32 %v4028, %v4494
      %v4559 = vadd.f32 %v4029, %v4499
      %v4560 = vadd.f32 %v4030, %v4504
      %v4561 = vadd.f32 %v4031, %v4509
      %v4562 = vadd.f32 %v4032, %v4514
      %v4563 = vld [vmem:[%s3] sm:$0x1]
      %v4564 = vlaneseq
      %v4565 = vshrl.u32 %v4564, 7
      %v4566 = vsub.s32 0, %v4565
      %v4567 = vrot.slane %v4563, %v4566
      %v4568 = vadd.f32 %v4517, %v4567
      %v4569 = vadd.f32 %v4518, %v4567
      %v4570 = vadd.f32 %v4519, %v4567
      %v4571 = vadd.f32 %v4520, %v4567
      %v4572 = vadd.f32 %v4521, %v4567
      %v4573 = vadd.f32 %v4522, %v4567
      %v4574 = vadd.f32 %v4523, %v4567
      %v4575 = vadd.f32 %v4524, %v4567
      %v4576 = vadd.f32 %v4525, %v4567
      %v4577 = vadd.f32 %v4526, %v4567
      %v4578 = vadd.f32 %v4527, %v4567
      %v4579 = vadd.f32 %v4528, %v4567
      %v4580 = vadd.f32 %v4529, %v4567
      %v4581 = vadd.f32 %v4530, %v4567
      %v4582 = vadd.f32 %v4531, %v4567
      %v4583 = vadd.f32 %v4532, %v4567
      %v4584 = vadd.f32 %v4533, %v4567
      %v4585 = vadd.f32 %v4534, %v4567
      %v4586 = vadd.f32 %v4535, %v4567
      %v4587 = vadd.f32 %v4536, %v4567
      %v4588 = vadd.f32 %v4537, %v4567
      %v4589 = vadd.f32 %v4538, %v4567
      %v4590 = vadd.f32 %v4539, %v4567
      %v4591 = vadd.f32 %v4540, %v4567
      %v4592 = vadd.f32 %v4541, %v4567
      %v4593 = vadd.f32 %v4542, %v4567
      %v4594 = vadd.f32 %v4543, %v4567
      %v4595 = vadd.f32 %v4544, %v4567
      %v4596 = vadd.f32 %v4545, %v4567
      %v4597 = vadd.f32 %v4546, %v4567
      %v4598 = vadd.f32 %v4547, %v4567
      %v4599 = vadd.f32 %v4548, %v4567
      %v4600 = vadd.f32 %v4549, %v4567
      %v4601 = vadd.f32 %v4550, %v4567
      %v4602 = vadd.f32 %v4551, %v4567
      %v4603 = vadd.f32 %v4552, %v4567
      %v4604 = vadd.f32 %v4553, %v4567
      %v4605 = vadd.f32 %v4554, %v4567
      %v4606 = vadd.f32 %v4555, %v4567
      %v4607 = vadd.f32 %v4556, %v4567
      %v4608 = vadd.f32 %v4557, %v4567
      %v4609 = vadd.f32 %v4558, %v4567
      %v4610 = vadd.f32 %v4559, %v4567
      %v4611 = vadd.f32 %v4560, %v4567
      %v4612 = vadd.f32 %v4561, %v4567
      %v4613 = vadd.f32 %v4562, %v4567
      %v4614 = vmax.f32 %v4568, 0.0
      %v4615 = vmax.f32 %v4569, 0.0
      %v4616 = vmax.f32 %v4570, 0.0
      %v4617 = vmax.f32 %v4571, 0.0
      %v4618 = vmax.f32 %v4572, 0.0
      %v4619 = vmax.f32 %v4573, 0.0
      %v4620 = vmax.f32 %v4574, 0.0
      %v4621 = vmax.f32 %v4575, 0.0
      %v4622 = vmax.f32 %v4576, 0.0
      %v4623 = vmax.f32 %v4577, 0.0
      %v4624 = vmax.f32 %v4578, 0.0
      %v4625 = vmax.f32 %v4579, 0.0
      %v4626 = vmax.f32 %v4580, 0.0
      %v4627 = vmax.f32 %v4581, 0.0
      %v4628 = vmax.f32 %v4582, 0.0
      %v4629 = vmax.f32 %v4583, 0.0
      %v4630 = vmax.f32 %v4584, 0.0
      %v4631 = vmax.f32 %v4585, 0.0
      %v4632 = vmax.f32 %v4586, 0.0
      %v4633 = vmax.f32 %v4587, 0.0
      %v4634 = vmax.f32 %v4588, 0.0
      %v4635 = vmax.f32 %v4589, 0.0
      %v4636 = vmax.f32 %v4590, 0.0
      %v4637 = vmax.f32 %v4591, 0.0
      %v4638 = vmax.f32 %v4592, 0.0
      %v4639 = vmax.f32 %v4593, 0.0
      %v4640 = vmax.f32 %v4594, 0.0
      %v4641 = vmax.f32 %v4595, 0.0
      %v4642 = vmax.f32 %v4596, 0.0
      %v4643 = vmax.f32 %v4597, 0.0
      %v4644 = vmax.f32 %v4598, 0.0
      %v4645 = vmax.f32 %v4599, 0.0
      %v4646 = vmax.f32 %v4600, 0.0
      %v4647 = vmax.f32 %v4601, 0.0
      %v4648 = vmax.f32 %v4602, 0.0
      %v4649 = vmax.f32 %v4603, 0.0
      %v4650 = vmax.f32 %v4604, 0.0
      %v4651 = vmax.f32 %v4605, 0.0
      %v4652 = vmax.f32 %v4606, 0.0
      %v4653 = vmax.f32 %v4607, 0.0
      %v4654 = vmax.f32 %v4608, 0.0
      %v4655 = vmax.f32 %v4609, 0.0
      %v4656 = vmax.f32 %v4610, 0.0
      %v4657 = vmax.f32 %v4611, 0.0
      %v4658 = vmax.f32 %v4612, 0.0
      %v4659 = vmax.f32 %v4613, 0.0
      %v4660 = vld [vmem:[%s4] sm:$0xff]
      %v4661 = vld [vmem:[%s4 + $0x8] sm:$0xff]
      %v4662 = vld [vmem:[%s4 + $0x10] sm:$0xff]
      %v4663 = vld [vmem:[%s4 + $0x18] sm:$0xff]
      %v4664 = vld [vmem:[%s4 + $0x20] sm:$0xff]
      %v4665 = vld [vmem:[%s4 + $0x28] sm:$0xff]
      %v4666 = vld [vmem:[%s4 + $0x30] sm:$0xff]
      %v4667 = vld [vmem:[%s4 + $0x38] sm:$0xff]
      %v4668 = vld [vmem:[%s4 + $0x40] sm:$0xff]
      %v4669 = vld [vmem:[%s4 + $0x48] sm:$0xff]
      %v4670 = vld [vmem:[%s4 + $0x50] sm:$0xff]
      %v4671 = vld [vmem:[%s4 + $0x58] sm:$0xff]
      %v4672 = vld [vmem:[%s4 + $0x60] sm:$0xff]
      %v4673 = vld [vmem:[%s4 + $0x68] sm:$0xff]
      %v4674 = vld [vmem:[%s4 + $0x70] sm:$0xff]
      %v4675 = vld [vmem:[%s4 + $0x78] sm:$0xff]
      %v4676 = vld [vmem:[%s4 + $0x80] sm:$0xff]
      %v4677 = vld [vmem:[%s4 + $0x88] sm:$0xff]
      %v4678 = vld [vmem:[%s4 + $0x90] sm:$0xff]
      %v4679 = vld [vmem:[%s4 + $0x98] sm:$0xff]
      %v4680 = vld [vmem:[%s4 + $0xa0] sm:$0xff]
      %v4681 = vld [vmem:[%s4 + $0xa8] sm:$0xff]
      %v4682 = vld [vmem:[%s4 + $0xb0] sm:$0xff]
      %v4683 = vld [vmem:[%s4 + $0xb8] sm:$0xff]
      %v4684 = vld [vmem:[%s4 + $0xc0] sm:$0xff]
      %v4685 = vld [vmem:[%s4 + $0xc8] sm:$0xff]
      %v4686 = vld [vmem:[%s4 + $0xd0] sm:$0xff]
      %v4687 = vld [vmem:[%s4 + $0xd8] sm:$0xff]
      %v4688 = vld [vmem:[%s4 + $0xe0] sm:$0xff]
      %v4689 = vld [vmem:[%s4 + $0xe8] sm:$0xff]
      %v4690 = vld [vmem:[%s4 + $0xf0] sm:$0xff]
      %v4691 = vld [vmem:[%s4 + $0xf8] sm:$0xff]
      %v4692 = vld [vmem:[%s4 + $0x100] sm:$0xff]
      %v4693 = vld [vmem:[%s4 + $0x108] sm:$0xff]
      %v4694 = vld [vmem:[%s4 + $0x110] sm:$0xff]
      %v4695 = vld [vmem:[%s4 + $0x118] sm:$0xff]
      %v4696 = vld [vmem:[%s4 + $0x120] sm:$0xff]
      %v4697 = vld [vmem:[%s4 + $0x128] sm:$0xff]
      %v4698 = vld [vmem:[%s4 + $0x130] sm:$0xff]
      %v4699 = vld [vmem:[%s4 + $0x138] sm:$0xff]
      %v4700 = vld [vmem:[%s4 + $0x140] sm:$0xff]
      %v4701 = vld [vmem:[%s4 + $0x148] sm:$0xff]
      %v4702 = vld [vmem:[%s4 + $0x150] sm:$0xff]
      %v4703 = vld [vmem:[%s4 + $0x158] sm:$0xff]
      %v4704 = vld [vmem:[%s4 + $0x160] sm:$0xff]
      %v4705 = vld [vmem:[%s4 + $0x168] sm:$0x3]
      %4707 = vset.pattern.permute.xlu0 0
      %4708 = vperm.xlu0 %4707, %v4660
      %v4709 = vpop.permute.xlu0 %4708
      %4712 = vset.pattern.permute.xlu0 0
      %4713 = vperm.xlu0 %4712, %v4661
      %v4714 = vpop.permute.xlu0 %4713
      %4717 = vset.pattern.permute.xlu0 0
      %4718 = vperm.xlu0 %4717, %v4662
      %v4719 = vpop.permute.xlu0 %4718
      %4722 = vset.pattern.permute.xlu0 0
      %4723 = vperm.xlu0 %4722, %v4663
      %v4724 = vpop.permute.xlu0 %4723
      %4727 = vset.pattern.permute.xlu0 0
      %4728 = vperm.xlu0 %4727, %v4664
      %v4729 = vpop.permute.xlu0 %4728
      %4732 = vset.pattern.permute.xlu0 0
      %4733 = vperm.xlu0 %4732, %v4665
      %v4734 = vpop.permute.xlu0 %4733
      %4737 = vset.pattern.permute.xlu0 0
      %4738 = vperm.xlu0 %4737, %v4666
      %v4739 = vpop.permute.xlu0 %4738
      %4742 = vset.pattern.permute.xlu0 0
      %4743 = vperm.xlu0 %4742, %v4667
      %v4744 = vpop.permute.xlu0 %4743
      %4747 = vset.pattern.permute.xlu0 0
      %4748 = vperm.xlu0 %4747, %v4668
      %v4749 = vpop.permute.xlu0 %4748
      %4752 = vset.pattern.permute.xlu0 0
      %4753 = vperm.xlu0 %4752, %v4669
      %v4754 = vpop.permute.xlu0 %4753
      %4757 = vset.pattern.permute.xlu0 0
      %4758 = vperm.xlu0 %4757, %v4670
      %v4759 = vpop.permute.xlu0 %4758
      %4762 = vset.pattern.permute.xlu0 0
      %4763 = vperm.xlu0 %4762, %v4671
      %v4764 = vpop.permute.xlu0 %4763
      %4767 = vset.pattern.permute.xlu0 0
      %4768 = vperm.xlu0 %4767, %v4672
      %v4769 = vpop.permute.xlu0 %4768
      %4772 = vset.pattern.permute.xlu0 0
      %4773 = vperm.xlu0 %4772, %v4673
      %v4774 = vpop.permute.xlu0 %4773
      %4777 = vset.pattern.permute.xlu0 0
      %4778 = vperm.xlu0 %4777, %v4674
      %v4779 = vpop.permute.xlu0 %4778
      %4782 = vset.pattern.permute.xlu0 0
      %4783 = vperm.xlu0 %4782, %v4675
      %v4784 = vpop.permute.xlu0 %4783
      %4787 = vset.pattern.permute.xlu0 0
      %4788 = vperm.xlu0 %4787, %v4676
      %v4789 = vpop.permute.xlu0 %4788
      %4792 = vset.pattern.permute.xlu0 0
      %4793 = vperm.xlu0 %4792, %v4677
      %v4794 = vpop.permute.xlu0 %4793
      %4797 = vset.pattern.permute.xlu0 0
      %4798 = vperm.xlu0 %4797, %v4678
      %v4799 = vpop.permute.xlu0 %4798
      %4802 = vset.pattern.permute.xlu0 0
      %4803 = vperm.xlu0 %4802, %v4679
      %v4804 = vpop.permute.xlu0 %4803
      %4807 = vset.pattern.permute.xlu0 0
      %4808 = vperm.xlu0 %4807, %v4680
      %v4809 = vpop.permute.xlu0 %4808
      %4812 = vset.pattern.permute.xlu0 0
      %4813 = vperm.xlu0 %4812, %v4681
      %v4814 = vpop.permute.xlu0 %4813
      %4817 = vset.pattern.permute.xlu0 0
      %4818 = vperm.xlu0 %4817, %v4682
      %v4819 = vpop.permute.xlu0 %4818
      %4822 = vset.pattern.permute.xlu0 0
      %4823 = vperm.xlu0 %4822, %v4683
      %v4824 = vpop.permute.xlu0 %4823
      %4827 = vset.pattern.permute.xlu0 0
      %4828 = vperm.xlu0 %4827, %v4684
      %v4829 = vpop.permute.xlu0 %4828
      %4832 = vset.pattern.permute.xlu0 0
      %4833 = vperm.xlu0 %4832, %v4685
      %v4834 = vpop.permute.xlu0 %4833
      %4837 = vset.pattern.permute.xlu0 0
      %4838 = vperm.xlu0 %4837, %v4686
      %v4839 = vpop.permute.xlu0 %4838
      %4842 = vset.pattern.permute.xlu0 0
      %4843 = vperm.xlu0 %4842, %v4687
      %v4844 = vpop.permute.xlu0 %4843
      %4847 = vset.pattern.permute.xlu0 0
      %4848 = vperm.xlu0 %4847, %v4688
      %v4849 = vpop.permute.xlu0 %4848
      %4852 = vset.pattern.permute.xlu0 0
      %4853 = vperm.xlu0 %4852, %v4689
      %v4854 = vpop.permute.xlu0 %4853
      %4857 = vset.pattern.permute.xlu0 0
      %4858 = vperm.xlu0 %4857, %v4690
      %v4859 = vpop.permute.xlu0 %4858
      %4862 = vset.pattern.permute.xlu0 0
      %4863 = vperm.xlu0 %4862, %v4691
      %v4864 = vpop.permute.xlu0 %4863
      %4867 = vset.pattern.permute.xlu0 0
      %4868 = vperm.xlu0 %4867, %v4692
      %v4869 = vpop.permute.xlu0 %4868
      %4872 = vset.pattern.permute.xlu0 0
      %4873 = vperm.xlu0 %4872, %v4693
      %v4874 = vpop.permute.xlu0 %4873
      %4877 = vset.pattern.permute.xlu0 0
      %4878 = vperm.xlu0 %4877, %v4694
      %v4879 = vpop.permute.xlu0 %4878
      %4882 = vset.pattern.permute.xlu0 0
      %4883 = vperm.xlu0 %4882, %v4695
      %v4884 = vpop.permute.xlu0 %4883
      %4887 = vset.pattern.permute.xlu0 0
      %4888 = vperm.xlu0 %4887, %v4696
      %v4889 = vpop.permute.xlu0 %4888
      %4892 = vset.pattern.permute.xlu0 0
      %4893 = vperm.xlu0 %4892, %v4697
      %v4894 = vpop.permute.xlu0 %4893
      %4897 = vset.pattern.permute.xlu0 0
      %4898 = vperm.xlu0 %4897, %v4698
      %v4899 = vpop.permute.xlu0 %4898
      %4902 = vset.pattern.permute.xlu0 0
      %4903 = vperm.xlu0 %4902, %v4699
      %v4904 = vpop.permute.xlu0 %4903
      %4907 = vset.pattern.permute.xlu0 0
      %4908 = vperm.xlu0 %4907, %v4700
      %v4909 = vpop.permute.xlu0 %4908
      %4912 = vset.pattern.permute.xlu0 0
      %4913 = vperm.xlu0 %4912, %v4701
      %v4914 = vpop.permute.xlu0 %4913
      %4917 = vset.pattern.permute.xlu0 0
      %4918 = vperm.xlu0 %4917, %v4702
      %v4919 = vpop.permute.xlu0 %4918
      %4922 = vset.pattern.permute.xlu0 0
      %4923 = vperm.xlu0 %4922, %v4703
      %v4924 = vpop.permute.xlu0 %4923
      %4927 = vset.pattern.permute.xlu0 0
      %4928 = vperm.xlu0 %4927, %v4704
      %v4929 = vpop.permute.xlu0 %4928
      %4932 = vset.pattern.permute.xlu0 0
      %4933 = vperm.xlu0 %4932, %v4705
      %v4934 = vpop.permute.xlu0 %4933
      %v4936 = vmul.f32 %v4614, %v4709
      %v4937 = vmul.f32 %v4615, %v4714
      %v4938 = vmul.f32 %v4616, %v4719
      %v4939 = vmul.f32 %v4617, %v4724
      %v4940 = vmul.f32 %v4618, %v4729
      %v4941 = vmul.f32 %v4619, %v4734
      %v4942 = vmul.f32 %v4620, %v4739
      %v4943 = vmul.f32 %v4621, %v4744
      %v4944 = vmul.f32 %v4622, %v4749
      %v4945 = vmul.f32 %v4623, %v4754
      %v4946 = vmul.f32 %v4624, %v4759
      %v4947 = vmul.f32 %v4625, %v4764
      %v4948 = vmul.f32 %v4626, %v4769
      %v4949 = vmul.f32 %v4627, %v4774
      %v4950 = vmul.f32 %v4628, %v4779
      %v4951 = vmul.f32 %v4629, %v4784
      %v4952 = vmul.f32 %v4630, %v4789
      %v4953 = vmul.f32 %v4631, %v4794
      %v4954 = vmul.f32 %v4632, %v4799
      %v4955 = vmul.f32 %v4633, %v4804
      %v4956 = vmul.f32 %v4634, %v4809
      %v4957 = vmul.f32 %v4635, %v4814
      %v4958 = vmul.f32 %v4636, %v4819
      %v4959 = vmul.f32 %v4637, %v4824
      %v4960 = vmul.f32 %v4638, %v4829
      %v4961 = vmul.f32 %v4639, %v4834
      %v4962 = vmul.f32 %v4640, %v4839
      %v4963 = vmul.f32 %v4641, %v4844
      %v4964 = vmul.f32 %v4642, %v4849
      %v4965 = vmul.f32 %v4643, %v4854
      %v4966 = vmul.f32 %v4644, %v4859
      %v4967 = vmul.f32 %v4645, %v4864
      %v4968 = vmul.f32 %v4646, %v4869
      %v4969 = vmul.f32 %v4647, %v4874
      %v4970 = vmul.f32 %v4648, %v4879
      %v4971 = vmul.f32 %v4649, %v4884
      %v4972 = vmul.f32 %v4650, %v4889
      %v4973 = vmul.f32 %v4651, %v4894
      %v4974 = vmul.f32 %v4652, %v4899
      %v4975 = vmul.f32 %v4653, %v4904
      %v4976 = vmul.f32 %v4654, %v4909
      %v4977 = vmul.f32 %v4655, %v4914
      %v4978 = vmul.f32 %v4656, %v4919
      %v4979 = vmul.f32 %v4657, %v4924
      %v4980 = vmul.f32 %v4658, %v4929
      %v4981 = vmul.f32 %v4659, %v4934
      %v4982 = vld [vmem:[%s2] sm:$0xf]
      %s4983 = scalar_lea.vmem %s2, 4
      %v4984 = vld [vmem:[%s4983] sm:$0xf]
      %v5026 = vrot.slane %v4936, 1
      %v5027 = vrot.slane %v4937, 1
      %v5028 = vsel %vm324, %v5026, %v5027
      %v5029 = vrot.slane %v4938, 1
      %v5030 = vsel %vm324, %v5027, %v5029
      %v5031 = vrot.slane %v4939, 1
      %v5032 = vsel %vm324, %v5029, %v5031
      %v5033 = vrot.slane %v4940, 1
      %v5034 = vsel %vm324, %v5031, %v5033
      %v5035 = vrot.slane %v4941, 1
      %v5036 = vsel %vm324, %v5033, %v5035
      %v5037 = vrot.slane %v4942, 1
      %v5038 = vsel %vm324, %v5035, %v5037
      %v5039 = vrot.slane %v4943, 1
      %v5040 = vsel %vm324, %v5037, %v5039
      %v5041 = vrot.slane %v4944, 1
      %v5042 = vsel %vm324, %v5039, %v5041
      %v5043 = vrot.slane %v4945, 1
      %v5044 = vsel %vm324, %v5041, %v5043
      %v5045 = vrot.slane %v4946, 1
      %v5046 = vsel %vm324, %v5043, %v5045
      %v5047 = vrot.slane %v4947, 1
      %v5048 = vsel %vm324, %v5045, %v5047
      %v5049 = vrot.slane %v4948, 1
      %v5050 = vsel %vm324, %v5047, %v5049
      %v5051 = vrot.slane %v4949, 1
      %v5052 = vsel %vm324, %v5049, %v5051
      %v5053 = vrot.slane %v4950, 1
      %v5054 = vsel %vm324, %v5051, %v5053
      %v5055 = vrot.slane %v4951, 1
      %v5056 = vsel %vm324, %v5053, %v5055
      %v5057 = vrot.slane %v4952, 1
      %v5058 = vsel %vm324, %v5055, %v5057
      %v5059 = vrot.slane %v4953, 1
      %v5060 = vsel %vm324, %v5057, %v5059
      %v5061 = vrot.slane %v4954, 1
      %v5062 = vsel %vm324, %v5059, %v5061
      %v5063 = vrot.slane %v4955, 1
      %v5064 = vsel %vm324, %v5061, %v5063
      %v5065 = vrot.slane %v4956, 1
      %v5066 = vsel %vm324, %v5063, %v5065
      %v5067 = vrot.slane %v4957, 1
      %v5068 = vsel %vm324, %v5065, %v5067
      %v5069 = vrot.slane %v4958, 1
      %v5070 = vsel %vm324, %v5067, %v5069
      %v5071 = vrot.slane %v4959, 1
      %v5072 = vsel %vm324, %v5069, %v5071
      %v5073 = vrot.slane %v4960, 1
      %v5074 = vsel %vm324, %v5071, %v5073
      %v5075 = vrot.slane %v4961, 1
      %v5076 = vsel %vm324, %v5073, %v5075
      %v5077 = vrot.slane %v4962, 1
      %v5078 = vsel %vm324, %v5075, %v5077
      %v5079 = vrot.slane %v4963, 1
      %v5080 = vsel %vm324, %v5077, %v5079
      %v5081 = vrot.slane %v4964, 1
      %v5082 = vsel %vm324, %v5079, %v5081
      %v5083 = vrot.slane %v4965, 1
      %v5084 = vsel %vm324, %v5081, %v5083
      %v5085 = vrot.slane %v4966, 1
      %v5086 = vsel %vm324, %v5083, %v5085
      %v5087 = vrot.slane %v4967, 1
      %v5088 = vsel %vm324, %v5085, %v5087
      %v5089 = vrot.slane %v4968, 1
      %v5090 = vsel %vm324, %v5087, %v5089
      %v5091 = vrot.slane %v4969, 1
      %v5092 = vsel %vm324, %v5089, %v5091
      %v5093 = vrot.slane %v4970, 1
      %v5094 = vsel %vm324, %v5091, %v5093
      %v5095 = vrot.slane %v4971, 1
      %v5096 = vsel %vm324, %v5093, %v5095
      %v5097 = vrot.slane %v4972, 1
      %v5098 = vsel %vm324, %v5095, %v5097
      %v5099 = vrot.slane %v4973, 1
      %v5100 = vsel %vm324, %v5097, %v5099
      %v5101 = vrot.slane %v4974, 1
      %v5102 = vsel %vm324, %v5099, %v5101
      %v5103 = vrot.slane %v4975, 1
      %v5104 = vsel %vm324, %v5101, %v5103
      %v5105 = vrot.slane %v4976, 1
      %v5106 = vsel %vm324, %v5103, %v5105
      %v5107 = vsel %vm416, %v5028, 0
      %v5109 = vsel %vm416, %v5030, 0
      %v5111 = vsel %vm416, %v5032, 0
      %v5113 = vsel %vm416, %v5034, 0
      %v5115 = vsel %vm416, %v5036, 0
      %v5117 = vsel %vm416, %v5038, 0
      %v5119 = vsel %vm416, %v5040, 0
      %v5121 = vsel %vm416, %v5042, 0
      %v5123 = vsel %vm416, %v5044, 0
      %v5125 = vsel %vm416, %v5046, 0
      %v5127 = vsel %vm416, %v5048, 0
      %v5129 = vsel %vm416, %v5050, 0
      %v5131 = vsel %vm416, %v5052, 0
      %v5133 = vsel %vm416, %v5054, 0
      %v5135 = vsel %vm416, %v5056, 0
      %v5137 = vsel %vm416, %v5058, 0
      %v5139 = vsel %vm416, %v5060, 0
      %v5141 = vsel %vm416, %v5062, 0
      %v5143 = vsel %vm416, %v5064, 0
      %v5145 = vsel %vm416, %v5066, 0
      %v5147 = vsel %vm416, %v5068, 0
      %v5149 = vsel %vm416, %v5070, 0
      %v5151 = vsel %vm416, %v5072, 0
      %v5153 = vsel %vm416, %v5074, 0
      %v5155 = vsel %vm416, %v5076, 0
      %v5157 = vsel %vm416, %v5078, 0
      %v5159 = vsel %vm416, %v5080, 0
      %v5161 = vsel %vm416, %v5082, 0
      %v5163 = vsel %vm416, %v5084, 0
      %v5165 = vsel %vm416, %v5086, 0
      %v5167 = vsel %vm416, %v5088, 0
      %v5169 = vsel %vm416, %v5090, 0
      %v5171 = vsel %vm416, %v5092, 0
      %v5173 = vsel %vm416, %v5094, 0
      %v5175 = vsel %vm416, %v5096, 0
      %v5177 = vsel %vm416, %v5098, 0
      %v5179 = vsel %vm416, %v5100, 0
      %v5181 = vsel %vm416, %v5102, 0
      %v5183 = vsel %vm416, %v5104, 0
      %v5185 = vsel %vm416, %v5106, 0
      %v5187 = vsel %vm416, %v5105, 0
      %v5190 = vsel %vm509, %v4984, 0
      %5192 = vmatprep.subr.mxu0 0.0
      %5193 = vmatpush1.msra.mxu0 %v5190
      %5194 = vmatprep.subr.mxu0 0.0
      %5195 = vmatpush1.msra.mxu0 0.0
      %5196 = vmatprep.subr.mxu0 0.0
      %5197 = vmatpush1.msra.mxu0 0.0
      %5198 = vmatprep.subr.mxu0 0.0
      %5199 = vmatpush1.msra.mxu0 0.0
      %5200 = vmatprep.subr.mxu0 0.0
      %5201 = vmatpush1.msra.mxu0 0.0
      %5202 = vmatprep.subr.mxu0 0.0
      %5203 = vmatpush1.msra.mxu0 0.0
      %5204 = vmatprep.subr.mxu0 0.0
      %5205 = vmatpush1.msra.mxu0 0.0
      %5206 = vmatprep.subr.mxu0 0.0
      %5207 = vmatpush1.msra.mxu0 0.0
      %5208 = vmatprep.subr.mxu0 0.0
      %5209 = vmatpush1.msra.mxu0 0.0
      %5210 = vmatprep.subr.mxu0 0.0
      %5211 = vmatpush1.msra.mxu0 0.0
      %5212 = vmatprep.subr.mxu0 0.0
      %5213 = vmatpush1.msra.mxu0 0.0
      %5214 = vmatprep.subr.mxu0 0.0
      %5215 = vmatpush1.msra.mxu0 0.0
      %5216 = vmatprep.subr.mxu0 0.0
      %5217 = vmatpush1.msra.mxu0 0.0
      %5218 = vmatprep.subr.mxu0 0.0
      %5219 = vmatpush1.msra.mxu0 0.0
      %5220 = vmatprep.subr.mxu0 0.0
      %5221 = vmatpush1.msra.mxu0 0.0
      %5222 = vmatprep.subr.mxu0 0.0
      %5223 = vmatpush1.msra.mxu0 0.0
      %5224 = vmatprep.subr.mxu0 0.0
      %5225 = vmatpush1.msra.mxu0 0.0
      %5226 = vmatprep.subr.mxu0 0.0
      %5227 = vmatpush1.msra.mxu0 0.0
      %5228 = vmatprep.subr.mxu0 0.0
      %5229 = vmatpush1.msra.mxu0 0.0
      %5230 = vmatprep.subr.mxu0 0.0
      %5231 = vmatpush1.msra.mxu0 0.0
      %5232 = vmatprep.subr.mxu0 0.0
      %5233 = vmatpush1.msra.mxu0 0.0
      %5234 = vmatprep.subr.mxu0 0.0
      %5235 = vmatpush1.msra.mxu0 0.0
      %5236 = vmatprep.subr.mxu0 0.0
      %5237 = vmatpush1.msra.mxu0 0.0
      %5238 = vmatprep.subr.mxu0 0.0
      %5239 = vmatpush1.msra.mxu0 0.0
      %5240 = vmatprep.subr.mxu0 0.0
      %5241 = vmatpush1.msra.mxu0 0.0
      %5242 = vmatprep.subr.mxu0 0.0
      %5243 = vmatpush1.msra.mxu0 0.0
      %5244 = vmatprep.subr.mxu0 0.0
      %5245 = vmatpush1.msra.mxu0 0.0
      %5246 = vmatprep.subr.mxu0 0.0
      %5247 = vmatpush1.msra.mxu0 0.0
      %5248 = vmatprep.subr.mxu0 0.0
      %5249 = vmatpush1.msra.mxu0 0.0
      %5250 = vmatprep.subr.mxu0 0.0
      %5251 = vmatpush1.msra.mxu0 0.0
      %5252 = vmatprep.subr.mxu0 0.0
      %5253 = vmatpush1.msra.mxu0 0.0
      %5254 = vmatprep.subr.mxu0 0.0
      %5255 = vmatpush1.msra.mxu0 0.0
      %5256 = vmatprep.mubr.f32.mxu0 0.0
      %5257 = vmatmul.mubr.f32.gmra.mrb[0].mxu0 %v5107
      %v5258 = vpop.f32.mrb[0].mxu0
      %v5259 = vadd.f32 0.0, %v5258
      %v5260 = vpop.f32.mrb[0].mxu0
      %5261 = vmatprep.mubr.f32.mxu0 0.0
      %5262 = vmatmul.mubr.f32.gmra.mrb[0].mxu0 %v5109
      %v5263 = vpop.f32.mrb[0].mxu0
      %v5264 = vadd.f32 0.0, %v5263
      %v5265 = vpop.f32.mrb[0].mxu0
      %5266 = vmatprep.mubr.f32.mxu0 0.0
      %5267 = vmatmul.mubr.f32.gmra.mrb[0].mxu0 %v5111
      %v5268 = vpop.f32.mrb[0].mxu0
      %v5269 = vadd.f32 0.0, %v5268
      %v5270 = vpop.f32.mrb[0].mxu0
      %5271 = vmatprep.mubr.f32.mxu0 0.0
      %5272 = vmatmul.mubr.f32.gmra.mrb[0].mxu0 %v5113
      %v5273 = vpop.f32.mrb[0].mxu0
      %v5274 = vadd.f32 0.0, %v5273
      %v5275 = vpop.f32.mrb[0].mxu0
      %5276 = vmatprep.mubr.f32.mxu0 0.0
      %5277 = vmatmul.mubr.f32.gmra.mrb[0].mxu0 %v5115
      %v5278 = vpop.f32.mrb[0].mxu0
      %v5279 = vadd.f32 0.0, %v5278
      %v5280 = vpop.f32.mrb[0].mxu0
      %5281 = vmatprep.mubr.f32.mxu0 0.0
      %5282 = vmatmul.mubr.f32.gmra.mrb[0].mxu0 %v5117
      %v5283 = vpop.f32.mrb[0].mxu0
      %v5284 = vadd.f32 0.0, %v5283
      %v5285 = vpop.f32.mrb[0].mxu0
      %5286 = vmatprep.mubr.f32.mxu0 0.0
      %5287 = vmatmul.mubr.f32.gmra.mrb[0].mxu0 %v5119
      %v5288 = vpop.f32.mrb[0].mxu0
      %v5289 = vadd.f32 0.0, %v5288
      %v5290 = vpop.f32.mrb[0].mxu0
      %5291 = vmatprep.mubr.f32.mxu0 0.0
      %5292 = vmatmul.mubr.f32.gmra.mrb[0].mxu0 %v5121
      %v5293 = vpop.f32.mrb[0].mxu0
      %v5294 = vadd.f32 0.0, %v5293
      %v5295 = vpop.f32.mrb[0].mxu0
      %5296 = vmatprep.mubr.f32.mxu0 0.0
      %5297 = vmatmul.mubr.f32.gmra.mrb[0].mxu0 %v5123
      %v5298 = vpop.f32.mrb[0].mxu0
      %v5299 = vadd.f32 0.0, %v5298
      %v5300 = vpop.f32.mrb[0].mxu0
      %5301 = vmatprep.mubr.f32.mxu0 0.0
      %5302 = vmatmul.mubr.f32.gmra.mrb[0].mxu0 %v5125
      %v5303 = vpop.f32.mrb[0].mxu0
      %v5304 = vadd.f32 0.0, %v5303
      %v5305 = vpop.f32.mrb[0].mxu0
      %5306 = vmatprep.mubr.f32.mxu0 0.0
      %5307 = vmatmul.mubr.f32.gmra.mrb[0].mxu0 %v5127
      %v5308 = vpop.f32.mrb[0].mxu0
      %v5309 = vadd.f32 0.0, %v5308
      %v5310 = vpop.f32.mrb[0].mxu0
      %5311 = vmatprep.mubr.f32.mxu0 0.0
      %5312 = vmatmul.mubr.f32.gmra.mrb[0].mxu0 %v5129
      %v5313 = vpop.f32.mrb[0].mxu0
      %v5314 = vadd.f32 0.0, %v5313
      %v5315 = vpop.f32.mrb[0].mxu0
      %5316 = vmatprep.mubr.f32.mxu0 0.0
      %5317 = vmatmul.mubr.f32.gmra.mrb[0].mxu0 %v5131
      %v5318 = vpop.f32.mrb[0].mxu0
      %v5319 = vadd.f32 0.0, %v5318
      %v5320 = vpop.f32.mrb[0].mxu0
      %5321 = vmatprep.mubr.f32.mxu0 0.0
      %5322 = vmatmul.mubr.f32.gmra.mrb[0].mxu0 %v5133
      %v5323 = vpop.f32.mrb[0].mxu0
      %v5324 = vadd.f32 0.0, %v5323
      %v5325 = vpop.f32.mrb[0].mxu0
      %5326 = vmatprep.mubr.f32.mxu0 0.0
      %5327 = vmatmul.mubr.f32.gmra.mrb[0].mxu0 %v5135
      %v5328 = vpop.f32.mrb[0].mxu0
      %v5329 = vadd.f32 0.0, %v5328
      %v5330 = vpop.f32.mrb[0].mxu0
      %5331 = vmatprep.mubr.f32.mxu0 0.0
      %5332 = vmatmul.mubr.f32.gmra.mrb[0].mxu0 %v5137
      %v5333 = vpop.f32.mrb[0].mxu0
      %v5334 = vadd.f32 0.0, %v5333
      %v5335 = vpop.f32.mrb[0].mxu0
      %5336 = vmatprep.mubr.f32.mxu0 0.0
      %5337 = vmatmul.mubr.f32.gmra.mrb[0].mxu0 %v5139
      %v5338 = vpop.f32.mrb[0].mxu0
      %v5339 = vadd.f32 0.0, %v5338
      %v5340 = vpop.f32.mrb[0].mxu0
      %5341 = vmatprep.mubr.f32.mxu0 0.0
      %5342 = vmatmul.mubr.f32.gmra.mrb[0].mxu0 %v5141
      %v5343 = vpop.f32.mrb[0].mxu0
      %v5344 = vadd.f32 0.0, %v5343
      %v5345 = vpop.f32.mrb[0].mxu0
      %5346 = vmatprep.mubr.f32.mxu0 0.0
      %5347 = vmatmul.mubr.f32.gmra.mrb[0].mxu0 %v5143
      %v5348 = vpop.f32.mrb[0].mxu0
      %v5349 = vadd.f32 0.0, %v5348
      %v5350 = vpop.f32.mrb[0].mxu0
      %5351 = vmatprep.mubr.f32.mxu0 0.0
      %5352 = vmatmul.mubr.f32.gmra.mrb[0].mxu0 %v5145
      %v5353 = vpop.f32.mrb[0].mxu0
      %v5354 = vadd.f32 0.0, %v5353
      %v5355 = vpop.f32.mrb[0].mxu0
      %5356 = vmatprep.mubr.f32.mxu0 0.0
      %5357 = vmatmul.mubr.f32.gmra.mrb[0].mxu0 %v5147
      %v5358 = vpop.f32.mrb[0].mxu0
      %v5359 = vadd.f32 0.0, %v5358
      %v5360 = vpop.f32.mrb[0].mxu0
      %5361 = vmatprep.mubr.f32.mxu0 0.0
      %5362 = vmatmul.mubr.f32.gmra.mrb[0].mxu0 %v5149
      %v5363 = vpop.f32.mrb[0].mxu0
      %v5364 = vadd.f32 0.0, %v5363
      %v5365 = vpop.f32.mrb[0].mxu0
      %5366 = vmatprep.mubr.f32.mxu0 0.0
      %5367 = vmatmul.mubr.f32.gmra.mrb[0].mxu0 %v5151
      %v5368 = vpop.f32.mrb[0].mxu0
      %v5369 = vadd.f32 0.0, %v5368
      %v5370 = vpop.f32.mrb[0].mxu0
      %5371 = vmatprep.mubr.f32.mxu0 0.0
      %5372 = vmatmul.mubr.f32.gmra.mrb[0].mxu0 %v5153
      %v5373 = vpop.f32.mrb[0].mxu0
      %v5374 = vadd.f32 0.0, %v5373
      %v5375 = vpop.f32.mrb[0].mxu0
      %5376 = vmatprep.mubr.f32.mxu0 0.0
      %5377 = vmatmul.mubr.f32.gmra.mrb[0].mxu0 %v5155
      %v5378 = vpop.f32.mrb[0].mxu0
      %v5379 = vadd.f32 0.0, %v5378
      %v5380 = vpop.f32.mrb[0].mxu0
      %5381 = vmatprep.mubr.f32.mxu0 0.0
      %5382 = vmatmul.mubr.f32.gmra.mrb[0].mxu0 %v5157
      %v5383 = vpop.f32.mrb[0].mxu0
      %v5384 = vadd.f32 0.0, %v5383
      %v5385 = vpop.f32.mrb[0].mxu0
      %5386 = vmatprep.mubr.f32.mxu0 0.0
      %5387 = vmatmul.mubr.f32.gmra.mrb[0].mxu0 %v5159
      %v5388 = vpop.f32.mrb[0].mxu0
      %v5389 = vadd.f32 0.0, %v5388
      %v5390 = vpop.f32.mrb[0].mxu0
      %5391 = vmatprep.mubr.f32.mxu0 0.0
      %5392 = vmatmul.mubr.f32.gmra.mrb[0].mxu0 %v5161
      %v5393 = vpop.f32.mrb[0].mxu0
      %v5394 = vadd.f32 0.0, %v5393
      %v5395 = vpop.f32.mrb[0].mxu0
      %5396 = vmatprep.mubr.f32.mxu0 0.0
      %5397 = vmatmul.mubr.f32.gmra.mrb[0].mxu0 %v5163
      %v5398 = vpop.f32.mrb[0].mxu0
      %v5399 = vadd.f32 0.0, %v5398
      %v5400 = vpop.f32.mrb[0].mxu0
      %5401 = vmatprep.mubr.f32.mxu0 0.0
      %5402 = vmatmul.mubr.f32.gmra.mrb[0].mxu0 %v5165
      %v5403 = vpop.f32.mrb[0].mxu0
      %v5404 = vadd.f32 0.0, %v5403
      %v5405 = vpop.f32.mrb[0].mxu0
      %5406 = vmatprep.mubr.f32.mxu0 0.0
      %5407 = vmatmul.mubr.f32.gmra.mrb[0].mxu0 %v5167
      %v5408 = vpop.f32.mrb[0].mxu0
      %v5409 = vadd.f32 0.0, %v5408
      %v5410 = vpop.f32.mrb[0].mxu0
      %5411 = vmatprep.mubr.f32.mxu0 0.0
      %5412 = vmatmul.mubr.f32.gmra.mrb[0].mxu0 %v5169
      %v5413 = vpop.f32.mrb[0].mxu0
      %v5414 = vadd.f32 0.0, %v5413
      %v5415 = vpop.f32.mrb[0].mxu0
      %5416 = vmatprep.mubr.f32.mxu0 0.0
      %5417 = vmatmul.mubr.f32.gmra.mrb[0].mxu0 %v5171
      %v5418 = vpop.f32.mrb[0].mxu0
      %v5419 = vadd.f32 0.0, %v5418
      %v5420 = vpop.f32.mrb[0].mxu0
      %5421 = vmatprep.mubr.f32.mxu0 0.0
      %5422 = vmatmul.mubr.f32.gmra.mrb[0].mxu0 %v5173
      %v5423 = vpop.f32.mrb[0].mxu0
      %v5424 = vadd.f32 0.0, %v5423
      %v5425 = vpop.f32.mrb[0].mxu0
      %5426 = vmatprep.mubr.f32.mxu0 0.0
      %5427 = vmatmul.mubr.f32.gmra.mrb[0].mxu0 %v5175
      %v5428 = vpop.f32.mrb[0].mxu0
      %v5429 = vadd.f32 0.0, %v5428
      %v5430 = vpop.f32.mrb[0].mxu0
      %5431 = vmatprep.mubr.f32.mxu0 0.0
      %5432 = vmatmul.mubr.f32.gmra.mrb[0].mxu0 %v5177
      %v5433 = vpop.f32.mrb[0].mxu0
      %v5434 = vadd.f32 0.0, %v5433
      %v5435 = vpop.f32.mrb[0].mxu0
      %5436 = vmatprep.mubr.f32.mxu0 0.0
      %5437 = vmatmul.mubr.f32.gmra.mrb[0].mxu0 %v5179
      %v5438 = vpop.f32.mrb[0].mxu0
      %v5439 = vadd.f32 0.0, %v5438
      %v5440 = vpop.f32.mrb[0].mxu0
      %5441 = vmatprep.mubr.f32.mxu0 0.0
      %5442 = vmatmul.mubr.f32.gmra.mrb[0].mxu0 %v5181
      %v5443 = vpop.f32.mrb[0].mxu0
      %v5444 = vadd.f32 0.0, %v5443
      %v5445 = vpop.f32.mrb[0].mxu0
      %5446 = vmatprep.mubr.f32.mxu0 0.0
      %5447 = vmatmul.mubr.f32.gmra.mrb[0].mxu0 %v5183
      %v5448 = vpop.f32.mrb[0].mxu0
      %v5449 = vadd.f32 0.0, %v5448
      %v5450 = vpop.f32.mrb[0].mxu0
      %5451 = vmatprep.mubr.f32.mxu0 0.0
      %5452 = vmatmul.mubr.f32.gmra.mrb[0].mxu0 %v5185
      %v5453 = vpop.f32.mrb[0].mxu0
      %v5454 = vadd.f32 0.0, %v5453
      %v5455 = vpop.f32.mrb[0].mxu0
      %5456 = vmatprep.mubr.f32.mxu0 0.0
      %5457 = vmatmul.mubr.f32.gmra.mrb[0].mxu0 %v5187
      %v5458 = vpop.f32.mrb[0].mxu0
      %v5459 = vadd.f32 0.0, %v5458
      %v5460 = vpop.f32.mrb[0].mxu0
      %5461 = vdwg.mxu0
      %v5462 = vsel %vm416, %v4936, 0
      %v5464 = vsel %vm416, %v4937, 0
      %v5466 = vsel %vm416, %v4938, 0
      %v5468 = vsel %vm416, %v4939, 0
      %v5470 = vsel %vm416, %v4940, 0
      %v5472 = vsel %vm416, %v4941, 0
      %v5474 = vsel %vm416, %v4942, 0
      %v5476 = vsel %vm416, %v4943, 0
      %v5478 = vsel %vm416, %v4944, 0
      %v5480 = vsel %vm416, %v4945, 0
      %v5482 = vsel %vm416, %v4946, 0
      %v5484 = vsel %vm416, %v4947, 0
      %v5486 = vsel %vm416, %v4948, 0
      %v5488 = vsel %vm416, %v4949, 0
      %v5490 = vsel %vm416, %v4950, 0
      %v5492 = vsel %vm416, %v4951, 0
      %v5494 = vsel %vm416, %v4952, 0
      %v5496 = vsel %vm416, %v4953, 0
      %v5498 = vsel %vm416, %v4954, 0
      %v5500 = vsel %vm416, %v4955, 0
      %v5502 = vsel %vm416, %v4956, 0
      %v5504 = vsel %vm416, %v4957, 0
      %v5506 = vsel %vm416, %v4958, 0
      %v5508 = vsel %vm416, %v4959, 0
      %v5510 = vsel %vm416, %v4960, 0
      %v5512 = vsel %vm416, %v4961, 0
      %v5514 = vsel %vm416, %v4962, 0
      %v5516 = vsel %vm416, %v4963, 0
      %v5518 = vsel %vm416, %v4964, 0
      %v5520 = vsel %vm416, %v4965, 0
      %v5522 = vsel %vm416, %v4966, 0
      %v5524 = vsel %vm416, %v4967, 0
      %v5526 = vsel %vm416, %v4968, 0
      %v5528 = vsel %vm416, %v4969, 0
      %v5530 = vsel %vm416, %v4970, 0
      %v5532 = vsel %vm416, %v4971, 0
      %v5534 = vsel %vm416, %v4972, 0
      %v5536 = vsel %vm416, %v4973, 0
      %v5538 = vsel %vm416, %v4974, 0
      %v5540 = vsel %vm416, %v4975, 0
      %v5542 = vsel %vm416, %v4976, 0
      %v5545 = vsel %vm509, %v4982, 0
      %5547 = vmatprep.subr.mxu0 0.0
      %5548 = vmatpush1.msra.mxu0 %v5545
      %5549 = vmatprep.subr.mxu0 0.0
      %5550 = vmatpush1.msra.mxu0 0.0
      %5551 = vmatprep.subr.mxu0 0.0
      %5552 = vmatpush1.msra.mxu0 0.0
      %5553 = vmatprep.subr.mxu0 0.0
      %5554 = vmatpush1.msra.mxu0 0.0
      %5555 = vmatprep.subr.mxu0 0.0
      %5556 = vmatpush1.msra.mxu0 0.0
      %5557 = vmatprep.subr.mxu0 0.0
      %5558 = vmatpush1.msra.mxu0 0.0
      %5559 = vmatprep.subr.mxu0 0.0
      %5560 = vmatpush1.msra.mxu0 0.0
      %5561 = vmatprep.subr.mxu0 0.0
      %5562 = vmatpush1.msra.mxu0 0.0
      %5563 = vmatprep.subr.mxu0 0.0
      %5564 = vmatpush1.msra.mxu0 0.0
      %5565 = vmatprep.subr.mxu0 0.0
      %5566 = vmatpush1.msra.mxu0 0.0
      %5567 = vmatprep.subr.mxu0 0.0
      %5568 = vmatpush1.msra.mxu0 0.0
      %5569 = vmatprep.subr.mxu0 0.0
      %5570 = vmatpush1.msra.mxu0 0.0
      %5571 = vmatprep.subr.mxu0 0.0
      %5572 = vmatpush1.msra.mxu0 0.0
      %5573 = vmatprep.subr.mxu0 0.0
      %5574 = vmatpush1.msra.mxu0 0.0
      %5575 = vmatprep.subr.mxu0 0.0
      %5576 = vmatpush1.msra.mxu0 0.0
      %5577 = vmatprep.subr.mxu0 0.0
      %5578 = vmatpush1.msra.mxu0 0.0
      %5579 = vmatprep.subr.mxu0 0.0
      %5580 = vmatpush1.msra.mxu0 0.0
      %5581 = vmatprep.subr.mxu0 0.0
      %5582 = vmatpush1.msra.mxu0 0.0
      %5583 = vmatprep.subr.mxu0 0.0
      %5584 = vmatpush1.msra.mxu0 0.0
      %5585 = vmatprep.subr.mxu0 0.0
      %5586 = vmatpush1.msra.mxu0 0.0
      %5587 = vmatprep.subr.mxu0 0.0
      %5588 = vmatpush1.msra.mxu0 0.0
      %5589 = vmatprep.subr.mxu0 0.0
      %5590 = vmatpush1.msra.mxu0 0.0
      %5591 = vmatprep.subr.mxu0 0.0
      %5592 = vmatpush1.msra.mxu0 0.0
      %5593 = vmatprep.subr.mxu0 0.0
      %5594 = vmatpush1.msra.mxu0 0.0
      %5595 = vmatprep.subr.mxu0 0.0
      %5596 = vmatpush1.msra.mxu0 0.0
      %5597 = vmatprep.subr.mxu0 0.0
      %5598 = vmatpush1.msra.mxu0 0.0
      %5599 = vmatprep.subr.mxu0 0.0
      %5600 = vmatpush1.msra.mxu0 0.0
      %5601 = vmatprep.subr.mxu0 0.0
      %5602 = vmatpush1.msra.mxu0 0.0
      %5603 = vmatprep.subr.mxu0 0.0
      %5604 = vmatpush1.msra.mxu0 0.0
      %5605 = vmatprep.subr.mxu0 0.0
      %5606 = vmatpush1.msra.mxu0 0.0
      %5607 = vmatprep.subr.mxu0 0.0
      %5608 = vmatpush1.msra.mxu0 0.0
      %5609 = vmatprep.subr.mxu0 0.0
      %5610 = vmatpush1.msra.mxu0 0.0
      %5611 = vmatprep.mubr.f32.mxu0 0.0
      %5612 = vmatmul.mubr.f32.gmra.mrb[0].mxu0 %v5462
      %v5613 = vpop.f32.mrb[0].mxu0
      %v5614 = vadd.f32 %v5259, %v5613
      %v5615 = vpop.f32.mrb[0].mxu0
      %5616 = vmatprep.mubr.f32.mxu0 0.0
      %5617 = vmatmul.mubr.f32.gmra.mrb[0].mxu0 %v5464
      %v5618 = vpop.f32.mrb[0].mxu0
      %v5619 = vadd.f32 %v5264, %v5618
      %v5620 = vpop.f32.mrb[0].mxu0
      %5621 = vmatprep.mubr.f32.mxu0 0.0
      %5622 = vmatmul.mubr.f32.gmra.mrb[0].mxu0 %v5466
      %v5623 = vpop.f32.mrb[0].mxu0
      %v5624 = vadd.f32 %v5269, %v5623
      %v5625 = vpop.f32.mrb[0].mxu0
      %5626 = vmatprep.mubr.f32.mxu0 0.0
      %5627 = vmatmul.mubr.f32.gmra.mrb[0].mxu0 %v5468
      %v5628 = vpop.f32.mrb[0].mxu0
      %v5629 = vadd.f32 %v5274, %v5628
      %v5630 = vpop.f32.mrb[0].mxu0
      %5631 = vmatprep.mubr.f32.mxu0 0.0
      %5632 = vmatmul.mubr.f32.gmra.mrb[0].mxu0 %v5470
      %v5633 = vpop.f32.mrb[0].mxu0
      %v5634 = vadd.f32 %v5279, %v5633
      %v5635 = vpop.f32.mrb[0].mxu0
      %5636 = vmatprep.mubr.f32.mxu0 0.0
      %5637 = vmatmul.mubr.f32.gmra.mrb[0].mxu0 %v5472
      %v5638 = vpop.f32.mrb[0].mxu0
      %v5639 = vadd.f32 %v5284, %v5638
      %v5640 = vpop.f32.mrb[0].mxu0
      %5641 = vmatprep.mubr.f32.mxu0 0.0
      %5642 = vmatmul.mubr.f32.gmra.mrb[0].mxu0 %v5474
      %v5643 = vpop.f32.mrb[0].mxu0
      %v5644 = vadd.f32 %v5289, %v5643
      %v5645 = vpop.f32.mrb[0].mxu0
      %5646 = vmatprep.mubr.f32.mxu0 0.0
      %5647 = vmatmul.mubr.f32.gmra.mrb[0].mxu0 %v5476
      %v5648 = vpop.f32.mrb[0].mxu0
      %v5649 = vadd.f32 %v5294, %v5648
      %v5650 = vpop.f32.mrb[0].mxu0
      %5651 = vmatprep.mubr.f32.mxu0 0.0
      %5652 = vmatmul.mubr.f32.gmra.mrb[0].mxu0 %v5478
      %v5653 = vpop.f32.mrb[0].mxu0
      %v5654 = vadd.f32 %v5299, %v5653
      %v5655 = vpop.f32.mrb[0].mxu0
      %5656 = vmatprep.mubr.f32.mxu0 0.0
      %5657 = vmatmul.mubr.f32.gmra.mrb[0].mxu0 %v5480
      %v5658 = vpop.f32.mrb[0].mxu0
      %v5659 = vadd.f32 %v5304, %v5658
      %v5660 = vpop.f32.mrb[0].mxu0
      %5661 = vmatprep.mubr.f32.mxu0 0.0
      %5662 = vmatmul.mubr.f32.gmra.mrb[0].mxu0 %v5482
      %v5663 = vpop.f32.mrb[0].mxu0
      %v5664 = vadd.f32 %v5309, %v5663
      %v5665 = vpop.f32.mrb[0].mxu0
      %5666 = vmatprep.mubr.f32.mxu0 0.0
      %5667 = vmatmul.mubr.f32.gmra.mrb[0].mxu0 %v5484
      %v5668 = vpop.f32.mrb[0].mxu0
      %v5669 = vadd.f32 %v5314, %v5668
      %v5670 = vpop.f32.mrb[0].mxu0
      %5671 = vmatprep.mubr.f32.mxu0 0.0
      %5672 = vmatmul.mubr.f32.gmra.mrb[0].mxu0 %v5486
      %v5673 = vpop.f32.mrb[0].mxu0
      %v5674 = vadd.f32 %v5319, %v5673
      %v5675 = vpop.f32.mrb[0].mxu0
      %5676 = vmatprep.mubr.f32.mxu0 0.0
      %5677 = vmatmul.mubr.f32.gmra.mrb[0].mxu0 %v5488
      %v5678 = vpop.f32.mrb[0].mxu0
      %v5679 = vadd.f32 %v5324, %v5678
      %v5680 = vpop.f32.mrb[0].mxu0
      %5681 = vmatprep.mubr.f32.mxu0 0.0
      %5682 = vmatmul.mubr.f32.gmra.mrb[0].mxu0 %v5490
      %v5683 = vpop.f32.mrb[0].mxu0
      %v5684 = vadd.f32 %v5329, %v5683
      %v5685 = vpop.f32.mrb[0].mxu0
      %5686 = vmatprep.mubr.f32.mxu0 0.0
      %5687 = vmatmul.mubr.f32.gmra.mrb[0].mxu0 %v5492
      %v5688 = vpop.f32.mrb[0].mxu0
      %v5689 = vadd.f32 %v5334, %v5688
      %v5690 = vpop.f32.mrb[0].mxu0
      %5691 = vmatprep.mubr.f32.mxu0 0.0
      %5692 = vmatmul.mubr.f32.gmra.mrb[0].mxu0 %v5494
      %v5693 = vpop.f32.mrb[0].mxu0
      %v5694 = vadd.f32 %v5339, %v5693
      %v5695 = vpop.f32.mrb[0].mxu0
      %5696 = vmatprep.mubr.f32.mxu0 0.0
      %5697 = vmatmul.mubr.f32.gmra.mrb[0].mxu0 %v5496
      %v5698 = vpop.f32.mrb[0].mxu0
      %v5699 = vadd.f32 %v5344, %v5698
      %v5700 = vpop.f32.mrb[0].mxu0
      %5701 = vmatprep.mubr.f32.mxu0 0.0
      %5702 = vmatmul.mubr.f32.gmra.mrb[0].mxu0 %v5498
      %v5703 = vpop.f32.mrb[0].mxu0
      %v5704 = vadd.f32 %v5349, %v5703
      %v5705 = vpop.f32.mrb[0].mxu0
      %5706 = vmatprep.mubr.f32.mxu0 0.0
      %5707 = vmatmul.mubr.f32.gmra.mrb[0].mxu0 %v5500
      %v5708 = vpop.f32.mrb[0].mxu0
      %v5709 = vadd.f32 %v5354, %v5708
      %v5710 = vpop.f32.mrb[0].mxu0
      %5711 = vmatprep.mubr.f32.mxu0 0.0
      %5712 = vmatmul.mubr.f32.gmra.mrb[0].mxu0 %v5502
      %v5713 = vpop.f32.mrb[0].mxu0
      %v5714 = vadd.f32 %v5359, %v5713
      %v5715 = vpop.f32.mrb[0].mxu0
      %5716 = vmatprep.mubr.f32.mxu0 0.0
      %5717 = vmatmul.mubr.f32.gmra.mrb[0].mxu0 %v5504
      %v5718 = vpop.f32.mrb[0].mxu0
      %v5719 = vadd.f32 %v5364, %v5718
      %v5720 = vpop.f32.mrb[0].mxu0
      %5721 = vmatprep.mubr.f32.mxu0 0.0
      %5722 = vmatmul.mubr.f32.gmra.mrb[0].mxu0 %v5506
      %v5723 = vpop.f32.mrb[0].mxu0
      %v5724 = vadd.f32 %v5369, %v5723
      %v5725 = vpop.f32.mrb[0].mxu0
      %5726 = vmatprep.mubr.f32.mxu0 0.0
      %5727 = vmatmul.mubr.f32.gmra.mrb[0].mxu0 %v5508
      %v5728 = vpop.f32.mrb[0].mxu0
      %v5729 = vadd.f32 %v5374, %v5728
      %v5730 = vpop.f32.mrb[0].mxu0
      %5731 = vmatprep.mubr.f32.mxu0 0.0
      %5732 = vmatmul.mubr.f32.gmra.mrb[0].mxu0 %v5510
      %v5733 = vpop.f32.mrb[0].mxu0
      %v5734 = vadd.f32 %v5379, %v5733
      %v5735 = vpop.f32.mrb[0].mxu0
      %5736 = vmatprep.mubr.f32.mxu0 0.0
      %5737 = vmatmul.mubr.f32.gmra.mrb[0].mxu0 %v5512
      %v5738 = vpop.f32.mrb[0].mxu0
      %v5739 = vadd.f32 %v5384, %v5738
      %v5740 = vpop.f32.mrb[0].mxu0
      %5741 = vmatprep.mubr.f32.mxu0 0.0
      %5742 = vmatmul.mubr.f32.gmra.mrb[0].mxu0 %v5514
      %v5743 = vpop.f32.mrb[0].mxu0
      %v5744 = vadd.f32 %v5389, %v5743
      %v5745 = vpop.f32.mrb[0].mxu0
      %5746 = vmatprep.mubr.f32.mxu0 0.0
      %5747 = vmatmul.mubr.f32.gmra.mrb[0].mxu0 %v5516
      %v5748 = vpop.f32.mrb[0].mxu0
      %v5749 = vadd.f32 %v5394, %v5748
      %v5750 = vpop.f32.mrb[0].mxu0
      %5751 = vmatprep.mubr.f32.mxu0 0.0
      %5752 = vmatmul.mubr.f32.gmra.mrb[0].mxu0 %v5518
      %v5753 = vpop.f32.mrb[0].mxu0
      %v5754 = vadd.f32 %v5399, %v5753
      %v5755 = vpop.f32.mrb[0].mxu0
      %5756 = vmatprep.mubr.f32.mxu0 0.0
      %5757 = vmatmul.mubr.f32.gmra.mrb[0].mxu0 %v5520
      %v5758 = vpop.f32.mrb[0].mxu0
      %v5759 = vadd.f32 %v5404, %v5758
      %v5760 = vpop.f32.mrb[0].mxu0
      %5761 = vmatprep.mubr.f32.mxu0 0.0
      %5762 = vmatmul.mubr.f32.gmra.mrb[0].mxu0 %v5522
      %v5763 = vpop.f32.mrb[0].mxu0
      %v5764 = vadd.f32 %v5409, %v5763
      %v5765 = vpop.f32.mrb[0].mxu0
      %5766 = vmatprep.mubr.f32.mxu0 0.0
      %5767 = vmatmul.mubr.f32.gmra.mrb[0].mxu0 %v5524
      %v5768 = vpop.f32.mrb[0].mxu0
      %v5769 = vadd.f32 %v5414, %v5768
      %v5770 = vpop.f32.mrb[0].mxu0
      %5771 = vmatprep.mubr.f32.mxu0 0.0
      %5772 = vmatmul.mubr.f32.gmra.mrb[0].mxu0 %v5526
      %v5773 = vpop.f32.mrb[0].mxu0
      %v5774 = vadd.f32 %v5419, %v5773
      %v5775 = vpop.f32.mrb[0].mxu0
      %5776 = vmatprep.mubr.f32.mxu0 0.0
      %5777 = vmatmul.mubr.f32.gmra.mrb[0].mxu0 %v5528
      %v5778 = vpop.f32.mrb[0].mxu0
      %v5779 = vadd.f32 %v5424, %v5778
      %v5780 = vpop.f32.mrb[0].mxu0
      %5781 = vmatprep.mubr.f32.mxu0 0.0
      %5782 = vmatmul.mubr.f32.gmra.mrb[0].mxu0 %v5530
      %v5783 = vpop.f32.mrb[0].mxu0
      %v5784 = vadd.f32 %v5429, %v5783
      %v5785 = vpop.f32.mrb[0].mxu0
      %5786 = vmatprep.mubr.f32.mxu0 0.0
      %5787 = vmatmul.mubr.f32.gmra.mrb[0].mxu0 %v5532
      %v5788 = vpop.f32.mrb[0].mxu0
      %v5789 = vadd.f32 %v5434, %v5788
      %v5790 = vpop.f32.mrb[0].mxu0
      %5791 = vmatprep.mubr.f32.mxu0 0.0
      %5792 = vmatmul.mubr.f32.gmra.mrb[0].mxu0 %v5534
      %v5793 = vpop.f32.mrb[0].mxu0
      %v5794 = vadd.f32 %v5439, %v5793
      %v5795 = vpop.f32.mrb[0].mxu0
      %5796 = vmatprep.mubr.f32.mxu0 0.0
      %5797 = vmatmul.mubr.f32.gmra.mrb[0].mxu0 %v5536
      %v5798 = vpop.f32.mrb[0].mxu0
      %v5799 = vadd.f32 %v5444, %v5798
      %v5800 = vpop.f32.mrb[0].mxu0
      %5801 = vmatprep.mubr.f32.mxu0 0.0
      %5802 = vmatmul.mubr.f32.gmra.mrb[0].mxu0 %v5538
      %v5803 = vpop.f32.mrb[0].mxu0
      %v5804 = vadd.f32 %v5449, %v5803
      %v5805 = vpop.f32.mrb[0].mxu0
      %5806 = vmatprep.mubr.f32.mxu0 0.0
      %5807 = vmatmul.mubr.f32.gmra.mrb[0].mxu0 %v5540
      %v5808 = vpop.f32.mrb[0].mxu0
      %v5809 = vadd.f32 %v5454, %v5808
      %v5810 = vpop.f32.mrb[0].mxu0
      %5811 = vmatprep.mubr.f32.mxu0 0.0
      %5812 = vmatmul.mubr.f32.gmra.mrb[0].mxu0 %v5542
      %v5813 = vpop.f32.mrb[0].mxu0
      %v5814 = vadd.f32 %v5459, %v5813
      %v5815 = vpop.f32.mrb[0].mxu0
      %5816 = vdwg.mxu0
      %s5817 = scalar_lea.vmem %s2, 8
      %v5818 = vld [vmem:[%s5817] sm:$0xf]
      %v5819 = vrot.slane %v4936, 2
      %v5820 = vrot.slane %v4937, 2
      %v5821 = vsel %vm1200, %v5819, %v5820
      %v5822 = vrot.slane %v4938, 2
      %v5823 = vsel %vm1200, %v5820, %v5822
      %v5824 = vrot.slane %v4939, 2
      %v5825 = vsel %vm1200, %v5822, %v5824
      %v5826 = vrot.slane %v4940, 2
      %v5827 = vsel %vm1200, %v5824, %v5826
      %v5828 = vrot.slane %v4941, 2
      %v5829 = vsel %vm1200, %v5826, %v5828
      %v5830 = vrot.slane %v4942, 2
      %v5831 = vsel %vm1200, %v5828, %v5830
      %v5832 = vrot.slane %v4943, 2
      %v5833 = vsel %vm1200, %v5830, %v5832
      %v5834 = vrot.slane %v4944, 2
      %v5835 = vsel %vm1200, %v5832, %v5834
      %v5836 = vrot.slane %v4945, 2
      %v5837 = vsel %vm1200, %v5834, %v5836
      %v5838 = vrot.slane %v4946, 2
      %v5839 = vsel %vm1200, %v5836, %v5838
      %v5840 = vrot.slane %v4947, 2
      %v5841 = vsel %vm1200, %v5838, %v5840
      %v5842 = vrot.slane %v4948, 2
      %v5843 = vsel %vm1200, %v5840, %v5842
      %v5844 = vrot.slane %v4949, 2
      %v5845 = vsel %vm1200, %v5842, %v5844
      %v5846 = vrot.slane %v4950, 2
      %v5847 = vsel %vm1200, %v5844, %v5846
      %v5848 = vrot.slane %v4951, 2
      %v5849 = vsel %vm1200, %v5846, %v5848
      %v5850 = vrot.slane %v4952, 2
      %v5851 = vsel %vm1200, %v5848, %v5850
      %v5852 = vrot.slane %v4953, 2
      %v5853 = vsel %vm1200, %v5850, %v5852
      %v5854 = vrot.slane %v4954, 2
      %v5855 = vsel %vm1200, %v5852, %v5854
      %v5856 = vrot.slane %v4955, 2
      %v5857 = vsel %vm1200, %v5854, %v5856
      %v5858 = vrot.slane %v4956, 2
      %v5859 = vsel %vm1200, %v5856, %v5858
      %v5860 = vrot.slane %v4957, 2
      %v5861 = vsel %vm1200, %v5858, %v5860
      %v5862 = vrot.slane %v4958, 2
      %v5863 = vsel %vm1200, %v5860, %v5862
      %v5864 = vrot.slane %v4959, 2
      %v5865 = vsel %vm1200, %v5862, %v5864
      %v5866 = vrot.slane %v4960, 2
      %v5867 = vsel %vm1200, %v5864, %v5866
      %v5868 = vrot.slane %v4961, 2
      %v5869 = vsel %vm1200, %v5866, %v5868
      %v5870 = vrot.slane %v4962, 2
      %v5871 = vsel %vm1200, %v5868, %v5870
      %v5872 = vrot.slane %v4963, 2
      %v5873 = vsel %vm1200, %v5870, %v5872
      %v5874 = vrot.slane %v4964, 2
      %v5875 = vsel %vm1200, %v5872, %v5874
      %v5876 = vrot.slane %v4965, 2
      %v5877 = vsel %vm1200, %v5874, %v5876
      %v5878 = vrot.slane %v4966, 2
      %v5879 = vsel %vm1200, %v5876, %v5878
      %v5880 = vrot.slane %v4967, 2
      %v5881 = vsel %vm1200, %v5878, %v5880
      %v5882 = vrot.slane %v4968, 2
      %v5883 = vsel %vm1200, %v5880, %v5882
      %v5884 = vrot.slane %v4969, 2
      %v5885 = vsel %vm1200, %v5882, %v5884
      %v5886 = vrot.slane %v4970, 2
      %v5887 = vsel %vm1200, %v5884, %v5886
      %v5888 = vrot.slane %v4971, 2
      %v5889 = vsel %vm1200, %v5886, %v5888
      %v5890 = vrot.slane %v4972, 2
      %v5891 = vsel %vm1200, %v5888, %v5890
      %v5892 = vrot.slane %v4973, 2
      %v5893 = vsel %vm1200, %v5890, %v5892
      %v5894 = vrot.slane %v4974, 2
      %v5895 = vsel %vm1200, %v5892, %v5894
      %v5896 = vrot.slane %v4975, 2
      %v5897 = vsel %vm1200, %v5894, %v5896
      %v5898 = vrot.slane %v4976, 2
      %v5899 = vsel %vm1200, %v5896, %v5898
      %v5900 = vsel %vm416, %v5821, 0
      %v5902 = vsel %vm416, %v5823, 0
      %v5904 = vsel %vm416, %v5825, 0
      %v5906 = vsel %vm416, %v5827, 0
      %v5908 = vsel %vm416, %v5829, 0
      %v5910 = vsel %vm416, %v5831, 0
      %v5912 = vsel %vm416, %v5833, 0
      %v5914 = vsel %vm416, %v5835, 0
      %v5916 = vsel %vm416, %v5837, 0
      %v5918 = vsel %vm416, %v5839, 0
      %v5920 = vsel %vm416, %v5841, 0
      %v5922 = vsel %vm416, %v5843, 0
      %v5924 = vsel %vm416, %v5845, 0
      %v5926 = vsel %vm416, %v5847, 0
      %v5928 = vsel %vm416, %v5849, 0
      %v5930 = vsel %vm416, %v5851, 0
      %v5932 = vsel %vm416, %v5853, 0
      %v5934 = vsel %vm416, %v5855, 0
      %v5936 = vsel %vm416, %v5857, 0
      %v5938 = vsel %vm416, %v5859, 0
      %v5940 = vsel %vm416, %v5861, 0
      %v5942 = vsel %vm416, %v5863, 0
      %v5944 = vsel %vm416, %v5865, 0
      %v5946 = vsel %vm416, %v5867, 0
      %v5948 = vsel %vm416, %v5869, 0
      %v5950 = vsel %vm416, %v5871, 0
      %v5952 = vsel %vm416, %v5873, 0
      %v5954 = vsel %vm416, %v5875, 0
      %v5956 = vsel %vm416, %v5877, 0
      %v5958 = vsel %vm416, %v5879, 0
      %v5960 = vsel %vm416, %v5881, 0
      %v5962 = vsel %vm416, %v5883, 0
      %v5964 = vsel %vm416, %v5885, 0
      %v5966 = vsel %vm416, %v5887, 0
      %v5968 = vsel %vm416, %v5889, 0
      %v5970 = vsel %vm416, %v5891, 0
      %v5972 = vsel %vm416, %v5893, 0
      %v5974 = vsel %vm416, %v5895, 0
      %v5976 = vsel %vm416, %v5897, 0
      %v5978 = vsel %vm416, %v5899, 0
      %v5980 = vsel %vm416, %v5898, 0
      %v5983 = vsel %vm509, %v5818, 0
      %5985 = vmatprep.subr.mxu0 0.0
      %5986 = vmatpush1.msra.mxu0 %v5983
      %5987 = vmatprep.subr.mxu0 0.0
      %5988 = vmatpush1.msra.mxu0 0.0
      %5989 = vmatprep.subr.mxu0 0.0
      %5990 = vmatpush1.msra.mxu0 0.0
      %5991 = vmatprep.subr.mxu0 0.0
      %5992 = vmatpush1.msra.mxu0 0.0
      %5993 = vmatprep.subr.mxu0 0.0
      %5994 = vmatpush1.msra.mxu0 0.0
      %5995 = vmatprep.subr.mxu0 0.0
      %5996 = vmatpush1.msra.mxu0 0.0
      %5997 = vmatprep.subr.mxu0 0.0
      %5998 = vmatpush1.msra.mxu0 0.0
      %5999 = vmatprep.subr.mxu0 0.0
      %6000 = vmatpush1.msra.mxu0 0.0
      %6001 = vmatprep.subr.mxu0 0.0
      %6002 = vmatpush1.msra.mxu0 0.0
      %6003 = vmatprep.subr.mxu0 0.0
      %6004 = vmatpush1.msra.mxu0 0.0
      %6005 = vmatprep.subr.mxu0 0.0
      %6006 = vmatpush1.msra.mxu0 0.0
      %6007 = vmatprep.subr.mxu0 0.0
      %6008 = vmatpush1.msra.mxu0 0.0
      %6009 = vmatprep.subr.mxu0 0.0
      %6010 = vmatpush1.msra.mxu0 0.0
      %6011 = vmatprep.subr.mxu0 0.0
      %6012 = vmatpush1.msra.mxu0 0.0
      %6013 = vmatprep.subr.mxu0 0.0
      %6014 = vmatpush1.msra.mxu0 0.0
      %6015 = vmatprep.subr.mxu0 0.0
      %6016 = vmatpush1.msra.mxu0 0.0
      %6017 = vmatprep.subr.mxu0 0.0
      %6018 = vmatpush1.msra.mxu0 0.0
      %6019 = vmatprep.subr.mxu0 0.0
      %6020 = vmatpush1.msra.mxu0 0.0
      %6021 = vmatprep.subr.mxu0 0.0
      %6022 = vmatpush1.msra.mxu0 0.0
      %6023 = vmatprep.subr.mxu0 0.0
      %6024 = vmatpush1.msra.mxu0 0.0
      %6025 = vmatprep.subr.mxu0 0.0
      %6026 = vmatpush1.msra.mxu0 0.0
      %6027 = vmatprep.subr.mxu0 0.0
      %6028 = vmatpush1.msra.mxu0 0.0
      %6029 = vmatprep.subr.mxu0 0.0
      %6030 = vmatpush1.msra.mxu0 0.0
      %6031 = vmatprep.subr.mxu0 0.0
      %6032 = vmatpush1.msra.mxu0 0.0
      %6033 = vmatprep.subr.mxu0 0.0
      %6034 = vmatpush1.msra.mxu0 0.0
      %6035 = vmatprep.subr.mxu0 0.0
      %6036 = vmatpush1.msra.mxu0 0.0
      %6037 = vmatprep.subr.mxu0 0.0
      %6038 = vmatpush1.msra.mxu0 0.0
      %6039 = vmatprep.subr.mxu0 0.0
      %6040 = vmatpush1.msra.mxu0 0.0
      %6041 = vmatprep.subr.mxu0 0.0
      %6042 = vmatpush1.msra.mxu0 0.0
      %6043 = vmatprep.subr.mxu0 0.0
      %6044 = vmatpush1.msra.mxu0 0.0
      %6045 = vmatprep.subr.mxu0 0.0
      %6046 = vmatpush1.msra.mxu0 0.0
      %6047 = vmatprep.subr.mxu0 0.0
      %6048 = vmatpush1.msra.mxu0 0.0
      %6049 = vmatprep.mubr.f32.mxu0 0.0
      %6050 = vmatmul.mubr.f32.gmra.mrb[0].mxu0 %v5900
      %v6051 = vpop.f32.mrb[0].mxu0
      %v6052 = vadd.f32 0.0, %v6051
      %v6053 = vpop.f32.mrb[0].mxu0
      %6054 = vmatprep.mubr.f32.mxu0 0.0
      %6055 = vmatmul.mubr.f32.gmra.mrb[0].mxu0 %v5902
      %v6056 = vpop.f32.mrb[0].mxu0
      %v6057 = vadd.f32 0.0, %v6056
      %v6058 = vpop.f32.mrb[0].mxu0
      %6059 = vmatprep.mubr.f32.mxu0 0.0
      %6060 = vmatmul.mubr.f32.gmra.mrb[0].mxu0 %v5904
      %v6061 = vpop.f32.mrb[0].mxu0
      %v6062 = vadd.f32 0.0, %v6061
      %v6063 = vpop.f32.mrb[0].mxu0
      %6064 = vmatprep.mubr.f32.mxu0 0.0
      %6065 = vmatmul.mubr.f32.gmra.mrb[0].mxu0 %v5906
      %v6066 = vpop.f32.mrb[0].mxu0
      %v6067 = vadd.f32 0.0, %v6066
      %v6068 = vpop.f32.mrb[0].mxu0
      %6069 = vmatprep.mubr.f32.mxu0 0.0
      %6070 = vmatmul.mubr.f32.gmra.mrb[0].mxu0 %v5908
      %v6071 = vpop.f32.mrb[0].mxu0
      %v6072 = vadd.f32 0.0, %v6071
      %v6073 = vpop.f32.mrb[0].mxu0
      %6074 = vmatprep.mubr.f32.mxu0 0.0
      %6075 = vmatmul.mubr.f32.gmra.mrb[0].mxu0 %v5910
      %v6076 = vpop.f32.mrb[0].mxu0
      %v6077 = vadd.f32 0.0, %v6076
      %v6078 = vpop.f32.mrb[0].mxu0
      %6079 = vmatprep.mubr.f32.mxu0 0.0
      %6080 = vmatmul.mubr.f32.gmra.mrb[0].mxu0 %v5912
      %v6081 = vpop.f32.mrb[0].mxu0
      %v6082 = vadd.f32 0.0, %v6081
      %v6083 = vpop.f32.mrb[0].mxu0
      %6084 = vmatprep.mubr.f32.mxu0 0.0
      %6085 = vmatmul.mubr.f32.gmra.mrb[0].mxu0 %v5914
      %v6086 = vpop.f32.mrb[0].mxu0
      %v6087 = vadd.f32 0.0, %v6086
      %v6088 = vpop.f32.mrb[0].mxu0
      %6089 = vmatprep.mubr.f32.mxu0 0.0
      %6090 = vmatmul.mubr.f32.gmra.mrb[0].mxu0 %v5916
      %v6091 = vpop.f32.mrb[0].mxu0
      %v6092 = vadd.f32 0.0, %v6091
      %v6093 = vpop.f32.mrb[0].mxu0
      %6094 = vmatprep.mubr.f32.mxu0 0.0
      %6095 = vmatmul.mubr.f32.gmra.mrb[0].mxu0 %v5918
      %v6096 = vpop.f32.mrb[0].mxu0
      %v6097 = vadd.f32 0.0, %v6096
      %v6098 = vpop.f32.mrb[0].mxu0
      %6099 = vmatprep.mubr.f32.mxu0 0.0
      %6100 = vmatmul.mubr.f32.gmra.mrb[0].mxu0 %v5920
      %v6101 = vpop.f32.mrb[0].mxu0
      %v6102 = vadd.f32 0.0, %v6101
      %v6103 = vpop.f32.mrb[0].mxu0
      %6104 = vmatprep.mubr.f32.mxu0 0.0
      %6105 = vmatmul.mubr.f32.gmra.mrb[0].mxu0 %v5922
      %v6106 = vpop.f32.mrb[0].mxu0
      %v6107 = vadd.f32 0.0, %v6106
      %v6108 = vpop.f32.mrb[0].mxu0
      %6109 = vmatprep.mubr.f32.mxu0 0.0
      %6110 = vmatmul.mubr.f32.gmra.mrb[0].mxu0 %v5924
      %v6111 = vpop.f32.mrb[0].mxu0
      %v6112 = vadd.f32 0.0, %v6111
      %v6113 = vpop.f32.mrb[0].mxu0
      %6114 = vmatprep.mubr.f32.mxu0 0.0
      %6115 = vmatmul.mubr.f32.gmra.mrb[0].mxu0 %v5926
      %v6116 = vpop.f32.mrb[0].mxu0
      %v6117 = vadd.f32 0.0, %v6116
      %v6118 = vpop.f32.mrb[0].mxu0
      %6119 = vmatprep.mubr.f32.mxu0 0.0
      %6120 = vmatmul.mubr.f32.gmra.mrb[0].mxu0 %v5928
      %v6121 = vpop.f32.mrb[0].mxu0
      %v6122 = vadd.f32 0.0, %v6121
      %v6123 = vpop.f32.mrb[0].mxu0
      %6124 = vmatprep.mubr.f32.mxu0 0.0
      %6125 = vmatmul.mubr.f32.gmra.mrb[0].mxu0 %v5930
      %v6126 = vpop.f32.mrb[0].mxu0
      %v6127 = vadd.f32 0.0, %v6126
      %v6128 = vpop.f32.mrb[0].mxu0
      %6129 = vmatprep.mubr.f32.mxu0 0.0
      %6130 = vmatmul.mubr.f32.gmra.mrb[0].mxu0 %v5932
      %v6131 = vpop.f32.mrb[0].mxu0
      %v6132 = vadd.f32 0.0, %v6131
      %v6133 = vpop.f32.mrb[0].mxu0
      %6134 = vmatprep.mubr.f32.mxu0 0.0
      %6135 = vmatmul.mubr.f32.gmra.mrb[0].mxu0 %v5934
      %v6136 = vpop.f32.mrb[0].mxu0
      %v6137 = vadd.f32 0.0, %v6136
      %v6138 = vpop.f32.mrb[0].mxu0
      %6139 = vmatprep.mubr.f32.mxu0 0.0
      %6140 = vmatmul.mubr.f32.gmra.mrb[0].mxu0 %v5936
      %v6141 = vpop.f32.mrb[0].mxu0
      %v6142 = vadd.f32 0.0, %v6141
      %v6143 = vpop.f32.mrb[0].mxu0
      %6144 = vmatprep.mubr.f32.mxu0 0.0
      %6145 = vmatmul.mubr.f32.gmra.mrb[0].mxu0 %v5938
      %v6146 = vpop.f32.mrb[0].mxu0
      %v6147 = vadd.f32 0.0, %v6146
      %v6148 = vpop.f32.mrb[0].mxu0
      %6149 = vmatprep.mubr.f32.mxu0 0.0
      %6150 = vmatmul.mubr.f32.gmra.mrb[0].mxu0 %v5940
      %v6151 = vpop.f32.mrb[0].mxu0
      %v6152 = vadd.f32 0.0, %v6151
      %v6153 = vpop.f32.mrb[0].mxu0
      %6154 = vmatprep.mubr.f32.mxu0 0.0
      %6155 = vmatmul.mubr.f32.gmra.mrb[0].mxu0 %v5942
      %v6156 = vpop.f32.mrb[0].mxu0
      %v6157 = vadd.f32 0.0, %v6156
      %v6158 = vpop.f32.mrb[0].mxu0
      %6159 = vmatprep.mubr.f32.mxu0 0.0
      %6160 = vmatmul.mubr.f32.gmra.mrb[0].mxu0 %v5944
      %v6161 = vpop.f32.mrb[0].mxu0
      %v6162 = vadd.f32 0.0, %v6161
      %v6163 = vpop.f32.mrb[0].mxu0
      %6164 = vmatprep.mubr.f32.mxu0 0.0
      %6165 = vmatmul.mubr.f32.gmra.mrb[0].mxu0 %v5946
      %v6166 = vpop.f32.mrb[0].mxu0
      %v6167 = vadd.f32 0.0, %v6166
      %v6168 = vpop.f32.mrb[0].mxu0
      %6169 = vmatprep.mubr.f32.mxu0 0.0
      %6170 = vmatmul.mubr.f32.gmra.mrb[0].mxu0 %v5948
      %v6171 = vpop.f32.mrb[0].mxu0
      %v6172 = vadd.f32 0.0, %v6171
      %v6173 = vpop.f32.mrb[0].mxu0
      %6174 = vmatprep.mubr.f32.mxu0 0.0
      %6175 = vmatmul.mubr.f32.gmra.mrb[0].mxu0 %v5950
      %v6176 = vpop.f32.mrb[0].mxu0
      %v6177 = vadd.f32 0.0, %v6176
      %v6178 = vpop.f32.mrb[0].mxu0
      %6179 = vmatprep.mubr.f32.mxu0 0.0
      %6180 = vmatmul.mubr.f32.gmra.mrb[0].mxu0 %v5952
      %v6181 = vpop.f32.mrb[0].mxu0
      %v6182 = vadd.f32 0.0, %v6181
      %v6183 = vpop.f32.mrb[0].mxu0
      %6184 = vmatprep.mubr.f32.mxu0 0.0
      %6185 = vmatmul.mubr.f32.gmra.mrb[0].mxu0 %v5954
      %v6186 = vpop.f32.mrb[0].mxu0
      %v6187 = vadd.f32 0.0, %v6186
      %v6188 = vpop.f32.mrb[0].mxu0
      %6189 = vmatprep.mubr.f32.mxu0 0.0
      %6190 = vmatmul.mubr.f32.gmra.mrb[0].mxu0 %v5956
      %v6191 = vpop.f32.mrb[0].mxu0
      %v6192 = vadd.f32 0.0, %v6191
      %v6193 = vpop.f32.mrb[0].mxu0
      %6194 = vmatprep.mubr.f32.mxu0 0.0
      %6195 = vmatmul.mubr.f32.gmra.mrb[0].mxu0 %v5958
      %v6196 = vpop.f32.mrb[0].mxu0
      %v6197 = vadd.f32 0.0, %v6196
      %v6198 = vpop.f32.mrb[0].mxu0
      %6199 = vmatprep.mubr.f32.mxu0 0.0
      %6200 = vmatmul.mubr.f32.gmra.mrb[0].mxu0 %v5960
      %v6201 = vpop.f32.mrb[0].mxu0
      %v6202 = vadd.f32 0.0, %v6201
      %v6203 = vpop.f32.mrb[0].mxu0
      %6204 = vmatprep.mubr.f32.mxu0 0.0
      %6205 = vmatmul.mubr.f32.gmra.mrb[0].mxu0 %v5962
      %v6206 = vpop.f32.mrb[0].mxu0
      %v6207 = vadd.f32 0.0, %v6206
      %v6208 = vpop.f32.mrb[0].mxu0
      %6209 = vmatprep.mubr.f32.mxu0 0.0
      %6210 = vmatmul.mubr.f32.gmra.mrb[0].mxu0 %v5964
      %v6211 = vpop.f32.mrb[0].mxu0
      %v6212 = vadd.f32 0.0, %v6211
      %v6213 = vpop.f32.mrb[0].mxu0
      %6214 = vmatprep.mubr.f32.mxu0 0.0
      %6215 = vmatmul.mubr.f32.gmra.mrb[0].mxu0 %v5966
      %v6216 = vpop.f32.mrb[0].mxu0
      %v6217 = vadd.f32 0.0, %v6216
      %v6218 = vpop.f32.mrb[0].mxu0
      %6219 = vmatprep.mubr.f32.mxu0 0.0
      %6220 = vmatmul.mubr.f32.gmra.mrb[0].mxu0 %v5968
      %v6221 = vpop.f32.mrb[0].mxu0
      %v6222 = vadd.f32 0.0, %v6221
      %v6223 = vpop.f32.mrb[0].mxu0
      %6224 = vmatprep.mubr.f32.mxu0 0.0
      %6225 = vmatmul.mubr.f32.gmra.mrb[0].mxu0 %v5970
      %v6226 = vpop.f32.mrb[0].mxu0
      %v6227 = vadd.f32 0.0, %v6226
      %v6228 = vpop.f32.mrb[0].mxu0
      %6229 = vmatprep.mubr.f32.mxu0 0.0
      %6230 = vmatmul.mubr.f32.gmra.mrb[0].mxu0 %v5972
      %v6231 = vpop.f32.mrb[0].mxu0
      %v6232 = vadd.f32 0.0, %v6231
      %v6233 = vpop.f32.mrb[0].mxu0
      %6234 = vmatprep.mubr.f32.mxu0 0.0
      %6235 = vmatmul.mubr.f32.gmra.mrb[0].mxu0 %v5974
      %v6236 = vpop.f32.mrb[0].mxu0
      %v6237 = vadd.f32 0.0, %v6236
      %v6238 = vpop.f32.mrb[0].mxu0
      %6239 = vmatprep.mubr.f32.mxu0 0.0
      %6240 = vmatmul.mubr.f32.gmra.mrb[0].mxu0 %v5976
      %v6241 = vpop.f32.mrb[0].mxu0
      %v6242 = vadd.f32 0.0, %v6241
      %v6243 = vpop.f32.mrb[0].mxu0
      %6244 = vmatprep.mubr.f32.mxu0 0.0
      %6245 = vmatmul.mubr.f32.gmra.mrb[0].mxu0 %v5978
      %v6246 = vpop.f32.mrb[0].mxu0
      %v6247 = vadd.f32 0.0, %v6246
      %v6248 = vpop.f32.mrb[0].mxu0
      %6249 = vmatprep.mubr.f32.mxu0 0.0
      %6250 = vmatmul.mubr.f32.gmra.mrb[0].mxu0 %v5980
      %v6251 = vpop.f32.mrb[0].mxu0
      %v6252 = vadd.f32 0.0, %v6251
      %v6253 = vpop.f32.mrb[0].mxu0
      %6254 = vdwg.mxu0
      %v6255 = vadd.f32 %v5614, %v6052
      %v6256 = vadd.f32 %v5619, %v6057
      %v6257 = vadd.f32 %v5624, %v6062
      %v6258 = vadd.f32 %v5629, %v6067
      %v6259 = vadd.f32 %v5634, %v6072
      %v6260 = vadd.f32 %v5639, %v6077
      %v6261 = vadd.f32 %v5644, %v6082
      %v6262 = vadd.f32 %v5649, %v6087
      %v6263 = vadd.f32 %v5654, %v6092
      %v6264 = vadd.f32 %v5659, %v6097
      %v6265 = vadd.f32 %v5664, %v6102
      %v6266 = vadd.f32 %v5669, %v6107
      %v6267 = vadd.f32 %v5674, %v6112
      %v6268 = vadd.f32 %v5679, %v6117
      %v6269 = vadd.f32 %v5684, %v6122
      %v6270 = vadd.f32 %v5689, %v6127
      %v6271 = vadd.f32 %v5694, %v6132
      %v6272 = vadd.f32 %v5699, %v6137
      %v6273 = vadd.f32 %v5704, %v6142
      %v6274 = vadd.f32 %v5709, %v6147
      %v6275 = vadd.f32 %v5714, %v6152
      %v6276 = vadd.f32 %v5719, %v6157
      %v6277 = vadd.f32 %v5724, %v6162
      %v6278 = vadd.f32 %v5729, %v6167
      %v6279 = vadd.f32 %v5734, %v6172
      %v6280 = vadd.f32 %v5739, %v6177
      %v6281 = vadd.f32 %v5744, %v6182
      %v6282 = vadd.f32 %v5749, %v6187
      %v6283 = vadd.f32 %v5754, %v6192
      %v6284 = vadd.f32 %v5759, %v6197
      %v6285 = vadd.f32 %v5764, %v6202
      %v6286 = vadd.f32 %v5769, %v6207
      %v6287 = vadd.f32 %v5774, %v6212
      %v6288 = vadd.f32 %v5779, %v6217
      %v6289 = vadd.f32 %v5784, %v6222
      %v6290 = vadd.f32 %v5789, %v6227
      %v6291 = vadd.f32 %v5794, %v6232
      %v6292 = vadd.f32 %v5799, %v6237
      %v6293 = vadd.f32 %v5804, %v6242
      %v6294 = vadd.f32 %v5809, %v6247
      %v6295 = vadd.f32 %v5814, %v6252
      %s6296 = scalar_lea.vmem %s2, 12
      %v6297 = vld [vmem:[%s6296] sm:$0xf]
      %v6300 = vrot.slane %v4977, 2
      %v6301 = vsel %vm1200, %v5898, %v6300
      %v6302 = vrot.slane %v4978, 2
      %v6303 = vsel %vm1200, %v6300, %v6302
      %v6304 = vsel %vm416, %v6301, 0
      %v6306 = vsel %vm416, %v6303, 0
      %v6308 = vsel %vm416, %v6302, 0
      %v6311 = vsel %vm509, %v6297, 0
      %6313 = vmatprep.subr.mxu0 0.0
      %6314 = vmatpush1.msra.mxu0 %v6311
      %6315 = vmatprep.subr.mxu0 0.0
      %6316 = vmatpush1.msra.mxu0 0.0
      %6317 = vmatprep.subr.mxu0 0.0
      %6318 = vmatpush1.msra.mxu0 0.0
      %6319 = vmatprep.subr.mxu0 0.0
      %6320 = vmatpush1.msra.mxu0 0.0
      %6321 = vmatprep.subr.mxu0 0.0
      %6322 = vmatpush1.msra.mxu0 0.0
      %6323 = vmatprep.subr.mxu0 0.0
      %6324 = vmatpush1.msra.mxu0 0.0
      %6325 = vmatprep.subr.mxu0 0.0
      %6326 = vmatpush1.msra.mxu0 0.0
      %6327 = vmatprep.subr.mxu0 0.0
      %6328 = vmatpush1.msra.mxu0 0.0
      %6329 = vmatprep.subr.mxu0 0.0
      %6330 = vmatpush1.msra.mxu0 0.0
      %6331 = vmatprep.subr.mxu0 0.0
      %6332 = vmatpush1.msra.mxu0 0.0
      %6333 = vmatprep.subr.mxu0 0.0
      %6334 = vmatpush1.msra.mxu0 0.0
      %6335 = vmatprep.subr.mxu0 0.0
      %6336 = vmatpush1.msra.mxu0 0.0
      %6337 = vmatprep.subr.mxu0 0.0
      %6338 = vmatpush1.msra.mxu0 0.0
      %6339 = vmatprep.subr.mxu0 0.0
      %6340 = vmatpush1.msra.mxu0 0.0
      %6341 = vmatprep.subr.mxu0 0.0
      %6342 = vmatpush1.msra.mxu0 0.0
      %6343 = vmatprep.subr.mxu0 0.0
      %6344 = vmatpush1.msra.mxu0 0.0
      %6345 = vmatprep.subr.mxu0 0.0
      %6346 = vmatpush1.msra.mxu0 0.0
      %6347 = vmatprep.subr.mxu0 0.0
      %6348 = vmatpush1.msra.mxu0 0.0
      %6349 = vmatprep.subr.mxu0 0.0
      %6350 = vmatpush1.msra.mxu0 0.0
      %6351 = vmatprep.subr.mxu0 0.0
      %6352 = vmatpush1.msra.mxu0 0.0
      %6353 = vmatprep.subr.mxu0 0.0
      %6354 = vmatpush1.msra.mxu0 0.0
      %6355 = vmatprep.subr.mxu0 0.0
      %6356 = vmatpush1.msra.mxu0 0.0
      %6357 = vmatprep.subr.mxu0 0.0
      %6358 = vmatpush1.msra.mxu0 0.0
      %6359 = vmatprep.subr.mxu0 0.0
      %6360 = vmatpush1.msra.mxu0 0.0
      %6361 = vmatprep.subr.mxu0 0.0
      %6362 = vmatpush1.msra.mxu0 0.0
      %6363 = vmatprep.subr.mxu0 0.0
      %6364 = vmatpush1.msra.mxu0 0.0
      %6365 = vmatprep.subr.mxu0 0.0
      %6366 = vmatpush1.msra.mxu0 0.0
      %6367 = vmatprep.subr.mxu0 0.0
      %6368 = vmatpush1.msra.mxu0 0.0
      %6369 = vmatprep.subr.mxu0 0.0
      %6370 = vmatpush1.msra.mxu0 0.0
      %6371 = vmatprep.subr.mxu0 0.0
      %6372 = vmatpush1.msra.mxu0 0.0
      %6373 = vmatprep.subr.mxu0 0.0
      %6374 = vmatpush1.msra.mxu0 0.0
      %6375 = vmatprep.subr.mxu0 0.0
      %6376 = vmatpush1.msra.mxu0 0.0
      %6377 = vmatprep.mubr.f32.mxu0 0.0
      %6378 = vmatmul.mubr.f32.gmra.mrb[0].mxu0 %v5904
      %v6379 = vpop.f32.mrb[0].mxu0
      %v6380 = vadd.f32 0.0, %v6379
      %v6381 = vpop.f32.mrb[0].mxu0
      %6382 = vmatprep.mubr.f32.mxu0 0.0
      %6383 = vmatmul.mubr.f32.gmra.mrb[0].mxu0 %v5906
      %v6384 = vpop.f32.mrb[0].mxu0
      %v6385 = vadd.f32 0.0, %v6384
      %v6386 = vpop.f32.mrb[0].mxu0
      %6387 = vmatprep.mubr.f32.mxu0 0.0
      %6388 = vmatmul.mubr.f32.gmra.mrb[0].mxu0 %v5908
      %v6389 = vpop.f32.mrb[0].mxu0
      %v6390 = vadd.f32 0.0, %v6389
      %v6391 = vpop.f32.mrb[0].mxu0
      %6392 = vmatprep.mubr.f32.mxu0 0.0
      %6393 = vmatmul.mubr.f32.gmra.mrb[0].mxu0 %v5910
      %v6394 = vpop.f32.mrb[0].mxu0
      %v6395 = vadd.f32 0.0, %v6394
      %v6396 = vpop.f32.mrb[0].mxu0
      %6397 = vmatprep.mubr.f32.mxu0 0.0
      %6398 = vmatmul.mubr.f32.gmra.mrb[0].mxu0 %v5912
      %v6399 = vpop.f32.mrb[0].mxu0
      %v6400 = vadd.f32 0.0, %v6399
      %v6401 = vpop.f32.mrb[0].mxu0
      %6402 = vmatprep.mubr.f32.mxu0 0.0
      %6403 = vmatmul.mubr.f32.gmra.mrb[0].mxu0 %v5914
      %v6404 = vpop.f32.mrb[0].mxu0
      %v6405 = vadd.f32 0.0, %v6404
      %v6406 = vpop.f32.mrb[0].mxu0
      %6407 = vmatprep.mubr.f32.mxu0 0.0
      %6408 = vmatmul.mubr.f32.gmra.mrb[0].mxu0 %v5916
      %v6409 = vpop.f32.mrb[0].mxu0
      %v6410 = vadd.f32 0.0, %v6409
      %v6411 = vpop.f32.mrb[0].mxu0
      %6412 = vmatprep.mubr.f32.mxu0 0.0
      %6413 = vmatmul.mubr.f32.gmra.mrb[0].mxu0 %v5918
      %v6414 = vpop.f32.mrb[0].mxu0
      %v6415 = vadd.f32 0.0, %v6414
      %v6416 = vpop.f32.mrb[0].mxu0
      %6417 = vmatprep.mubr.f32.mxu0 0.0
      %6418 = vmatmul.mubr.f32.gmra.mrb[0].mxu0 %v5920
      %v6419 = vpop.f32.mrb[0].mxu0
      %v6420 = vadd.f32 0.0, %v6419
      %v6421 = vpop.f32.mrb[0].mxu0
      %6422 = vmatprep.mubr.f32.mxu0 0.0
      %6423 = vmatmul.mubr.f32.gmra.mrb[0].mxu0 %v5922
      %v6424 = vpop.f32.mrb[0].mxu0
      %v6425 = vadd.f32 0.0, %v6424
      %v6426 = vpop.f32.mrb[0].mxu0
      %6427 = vmatprep.mubr.f32.mxu0 0.0
      %6428 = vmatmul.mubr.f32.gmra.mrb[0].mxu0 %v5924
      %v6429 = vpop.f32.mrb[0].mxu0
      %v6430 = vadd.f32 0.0, %v6429
      %v6431 = vpop.f32.mrb[0].mxu0
      %6432 = vmatprep.mubr.f32.mxu0 0.0
      %6433 = vmatmul.mubr.f32.gmra.mrb[0].mxu0 %v5926
      %v6434 = vpop.f32.mrb[0].mxu0
      %v6435 = vadd.f32 0.0, %v6434
      %v6436 = vpop.f32.mrb[0].mxu0
      %6437 = vmatprep.mubr.f32.mxu0 0.0
      %6438 = vmatmul.mubr.f32.gmra.mrb[0].mxu0 %v5928
      %v6439 = vpop.f32.mrb[0].mxu0
      %v6440 = vadd.f32 0.0, %v6439
      %v6441 = vpop.f32.mrb[0].mxu0
      %6442 = vmatprep.mubr.f32.mxu0 0.0
      %6443 = vmatmul.mubr.f32.gmra.mrb[0].mxu0 %v5930
      %v6444 = vpop.f32.mrb[0].mxu0
      %v6445 = vadd.f32 0.0, %v6444
      %v6446 = vpop.f32.mrb[0].mxu0
      %6447 = vmatprep.mubr.f32.mxu0 0.0
      %6448 = vmatmul.mubr.f32.gmra.mrb[0].mxu0 %v5932
      %v6449 = vpop.f32.mrb[0].mxu0
      %v6450 = vadd.f32 0.0, %v6449
      %v6451 = vpop.f32.mrb[0].mxu0
      %6452 = vmatprep.mubr.f32.mxu0 0.0
      %6453 = vmatmul.mubr.f32.gmra.mrb[0].mxu0 %v5934
      %v6454 = vpop.f32.mrb[0].mxu0
      %v6455 = vadd.f32 0.0, %v6454
      %v6456 = vpop.f32.mrb[0].mxu0
      %6457 = vmatprep.mubr.f32.mxu0 0.0
      %6458 = vmatmul.mubr.f32.gmra.mrb[0].mxu0 %v5936
      %v6459 = vpop.f32.mrb[0].mxu0
      %v6460 = vadd.f32 0.0, %v6459
      %v6461 = vpop.f32.mrb[0].mxu0
      %6462 = vmatprep.mubr.f32.mxu0 0.0
      %6463 = vmatmul.mubr.f32.gmra.mrb[0].mxu0 %v5938
      %v6464 = vpop.f32.mrb[0].mxu0
      %v6465 = vadd.f32 0.0, %v6464
      %v6466 = vpop.f32.mrb[0].mxu0
      %6467 = vmatprep.mubr.f32.mxu0 0.0
      %6468 = vmatmul.mubr.f32.gmra.mrb[0].mxu0 %v5940
      %v6469 = vpop.f32.mrb[0].mxu0
      %v6470 = vadd.f32 0.0, %v6469
      %v6471 = vpop.f32.mrb[0].mxu0
      %6472 = vmatprep.mubr.f32.mxu0 0.0
      %6473 = vmatmul.mubr.f32.gmra.mrb[0].mxu0 %v5942
      %v6474 = vpop.f32.mrb[0].mxu0
      %v6475 = vadd.f32 0.0, %v6474
      %v6476 = vpop.f32.mrb[0].mxu0
      %6477 = vmatprep.mubr.f32.mxu0 0.0
      %6478 = vmatmul.mubr.f32.gmra.mrb[0].mxu0 %v5944
      %v6479 = vpop.f32.mrb[0].mxu0
      %v6480 = vadd.f32 0.0, %v6479
      %v6481 = vpop.f32.mrb[0].mxu0
      %6482 = vmatprep.mubr.f32.mxu0 0.0
      %6483 = vmatmul.mubr.f32.gmra.mrb[0].mxu0 %v5946
      %v6484 = vpop.f32.mrb[0].mxu0
      %v6485 = vadd.f32 0.0, %v6484
      %v6486 = vpop.f32.mrb[0].mxu0
      %6487 = vmatprep.mubr.f32.mxu0 0.0
      %6488 = vmatmul.mubr.f32.gmra.mrb[0].mxu0 %v5948
      %v6489 = vpop.f32.mrb[0].mxu0
      %v6490 = vadd.f32 0.0, %v6489
      %v6491 = vpop.f32.mrb[0].mxu0
      %6492 = vmatprep.mubr.f32.mxu0 0.0
      %6493 = vmatmul.mubr.f32.gmra.mrb[0].mxu0 %v5950
      %v6494 = vpop.f32.mrb[0].mxu0
      %v6495 = vadd.f32 0.0, %v6494
      %v6496 = vpop.f32.mrb[0].mxu0
      %6497 = vmatprep.mubr.f32.mxu0 0.0
      %6498 = vmatmul.mubr.f32.gmra.mrb[0].mxu0 %v5952
      %v6499 = vpop.f32.mrb[0].mxu0
      %v6500 = vadd.f32 0.0, %v6499
      %v6501 = vpop.f32.mrb[0].mxu0
      %6502 = vmatprep.mubr.f32.mxu0 0.0
      %6503 = vmatmul.mubr.f32.gmra.mrb[0].mxu0 %v5954
      %v6504 = vpop.f32.mrb[0].mxu0
      %v6505 = vadd.f32 0.0, %v6504
      %v6506 = vpop.f32.mrb[0].mxu0
      %6507 = vmatprep.mubr.f32.mxu0 0.0
      %6508 = vmatmul.mubr.f32.gmra.mrb[0].mxu0 %v5956
      %v6509 = vpop.f32.mrb[0].mxu0
      %v6510 = vadd.f32 0.0, %v6509
      %v6511 = vpop.f32.mrb[0].mxu0
      %6512 = vmatprep.mubr.f32.mxu0 0.0
      %6513 = vmatmul.mubr.f32.gmra.mrb[0].mxu0 %v5958
      %v6514 = vpop.f32.mrb[0].mxu0
      %v6515 = vadd.f32 0.0, %v6514
      %v6516 = vpop.f32.mrb[0].mxu0
      %6517 = vmatprep.mubr.f32.mxu0 0.0
      %6518 = vmatmul.mubr.f32.gmra.mrb[0].mxu0 %v5960
      %v6519 = vpop.f32.mrb[0].mxu0
      %v6520 = vadd.f32 0.0, %v6519
      %v6521 = vpop.f32.mrb[0].mxu0
      %6522 = vmatprep.mubr.f32.mxu0 0.0
      %6523 = vmatmul.mubr.f32.gmra.mrb[0].mxu0 %v5962
      %v6524 = vpop.f32.mrb[0].mxu0
      %v6525 = vadd.f32 0.0, %v6524
      %v6526 = vpop.f32.mrb[0].mxu0
      %6527 = vmatprep.mubr.f32.mxu0 0.0
      %6528 = vmatmul.mubr.f32.gmra.mrb[0].mxu0 %v5964
      %v6529 = vpop.f32.mrb[0].mxu0
      %v6530 = vadd.f32 0.0, %v6529
      %v6531 = vpop.f32.mrb[0].mxu0
      %6532 = vmatprep.mubr.f32.mxu0 0.0
      %6533 = vmatmul.mubr.f32.gmra.mrb[0].mxu0 %v5966
      %v6534 = vpop.f32.mrb[0].mxu0
      %v6535 = vadd.f32 0.0, %v6534
      %v6536 = vpop.f32.mrb[0].mxu0
      %6537 = vmatprep.mubr.f32.mxu0 0.0
      %6538 = vmatmul.mubr.f32.gmra.mrb[0].mxu0 %v5968
      %v6539 = vpop.f32.mrb[0].mxu0
      %v6540 = vadd.f32 0.0, %v6539
      %v6541 = vpop.f32.mrb[0].mxu0
      %6542 = vmatprep.mubr.f32.mxu0 0.0
      %6543 = vmatmul.mubr.f32.gmra.mrb[0].mxu0 %v5970
      %v6544 = vpop.f32.mrb[0].mxu0
      %v6545 = vadd.f32 0.0, %v6544
      %v6546 = vpop.f32.mrb[0].mxu0
      %6547 = vmatprep.mubr.f32.mxu0 0.0
      %6548 = vmatmul.mubr.f32.gmra.mrb[0].mxu0 %v5972
      %v6549 = vpop.f32.mrb[0].mxu0
      %v6550 = vadd.f32 0.0, %v6549
      %v6551 = vpop.f32.mrb[0].mxu0
      %6552 = vmatprep.mubr.f32.mxu0 0.0
      %6553 = vmatmul.mubr.f32.gmra.mrb[0].mxu0 %v5974
      %v6554 = vpop.f32.mrb[0].mxu0
      %v6555 = vadd.f32 0.0, %v6554
      %v6556 = vpop.f32.mrb[0].mxu0
      %6557 = vmatprep.mubr.f32.mxu0 0.0
      %6558 = vmatmul.mubr.f32.gmra.mrb[0].mxu0 %v5976
      %v6559 = vpop.f32.mrb[0].mxu0
      %v6560 = vadd.f32 0.0, %v6559
      %v6561 = vpop.f32.mrb[0].mxu0
      %6562 = vmatprep.mubr.f32.mxu0 0.0
      %6563 = vmatmul.mubr.f32.gmra.mrb[0].mxu0 %v5978
      %v6564 = vpop.f32.mrb[0].mxu0
      %v6565 = vadd.f32 0.0, %v6564
      %v6566 = vpop.f32.mrb[0].mxu0
      %6567 = vmatprep.mubr.f32.mxu0 0.0
      %6568 = vmatmul.mubr.f32.gmra.mrb[0].mxu0 %v6304
      %v6569 = vpop.f32.mrb[0].mxu0
      %v6570 = vadd.f32 0.0, %v6569
      %v6571 = vpop.f32.mrb[0].mxu0
      %6572 = vmatprep.mubr.f32.mxu0 0.0
      %6573 = vmatmul.mubr.f32.gmra.mrb[0].mxu0 %v6306
      %v6574 = vpop.f32.mrb[0].mxu0
      %v6575 = vadd.f32 0.0, %v6574
      %v6576 = vpop.f32.mrb[0].mxu0
      %6577 = vmatprep.mubr.f32.mxu0 0.0
      %6578 = vmatmul.mubr.f32.gmra.mrb[0].mxu0 %v6308
      %v6579 = vpop.f32.mrb[0].mxu0
      %v6580 = vadd.f32 0.0, %v6579
      %v6581 = vpop.f32.mrb[0].mxu0
      %6582 = vdwg.mxu0
      %v6583 = vadd.f32 %v6255, %v6380
      %v6584 = vadd.f32 %v6256, %v6385
      %v6585 = vadd.f32 %v6257, %v6390
      %v6586 = vadd.f32 %v6258, %v6395
      %v6587 = vadd.f32 %v6259, %v6400
      %v6588 = vadd.f32 %v6260, %v6405
      %v6589 = vadd.f32 %v6261, %v6410
      %v6590 = vadd.f32 %v6262, %v6415
      %v6591 = vadd.f32 %v6263, %v6420
      %v6592 = vadd.f32 %v6264, %v6425
      %v6593 = vadd.f32 %v6265, %v6430
      %v6594 = vadd.f32 %v6266, %v6435
      %v6595 = vadd.f32 %v6267, %v6440
      %v6596 = vadd.f32 %v6268, %v6445
      %v6597 = vadd.f32 %v6269, %v6450
      %v6598 = vadd.f32 %v6270, %v6455
      %v6599 = vadd.f32 %v6271, %v6460
      %v6600 = vadd.f32 %v6272, %v6465
      %v6601 = vadd.f32 %v6273, %v6470
      %v6602 = vadd.f32 %v6274, %v6475
      %v6603 = vadd.f32 %v6275, %v6480
      %v6604 = vadd.f32 %v6276, %v6485
      %v6605 = vadd.f32 %v6277, %v6490
      %v6606 = vadd.f32 %v6278, %v6495
      %v6607 = vadd.f32 %v6279, %v6500
      %v6608 = vadd.f32 %v6280, %v6505
      %v6609 = vadd.f32 %v6281, %v6510
      %v6610 = vadd.f32 %v6282, %v6515
      %v6611 = vadd.f32 %v6283, %v6520
      %v6612 = vadd.f32 %v6284, %v6525
      %v6613 = vadd.f32 %v6285, %v6530
      %v6614 = vadd.f32 %v6286, %v6535
      %v6615 = vadd.f32 %v6287, %v6540
      %v6616 = vadd.f32 %v6288, %v6545
      %v6617 = vadd.f32 %v6289, %v6550
      %v6618 = vadd.f32 %v6290, %v6555
      %v6619 = vadd.f32 %v6291, %v6560
      %v6620 = vadd.f32 %v6292, %v6565
      %v6621 = vadd.f32 %v6293, %v6570
      %v6622 = vadd.f32 %v6294, %v6575
      %v6623 = vadd.f32 %v6295, %v6580
      %s6624 = scalar_lea.vmem %s2, 16
      %v6625 = vld [vmem:[%s6624] sm:$0xf]
      %v6626 = vrot.slane %v4938, 3
      %v6627 = vrot.slane %v4939, 3
      %v6628 = vsel %vm2088, %v6626, %v6627
      %v6629 = vrot.slane %v4940, 3
      %v6630 = vsel %vm2088, %v6627, %v6629
      %v6631 = vrot.slane %v4941, 3
      %v6632 = vsel %vm2088, %v6629, %v6631
      %v6633 = vrot.slane %v4942, 3
      %v6634 = vsel %vm2088, %v6631, %v6633
      %v6635 = vrot.slane %v4943, 3
      %v6636 = vsel %vm2088, %v6633, %v6635
      %v6637 = vrot.slane %v4944, 3
      %v6638 = vsel %vm2088, %v6635, %v6637
      %v6639 = vrot.slane %v4945, 3
      %v6640 = vsel %vm2088, %v6637, %v6639
      %v6641 = vrot.slane %v4946, 3
      %v6642 = vsel %vm2088, %v6639, %v6641
      %v6643 = vrot.slane %v4947, 3
      %v6644 = vsel %vm2088, %v6641, %v6643
      %v6645 = vrot.slane %v4948, 3
      %v6646 = vsel %vm2088, %v6643, %v6645
      %v6647 = vrot.slane %v4949, 3
      %v6648 = vsel %vm2088, %v6645, %v6647
      %v6649 = vrot.slane %v4950, 3
      %v6650 = vsel %vm2088, %v6647, %v6649
      %v6651 = vrot.slane %v4951, 3
      %v6652 = vsel %vm2088, %v6649, %v6651
      %v6653 = vrot.slane %v4952, 3
      %v6654 = vsel %vm2088, %v6651, %v6653
      %v6655 = vrot.slane %v4953, 3
      %v6656 = vsel %vm2088, %v6653, %v6655
      %v6657 = vrot.slane %v4954, 3
      %v6658 = vsel %vm2088, %v6655, %v6657
      %v6659 = vrot.slane %v4955, 3
      %v6660 = vsel %vm2088, %v6657, %v6659
      %v6661 = vrot.slane %v4956, 3
      %v6662 = vsel %vm2088, %v6659, %v6661
      %v6663 = vrot.slane %v4957, 3
      %v6664 = vsel %vm2088, %v6661, %v6663
      %v6665 = vrot.slane %v4958, 3
      %v6666 = vsel %vm2088, %v6663, %v6665
      %v6667 = vrot.slane %v4959, 3
      %v6668 = vsel %vm2088, %v6665, %v6667
      %v6669 = vrot.slane %v4960, 3
      %v6670 = vsel %vm2088, %v6667, %v6669
      %v6671 = vrot.slane %v4961, 3
      %v6672 = vsel %vm2088, %v6669, %v6671
      %v6673 = vrot.slane %v4962, 3
      %v6674 = vsel %vm2088, %v6671, %v6673
      %v6675 = vrot.slane %v4963, 3
      %v6676 = vsel %vm2088, %v6673, %v6675
      %v6677 = vrot.slane %v4964, 3
      %v6678 = vsel %vm2088, %v6675, %v6677
      %v6679 = vrot.slane %v4965, 3
      %v6680 = vsel %vm2088, %v6677, %v6679
      %v6681 = vrot.slane %v4966, 3
      %v6682 = vsel %vm2088, %v6679, %v6681
      %v6683 = vrot.slane %v4967, 3
      %v6684 = vsel %vm2088, %v6681, %v6683
      %v6685 = vrot.slane %v4968, 3
      %v6686 = vsel %vm2088, %v6683, %v6685
      %v6687 = vrot.slane %v4969, 3
      %v6688 = vsel %vm2088, %v6685, %v6687
      %v6689 = vrot.slane %v4970, 3
      %v6690 = vsel %vm2088, %v6687, %v6689
      %v6691 = vrot.slane %v4971, 3
      %v6692 = vsel %vm2088, %v6689, %v6691
      %v6693 = vrot.slane %v4972, 3
      %v6694 = vsel %vm2088, %v6691, %v6693
      %v6695 = vrot.slane %v4973, 3
      %v6696 = vsel %vm2088, %v6693, %v6695
      %v6697 = vrot.slane %v4974, 3
      %v6698 = vsel %vm2088, %v6695, %v6697
      %v6699 = vrot.slane %v4975, 3
      %v6700 = vsel %vm2088, %v6697, %v6699
      %v6701 = vrot.slane %v4976, 3
      %v6702 = vsel %vm2088, %v6699, %v6701
      %v6703 = vrot.slane %v4977, 3
      %v6704 = vsel %vm2088, %v6701, %v6703
      %v6705 = vrot.slane %v4978, 3
      %v6706 = vsel %vm2088, %v6703, %v6705
      %v6707 = vsel %vm416, %v6628, 0
      %v6709 = vsel %vm416, %v6630, 0
      %v6711 = vsel %vm416, %v6632, 0
      %v6713 = vsel %vm416, %v6634, 0
      %v6715 = vsel %vm416, %v6636, 0
      %v6717 = vsel %vm416, %v6638, 0
      %v6719 = vsel %vm416, %v6640, 0
      %v6721 = vsel %vm416, %v6642, 0
      %v6723 = vsel %vm416, %v6644, 0
      %v6725 = vsel %vm416, %v6646, 0
      %v6727 = vsel %vm416, %v6648, 0
      %v6729 = vsel %vm416, %v6650, 0
      %v6731 = vsel %vm416, %v6652, 0
      %v6733 = vsel %vm416, %v6654, 0
      %v6735 = vsel %vm416, %v6656, 0
      %v6737 = vsel %vm416, %v6658, 0
      %v6739 = vsel %vm416, %v6660, 0
      %v6741 = vsel %vm416, %v6662, 0
      %v6743 = vsel %vm416, %v6664, 0
      %v6745 = vsel %vm416, %v6666, 0
      %v6747 = vsel %vm416, %v6668, 0
      %v6749 = vsel %vm416, %v6670, 0
      %v6751 = vsel %vm416, %v6672, 0
      %v6753 = vsel %vm416, %v6674, 0
      %v6755 = vsel %vm416, %v6676, 0
      %v6757 = vsel %vm416, %v6678, 0
      %v6759 = vsel %vm416, %v6680, 0
      %v6761 = vsel %vm416, %v6682, 0
      %v6763 = vsel %vm416, %v6684, 0
      %v6765 = vsel %vm416, %v6686, 0
      %v6767 = vsel %vm416, %v6688, 0
      %v6769 = vsel %vm416, %v6690, 0
      %v6771 = vsel %vm416, %v6692, 0
      %v6773 = vsel %vm416, %v6694, 0
      %v6775 = vsel %vm416, %v6696, 0
      %v6777 = vsel %vm416, %v6698, 0
      %v6779 = vsel %vm416, %v6700, 0
      %v6781 = vsel %vm416, %v6702, 0
      %v6783 = vsel %vm416, %v6704, 0
      %v6785 = vsel %vm416, %v6706, 0
      %v6787 = vsel %vm416, %v6705, 0
      %v6790 = vsel %vm509, %v6625, 0
      %6792 = vmatprep.subr.mxu0 0.0
      %6793 = vmatpush1.msra.mxu0 %v6790
      %6794 = vmatprep.subr.mxu0 0.0
      %6795 = vmatpush1.msra.mxu0 0.0
      %6796 = vmatprep.subr.mxu0 0.0
      %6797 = vmatpush1.msra.mxu0 0.0
      %6798 = vmatprep.subr.mxu0 0.0
      %6799 = vmatpush1.msra.mxu0 0.0
      %6800 = vmatprep.subr.mxu0 0.0
      %6801 = vmatpush1.msra.mxu0 0.0
      %6802 = vmatprep.subr.mxu0 0.0
      %6803 = vmatpush1.msra.mxu0 0.0
      %6804 = vmatprep.subr.mxu0 0.0
      %6805 = vmatpush1.msra.mxu0 0.0
      %6806 = vmatprep.subr.mxu0 0.0
      %6807 = vmatpush1.msra.mxu0 0.0
      %6808 = vmatprep.subr.mxu0 0.0
      %6809 = vmatpush1.msra.mxu0 0.0
      %6810 = vmatprep.subr.mxu0 0.0
      %6811 = vmatpush1.msra.mxu0 0.0
      %6812 = vmatprep.subr.mxu0 0.0
      %6813 = vmatpush1.msra.mxu0 0.0
      %6814 = vmatprep.subr.mxu0 0.0
      %6815 = vmatpush1.msra.mxu0 0.0
      %6816 = vmatprep.subr.mxu0 0.0
      %6817 = vmatpush1.msra.mxu0 0.0
      %6818 = vmatprep.subr.mxu0 0.0
      %6819 = vmatpush1.msra.mxu0 0.0
      %6820 = vmatprep.subr.mxu0 0.0
      %6821 = vmatpush1.msra.mxu0 0.0
      %6822 = vmatprep.subr.mxu0 0.0
      %6823 = vmatpush1.msra.mxu0 0.0
      %6824 = vmatprep.subr.mxu0 0.0
      %6825 = vmatpush1.msra.mxu0 0.0
      %6826 = vmatprep.subr.mxu0 0.0
      %6827 = vmatpush1.msra.mxu0 0.0
      %6828 = vmatprep.subr.mxu0 0.0
      %6829 = vmatpush1.msra.mxu0 0.0
      %6830 = vmatprep.subr.mxu0 0.0
      %6831 = vmatpush1.msra.mxu0 0.0
      %6832 = vmatprep.subr.mxu0 0.0
      %6833 = vmatpush1.msra.mxu0 0.0
      %6834 = vmatprep.subr.mxu0 0.0
      %6835 = vmatpush1.msra.mxu0 0.0
      %6836 = vmatprep.subr.mxu0 0.0
      %6837 = vmatpush1.msra.mxu0 0.0
      %6838 = vmatprep.subr.mxu0 0.0
      %6839 = vmatpush1.msra.mxu0 0.0
      %6840 = vmatprep.subr.mxu0 0.0
      %6841 = vmatpush1.msra.mxu0 0.0
      %6842 = vmatprep.subr.mxu0 0.0
      %6843 = vmatpush1.msra.mxu0 0.0
      %6844 = vmatprep.subr.mxu0 0.0
      %6845 = vmatpush1.msra.mxu0 0.0
      %6846 = vmatprep.subr.mxu0 0.0
      %6847 = vmatpush1.msra.mxu0 0.0
      %6848 = vmatprep.subr.mxu0 0.0
      %6849 = vmatpush1.msra.mxu0 0.0
      %6850 = vmatprep.subr.mxu0 0.0
      %6851 = vmatpush1.msra.mxu0 0.0
      %6852 = vmatprep.subr.mxu0 0.0
      %6853 = vmatpush1.msra.mxu0 0.0
      %6854 = vmatprep.subr.mxu0 0.0
      %6855 = vmatpush1.msra.mxu0 0.0
      %6856 = vmatprep.mubr.f32.mxu0 0.0
      %6857 = vmatmul.mubr.f32.gmra.mrb[0].mxu0 %v6707
      %v6858 = vpop.f32.mrb[0].mxu0
      %v6859 = vadd.f32 0.0, %v6858
      %v6860 = vpop.f32.mrb[0].mxu0
      %6861 = vmatprep.mubr.f32.mxu0 0.0
      %6862 = vmatmul.mubr.f32.gmra.mrb[0].mxu0 %v6709
      %v6863 = vpop.f32.mrb[0].mxu0
      %v6864 = vadd.f32 0.0, %v6863
      %v6865 = vpop.f32.mrb[0].mxu0
      %6866 = vmatprep.mubr.f32.mxu0 0.0
      %6867 = vmatmul.mubr.f32.gmra.mrb[0].mxu0 %v6711
      %v6868 = vpop.f32.mrb[0].mxu0
      %v6869 = vadd.f32 0.0, %v6868
      %v6870 = vpop.f32.mrb[0].mxu0
      %6871 = vmatprep.mubr.f32.mxu0 0.0
      %6872 = vmatmul.mubr.f32.gmra.mrb[0].mxu0 %v6713
      %v6873 = vpop.f32.mrb[0].mxu0
      %v6874 = vadd.f32 0.0, %v6873
      %v6875 = vpop.f32.mrb[0].mxu0
      %6876 = vmatprep.mubr.f32.mxu0 0.0
      %6877 = vmatmul.mubr.f32.gmra.mrb[0].mxu0 %v6715
      %v6878 = vpop.f32.mrb[0].mxu0
      %v6879 = vadd.f32 0.0, %v6878
      %v6880 = vpop.f32.mrb[0].mxu0
      %6881 = vmatprep.mubr.f32.mxu0 0.0
      %6882 = vmatmul.mubr.f32.gmra.mrb[0].mxu0 %v6717
      %v6883 = vpop.f32.mrb[0].mxu0
      %v6884 = vadd.f32 0.0, %v6883
      %v6885 = vpop.f32.mrb[0].mxu0
      %6886 = vmatprep.mubr.f32.mxu0 0.0
      %6887 = vmatmul.mubr.f32.gmra.mrb[0].mxu0 %v6719
      %v6888 = vpop.f32.mrb[0].mxu0
      %v6889 = vadd.f32 0.0, %v6888
      %v6890 = vpop.f32.mrb[0].mxu0
      %6891 = vmatprep.mubr.f32.mxu0 0.0
      %6892 = vmatmul.mubr.f32.gmra.mrb[0].mxu0 %v6721
      %v6893 = vpop.f32.mrb[0].mxu0
      %v6894 = vadd.f32 0.0, %v6893
      %v6895 = vpop.f32.mrb[0].mxu0
      %6896 = vmatprep.mubr.f32.mxu0 0.0
      %6897 = vmatmul.mubr.f32.gmra.mrb[0].mxu0 %v6723
      %v6898 = vpop.f32.mrb[0].mxu0
      %v6899 = vadd.f32 0.0, %v6898
      %v6900 = vpop.f32.mrb[0].mxu0
      %6901 = vmatprep.mubr.f32.mxu0 0.0
      %6902 = vmatmul.mubr.f32.gmra.mrb[0].mxu0 %v6725
      %v6903 = vpop.f32.mrb[0].mxu0
      %v6904 = vadd.f32 0.0, %v6903
      %v6905 = vpop.f32.mrb[0].mxu0
      %6906 = vmatprep.mubr.f32.mxu0 0.0
      %6907 = vmatmul.mubr.f32.gmra.mrb[0].mxu0 %v6727
      %v6908 = vpop.f32.mrb[0].mxu0
      %v6909 = vadd.f32 0.0, %v6908
      %v6910 = vpop.f32.mrb[0].mxu0
      %6911 = vmatprep.mubr.f32.mxu0 0.0
      %6912 = vmatmul.mubr.f32.gmra.mrb[0].mxu0 %v6729
      %v6913 = vpop.f32.mrb[0].mxu0
      %v6914 = vadd.f32 0.0, %v6913
      %v6915 = vpop.f32.mrb[0].mxu0
      %6916 = vmatprep.mubr.f32.mxu0 0.0
      %6917 = vmatmul.mubr.f32.gmra.mrb[0].mxu0 %v6731
      %v6918 = vpop.f32.mrb[0].mxu0
      %v6919 = vadd.f32 0.0, %v6918
      %v6920 = vpop.f32.mrb[0].mxu0
      %6921 = vmatprep.mubr.f32.mxu0 0.0
      %6922 = vmatmul.mubr.f32.gmra.mrb[0].mxu0 %v6733
      %v6923 = vpop.f32.mrb[0].mxu0
      %v6924 = vadd.f32 0.0, %v6923
      %v6925 = vpop.f32.mrb[0].mxu0
      %6926 = vmatprep.mubr.f32.mxu0 0.0
      %6927 = vmatmul.mubr.f32.gmra.mrb[0].mxu0 %v6735
      %v6928 = vpop.f32.mrb[0].mxu0
      %v6929 = vadd.f32 0.0, %v6928
      %v6930 = vpop.f32.mrb[0].mxu0
      %6931 = vmatprep.mubr.f32.mxu0 0.0
      %6932 = vmatmul.mubr.f32.gmra.mrb[0].mxu0 %v6737
      %v6933 = vpop.f32.mrb[0].mxu0
      %v6934 = vadd.f32 0.0, %v6933
      %v6935 = vpop.f32.mrb[0].mxu0
      %6936 = vmatprep.mubr.f32.mxu0 0.0
      %6937 = vmatmul.mubr.f32.gmra.mrb[0].mxu0 %v6739
      %v6938 = vpop.f32.mrb[0].mxu0
      %v6939 = vadd.f32 0.0, %v6938
      %v6940 = vpop.f32.mrb[0].mxu0
      %6941 = vmatprep.mubr.f32.mxu0 0.0
      %6942 = vmatmul.mubr.f32.gmra.mrb[0].mxu0 %v6741
      %v6943 = vpop.f32.mrb[0].mxu0
      %v6944 = vadd.f32 0.0, %v6943
      %v6945 = vpop.f32.mrb[0].mxu0
      %6946 = vmatprep.mubr.f32.mxu0 0.0
      %6947 = vmatmul.mubr.f32.gmra.mrb[0].mxu0 %v6743
      %v6948 = vpop.f32.mrb[0].mxu0
      %v6949 = vadd.f32 0.0, %v6948
      %v6950 = vpop.f32.mrb[0].mxu0
      %6951 = vmatprep.mubr.f32.mxu0 0.0
      %6952 = vmatmul.mubr.f32.gmra.mrb[0].mxu0 %v6745
      %v6953 = vpop.f32.mrb[0].mxu0
      %v6954 = vadd.f32 0.0, %v6953
      %v6955 = vpop.f32.mrb[0].mxu0
      %6956 = vmatprep.mubr.f32.mxu0 0.0
      %6957 = vmatmul.mubr.f32.gmra.mrb[0].mxu0 %v6747
      %v6958 = vpop.f32.mrb[0].mxu0
      %v6959 = vadd.f32 0.0, %v6958
      %v6960 = vpop.f32.mrb[0].mxu0
      %6961 = vmatprep.mubr.f32.mxu0 0.0
      %6962 = vmatmul.mubr.f32.gmra.mrb[0].mxu0 %v6749
      %v6963 = vpop.f32.mrb[0].mxu0
      %v6964 = vadd.f32 0.0, %v6963
      %v6965 = vpop.f32.mrb[0].mxu0
      %6966 = vmatprep.mubr.f32.mxu0 0.0
      %6967 = vmatmul.mubr.f32.gmra.mrb[0].mxu0 %v6751
      %v6968 = vpop.f32.mrb[0].mxu0
      %v6969 = vadd.f32 0.0, %v6968
      %v6970 = vpop.f32.mrb[0].mxu0
      %6971 = vmatprep.mubr.f32.mxu0 0.0
      %6972 = vmatmul.mubr.f32.gmra.mrb[0].mxu0 %v6753
      %v6973 = vpop.f32.mrb[0].mxu0
      %v6974 = vadd.f32 0.0, %v6973
      %v6975 = vpop.f32.mrb[0].mxu0
      %6976 = vmatprep.mubr.f32.mxu0 0.0
      %6977 = vmatmul.mubr.f32.gmra.mrb[0].mxu0 %v6755
      %v6978 = vpop.f32.mrb[0].mxu0
      %v6979 = vadd.f32 0.0, %v6978
      %v6980 = vpop.f32.mrb[0].mxu0
      %6981 = vmatprep.mubr.f32.mxu0 0.0
      %6982 = vmatmul.mubr.f32.gmra.mrb[0].mxu0 %v6757
      %v6983 = vpop.f32.mrb[0].mxu0
      %v6984 = vadd.f32 0.0, %v6983
      %v6985 = vpop.f32.mrb[0].mxu0
      %6986 = vmatprep.mubr.f32.mxu0 0.0
      %6987 = vmatmul.mubr.f32.gmra.mrb[0].mxu0 %v6759
      %v6988 = vpop.f32.mrb[0].mxu0
      %v6989 = vadd.f32 0.0, %v6988
      %v6990 = vpop.f32.mrb[0].mxu0
      %6991 = vmatprep.mubr.f32.mxu0 0.0
      %6992 = vmatmul.mubr.f32.gmra.mrb[0].mxu0 %v6761
      %v6993 = vpop.f32.mrb[0].mxu0
      %v6994 = vadd.f32 0.0, %v6993
      %v6995 = vpop.f32.mrb[0].mxu0
      %6996 = vmatprep.mubr.f32.mxu0 0.0
      %6997 = vmatmul.mubr.f32.gmra.mrb[0].mxu0 %v6763
      %v6998 = vpop.f32.mrb[0].mxu0
      %v6999 = vadd.f32 0.0, %v6998
      %v7000 = vpop.f32.mrb[0].mxu0
      %7001 = vmatprep.mubr.f32.mxu0 0.0
      %7002 = vmatmul.mubr.f32.gmra.mrb[0].mxu0 %v6765
      %v7003 = vpop.f32.mrb[0].mxu0
      %v7004 = vadd.f32 0.0, %v7003
      %v7005 = vpop.f32.mrb[0].mxu0
      %7006 = vmatprep.mubr.f32.mxu0 0.0
      %7007 = vmatmul.mubr.f32.gmra.mrb[0].mxu0 %v6767
      %v7008 = vpop.f32.mrb[0].mxu0
      %v7009 = vadd.f32 0.0, %v7008
      %v7010 = vpop.f32.mrb[0].mxu0
      %7011 = vmatprep.mubr.f32.mxu0 0.0
      %7012 = vmatmul.mubr.f32.gmra.mrb[0].mxu0 %v6769
      %v7013 = vpop.f32.mrb[0].mxu0
      %v7014 = vadd.f32 0.0, %v7013
      %v7015 = vpop.f32.mrb[0].mxu0
      %7016 = vmatprep.mubr.f32.mxu0 0.0
      %7017 = vmatmul.mubr.f32.gmra.mrb[0].mxu0 %v6771
      %v7018 = vpop.f32.mrb[0].mxu0
      %v7019 = vadd.f32 0.0, %v7018
      %v7020 = vpop.f32.mrb[0].mxu0
      %7021 = vmatprep.mubr.f32.mxu0 0.0
      %7022 = vmatmul.mubr.f32.gmra.mrb[0].mxu0 %v6773
      %v7023 = vpop.f32.mrb[0].mxu0
      %v7024 = vadd.f32 0.0, %v7023
      %v7025 = vpop.f32.mrb[0].mxu0
      %7026 = vmatprep.mubr.f32.mxu0 0.0
      %7027 = vmatmul.mubr.f32.gmra.mrb[0].mxu0 %v6775
      %v7028 = vpop.f32.mrb[0].mxu0
      %v7029 = vadd.f32 0.0, %v7028
      %v7030 = vpop.f32.mrb[0].mxu0
      %7031 = vmatprep.mubr.f32.mxu0 0.0
      %7032 = vmatmul.mubr.f32.gmra.mrb[0].mxu0 %v6777
      %v7033 = vpop.f32.mrb[0].mxu0
      %v7034 = vadd.f32 0.0, %v7033
      %v7035 = vpop.f32.mrb[0].mxu0
      %7036 = vmatprep.mubr.f32.mxu0 0.0
      %7037 = vmatmul.mubr.f32.gmra.mrb[0].mxu0 %v6779
      %v7038 = vpop.f32.mrb[0].mxu0
      %v7039 = vadd.f32 0.0, %v7038
      %v7040 = vpop.f32.mrb[0].mxu0
      %7041 = vmatprep.mubr.f32.mxu0 0.0
      %7042 = vmatmul.mubr.f32.gmra.mrb[0].mxu0 %v6781
      %v7043 = vpop.f32.mrb[0].mxu0
      %v7044 = vadd.f32 0.0, %v7043
      %v7045 = vpop.f32.mrb[0].mxu0
      %7046 = vmatprep.mubr.f32.mxu0 0.0
      %7047 = vmatmul.mubr.f32.gmra.mrb[0].mxu0 %v6783
      %v7048 = vpop.f32.mrb[0].mxu0
      %v7049 = vadd.f32 0.0, %v7048
      %v7050 = vpop.f32.mrb[0].mxu0
      %7051 = vmatprep.mubr.f32.mxu0 0.0
      %7052 = vmatmul.mubr.f32.gmra.mrb[0].mxu0 %v6785
      %v7053 = vpop.f32.mrb[0].mxu0
      %v7054 = vadd.f32 0.0, %v7053
      %v7055 = vpop.f32.mrb[0].mxu0
      %7056 = vmatprep.mubr.f32.mxu0 0.0
      %7057 = vmatmul.mubr.f32.gmra.mrb[0].mxu0 %v6787
      %v7058 = vpop.f32.mrb[0].mxu0
      %v7059 = vadd.f32 0.0, %v7058
      %v7060 = vpop.f32.mrb[0].mxu0
      %7061 = vdwg.mxu0
      %v7062 = vadd.f32 %v6583, %v6859
      %v7063 = vadd.f32 %v6584, %v6864
      %v7064 = vadd.f32 %v6585, %v6869
      %v7065 = vadd.f32 %v6586, %v6874
      %v7066 = vadd.f32 %v6587, %v6879
      %v7067 = vadd.f32 %v6588, %v6884
      %v7068 = vadd.f32 %v6589, %v6889
      %v7069 = vadd.f32 %v6590, %v6894
      %v7070 = vadd.f32 %v6591, %v6899
      %v7071 = vadd.f32 %v6592, %v6904
      %v7072 = vadd.f32 %v6593, %v6909
      %v7073 = vadd.f32 %v6594, %v6914
      %v7074 = vadd.f32 %v6595, %v6919
      %v7075 = vadd.f32 %v6596, %v6924
      %v7076 = vadd.f32 %v6597, %v6929
      %v7077 = vadd.f32 %v6598, %v6934
      %v7078 = vadd.f32 %v6599, %v6939
      %v7079 = vadd.f32 %v6600, %v6944
      %v7080 = vadd.f32 %v6601, %v6949
      %v7081 = vadd.f32 %v6602, %v6954
      %v7082 = vadd.f32 %v6603, %v6959
      %v7083 = vadd.f32 %v6604, %v6964
      %v7084 = vadd.f32 %v6605, %v6969
      %v7085 = vadd.f32 %v6606, %v6974
      %v7086 = vadd.f32 %v6607, %v6979
      %v7087 = vadd.f32 %v6608, %v6984
      %v7088 = vadd.f32 %v6609, %v6989
      %v7089 = vadd.f32 %v6610, %v6994
      %v7090 = vadd.f32 %v6611, %v6999
      %v7091 = vadd.f32 %v6612, %v7004
      %v7092 = vadd.f32 %v6613, %v7009
      %v7093 = vadd.f32 %v6614, %v7014
      %v7094 = vadd.f32 %v6615, %v7019
      %v7095 = vadd.f32 %v6616, %v7024
      %v7096 = vadd.f32 %v6617, %v7029
      %v7097 = vadd.f32 %v6618, %v7034
      %v7098 = vadd.f32 %v6619, %v7039
      %v7099 = vadd.f32 %v6620, %v7044
      %v7100 = vadd.f32 %v6621, %v7049
      %v7101 = vadd.f32 %v6622, %v7054
      %v7102 = vadd.f32 %v6623, %v7059
      %s7103 = scalar_lea.vmem %s2, 20
      %v7104 = vld [vmem:[%s7103] sm:$0xf]
      %v7105 = vrot.slane %v4938, 4
      %v7106 = vrot.slane %v4939, 4
      %v7107 = vsel %vm509, %v7105, %v7106
      %v7108 = vrot.slane %v4940, 4
      %v7109 = vsel %vm509, %v7106, %v7108
      %v7110 = vrot.slane %v4941, 4
      %v7111 = vsel %vm509, %v7108, %v7110
      %v7112 = vrot.slane %v4942, 4
      %v7113 = vsel %vm509, %v7110, %v7112
      %v7114 = vrot.slane %v4943, 4
      %v7115 = vsel %vm509, %v7112, %v7114
      %v7116 = vrot.slane %v4944, 4
      %v7117 = vsel %vm509, %v7114, %v7116
      %v7118 = vrot.slane %v4945, 4
      %v7119 = vsel %vm509, %v7116, %v7118
      %v7120 = vrot.slane %v4946, 4
      %v7121 = vsel %vm509, %v7118, %v7120
      %v7122 = vrot.slane %v4947, 4
      %v7123 = vsel %vm509, %v7120, %v7122
      %v7124 = vrot.slane %v4948, 4
      %v7125 = vsel %vm509, %v7122, %v7124
      %v7126 = vrot.slane %v4949, 4
      %v7127 = vsel %vm509, %v7124, %v7126
      %v7128 = vrot.slane %v4950, 4
      %v7129 = vsel %vm509, %v7126, %v7128
      %v7130 = vrot.slane %v4951, 4
      %v7131 = vsel %vm509, %v7128, %v7130
      %v7132 = vrot.slane %v4952, 4
      %v7133 = vsel %vm509, %v7130, %v7132
      %v7134 = vrot.slane %v4953, 4
      %v7135 = vsel %vm509, %v7132, %v7134
      %v7136 = vrot.slane %v4954, 4
      %v7137 = vsel %vm509, %v7134, %v7136
      %v7138 = vrot.slane %v4955, 4
      %v7139 = vsel %vm509, %v7136, %v7138
      %v7140 = vrot.slane %v4956, 4
      %v7141 = vsel %vm509, %v7138, %v7140
      %v7142 = vrot.slane %v4957, 4
      %v7143 = vsel %vm509, %v7140, %v7142
      %v7144 = vrot.slane %v4958, 4
      %v7145 = vsel %vm509, %v7142, %v7144
      %v7146 = vrot.slane %v4959, 4
      %v7147 = vsel %vm509, %v7144, %v7146
      %v7148 = vrot.slane %v4960, 4
      %v7149 = vsel %vm509, %v7146, %v7148
      %v7150 = vrot.slane %v4961, 4
      %v7151 = vsel %vm509, %v7148, %v7150
      %v7152 = vrot.slane %v4962, 4
      %v7153 = vsel %vm509, %v7150, %v7152
      %v7154 = vrot.slane %v4963, 4
      %v7155 = vsel %vm509, %v7152, %v7154
      %v7156 = vrot.slane %v4964, 4
      %v7157 = vsel %vm509, %v7154, %v7156
      %v7158 = vrot.slane %v4965, 4
      %v7159 = vsel %vm509, %v7156, %v7158
      %v7160 = vrot.slane %v4966, 4
      %v7161 = vsel %vm509, %v7158, %v7160
      %v7162 = vrot.slane %v4967, 4
      %v7163 = vsel %vm509, %v7160, %v7162
      %v7164 = vrot.slane %v4968, 4
      %v7165 = vsel %vm509, %v7162, %v7164
      %v7166 = vrot.slane %v4969, 4
      %v7167 = vsel %vm509, %v7164, %v7166
      %v7168 = vrot.slane %v4970, 4
      %v7169 = vsel %vm509, %v7166, %v7168
      %v7170 = vrot.slane %v4971, 4
      %v7171 = vsel %vm509, %v7168, %v7170
      %v7172 = vrot.slane %v4972, 4
      %v7173 = vsel %vm509, %v7170, %v7172
      %v7174 = vrot.slane %v4973, 4
      %v7175 = vsel %vm509, %v7172, %v7174
      %v7176 = vrot.slane %v4974, 4
      %v7177 = vsel %vm509, %v7174, %v7176
      %v7178 = vrot.slane %v4975, 4
      %v7179 = vsel %vm509, %v7176, %v7178
      %v7180 = vrot.slane %v4976, 4
      %v7181 = vsel %vm509, %v7178, %v7180
      %v7182 = vrot.slane %v4977, 4
      %v7183 = vsel %vm509, %v7180, %v7182
      %v7184 = vrot.slane %v4978, 4
      %v7185 = vsel %vm509, %v7182, %v7184
      %v7186 = vsel %vm416, %v7107, 0
      %v7188 = vsel %vm416, %v7109, 0
      %v7190 = vsel %vm416, %v7111, 0
      %v7192 = vsel %vm416, %v7113, 0
      %v7194 = vsel %vm416, %v7115, 0
      %v7196 = vsel %vm416, %v7117, 0
      %v7198 = vsel %vm416, %v7119, 0
      %v7200 = vsel %vm416, %v7121, 0
      %v7202 = vsel %vm416, %v7123, 0
      %v7204 = vsel %vm416, %v7125, 0
      %v7206 = vsel %vm416, %v7127, 0
      %v7208 = vsel %vm416, %v7129, 0
      %v7210 = vsel %vm416, %v7131, 0
      %v7212 = vsel %vm416, %v7133, 0
      %v7214 = vsel %vm416, %v7135, 0
      %v7216 = vsel %vm416, %v7137, 0
      %v7218 = vsel %vm416, %v7139, 0
      %v7220 = vsel %vm416, %v7141, 0
      %v7222 = vsel %vm416, %v7143, 0
      %v7224 = vsel %vm416, %v7145, 0
      %v7226 = vsel %vm416, %v7147, 0
      %v7228 = vsel %vm416, %v7149, 0
      %v7230 = vsel %vm416, %v7151, 0
      %v7232 = vsel %vm416, %v7153, 0
      %v7234 = vsel %vm416, %v7155, 0
      %v7236 = vsel %vm416, %v7157, 0
      %v7238 = vsel %vm416, %v7159, 0
      %v7240 = vsel %vm416, %v7161, 0
      %v7242 = vsel %vm416, %v7163, 0
      %v7244 = vsel %vm416, %v7165, 0
      %v7246 = vsel %vm416, %v7167, 0
      %v7248 = vsel %vm416, %v7169, 0
      %v7250 = vsel %vm416, %v7171, 0
      %v7252 = vsel %vm416, %v7173, 0
      %v7254 = vsel %vm416, %v7175, 0
      %v7256 = vsel %vm416, %v7177, 0
      %v7258 = vsel %vm416, %v7179, 0
      %v7260 = vsel %vm416, %v7181, 0
      %v7262 = vsel %vm416, %v7183, 0
      %v7264 = vsel %vm416, %v7185, 0
      %v7266 = vsel %vm416, %v7184, 0
      %v7269 = vsel %vm509, %v7104, 0
      %7271 = vmatprep.subr.mxu0 0.0
      %7272 = vmatpush1.msra.mxu0 %v7269
      %7273 = vmatprep.subr.mxu0 0.0
      %7274 = vmatpush1.msra.mxu0 0.0
      %7275 = vmatprep.subr.mxu0 0.0
      %7276 = vmatpush1.msra.mxu0 0.0
      %7277 = vmatprep.subr.mxu0 0.0
      %7278 = vmatpush1.msra.mxu0 0.0
      %7279 = vmatprep.subr.mxu0 0.0
      %7280 = vmatpush1.msra.mxu0 0.0
      %7281 = vmatprep.subr.mxu0 0.0
      %7282 = vmatpush1.msra.mxu0 0.0
      %7283 = vmatprep.subr.mxu0 0.0
      %7284 = vmatpush1.msra.mxu0 0.0
      %7285 = vmatprep.subr.mxu0 0.0
      %7286 = vmatpush1.msra.mxu0 0.0
      %7287 = vmatprep.subr.mxu0 0.0
      %7288 = vmatpush1.msra.mxu0 0.0
      %7289 = vmatprep.subr.mxu0 0.0
      %7290 = vmatpush1.msra.mxu0 0.0
      %7291 = vmatprep.subr.mxu0 0.0
      %7292 = vmatpush1.msra.mxu0 0.0
      %7293 = vmatprep.subr.mxu0 0.0
      %7294 = vmatpush1.msra.mxu0 0.0
      %7295 = vmatprep.subr.mxu0 0.0
      %7296 = vmatpush1.msra.mxu0 0.0
      %7297 = vmatprep.subr.mxu0 0.0
      %7298 = vmatpush1.msra.mxu0 0.0
      %7299 = vmatprep.subr.mxu0 0.0
      %7300 = vmatpush1.msra.mxu0 0.0
      %7301 = vmatprep.subr.mxu0 0.0
      %7302 = vmatpush1.msra.mxu0 0.0
      %7303 = vmatprep.subr.mxu0 0.0
      %7304 = vmatpush1.msra.mxu0 0.0
      %7305 = vmatprep.subr.mxu0 0.0
      %7306 = vmatpush1.msra.mxu0 0.0
      %7307 = vmatprep.subr.mxu0 0.0
      %7308 = vmatpush1.msra.mxu0 0.0
      %7309 = vmatprep.subr.mxu0 0.0
      %7310 = vmatpush1.msra.mxu0 0.0
      %7311 = vmatprep.subr.mxu0 0.0
      %7312 = vmatpush1.msra.mxu0 0.0
      %7313 = vmatprep.subr.mxu0 0.0
      %7314 = vmatpush1.msra.mxu0 0.0
      %7315 = vmatprep.subr.mxu0 0.0
      %7316 = vmatpush1.msra.mxu0 0.0
      %7317 = vmatprep.subr.mxu0 0.0
      %7318 = vmatpush1.msra.mxu0 0.0
      %7319 = vmatprep.subr.mxu0 0.0
      %7320 = vmatpush1.msra.mxu0 0.0
      %7321 = vmatprep.subr.mxu0 0.0
      %7322 = vmatpush1.msra.mxu0 0.0
      %7323 = vmatprep.subr.mxu0 0.0
      %7324 = vmatpush1.msra.mxu0 0.0
      %7325 = vmatprep.subr.mxu0 0.0
      %7326 = vmatpush1.msra.mxu0 0.0
      %7327 = vmatprep.subr.mxu0 0.0
      %7328 = vmatpush1.msra.mxu0 0.0
      %7329 = vmatprep.subr.mxu0 0.0
      %7330 = vmatpush1.msra.mxu0 0.0
      %7331 = vmatprep.subr.mxu0 0.0
      %7332 = vmatpush1.msra.mxu0 0.0
      %7333 = vmatprep.subr.mxu0 0.0
      %7334 = vmatpush1.msra.mxu0 0.0
      %7335 = vmatprep.mubr.f32.mxu0 0.0
      %7336 = vmatmul.mubr.f32.gmra.mrb[0].mxu0 %v7186
      %v7337 = vpop.f32.mrb[0].mxu0
      %v7338 = vadd.f32 0.0, %v7337
      %v7339 = vpop.f32.mrb[0].mxu0
      %7340 = vmatprep.mubr.f32.mxu0 0.0
      %7341 = vmatmul.mubr.f32.gmra.mrb[0].mxu0 %v7188
      %v7342 = vpop.f32.mrb[0].mxu0
      %v7343 = vadd.f32 0.0, %v7342
      %v7344 = vpop.f32.mrb[0].mxu0
      %7345 = vmatprep.mubr.f32.mxu0 0.0
      %7346 = vmatmul.mubr.f32.gmra.mrb[0].mxu0 %v7190
      %v7347 = vpop.f32.mrb[0].mxu0
      %v7348 = vadd.f32 0.0, %v7347
      %v7349 = vpop.f32.mrb[0].mxu0
      %7350 = vmatprep.mubr.f32.mxu0 0.0
      %7351 = vmatmul.mubr.f32.gmra.mrb[0].mxu0 %v7192
      %v7352 = vpop.f32.mrb[0].mxu0
      %v7353 = vadd.f32 0.0, %v7352
      %v7354 = vpop.f32.mrb[0].mxu0
      %7355 = vmatprep.mubr.f32.mxu0 0.0
      %7356 = vmatmul.mubr.f32.gmra.mrb[0].mxu0 %v7194
      %v7357 = vpop.f32.mrb[0].mxu0
      %v7358 = vadd.f32 0.0, %v7357
      %v7359 = vpop.f32.mrb[0].mxu0
      %7360 = vmatprep.mubr.f32.mxu0 0.0
      %7361 = vmatmul.mubr.f32.gmra.mrb[0].mxu0 %v7196
      %v7362 = vpop.f32.mrb[0].mxu0
      %v7363 = vadd.f32 0.0, %v7362
      %v7364 = vpop.f32.mrb[0].mxu0
      %7365 = vmatprep.mubr.f32.mxu0 0.0
      %7366 = vmatmul.mubr.f32.gmra.mrb[0].mxu0 %v7198
      %v7367 = vpop.f32.mrb[0].mxu0
      %v7368 = vadd.f32 0.0, %v7367
      %v7369 = vpop.f32.mrb[0].mxu0
      %7370 = vmatprep.mubr.f32.mxu0 0.0
      %7371 = vmatmul.mubr.f32.gmra.mrb[0].mxu0 %v7200
      %v7372 = vpop.f32.mrb[0].mxu0
      %v7373 = vadd.f32 0.0, %v7372
      %v7374 = vpop.f32.mrb[0].mxu0
      %7375 = vmatprep.mubr.f32.mxu0 0.0
      %7376 = vmatmul.mubr.f32.gmra.mrb[0].mxu0 %v7202
      %v7377 = vpop.f32.mrb[0].mxu0
      %v7378 = vadd.f32 0.0, %v7377
      %v7379 = vpop.f32.mrb[0].mxu0
      %7380 = vmatprep.mubr.f32.mxu0 0.0
      %7381 = vmatmul.mubr.f32.gmra.mrb[0].mxu0 %v7204
      %v7382 = vpop.f32.mrb[0].mxu0
      %v7383 = vadd.f32 0.0, %v7382
      %v7384 = vpop.f32.mrb[0].mxu0
      %7385 = vmatprep.mubr.f32.mxu0 0.0
      %7386 = vmatmul.mubr.f32.gmra.mrb[0].mxu0 %v7206
      %v7387 = vpop.f32.mrb[0].mxu0
      %v7388 = vadd.f32 0.0, %v7387
      %v7389 = vpop.f32.mrb[0].mxu0
      %7390 = vmatprep.mubr.f32.mxu0 0.0
      %7391 = vmatmul.mubr.f32.gmra.mrb[0].mxu0 %v7208
      %v7392 = vpop.f32.mrb[0].mxu0
      %v7393 = vadd.f32 0.0, %v7392
      %v7394 = vpop.f32.mrb[0].mxu0
      %7395 = vmatprep.mubr.f32.mxu0 0.0
      %7396 = vmatmul.mubr.f32.gmra.mrb[0].mxu0 %v7210
      %v7397 = vpop.f32.mrb[0].mxu0
      %v7398 = vadd.f32 0.0, %v7397
      %v7399 = vpop.f32.mrb[0].mxu0
      %7400 = vmatprep.mubr.f32.mxu0 0.0
      %7401 = vmatmul.mubr.f32.gmra.mrb[0].mxu0 %v7212
      %v7402 = vpop.f32.mrb[0].mxu0
      %v7403 = vadd.f32 0.0, %v7402
      %v7404 = vpop.f32.mrb[0].mxu0
      %7405 = vmatprep.mubr.f32.mxu0 0.0
      %7406 = vmatmul.mubr.f32.gmra.mrb[0].mxu0 %v7214
      %v7407 = vpop.f32.mrb[0].mxu0
      %v7408 = vadd.f32 0.0, %v7407
      %v7409 = vpop.f32.mrb[0].mxu0
      %7410 = vmatprep.mubr.f32.mxu0 0.0
      %7411 = vmatmul.mubr.f32.gmra.mrb[0].mxu0 %v7216
      %v7412 = vpop.f32.mrb[0].mxu0
      %v7413 = vadd.f32 0.0, %v7412
      %v7414 = vpop.f32.mrb[0].mxu0
      %7415 = vmatprep.mubr.f32.mxu0 0.0
      %7416 = vmatmul.mubr.f32.gmra.mrb[0].mxu0 %v7218
      %v7417 = vpop.f32.mrb[0].mxu0
      %v7418 = vadd.f32 0.0, %v7417
      %v7419 = vpop.f32.mrb[0].mxu0
      %7420 = vmatprep.mubr.f32.mxu0 0.0
      %7421 = vmatmul.mubr.f32.gmra.mrb[0].mxu0 %v7220
      %v7422 = vpop.f32.mrb[0].mxu0
      %v7423 = vadd.f32 0.0, %v7422
      %v7424 = vpop.f32.mrb[0].mxu0
      %7425 = vmatprep.mubr.f32.mxu0 0.0
      %7426 = vmatmul.mubr.f32.gmra.mrb[0].mxu0 %v7222
      %v7427 = vpop.f32.mrb[0].mxu0
      %v7428 = vadd.f32 0.0, %v7427
      %v7429 = vpop.f32.mrb[0].mxu0
      %7430 = vmatprep.mubr.f32.mxu0 0.0
      %7431 = vmatmul.mubr.f32.gmra.mrb[0].mxu0 %v7224
      %v7432 = vpop.f32.mrb[0].mxu0
      %v7433 = vadd.f32 0.0, %v7432
      %v7434 = vpop.f32.mrb[0].mxu0
      %7435 = vmatprep.mubr.f32.mxu0 0.0
      %7436 = vmatmul.mubr.f32.gmra.mrb[0].mxu0 %v7226
      %v7437 = vpop.f32.mrb[0].mxu0
      %v7438 = vadd.f32 0.0, %v7437
      %v7439 = vpop.f32.mrb[0].mxu0
      %7440 = vmatprep.mubr.f32.mxu0 0.0
      %7441 = vmatmul.mubr.f32.gmra.mrb[0].mxu0 %v7228
      %v7442 = vpop.f32.mrb[0].mxu0
      %v7443 = vadd.f32 0.0, %v7442
      %v7444 = vpop.f32.mrb[0].mxu0
      %7445 = vmatprep.mubr.f32.mxu0 0.0
      %7446 = vmatmul.mubr.f32.gmra.mrb[0].mxu0 %v7230
      %v7447 = vpop.f32.mrb[0].mxu0
      %v7448 = vadd.f32 0.0, %v7447
      %v7449 = vpop.f32.mrb[0].mxu0
      %7450 = vmatprep.mubr.f32.mxu0 0.0
      %7451 = vmatmul.mubr.f32.gmra.mrb[0].mxu0 %v7232
      %v7452 = vpop.f32.mrb[0].mxu0
      %v7453 = vadd.f32 0.0, %v7452
      %v7454 = vpop.f32.mrb[0].mxu0
      %7455 = vmatprep.mubr.f32.mxu0 0.0
      %7456 = vmatmul.mubr.f32.gmra.mrb[0].mxu0 %v7234
      %v7457 = vpop.f32.mrb[0].mxu0
      %v7458 = vadd.f32 0.0, %v7457
      %v7459 = vpop.f32.mrb[0].mxu0
      %7460 = vmatprep.mubr.f32.mxu0 0.0
      %7461 = vmatmul.mubr.f32.gmra.mrb[0].mxu0 %v7236
      %v7462 = vpop.f32.mrb[0].mxu0
      %v7463 = vadd.f32 0.0, %v7462
      %v7464 = vpop.f32.mrb[0].mxu0
      %7465 = vmatprep.mubr.f32.mxu0 0.0
      %7466 = vmatmul.mubr.f32.gmra.mrb[0].mxu0 %v7238
      %v7467 = vpop.f32.mrb[0].mxu0
      %v7468 = vadd.f32 0.0, %v7467
      %v7469 = vpop.f32.mrb[0].mxu0
      %7470 = vmatprep.mubr.f32.mxu0 0.0
      %7471 = vmatmul.mubr.f32.gmra.mrb[0].mxu0 %v7240
      %v7472 = vpop.f32.mrb[0].mxu0
      %v7473 = vadd.f32 0.0, %v7472
      %v7474 = vpop.f32.mrb[0].mxu0
      %7475 = vmatprep.mubr.f32.mxu0 0.0
      %7476 = vmatmul.mubr.f32.gmra.mrb[0].mxu0 %v7242
      %v7477 = vpop.f32.mrb[0].mxu0
      %v7478 = vadd.f32 0.0, %v7477
      %v7479 = vpop.f32.mrb[0].mxu0
      %7480 = vmatprep.mubr.f32.mxu0 0.0
      %7481 = vmatmul.mubr.f32.gmra.mrb[0].mxu0 %v7244
      %v7482 = vpop.f32.mrb[0].mxu0
      %v7483 = vadd.f32 0.0, %v7482
      %v7484 = vpop.f32.mrb[0].mxu0
      %7485 = vmatprep.mubr.f32.mxu0 0.0
      %7486 = vmatmul.mubr.f32.gmra.mrb[0].mxu0 %v7246
      %v7487 = vpop.f32.mrb[0].mxu0
      %v7488 = vadd.f32 0.0, %v7487
      %v7489 = vpop.f32.mrb[0].mxu0
      %7490 = vmatprep.mubr.f32.mxu0 0.0
      %7491 = vmatmul.mubr.f32.gmra.mrb[0].mxu0 %v7248
      %v7492 = vpop.f32.mrb[0].mxu0
      %v7493 = vadd.f32 0.0, %v7492
      %v7494 = vpop.f32.mrb[0].mxu0
      %7495 = vmatprep.mubr.f32.mxu0 0.0
      %7496 = vmatmul.mubr.f32.gmra.mrb[0].mxu0 %v7250
      %v7497 = vpop.f32.mrb[0].mxu0
      %v7498 = vadd.f32 0.0, %v7497
      %v7499 = vpop.f32.mrb[0].mxu0
      %7500 = vmatprep.mubr.f32.mxu0 0.0
      %7501 = vmatmul.mubr.f32.gmra.mrb[0].mxu0 %v7252
      %v7502 = vpop.f32.mrb[0].mxu0
      %v7503 = vadd.f32 0.0, %v7502
      %v7504 = vpop.f32.mrb[0].mxu0
      %7505 = vmatprep.mubr.f32.mxu0 0.0
      %7506 = vmatmul.mubr.f32.gmra.mrb[0].mxu0 %v7254
      %v7507 = vpop.f32.mrb[0].mxu0
      %v7508 = vadd.f32 0.0, %v7507
      %v7509 = vpop.f32.mrb[0].mxu0
      %7510 = vmatprep.mubr.f32.mxu0 0.0
      %7511 = vmatmul.mubr.f32.gmra.mrb[0].mxu0 %v7256
      %v7512 = vpop.f32.mrb[0].mxu0
      %v7513 = vadd.f32 0.0, %v7512
      %v7514 = vpop.f32.mrb[0].mxu0
      %7515 = vmatprep.mubr.f32.mxu0 0.0
      %7516 = vmatmul.mubr.f32.gmra.mrb[0].mxu0 %v7258
      %v7517 = vpop.f32.mrb[0].mxu0
      %v7518 = vadd.f32 0.0, %v7517
      %v7519 = vpop.f32.mrb[0].mxu0
      %7520 = vmatprep.mubr.f32.mxu0 0.0
      %7521 = vmatmul.mubr.f32.gmra.mrb[0].mxu0 %v7260
      %v7522 = vpop.f32.mrb[0].mxu0
      %v7523 = vadd.f32 0.0, %v7522
      %v7524 = vpop.f32.mrb[0].mxu0
      %7525 = vmatprep.mubr.f32.mxu0 0.0
      %7526 = vmatmul.mubr.f32.gmra.mrb[0].mxu0 %v7262
      %v7527 = vpop.f32.mrb[0].mxu0
      %v7528 = vadd.f32 0.0, %v7527
      %v7529 = vpop.f32.mrb[0].mxu0
      %7530 = vmatprep.mubr.f32.mxu0 0.0
      %7531 = vmatmul.mubr.f32.gmra.mrb[0].mxu0 %v7264
      %v7532 = vpop.f32.mrb[0].mxu0
      %v7533 = vadd.f32 0.0, %v7532
      %v7534 = vpop.f32.mrb[0].mxu0
      %7535 = vmatprep.mubr.f32.mxu0 0.0
      %7536 = vmatmul.mubr.f32.gmra.mrb[0].mxu0 %v7266
      %v7537 = vpop.f32.mrb[0].mxu0
      %v7538 = vadd.f32 0.0, %v7537
      %v7539 = vpop.f32.mrb[0].mxu0
      %7540 = vdwg.mxu0
      %v7541 = vadd.f32 %v7062, %v7338
      %v7542 = vadd.f32 %v7063, %v7343
      %v7543 = vadd.f32 %v7064, %v7348
      %v7544 = vadd.f32 %v7065, %v7353
      %v7545 = vadd.f32 %v7066, %v7358
      %v7546 = vadd.f32 %v7067, %v7363
      %v7547 = vadd.f32 %v7068, %v7368
      %v7548 = vadd.f32 %v7069, %v7373
      %v7549 = vadd.f32 %v7070, %v7378
      %v7550 = vadd.f32 %v7071, %v7383
      %v7551 = vadd.f32 %v7072, %v7388
      %v7552 = vadd.f32 %v7073, %v7393
      %v7553 = vadd.f32 %v7074, %v7398
      %v7554 = vadd.f32 %v7075, %v7403
      %v7555 = vadd.f32 %v7076, %v7408
      %v7556 = vadd.f32 %v7077, %v7413
      %v7557 = vadd.f32 %v7078, %v7418
      %v7558 = vadd.f32 %v7079, %v7423
      %v7559 = vadd.f32 %v7080, %v7428
      %v7560 = vadd.f32 %v7081, %v7433
      %v7561 = vadd.f32 %v7082, %v7438
      %v7562 = vadd.f32 %v7083, %v7443
      %v7563 = vadd.f32 %v7084, %v7448
      %v7564 = vadd.f32 %v7085, %v7453
      %v7565 = vadd.f32 %v7086, %v7458
      %v7566 = vadd.f32 %v7087, %v7463
      %v7567 = vadd.f32 %v7088, %v7468
      %v7568 = vadd.f32 %v7089, %v7473
      %v7569 = vadd.f32 %v7090, %v7478
      %v7570 = vadd.f32 %v7091, %v7483
      %v7571 = vadd.f32 %v7092, %v7488
      %v7572 = vadd.f32 %v7093, %v7493
      %v7573 = vadd.f32 %v7094, %v7498
      %v7574 = vadd.f32 %v7095, %v7503
      %v7575 = vadd.f32 %v7096, %v7508
      %v7576 = vadd.f32 %v7097, %v7513
      %v7577 = vadd.f32 %v7098, %v7518
      %v7578 = vadd.f32 %v7099, %v7523
      %v7579 = vadd.f32 %v7100, %v7528
      %v7580 = vadd.f32 %v7101, %v7533
      %v7581 = vadd.f32 %v7102, %v7538
      %s7582 = scalar_lea.vmem %s2, 24
      %v7583 = vld [vmem:[%s7582] sm:$0xf]
      %v7586 = vrot.slane %v4979, 4
      %v7587 = vsel %vm509, %v7184, %v7586
      %v7588 = vrot.slane %v4980, 4
      %v7589 = vsel %vm509, %v7586, %v7588
      %v7590 = vsel %vm416, %v7587, 0
      %v7592 = vsel %vm416, %v7589, 0
      %v7594 = vsel %vm416, %v7588, 0
      %v7597 = vsel %vm509, %v7583, 0
      %7599 = vmatprep.subr.mxu0 0.0
      %7600 = vmatpush1.msra.mxu0 %v7597
      %7601 = vmatprep.subr.mxu0 0.0
      %7602 = vmatpush1.msra.mxu0 0.0
      %7603 = vmatprep.subr.mxu0 0.0
      %7604 = vmatpush1.msra.mxu0 0.0
      %7605 = vmatprep.subr.mxu0 0.0
      %7606 = vmatpush1.msra.mxu0 0.0
      %7607 = vmatprep.subr.mxu0 0.0
      %7608 = vmatpush1.msra.mxu0 0.0
      %7609 = vmatprep.subr.mxu0 0.0
      %7610 = vmatpush1.msra.mxu0 0.0
      %7611 = vmatprep.subr.mxu0 0.0
      %7612 = vmatpush1.msra.mxu0 0.0
      %7613 = vmatprep.subr.mxu0 0.0
      %7614 = vmatpush1.msra.mxu0 0.0
      %7615 = vmatprep.subr.mxu0 0.0
      %7616 = vmatpush1.msra.mxu0 0.0
      %7617 = vmatprep.subr.mxu0 0.0
      %7618 = vmatpush1.msra.mxu0 0.0
      %7619 = vmatprep.subr.mxu0 0.0
      %7620 = vmatpush1.msra.mxu0 0.0
      %7621 = vmatprep.subr.mxu0 0.0
      %7622 = vmatpush1.msra.mxu0 0.0
      %7623 = vmatprep.subr.mxu0 0.0
      %7624 = vmatpush1.msra.mxu0 0.0
      %7625 = vmatprep.subr.mxu0 0.0
      %7626 = vmatpush1.msra.mxu0 0.0
      %7627 = vmatprep.subr.mxu0 0.0
      %7628 = vmatpush1.msra.mxu0 0.0
      %7629 = vmatprep.subr.mxu0 0.0
      %7630 = vmatpush1.msra.mxu0 0.0
      %7631 = vmatprep.subr.mxu0 0.0
      %7632 = vmatpush1.msra.mxu0 0.0
      %7633 = vmatprep.subr.mxu0 0.0
      %7634 = vmatpush1.msra.mxu0 0.0
      %7635 = vmatprep.subr.mxu0 0.0
      %7636 = vmatpush1.msra.mxu0 0.0
      %7637 = vmatprep.subr.mxu0 0.0
      %7638 = vmatpush1.msra.mxu0 0.0
      %7639 = vmatprep.subr.mxu0 0.0
      %7640 = vmatpush1.msra.mxu0 0.0
      %7641 = vmatprep.subr.mxu0 0.0
      %7642 = vmatpush1.msra.mxu0 0.0
      %7643 = vmatprep.subr.mxu0 0.0
      %7644 = vmatpush1.msra.mxu0 0.0
      %7645 = vmatprep.subr.mxu0 0.0
      %7646 = vmatpush1.msra.mxu0 0.0
      %7647 = vmatprep.subr.mxu0 0.0
      %7648 = vmatpush1.msra.mxu0 0.0
      %7649 = vmatprep.subr.mxu0 0.0
      %7650 = vmatpush1.msra.mxu0 0.0
      %7651 = vmatprep.subr.mxu0 0.0
      %7652 = vmatpush1.msra.mxu0 0.0
      %7653 = vmatprep.subr.mxu0 0.0
      %7654 = vmatpush1.msra.mxu0 0.0
      %7655 = vmatprep.subr.mxu0 0.0
      %7656 = vmatpush1.msra.mxu0 0.0
      %7657 = vmatprep.subr.mxu0 0.0
      %7658 = vmatpush1.msra.mxu0 0.0
      %7659 = vmatprep.subr.mxu0 0.0
      %7660 = vmatpush1.msra.mxu0 0.0
      %7661 = vmatprep.subr.mxu0 0.0
      %7662 = vmatpush1.msra.mxu0 0.0
      %7663 = vmatprep.mubr.f32.mxu0 0.0
      %7664 = vmatmul.mubr.f32.gmra.mrb[0].mxu0 %v7190
      %v7665 = vpop.f32.mrb[0].mxu0
      %v7666 = vadd.f32 0.0, %v7665
      %v7667 = vpop.f32.mrb[0].mxu0
      %7668 = vmatprep.mubr.f32.mxu0 0.0
      %7669 = vmatmul.mubr.f32.gmra.mrb[0].mxu0 %v7192
      %v7670 = vpop.f32.mrb[0].mxu0
      %v7671 = vadd.f32 0.0, %v7670
      %v7672 = vpop.f32.mrb[0].mxu0
      %7673 = vmatprep.mubr.f32.mxu0 0.0
      %7674 = vmatmul.mubr.f32.gmra.mrb[0].mxu0 %v7194
      %v7675 = vpop.f32.mrb[0].mxu0
      %v7676 = vadd.f32 0.0, %v7675
      %v7677 = vpop.f32.mrb[0].mxu0
      %7678 = vmatprep.mubr.f32.mxu0 0.0
      %7679 = vmatmul.mubr.f32.gmra.mrb[0].mxu0 %v7196
      %v7680 = vpop.f32.mrb[0].mxu0
      %v7681 = vadd.f32 0.0, %v7680
      %v7682 = vpop.f32.mrb[0].mxu0
      %7683 = vmatprep.mubr.f32.mxu0 0.0
      %7684 = vmatmul.mubr.f32.gmra.mrb[0].mxu0 %v7198
      %v7685 = vpop.f32.mrb[0].mxu0
      %v7686 = vadd.f32 0.0, %v7685
      %v7687 = vpop.f32.mrb[0].mxu0
      %7688 = vmatprep.mubr.f32.mxu0 0.0
      %7689 = vmatmul.mubr.f32.gmra.mrb[0].mxu0 %v7200
      %v7690 = vpop.f32.mrb[0].mxu0
      %v7691 = vadd.f32 0.0, %v7690
      %v7692 = vpop.f32.mrb[0].mxu0
      %7693 = vmatprep.mubr.f32.mxu0 0.0
      %7694 = vmatmul.mubr.f32.gmra.mrb[0].mxu0 %v7202
      %v7695 = vpop.f32.mrb[0].mxu0
      %v7696 = vadd.f32 0.0, %v7695
      %v7697 = vpop.f32.mrb[0].mxu0
      %7698 = vmatprep.mubr.f32.mxu0 0.0
      %7699 = vmatmul.mubr.f32.gmra.mrb[0].mxu0 %v7204
      %v7700 = vpop.f32.mrb[0].mxu0
      %v7701 = vadd.f32 0.0, %v7700
      %v7702 = vpop.f32.mrb[0].mxu0
      %7703 = vmatprep.mubr.f32.mxu0 0.0
      %7704 = vmatmul.mubr.f32.gmra.mrb[0].mxu0 %v7206
      %v7705 = vpop.f32.mrb[0].mxu0
      %v7706 = vadd.f32 0.0, %v7705
      %v7707 = vpop.f32.mrb[0].mxu0
      %7708 = vmatprep.mubr.f32.mxu0 0.0
      %7709 = vmatmul.mubr.f32.gmra.mrb[0].mxu0 %v7208
      %v7710 = vpop.f32.mrb[0].mxu0
      %v7711 = vadd.f32 0.0, %v7710
      %v7712 = vpop.f32.mrb[0].mxu0
      %7713 = vmatprep.mubr.f32.mxu0 0.0
      %7714 = vmatmul.mubr.f32.gmra.mrb[0].mxu0 %v7210
      %v7715 = vpop.f32.mrb[0].mxu0
      %v7716 = vadd.f32 0.0, %v7715
      %v7717 = vpop.f32.mrb[0].mxu0
      %7718 = vmatprep.mubr.f32.mxu0 0.0
      %7719 = vmatmul.mubr.f32.gmra.mrb[0].mxu0 %v7212
      %v7720 = vpop.f32.mrb[0].mxu0
      %v7721 = vadd.f32 0.0, %v7720
      %v7722 = vpop.f32.mrb[0].mxu0
      %7723 = vmatprep.mubr.f32.mxu0 0.0
      %7724 = vmatmul.mubr.f32.gmra.mrb[0].mxu0 %v7214
      %v7725 = vpop.f32.mrb[0].mxu0
      %v7726 = vadd.f32 0.0, %v7725
      %v7727 = vpop.f32.mrb[0].mxu0
      %7728 = vmatprep.mubr.f32.mxu0 0.0
      %7729 = vmatmul.mubr.f32.gmra.mrb[0].mxu0 %v7216
      %v7730 = vpop.f32.mrb[0].mxu0
      %v7731 = vadd.f32 0.0, %v7730
      %v7732 = vpop.f32.mrb[0].mxu0
      %7733 = vmatprep.mubr.f32.mxu0 0.0
      %7734 = vmatmul.mubr.f32.gmra.mrb[0].mxu0 %v7218
      %v7735 = vpop.f32.mrb[0].mxu0
      %v7736 = vadd.f32 0.0, %v7735
      %v7737 = vpop.f32.mrb[0].mxu0
      %7738 = vmatprep.mubr.f32.mxu0 0.0
      %7739 = vmatmul.mubr.f32.gmra.mrb[0].mxu0 %v7220
      %v7740 = vpop.f32.mrb[0].mxu0
      %v7741 = vadd.f32 0.0, %v7740
      %v7742 = vpop.f32.mrb[0].mxu0
      %7743 = vmatprep.mubr.f32.mxu0 0.0
      %7744 = vmatmul.mubr.f32.gmra.mrb[0].mxu0 %v7222
      %v7745 = vpop.f32.mrb[0].mxu0
      %v7746 = vadd.f32 0.0, %v7745
      %v7747 = vpop.f32.mrb[0].mxu0
      %7748 = vmatprep.mubr.f32.mxu0 0.0
      %7749 = vmatmul.mubr.f32.gmra.mrb[0].mxu0 %v7224
      %v7750 = vpop.f32.mrb[0].mxu0
      %v7751 = vadd.f32 0.0, %v7750
      %v7752 = vpop.f32.mrb[0].mxu0
      %7753 = vmatprep.mubr.f32.mxu0 0.0
      %7754 = vmatmul.mubr.f32.gmra.mrb[0].mxu0 %v7226
      %v7755 = vpop.f32.mrb[0].mxu0
      %v7756 = vadd.f32 0.0, %v7755
      %v7757 = vpop.f32.mrb[0].mxu0
      %7758 = vmatprep.mubr.f32.mxu0 0.0
      %7759 = vmatmul.mubr.f32.gmra.mrb[0].mxu0 %v7228
      %v7760 = vpop.f32.mrb[0].mxu0
      %v7761 = vadd.f32 0.0, %v7760
      %v7762 = vpop.f32.mrb[0].mxu0
      %7763 = vmatprep.mubr.f32.mxu0 0.0
      %7764 = vmatmul.mubr.f32.gmra.mrb[0].mxu0 %v7230
      %v7765 = vpop.f32.mrb[0].mxu0
      %v7766 = vadd.f32 0.0, %v7765
      %v7767 = vpop.f32.mrb[0].mxu0
      %7768 = vmatprep.mubr.f32.mxu0 0.0
      %7769 = vmatmul.mubr.f32.gmra.mrb[0].mxu0 %v7232
      %v7770 = vpop.f32.mrb[0].mxu0
      %v7771 = vadd.f32 0.0, %v7770
      %v7772 = vpop.f32.mrb[0].mxu0
      %7773 = vmatprep.mubr.f32.mxu0 0.0
      %7774 = vmatmul.mubr.f32.gmra.mrb[0].mxu0 %v7234
      %v7775 = vpop.f32.mrb[0].mxu0
      %v7776 = vadd.f32 0.0, %v7775
      %v7777 = vpop.f32.mrb[0].mxu0
      %7778 = vmatprep.mubr.f32.mxu0 0.0
      %7779 = vmatmul.mubr.f32.gmra.mrb[0].mxu0 %v7236
      %v7780 = vpop.f32.mrb[0].mxu0
      %v7781 = vadd.f32 0.0, %v7780
      %v7782 = vpop.f32.mrb[0].mxu0
      %7783 = vmatprep.mubr.f32.mxu0 0.0
      %7784 = vmatmul.mubr.f32.gmra.mrb[0].mxu0 %v7238
      %v7785 = vpop.f32.mrb[0].mxu0
      %v7786 = vadd.f32 0.0, %v7785
      %v7787 = vpop.f32.mrb[0].mxu0
      %7788 = vmatprep.mubr.f32.mxu0 0.0
      %7789 = vmatmul.mubr.f32.gmra.mrb[0].mxu0 %v7240
      %v7790 = vpop.f32.mrb[0].mxu0
      %v7791 = vadd.f32 0.0, %v7790
      %v7792 = vpop.f32.mrb[0].mxu0
      %7793 = vmatprep.mubr.f32.mxu0 0.0
      %7794 = vmatmul.mubr.f32.gmra.mrb[0].mxu0 %v7242
      %v7795 = vpop.f32.mrb[0].mxu0
      %v7796 = vadd.f32 0.0, %v7795
      %v7797 = vpop.f32.mrb[0].mxu0
      %7798 = vmatprep.mubr.f32.mxu0 0.0
      %7799 = vmatmul.mubr.f32.gmra.mrb[0].mxu0 %v7244
      %v7800 = vpop.f32.mrb[0].mxu0
      %v7801 = vadd.f32 0.0, %v7800
      %v7802 = vpop.f32.mrb[0].mxu0
      %7803 = vmatprep.mubr.f32.mxu0 0.0
      %7804 = vmatmul.mubr.f32.gmra.mrb[0].mxu0 %v7246
      %v7805 = vpop.f32.mrb[0].mxu0
      %v7806 = vadd.f32 0.0, %v7805
      %v7807 = vpop.f32.mrb[0].mxu0
      %7808 = vmatprep.mubr.f32.mxu0 0.0
      %7809 = vmatmul.mubr.f32.gmra.mrb[0].mxu0 %v7248
      %v7810 = vpop.f32.mrb[0].mxu0
      %v7811 = vadd.f32 0.0, %v7810
      %v7812 = vpop.f32.mrb[0].mxu0
      %7813 = vmatprep.mubr.f32.mxu0 0.0
      %7814 = vmatmul.mubr.f32.gmra.mrb[0].mxu0 %v7250
      %v7815 = vpop.f32.mrb[0].mxu0
      %v7816 = vadd.f32 0.0, %v7815
      %v7817 = vpop.f32.mrb[0].mxu0
      %7818 = vmatprep.mubr.f32.mxu0 0.0
      %7819 = vmatmul.mubr.f32.gmra.mrb[0].mxu0 %v7252
      %v7820 = vpop.f32.mrb[0].mxu0
      %v7821 = vadd.f32 0.0, %v7820
      %v7822 = vpop.f32.mrb[0].mxu0
      %7823 = vmatprep.mubr.f32.mxu0 0.0
      %7824 = vmatmul.mubr.f32.gmra.mrb[0].mxu0 %v7254
      %v7825 = vpop.f32.mrb[0].mxu0
      %v7826 = vadd.f32 0.0, %v7825
      %v7827 = vpop.f32.mrb[0].mxu0
      %7828 = vmatprep.mubr.f32.mxu0 0.0
      %7829 = vmatmul.mubr.f32.gmra.mrb[0].mxu0 %v7256
      %v7830 = vpop.f32.mrb[0].mxu0
      %v7831 = vadd.f32 0.0, %v7830
      %v7832 = vpop.f32.mrb[0].mxu0
      %7833 = vmatprep.mubr.f32.mxu0 0.0
      %7834 = vmatmul.mubr.f32.gmra.mrb[0].mxu0 %v7258
      %v7835 = vpop.f32.mrb[0].mxu0
      %v7836 = vadd.f32 0.0, %v7835
      %v7837 = vpop.f32.mrb[0].mxu0
      %7838 = vmatprep.mubr.f32.mxu0 0.0
      %7839 = vmatmul.mubr.f32.gmra.mrb[0].mxu0 %v7260
      %v7840 = vpop.f32.mrb[0].mxu0
      %v7841 = vadd.f32 0.0, %v7840
      %v7842 = vpop.f32.mrb[0].mxu0
      %7843 = vmatprep.mubr.f32.mxu0 0.0
      %7844 = vmatmul.mubr.f32.gmra.mrb[0].mxu0 %v7262
      %v7845 = vpop.f32.mrb[0].mxu0
      %v7846 = vadd.f32 0.0, %v7845
      %v7847 = vpop.f32.mrb[0].mxu0
      %7848 = vmatprep.mubr.f32.mxu0 0.0
      %7849 = vmatmul.mubr.f32.gmra.mrb[0].mxu0 %v7264
      %v7850 = vpop.f32.mrb[0].mxu0
      %v7851 = vadd.f32 0.0, %v7850
      %v7852 = vpop.f32.mrb[0].mxu0
      %7853 = vmatprep.mubr.f32.mxu0 0.0
      %7854 = vmatmul.mubr.f32.gmra.mrb[0].mxu0 %v7590
      %v7855 = vpop.f32.mrb[0].mxu0
      %v7856 = vadd.f32 0.0, %v7855
      %v7857 = vpop.f32.mrb[0].mxu0
      %7858 = vmatprep.mubr.f32.mxu0 0.0
      %7859 = vmatmul.mubr.f32.gmra.mrb[0].mxu0 %v7592
      %v7860 = vpop.f32.mrb[0].mxu0
      %v7861 = vadd.f32 0.0, %v7860
      %v7862 = vpop.f32.mrb[0].mxu0
      %7863 = vmatprep.mubr.f32.mxu0 0.0
      %7864 = vmatmul.mubr.f32.gmra.mrb[0].mxu0 %v7594
      %v7865 = vpop.f32.mrb[0].mxu0
      %v7866 = vadd.f32 0.0, %v7865
      %v7867 = vpop.f32.mrb[0].mxu0
      %7868 = vdwg.mxu0
      %v7869 = vadd.f32 %v7541, %v7666
      %v7870 = vadd.f32 %v7542, %v7671
      %v7871 = vadd.f32 %v7543, %v7676
      %v7872 = vadd.f32 %v7544, %v7681
      %v7873 = vadd.f32 %v7545, %v7686
      %v7874 = vadd.f32 %v7546, %v7691
      %v7875 = vadd.f32 %v7547, %v7696
      %v7876 = vadd.f32 %v7548, %v7701
      %v7877 = vadd.f32 %v7549, %v7706
      %v7878 = vadd.f32 %v7550, %v7711
      %v7879 = vadd.f32 %v7551, %v7716
      %v7880 = vadd.f32 %v7552, %v7721
      %v7881 = vadd.f32 %v7553, %v7726
      %v7882 = vadd.f32 %v7554, %v7731
      %v7883 = vadd.f32 %v7555, %v7736
      %v7884 = vadd.f32 %v7556, %v7741
      %v7885 = vadd.f32 %v7557, %v7746
      %v7886 = vadd.f32 %v7558, %v7751
      %v7887 = vadd.f32 %v7559, %v7756
      %v7888 = vadd.f32 %v7560, %v7761
      %v7889 = vadd.f32 %v7561, %v7766
      %v7890 = vadd.f32 %v7562, %v7771
      %v7891 = vadd.f32 %v7563, %v7776
      %v7892 = vadd.f32 %v7564, %v7781
      %v7893 = vadd.f32 %v7565, %v7786
      %v7894 = vadd.f32 %v7566, %v7791
      %v7895 = vadd.f32 %v7567, %v7796
      %v7896 = vadd.f32 %v7568, %v7801
      %v7897 = vadd.f32 %v7569, %v7806
      %v7898 = vadd.f32 %v7570, %v7811
      %v7899 = vadd.f32 %v7571, %v7816
      %v7900 = vadd.f32 %v7572, %v7821
      %v7901 = vadd.f32 %v7573, %v7826
      %v7902 = vadd.f32 %v7574, %v7831
      %v7903 = vadd.f32 %v7575, %v7836
      %v7904 = vadd.f32 %v7576, %v7841
      %v7905 = vadd.f32 %v7577, %v7846
      %v7906 = vadd.f32 %v7578, %v7851
      %v7907 = vadd.f32 %v7579, %v7856
      %v7908 = vadd.f32 %v7580, %v7861
      %v7909 = vadd.f32 %v7581, %v7866
      %s7910 = scalar_lea.vmem %s2, 28
      %v7911 = vld [vmem:[%s7910] sm:$0xf]
      %v7913 = vrot.slane %v4940, 5
      %v7914 = vrot.slane %v4941, 5
      %v7915 = vsel %vm3505, %v7913, %v7914
      %v7916 = vrot.slane %v4942, 5
      %v7917 = vsel %vm3505, %v7914, %v7916
      %v7918 = vrot.slane %v4943, 5
      %v7919 = vsel %vm3505, %v7916, %v7918
      %v7920 = vrot.slane %v4944, 5
      %v7921 = vsel %vm3505, %v7918, %v7920
      %v7922 = vrot.slane %v4945, 5
      %v7923 = vsel %vm3505, %v7920, %v7922
      %v7924 = vrot.slane %v4946, 5
      %v7925 = vsel %vm3505, %v7922, %v7924
      %v7926 = vrot.slane %v4947, 5
      %v7927 = vsel %vm3505, %v7924, %v7926
      %v7928 = vrot.slane %v4948, 5
      %v7929 = vsel %vm3505, %v7926, %v7928
      %v7930 = vrot.slane %v4949, 5
      %v7931 = vsel %vm3505, %v7928, %v7930
      %v7932 = vrot.slane %v4950, 5
      %v7933 = vsel %vm3505, %v7930, %v7932
      %v7934 = vrot.slane %v4951, 5
      %v7935 = vsel %vm3505, %v7932, %v7934
      %v7936 = vrot.slane %v4952, 5
      %v7937 = vsel %vm3505, %v7934, %v7936
      %v7938 = vrot.slane %v4953, 5
      %v7939 = vsel %vm3505, %v7936, %v7938
      %v7940 = vrot.slane %v4954, 5
      %v7941 = vsel %vm3505, %v7938, %v7940
      %v7942 = vrot.slane %v4955, 5
      %v7943 = vsel %vm3505, %v7940, %v7942
      %v7944 = vrot.slane %v4956, 5
      %v7945 = vsel %vm3505, %v7942, %v7944
      %v7946 = vrot.slane %v4957, 5
      %v7947 = vsel %vm3505, %v7944, %v7946
      %v7948 = vrot.slane %v4958, 5
      %v7949 = vsel %vm3505, %v7946, %v7948
      %v7950 = vrot.slane %v4959, 5
      %v7951 = vsel %vm3505, %v7948, %v7950
      %v7952 = vrot.slane %v4960, 5
      %v7953 = vsel %vm3505, %v7950, %v7952
      %v7954 = vrot.slane %v4961, 5
      %v7955 = vsel %vm3505, %v7952, %v7954
      %v7956 = vrot.slane %v4962, 5
      %v7957 = vsel %vm3505, %v7954, %v7956
      %v7958 = vrot.slane %v4963, 5
      %v7959 = vsel %vm3505, %v7956, %v7958
      %v7960 = vrot.slane %v4964, 5
      %v7961 = vsel %vm3505, %v7958, %v7960
      %v7962 = vrot.slane %v4965, 5
      %v7963 = vsel %vm3505, %v7960, %v7962
      %v7964 = vrot.slane %v4966, 5
      %v7965 = vsel %vm3505, %v7962, %v7964
      %v7966 = vrot.slane %v4967, 5
      %v7967 = vsel %vm3505, %v7964, %v7966
      %v7968 = vrot.slane %v4968, 5
      %v7969 = vsel %vm3505, %v7966, %v7968
      %v7970 = vrot.slane %v4969, 5
      %v7971 = vsel %vm3505, %v7968, %v7970
      %v7972 = vrot.slane %v4970, 5
      %v7973 = vsel %vm3505, %v7970, %v7972
      %v7974 = vrot.slane %v4971, 5
      %v7975 = vsel %vm3505, %v7972, %v7974
      %v7976 = vrot.slane %v4972, 5
      %v7977 = vsel %vm3505, %v7974, %v7976
      %v7978 = vrot.slane %v4973, 5
      %v7979 = vsel %vm3505, %v7976, %v7978
      %v7980 = vrot.slane %v4974, 5
      %v7981 = vsel %vm3505, %v7978, %v7980
      %v7982 = vrot.slane %v4975, 5
      %v7983 = vsel %vm3505, %v7980, %v7982
      %v7984 = vrot.slane %v4976, 5
      %v7985 = vsel %vm3505, %v7982, %v7984
      %v7986 = vrot.slane %v4977, 5
      %v7987 = vsel %vm3505, %v7984, %v7986
      %v7988 = vrot.slane %v4978, 5
      %v7989 = vsel %vm3505, %v7986, %v7988
      %v7990 = vrot.slane %v4979, 5
      %v7991 = vsel %vm3505, %v7988, %v7990
      %v7992 = vrot.slane %v4980, 5
      %v7993 = vsel %vm3505, %v7990, %v7992
      %v7994 = vrot.slane %v4981, 5
      %v7995 = vsel %vm3505, %v7992, %v7994
      %v7996 = vsel %vm416, %v7915, 0
      %v7998 = vsel %vm416, %v7917, 0
      %v8000 = vsel %vm416, %v7919, 0
      %v8002 = vsel %vm416, %v7921, 0
      %v8004 = vsel %vm416, %v7923, 0
      %v8006 = vsel %vm416, %v7925, 0
      %v8008 = vsel %vm416, %v7927, 0
      %v8010 = vsel %vm416, %v7929, 0
      %v8012 = vsel %vm416, %v7931, 0
      %v8014 = vsel %vm416, %v7933, 0
      %v8016 = vsel %vm416, %v7935, 0
      %v8018 = vsel %vm416, %v7937, 0
      %v8020 = vsel %vm416, %v7939, 0
      %v8022 = vsel %vm416, %v7941, 0
      %v8024 = vsel %vm416, %v7943, 0
      %v8026 = vsel %vm416, %v7945, 0
      %v8028 = vsel %vm416, %v7947, 0
      %v8030 = vsel %vm416, %v7949, 0
      %v8032 = vsel %vm416, %v7951, 0
      %v8034 = vsel %vm416, %v7953, 0
      %v8036 = vsel %vm416, %v7955, 0
      %v8038 = vsel %vm416, %v7957, 0
      %v8040 = vsel %vm416, %v7959, 0
      %v8042 = vsel %vm416, %v7961, 0
      %v8044 = vsel %vm416, %v7963, 0
      %v8046 = vsel %vm416, %v7965, 0
      %v8048 = vsel %vm416, %v7967, 0
      %v8050 = vsel %vm416, %v7969, 0
      %v8052 = vsel %vm416, %v7971, 0
      %v8054 = vsel %vm416, %v7973, 0
      %v8056 = vsel %vm416, %v7975, 0
      %v8058 = vsel %vm416, %v7977, 0
      %v8060 = vsel %vm416, %v7979, 0
      %v8062 = vsel %vm416, %v7981, 0
      %v8064 = vsel %vm416, %v7983, 0
      %v8066 = vsel %vm416, %v7985, 0
      %v8068 = vsel %vm416, %v7987, 0
      %v8070 = vsel %vm416, %v7989, 0
      %v8072 = vsel %vm416, %v7991, 0
      %v8074 = vsel %vm416, %v7993, 0
      %v8076 = vsel %vm416, %v7995, 0
      %v8079 = vsel %vm509, %v7911, 0
      %8081 = vmatprep.subr.mxu0 0.0
      %8082 = vmatpush1.msra.mxu0 %v8079
      %8083 = vmatprep.subr.mxu0 0.0
      %8084 = vmatpush1.msra.mxu0 0.0
      %8085 = vmatprep.subr.mxu0 0.0
      %8086 = vmatpush1.msra.mxu0 0.0
      %8087 = vmatprep.subr.mxu0 0.0
      %8088 = vmatpush1.msra.mxu0 0.0
      %8089 = vmatprep.subr.mxu0 0.0
      %8090 = vmatpush1.msra.mxu0 0.0
      %8091 = vmatprep.subr.mxu0 0.0
      %8092 = vmatpush1.msra.mxu0 0.0
      %8093 = vmatprep.subr.mxu0 0.0
      %8094 = vmatpush1.msra.mxu0 0.0
      %8095 = vmatprep.subr.mxu0 0.0
      %8096 = vmatpush1.msra.mxu0 0.0
      %8097 = vmatprep.subr.mxu0 0.0
      %8098 = vmatpush1.msra.mxu0 0.0
      %8099 = vmatprep.subr.mxu0 0.0
      %8100 = vmatpush1.msra.mxu0 0.0
      %8101 = vmatprep.subr.mxu0 0.0
      %8102 = vmatpush1.msra.mxu0 0.0
      %8103 = vmatprep.subr.mxu0 0.0
      %8104 = vmatpush1.msra.mxu0 0.0
      %8105 = vmatprep.subr.mxu0 0.0
      %8106 = vmatpush1.msra.mxu0 0.0
      %8107 = vmatprep.subr.mxu0 0.0
      %8108 = vmatpush1.msra.mxu0 0.0
      %8109 = vmatprep.subr.mxu0 0.0
      %8110 = vmatpush1.msra.mxu0 0.0
      %8111 = vmatprep.subr.mxu0 0.0
      %8112 = vmatpush1.msra.mxu0 0.0
      %8113 = vmatprep.subr.mxu0 0.0
      %8114 = vmatpush1.msra.mxu0 0.0
      %8115 = vmatprep.subr.mxu0 0.0
      %8116 = vmatpush1.msra.mxu0 0.0
      %8117 = vmatprep.subr.mxu0 0.0
      %8118 = vmatpush1.msra.mxu0 0.0
      %8119 = vmatprep.subr.mxu0 0.0
      %8120 = vmatpush1.msra.mxu0 0.0
      %8121 = vmatprep.subr.mxu0 0.0
      %8122 = vmatpush1.msra.mxu0 0.0
      %8123 = vmatprep.subr.mxu0 0.0
      %8124 = vmatpush1.msra.mxu0 0.0
      %8125 = vmatprep.subr.mxu0 0.0
      %8126 = vmatpush1.msra.mxu0 0.0
      %8127 = vmatprep.subr.mxu0 0.0
      %8128 = vmatpush1.msra.mxu0 0.0
      %8129 = vmatprep.subr.mxu0 0.0
      %8130 = vmatpush1.msra.mxu0 0.0
      %8131 = vmatprep.subr.mxu0 0.0
      %8132 = vmatpush1.msra.mxu0 0.0
      %8133 = vmatprep.subr.mxu0 0.0
      %8134 = vmatpush1.msra.mxu0 0.0
      %8135 = vmatprep.subr.mxu0 0.0
      %8136 = vmatpush1.msra.mxu0 0.0
      %8137 = vmatprep.subr.mxu0 0.0
      %8138 = vmatpush1.msra.mxu0 0.0
      %8139 = vmatprep.subr.mxu0 0.0
      %8140 = vmatpush1.msra.mxu0 0.0
      %8141 = vmatprep.subr.mxu0 0.0
      %8142 = vmatpush1.msra.mxu0 0.0
      %8143 = vmatprep.subr.mxu0 0.0
      %8144 = vmatpush1.msra.mxu0 0.0
      %8145 = vmatprep.mubr.f32.mxu0 0.0
      %8146 = vmatmul.mubr.f32.gmra.mrb[0].mxu0 %v7996
      %v8147 = vpop.f32.mrb[0].mxu0
      %v8148 = vadd.f32 0.0, %v8147
      %v8149 = vpop.f32.mrb[0].mxu0
      %8150 = vmatprep.mubr.f32.mxu0 0.0
      %8151 = vmatmul.mubr.f32.gmra.mrb[0].mxu0 %v7998
      %v8152 = vpop.f32.mrb[0].mxu0
      %v8153 = vadd.f32 0.0, %v8152
      %v8154 = vpop.f32.mrb[0].mxu0
      %8155 = vmatprep.mubr.f32.mxu0 0.0
      %8156 = vmatmul.mubr.f32.gmra.mrb[0].mxu0 %v8000
      %v8157 = vpop.f32.mrb[0].mxu0
      %v8158 = vadd.f32 0.0, %v8157
      %v8159 = vpop.f32.mrb[0].mxu0
      %8160 = vmatprep.mubr.f32.mxu0 0.0
      %8161 = vmatmul.mubr.f32.gmra.mrb[0].mxu0 %v8002
      %v8162 = vpop.f32.mrb[0].mxu0
      %v8163 = vadd.f32 0.0, %v8162
      %v8164 = vpop.f32.mrb[0].mxu0
      %8165 = vmatprep.mubr.f32.mxu0 0.0
      %8166 = vmatmul.mubr.f32.gmra.mrb[0].mxu0 %v8004
      %v8167 = vpop.f32.mrb[0].mxu0
      %v8168 = vadd.f32 0.0, %v8167
      %v8169 = vpop.f32.mrb[0].mxu0
      %8170 = vmatprep.mubr.f32.mxu0 0.0
      %8171 = vmatmul.mubr.f32.gmra.mrb[0].mxu0 %v8006
      %v8172 = vpop.f32.mrb[0].mxu0
      %v8173 = vadd.f32 0.0, %v8172
      %v8174 = vpop.f32.mrb[0].mxu0
      %8175 = vmatprep.mubr.f32.mxu0 0.0
      %8176 = vmatmul.mubr.f32.gmra.mrb[0].mxu0 %v8008
      %v8177 = vpop.f32.mrb[0].mxu0
      %v8178 = vadd.f32 0.0, %v8177
      %v8179 = vpop.f32.mrb[0].mxu0
      %8180 = vmatprep.mubr.f32.mxu0 0.0
      %8181 = vmatmul.mubr.f32.gmra.mrb[0].mxu0 %v8010
      %v8182 = vpop.f32.mrb[0].mxu0
      %v8183 = vadd.f32 0.0, %v8182
      %v8184 = vpop.f32.mrb[0].mxu0
      %8185 = vmatprep.mubr.f32.mxu0 0.0
      %8186 = vmatmul.mubr.f32.gmra.mrb[0].mxu0 %v8012
      %v8187 = vpop.f32.mrb[0].mxu0
      %v8188 = vadd.f32 0.0, %v8187
      %v8189 = vpop.f32.mrb[0].mxu0
      %8190 = vmatprep.mubr.f32.mxu0 0.0
      %8191 = vmatmul.mubr.f32.gmra.mrb[0].mxu0 %v8014
      %v8192 = vpop.f32.mrb[0].mxu0
      %v8193 = vadd.f32 0.0, %v8192
      %v8194 = vpop.f32.mrb[0].mxu0
      %8195 = vmatprep.mubr.f32.mxu0 0.0
      %8196 = vmatmul.mubr.f32.gmra.mrb[0].mxu0 %v8016
      %v8197 = vpop.f32.mrb[0].mxu0
      %v8198 = vadd.f32 0.0, %v8197
      %v8199 = vpop.f32.mrb[0].mxu0
      %8200 = vmatprep.mubr.f32.mxu0 0.0
      %8201 = vmatmul.mubr.f32.gmra.mrb[0].mxu0 %v8018
      %v8202 = vpop.f32.mrb[0].mxu0
      %v8203 = vadd.f32 0.0, %v8202
      %v8204 = vpop.f32.mrb[0].mxu0
      %8205 = vmatprep.mubr.f32.mxu0 0.0
      %8206 = vmatmul.mubr.f32.gmra.mrb[0].mxu0 %v8020
      %v8207 = vpop.f32.mrb[0].mxu0
      %v8208 = vadd.f32 0.0, %v8207
      %v8209 = vpop.f32.mrb[0].mxu0
      %8210 = vmatprep.mubr.f32.mxu0 0.0
      %8211 = vmatmul.mubr.f32.gmra.mrb[0].mxu0 %v8022
      %v8212 = vpop.f32.mrb[0].mxu0
      %v8213 = vadd.f32 0.0, %v8212
      %v8214 = vpop.f32.mrb[0].mxu0
      %8215 = vmatprep.mubr.f32.mxu0 0.0
      %8216 = vmatmul.mubr.f32.gmra.mrb[0].mxu0 %v8024
      %v8217 = vpop.f32.mrb[0].mxu0
      %v8218 = vadd.f32 0.0, %v8217
      %v8219 = vpop.f32.mrb[0].mxu0
      %8220 = vmatprep.mubr.f32.mxu0 0.0
      %8221 = vmatmul.mubr.f32.gmra.mrb[0].mxu0 %v8026
      %v8222 = vpop.f32.mrb[0].mxu0
      %v8223 = vadd.f32 0.0, %v8222
      %v8224 = vpop.f32.mrb[0].mxu0
      %8225 = vmatprep.mubr.f32.mxu0 0.0
      %8226 = vmatmul.mubr.f32.gmra.mrb[0].mxu0 %v8028
      %v8227 = vpop.f32.mrb[0].mxu0
      %v8228 = vadd.f32 0.0, %v8227
      %v8229 = vpop.f32.mrb[0].mxu0
      %8230 = vmatprep.mubr.f32.mxu0 0.0
      %8231 = vmatmul.mubr.f32.gmra.mrb[0].mxu0 %v8030
      %v8232 = vpop.f32.mrb[0].mxu0
      %v8233 = vadd.f32 0.0, %v8232
      %v8234 = vpop.f32.mrb[0].mxu0
      %8235 = vmatprep.mubr.f32.mxu0 0.0
      %8236 = vmatmul.mubr.f32.gmra.mrb[0].mxu0 %v8032
      %v8237 = vpop.f32.mrb[0].mxu0
      %v8238 = vadd.f32 0.0, %v8237
      %v8239 = vpop.f32.mrb[0].mxu0
      %8240 = vmatprep.mubr.f32.mxu0 0.0
      %8241 = vmatmul.mubr.f32.gmra.mrb[0].mxu0 %v8034
      %v8242 = vpop.f32.mrb[0].mxu0
      %v8243 = vadd.f32 0.0, %v8242
      %v8244 = vpop.f32.mrb[0].mxu0
      %8245 = vmatprep.mubr.f32.mxu0 0.0
      %8246 = vmatmul.mubr.f32.gmra.mrb[0].mxu0 %v8036
      %v8247 = vpop.f32.mrb[0].mxu0
      %v8248 = vadd.f32 0.0, %v8247
      %v8249 = vpop.f32.mrb[0].mxu0
      %8250 = vmatprep.mubr.f32.mxu0 0.0
      %8251 = vmatmul.mubr.f32.gmra.mrb[0].mxu0 %v8038
      %v8252 = vpop.f32.mrb[0].mxu0
      %v8253 = vadd.f32 0.0, %v8252
      %v8254 = vpop.f32.mrb[0].mxu0
      %8255 = vmatprep.mubr.f32.mxu0 0.0
      %8256 = vmatmul.mubr.f32.gmra.mrb[0].mxu0 %v8040
      %v8257 = vpop.f32.mrb[0].mxu0
      %v8258 = vadd.f32 0.0, %v8257
      %v8259 = vpop.f32.mrb[0].mxu0
      %8260 = vmatprep.mubr.f32.mxu0 0.0
      %8261 = vmatmul.mubr.f32.gmra.mrb[0].mxu0 %v8042
      %v8262 = vpop.f32.mrb[0].mxu0
      %v8263 = vadd.f32 0.0, %v8262
      %v8264 = vpop.f32.mrb[0].mxu0
      %8265 = vmatprep.mubr.f32.mxu0 0.0
      %8266 = vmatmul.mubr.f32.gmra.mrb[0].mxu0 %v8044
      %v8267 = vpop.f32.mrb[0].mxu0
      %v8268 = vadd.f32 0.0, %v8267
      %v8269 = vpop.f32.mrb[0].mxu0
      %8270 = vmatprep.mubr.f32.mxu0 0.0
      %8271 = vmatmul.mubr.f32.gmra.mrb[0].mxu0 %v8046
      %v8272 = vpop.f32.mrb[0].mxu0
      %v8273 = vadd.f32 0.0, %v8272
      %v8274 = vpop.f32.mrb[0].mxu0
      %8275 = vmatprep.mubr.f32.mxu0 0.0
      %8276 = vmatmul.mubr.f32.gmra.mrb[0].mxu0 %v8048
      %v8277 = vpop.f32.mrb[0].mxu0
      %v8278 = vadd.f32 0.0, %v8277
      %v8279 = vpop.f32.mrb[0].mxu0
      %8280 = vmatprep.mubr.f32.mxu0 0.0
      %8281 = vmatmul.mubr.f32.gmra.mrb[0].mxu0 %v8050
      %v8282 = vpop.f32.mrb[0].mxu0
      %v8283 = vadd.f32 0.0, %v8282
      %v8284 = vpop.f32.mrb[0].mxu0
      %8285 = vmatprep.mubr.f32.mxu0 0.0
      %8286 = vmatmul.mubr.f32.gmra.mrb[0].mxu0 %v8052
      %v8287 = vpop.f32.mrb[0].mxu0
      %v8288 = vadd.f32 0.0, %v8287
      %v8289 = vpop.f32.mrb[0].mxu0
      %8290 = vmatprep.mubr.f32.mxu0 0.0
      %8291 = vmatmul.mubr.f32.gmra.mrb[0].mxu0 %v8054
      %v8292 = vpop.f32.mrb[0].mxu0
      %v8293 = vadd.f32 0.0, %v8292
      %v8294 = vpop.f32.mrb[0].mxu0
      %8295 = vmatprep.mubr.f32.mxu0 0.0
      %8296 = vmatmul.mubr.f32.gmra.mrb[0].mxu0 %v8056
      %v8297 = vpop.f32.mrb[0].mxu0
      %v8298 = vadd.f32 0.0, %v8297
      %v8299 = vpop.f32.mrb[0].mxu0
      %8300 = vmatprep.mubr.f32.mxu0 0.0
      %8301 = vmatmul.mubr.f32.gmra.mrb[0].mxu0 %v8058
      %v8302 = vpop.f32.mrb[0].mxu0
      %v8303 = vadd.f32 0.0, %v8302
      %v8304 = vpop.f32.mrb[0].mxu0
      %8305 = vmatprep.mubr.f32.mxu0 0.0
      %8306 = vmatmul.mubr.f32.gmra.mrb[0].mxu0 %v8060
      %v8307 = vpop.f32.mrb[0].mxu0
      %v8308 = vadd.f32 0.0, %v8307
      %v8309 = vpop.f32.mrb[0].mxu0
      %8310 = vmatprep.mubr.f32.mxu0 0.0
      %8311 = vmatmul.mubr.f32.gmra.mrb[0].mxu0 %v8062
      %v8312 = vpop.f32.mrb[0].mxu0
      %v8313 = vadd.f32 0.0, %v8312
      %v8314 = vpop.f32.mrb[0].mxu0
      %8315 = vmatprep.mubr.f32.mxu0 0.0
      %8316 = vmatmul.mubr.f32.gmra.mrb[0].mxu0 %v8064
      %v8317 = vpop.f32.mrb[0].mxu0
      %v8318 = vadd.f32 0.0, %v8317
      %v8319 = vpop.f32.mrb[0].mxu0
      %8320 = vmatprep.mubr.f32.mxu0 0.0
      %8321 = vmatmul.mubr.f32.gmra.mrb[0].mxu0 %v8066
      %v8322 = vpop.f32.mrb[0].mxu0
      %v8323 = vadd.f32 0.0, %v8322
      %v8324 = vpop.f32.mrb[0].mxu0
      %8325 = vmatprep.mubr.f32.mxu0 0.0
      %8326 = vmatmul.mubr.f32.gmra.mrb[0].mxu0 %v8068
      %v8327 = vpop.f32.mrb[0].mxu0
      %v8328 = vadd.f32 0.0, %v8327
      %v8329 = vpop.f32.mrb[0].mxu0
      %8330 = vmatprep.mubr.f32.mxu0 0.0
      %8331 = vmatmul.mubr.f32.gmra.mrb[0].mxu0 %v8070
      %v8332 = vpop.f32.mrb[0].mxu0
      %v8333 = vadd.f32 0.0, %v8332
      %v8334 = vpop.f32.mrb[0].mxu0
      %8335 = vmatprep.mubr.f32.mxu0 0.0
      %8336 = vmatmul.mubr.f32.gmra.mrb[0].mxu0 %v8072
      %v8337 = vpop.f32.mrb[0].mxu0
      %v8338 = vadd.f32 0.0, %v8337
      %v8339 = vpop.f32.mrb[0].mxu0
      %8340 = vmatprep.mubr.f32.mxu0 0.0
      %8341 = vmatmul.mubr.f32.gmra.mrb[0].mxu0 %v8074
      %v8342 = vpop.f32.mrb[0].mxu0
      %v8343 = vadd.f32 0.0, %v8342
      %v8344 = vpop.f32.mrb[0].mxu0
      %8345 = vmatprep.mubr.f32.mxu0 0.0
      %8346 = vmatmul.mubr.f32.gmra.mrb[0].mxu0 %v8076
      %v8347 = vpop.f32.mrb[0].mxu0
      %v8348 = vadd.f32 0.0, %v8347
      %v8349 = vpop.f32.mrb[0].mxu0
      %8350 = vdwg.mxu0
      %v8351 = vadd.f32 %v7869, %v8148
      %v8352 = vadd.f32 %v7870, %v8153
      %v8353 = vadd.f32 %v7871, %v8158
      %v8354 = vadd.f32 %v7872, %v8163
      %v8355 = vadd.f32 %v7873, %v8168
      %v8356 = vadd.f32 %v7874, %v8173
      %v8357 = vadd.f32 %v7875, %v8178
      %v8358 = vadd.f32 %v7876, %v8183
      %v8359 = vadd.f32 %v7877, %v8188
      %v8360 = vadd.f32 %v7878, %v8193
      %v8361 = vadd.f32 %v7879, %v8198
      %v8362 = vadd.f32 %v7880, %v8203
      %v8363 = vadd.f32 %v7881, %v8208
      %v8364 = vadd.f32 %v7882, %v8213
      %v8365 = vadd.f32 %v7883, %v8218
      %v8366 = vadd.f32 %v7884, %v8223
      %v8367 = vadd.f32 %v7885, %v8228
      %v8368 = vadd.f32 %v7886, %v8233
      %v8369 = vadd.f32 %v7887, %v8238
      %v8370 = vadd.f32 %v7888, %v8243
      %v8371 = vadd.f32 %v7889, %v8248
      %v8372 = vadd.f32 %v7890, %v8253
      %v8373 = vadd.f32 %v7891, %v8258
      %v8374 = vadd.f32 %v7892, %v8263
      %v8375 = vadd.f32 %v7893, %v8268
      %v8376 = vadd.f32 %v7894, %v8273
      %v8377 = vadd.f32 %v7895, %v8278
      %v8378 = vadd.f32 %v7896, %v8283
      %v8379 = vadd.f32 %v7897, %v8288
      %v8380 = vadd.f32 %v7898, %v8293
      %v8381 = vadd.f32 %v7899, %v8298
      %v8382 = vadd.f32 %v7900, %v8303
      %v8383 = vadd.f32 %v7901, %v8308
      %v8384 = vadd.f32 %v7902, %v8313
      %v8385 = vadd.f32 %v7903, %v8318
      %v8386 = vadd.f32 %v7904, %v8323
      %v8387 = vadd.f32 %v7905, %v8328
      %v8388 = vadd.f32 %v7906, %v8333
      %v8389 = vadd.f32 %v7907, %v8338
      %v8390 = vadd.f32 %v7908, %v8343
      %v8391 = vadd.f32 %v7909, %v8348
      %s8392 = scalar_lea.vmem %s2, 32
      %v8393 = vld [vmem:[%s8392] sm:$0xf]
      %v8394 = vrot.slane %v4940, 6
      %v8395 = vrot.slane %v4941, 6
      %v8396 = vsel %vm4035, %v8394, %v8395
      %v8397 = vrot.slane %v4942, 6
      %v8398 = vsel %vm4035, %v8395, %v8397
      %v8399 = vrot.slane %v4943, 6
      %v8400 = vsel %vm4035, %v8397, %v8399
      %v8401 = vrot.slane %v4944, 6
      %v8402 = vsel %vm4035, %v8399, %v8401
      %v8403 = vrot.slane %v4945, 6
      %v8404 = vsel %vm4035, %v8401, %v8403
      %v8405 = vrot.slane %v4946, 6
      %v8406 = vsel %vm4035, %v8403, %v8405
      %v8407 = vrot.slane %v4947, 6
      %v8408 = vsel %vm4035, %v8405, %v8407
      %v8409 = vrot.slane %v4948, 6
      %v8410 = vsel %vm4035, %v8407, %v8409
      %v8411 = vrot.slane %v4949, 6
      %v8412 = vsel %vm4035, %v8409, %v8411
      %v8413 = vrot.slane %v4950, 6
      %v8414 = vsel %vm4035, %v8411, %v8413
      %v8415 = vrot.slane %v4951, 6
      %v8416 = vsel %vm4035, %v8413, %v8415
      %v8417 = vrot.slane %v4952, 6
      %v8418 = vsel %vm4035, %v8415, %v8417
      %v8419 = vrot.slane %v4953, 6
      %v8420 = vsel %vm4035, %v8417, %v8419
      %v8421 = vrot.slane %v4954, 6
      %v8422 = vsel %vm4035, %v8419, %v8421
      %v8423 = vrot.slane %v4955, 6
      %v8424 = vsel %vm4035, %v8421, %v8423
      %v8425 = vrot.slane %v4956, 6
      %v8426 = vsel %vm4035, %v8423, %v8425
      %v8427 = vrot.slane %v4957, 6
      %v8428 = vsel %vm4035, %v8425, %v8427
      %v8429 = vrot.slane %v4958, 6
      %v8430 = vsel %vm4035, %v8427, %v8429
      %v8431 = vrot.slane %v4959, 6
      %v8432 = vsel %vm4035, %v8429, %v8431
      %v8433 = vrot.slane %v4960, 6
      %v8434 = vsel %vm4035, %v8431, %v8433
      %v8435 = vrot.slane %v4961, 6
      %v8436 = vsel %vm4035, %v8433, %v8435
      %v8437 = vrot.slane %v4962, 6
      %v8438 = vsel %vm4035, %v8435, %v8437
      %v8439 = vrot.slane %v4963, 6
      %v8440 = vsel %vm4035, %v8437, %v8439
      %v8441 = vrot.slane %v4964, 6
      %v8442 = vsel %vm4035, %v8439, %v8441
      %v8443 = vrot.slane %v4965, 6
      %v8444 = vsel %vm4035, %v8441, %v8443
      %v8445 = vrot.slane %v4966, 6
      %v8446 = vsel %vm4035, %v8443, %v8445
      %v8447 = vrot.slane %v4967, 6
      %v8448 = vsel %vm4035, %v8445, %v8447
      %v8449 = vrot.slane %v4968, 6
      %v8450 = vsel %vm4035, %v8447, %v8449
      %v8451 = vrot.slane %v4969, 6
      %v8452 = vsel %vm4035, %v8449, %v8451
      %v8453 = vrot.slane %v4970, 6
      %v8454 = vsel %vm4035, %v8451, %v8453
      %v8455 = vrot.slane %v4971, 6
      %v8456 = vsel %vm4035, %v8453, %v8455
      %v8457 = vrot.slane %v4972, 6
      %v8458 = vsel %vm4035, %v8455, %v8457
      %v8459 = vrot.slane %v4973, 6
      %v8460 = vsel %vm4035, %v8457, %v8459
      %v8461 = vrot.slane %v4974, 6
      %v8462 = vsel %vm4035, %v8459, %v8461
      %v8463 = vrot.slane %v4975, 6
      %v8464 = vsel %vm4035, %v8461, %v8463
      %v8465 = vrot.slane %v4976, 6
      %v8466 = vsel %vm4035, %v8463, %v8465
      %v8467 = vrot.slane %v4977, 6
      %v8468 = vsel %vm4035, %v8465, %v8467
      %v8469 = vrot.slane %v4978, 6
      %v8470 = vsel %vm4035, %v8467, %v8469
      %v8471 = vrot.slane %v4979, 6
      %v8472 = vsel %vm4035, %v8469, %v8471
      %v8473 = vrot.slane %v4980, 6
      %v8474 = vsel %vm4035, %v8471, %v8473
      %v8475 = vrot.slane %v4981, 6
      %v8476 = vsel %vm4035, %v8473, %v8475
      %v8477 = vsel %vm416, %v8396, 0
      %v8479 = vsel %vm416, %v8398, 0
      %v8481 = vsel %vm416, %v8400, 0
      %v8483 = vsel %vm416, %v8402, 0
      %v8485 = vsel %vm416, %v8404, 0
      %v8487 = vsel %vm416, %v8406, 0
      %v8489 = vsel %vm416, %v8408, 0
      %v8491 = vsel %vm416, %v8410, 0
      %v8493 = vsel %vm416, %v8412, 0
      %v8495 = vsel %vm416, %v8414, 0
      %v8497 = vsel %vm416, %v8416, 0
      %v8499 = vsel %vm416, %v8418, 0
      %v8501 = vsel %vm416, %v8420, 0
      %v8503 = vsel %vm416, %v8422, 0
      %v8505 = vsel %vm416, %v8424, 0
      %v8507 = vsel %vm416, %v8426, 0
      %v8509 = vsel %vm416, %v8428, 0
      %v8511 = vsel %vm416, %v8430, 0
      %v8513 = vsel %vm416, %v8432, 0
      %v8515 = vsel %vm416, %v8434, 0
      %v8517 = vsel %vm416, %v8436, 0
      %v8519 = vsel %vm416, %v8438, 0
      %v8521 = vsel %vm416, %v8440, 0
      %v8523 = vsel %vm416, %v8442, 0
      %v8525 = vsel %vm416, %v8444, 0
      %v8527 = vsel %vm416, %v8446, 0
      %v8529 = vsel %vm416, %v8448, 0
      %v8531 = vsel %vm416, %v8450, 0
      %v8533 = vsel %vm416, %v8452, 0
      %v8535 = vsel %vm416, %v8454, 0
      %v8537 = vsel %vm416, %v8456, 0
      %v8539 = vsel %vm416, %v8458, 0
      %v8541 = vsel %vm416, %v8460, 0
      %v8543 = vsel %vm416, %v8462, 0
      %v8545 = vsel %vm416, %v8464, 0
      %v8547 = vsel %vm416, %v8466, 0
      %v8549 = vsel %vm416, %v8468, 0
      %v8551 = vsel %vm416, %v8470, 0
      %v8553 = vsel %vm416, %v8472, 0
      %v8555 = vsel %vm416, %v8474, 0
      %v8557 = vsel %vm416, %v8476, 0
      %v8560 = vsel %vm509, %v8393, 0
      %8562 = vmatprep.subr.mxu0 0.0
      %8563 = vmatpush1.msra.mxu0 %v8560
      %8564 = vmatprep.subr.mxu0 0.0
      %8565 = vmatpush1.msra.mxu0 0.0
      %8566 = vmatprep.subr.mxu0 0.0
      %8567 = vmatpush1.msra.mxu0 0.0
      %8568 = vmatprep.subr.mxu0 0.0
      %8569 = vmatpush1.msra.mxu0 0.0
      %8570 = vmatprep.subr.mxu0 0.0
      %8571 = vmatpush1.msra.mxu0 0.0
      %8572 = vmatprep.subr.mxu0 0.0
      %8573 = vmatpush1.msra.mxu0 0.0
      %8574 = vmatprep.subr.mxu0 0.0
      %8575 = vmatpush1.msra.mxu0 0.0
      %8576 = vmatprep.subr.mxu0 0.0
      %8577 = vmatpush1.msra.mxu0 0.0
      %8578 = vmatprep.subr.mxu0 0.0
      %8579 = vmatpush1.msra.mxu0 0.0
      %8580 = vmatprep.subr.mxu0 0.0
      %8581 = vmatpush1.msra.mxu0 0.0
      %8582 = vmatprep.subr.mxu0 0.0
      %8583 = vmatpush1.msra.mxu0 0.0
      %8584 = vmatprep.subr.mxu0 0.0
      %8585 = vmatpush1.msra.mxu0 0.0
      %8586 = vmatprep.subr.mxu0 0.0
      %8587 = vmatpush1.msra.mxu0 0.0
      %8588 = vmatprep.subr.mxu0 0.0
      %8589 = vmatpush1.msra.mxu0 0.0
      %8590 = vmatprep.subr.mxu0 0.0
      %8591 = vmatpush1.msra.mxu0 0.0
      %8592 = vmatprep.subr.mxu0 0.0
      %8593 = vmatpush1.msra.mxu0 0.0
      %8594 = vmatprep.subr.mxu0 0.0
      %8595 = vmatpush1.msra.mxu0 0.0
      %8596 = vmatprep.subr.mxu0 0.0
      %8597 = vmatpush1.msra.mxu0 0.0
      %8598 = vmatprep.subr.mxu0 0.0
      %8599 = vmatpush1.msra.mxu0 0.0
      %8600 = vmatprep.subr.mxu0 0.0
      %8601 = vmatpush1.msra.mxu0 0.0
      %8602 = vmatprep.subr.mxu0 0.0
      %8603 = vmatpush1.msra.mxu0 0.0
      %8604 = vmatprep.subr.mxu0 0.0
      %8605 = vmatpush1.msra.mxu0 0.0
      %8606 = vmatprep.subr.mxu0 0.0
      %8607 = vmatpush1.msra.mxu0 0.0
      %8608 = vmatprep.subr.mxu0 0.0
      %8609 = vmatpush1.msra.mxu0 0.0
      %8610 = vmatprep.subr.mxu0 0.0
      %8611 = vmatpush1.msra.mxu0 0.0
      %8612 = vmatprep.subr.mxu0 0.0
      %8613 = vmatpush1.msra.mxu0 0.0
      %8614 = vmatprep.subr.mxu0 0.0
      %8615 = vmatpush1.msra.mxu0 0.0
      %8616 = vmatprep.subr.mxu0 0.0
      %8617 = vmatpush1.msra.mxu0 0.0
      %8618 = vmatprep.subr.mxu0 0.0
      %8619 = vmatpush1.msra.mxu0 0.0
      %8620 = vmatprep.subr.mxu0 0.0
      %8621 = vmatpush1.msra.mxu0 0.0
      %8622 = vmatprep.subr.mxu0 0.0
      %8623 = vmatpush1.msra.mxu0 0.0
      %8624 = vmatprep.subr.mxu0 0.0
      %8625 = vmatpush1.msra.mxu0 0.0
      %8626 = vmatprep.mubr.f32.mxu0 0.0
      %8627 = vmatmul.mubr.f32.gmra.mrb[0].mxu0 %v8477
      %v8628 = vpop.f32.mrb[0].mxu0
      %v8629 = vadd.f32 0.0, %v8628
      %v8630 = vpop.f32.mrb[0].mxu0
      %8631 = vmatprep.mubr.f32.mxu0 0.0
      %8632 = vmatmul.mubr.f32.gmra.mrb[0].mxu0 %v8479
      %v8633 = vpop.f32.mrb[0].mxu0
      %v8634 = vadd.f32 0.0, %v8633
      %v8635 = vpop.f32.mrb[0].mxu0
      %8636 = vmatprep.mubr.f32.mxu0 0.0
      %8637 = vmatmul.mubr.f32.gmra.mrb[0].mxu0 %v8481
      %v8638 = vpop.f32.mrb[0].mxu0
      %v8639 = vadd.f32 0.0, %v8638
      %v8640 = vpop.f32.mrb[0].mxu0
      %8641 = vmatprep.mubr.f32.mxu0 0.0
      %8642 = vmatmul.mubr.f32.gmra.mrb[0].mxu0 %v8483
      %v8643 = vpop.f32.mrb[0].mxu0
      %v8644 = vadd.f32 0.0, %v8643
      %v8645 = vpop.f32.mrb[0].mxu0
      %8646 = vmatprep.mubr.f32.mxu0 0.0
      %8647 = vmatmul.mubr.f32.gmra.mrb[0].mxu0 %v8485
      %v8648 = vpop.f32.mrb[0].mxu0
      %v8649 = vadd.f32 0.0, %v8648
      %v8650 = vpop.f32.mrb[0].mxu0
      %8651 = vmatprep.mubr.f32.mxu0 0.0
      %8652 = vmatmul.mubr.f32.gmra.mrb[0].mxu0 %v8487
      %v8653 = vpop.f32.mrb[0].mxu0
      %v8654 = vadd.f32 0.0, %v8653
      %v8655 = vpop.f32.mrb[0].mxu0
      %8656 = vmatprep.mubr.f32.mxu0 0.0
      %8657 = vmatmul.mubr.f32.gmra.mrb[0].mxu0 %v8489
      %v8658 = vpop.f32.mrb[0].mxu0
      %v8659 = vadd.f32 0.0, %v8658
      %v8660 = vpop.f32.mrb[0].mxu0
      %8661 = vmatprep.mubr.f32.mxu0 0.0
      %8662 = vmatmul.mubr.f32.gmra.mrb[0].mxu0 %v8491
      %v8663 = vpop.f32.mrb[0].mxu0
      %v8664 = vadd.f32 0.0, %v8663
      %v8665 = vpop.f32.mrb[0].mxu0
      %8666 = vmatprep.mubr.f32.mxu0 0.0
      %8667 = vmatmul.mubr.f32.gmra.mrb[0].mxu0 %v8493
      %v8668 = vpop.f32.mrb[0].mxu0
      %v8669 = vadd.f32 0.0, %v8668
      %v8670 = vpop.f32.mrb[0].mxu0
      %8671 = vmatprep.mubr.f32.mxu0 0.0
      %8672 = vmatmul.mubr.f32.gmra.mrb[0].mxu0 %v8495
      %v8673 = vpop.f32.mrb[0].mxu0
      %v8674 = vadd.f32 0.0, %v8673
      %v8675 = vpop.f32.mrb[0].mxu0
      %8676 = vmatprep.mubr.f32.mxu0 0.0
      %8677 = vmatmul.mubr.f32.gmra.mrb[0].mxu0 %v8497
      %v8678 = vpop.f32.mrb[0].mxu0
      %v8679 = vadd.f32 0.0, %v8678
      %v8680 = vpop.f32.mrb[0].mxu0
      %8681 = vmatprep.mubr.f32.mxu0 0.0
      %8682 = vmatmul.mubr.f32.gmra.mrb[0].mxu0 %v8499
      %v8683 = vpop.f32.mrb[0].mxu0
      %v8684 = vadd.f32 0.0, %v8683
      %v8685 = vpop.f32.mrb[0].mxu0
      %8686 = vmatprep.mubr.f32.mxu0 0.0
      %8687 = vmatmul.mubr.f32.gmra.mrb[0].mxu0 %v8501
      %v8688 = vpop.f32.mrb[0].mxu0
      %v8689 = vadd.f32 0.0, %v8688
      %v8690 = vpop.f32.mrb[0].mxu0
      %8691 = vmatprep.mubr.f32.mxu0 0.0
      %8692 = vmatmul.mubr.f32.gmra.mrb[0].mxu0 %v8503
      %v8693 = vpop.f32.mrb[0].mxu0
      %v8694 = vadd.f32 0.0, %v8693
      %v8695 = vpop.f32.mrb[0].mxu0
      %8696 = vmatprep.mubr.f32.mxu0 0.0
      %8697 = vmatmul.mubr.f32.gmra.mrb[0].mxu0 %v8505
      %v8698 = vpop.f32.mrb[0].mxu0
      %v8699 = vadd.f32 0.0, %v8698
      %v8700 = vpop.f32.mrb[0].mxu0
      %8701 = vmatprep.mubr.f32.mxu0 0.0
      %8702 = vmatmul.mubr.f32.gmra.mrb[0].mxu0 %v8507
      %v8703 = vpop.f32.mrb[0].mxu0
      %v8704 = vadd.f32 0.0, %v8703
      %v8705 = vpop.f32.mrb[0].mxu0
      %8706 = vmatprep.mubr.f32.mxu0 0.0
      %8707 = vmatmul.mubr.f32.gmra.mrb[0].mxu0 %v8509
      %v8708 = vpop.f32.mrb[0].mxu0
      %v8709 = vadd.f32 0.0, %v8708
      %v8710 = vpop.f32.mrb[0].mxu0
      %8711 = vmatprep.mubr.f32.mxu0 0.0
      %8712 = vmatmul.mubr.f32.gmra.mrb[0].mxu0 %v8511
      %v8713 = vpop.f32.mrb[0].mxu0
      %v8714 = vadd.f32 0.0, %v8713
      %v8715 = vpop.f32.mrb[0].mxu0
      %8716 = vmatprep.mubr.f32.mxu0 0.0
      %8717 = vmatmul.mubr.f32.gmra.mrb[0].mxu0 %v8513
      %v8718 = vpop.f32.mrb[0].mxu0
      %v8719 = vadd.f32 0.0, %v8718
      %v8720 = vpop.f32.mrb[0].mxu0
      %8721 = vmatprep.mubr.f32.mxu0 0.0
      %8722 = vmatmul.mubr.f32.gmra.mrb[0].mxu0 %v8515
      %v8723 = vpop.f32.mrb[0].mxu0
      %v8724 = vadd.f32 0.0, %v8723
      %v8725 = vpop.f32.mrb[0].mxu0
      %8726 = vmatprep.mubr.f32.mxu0 0.0
      %8727 = vmatmul.mubr.f32.gmra.mrb[0].mxu0 %v8517
      %v8728 = vpop.f32.mrb[0].mxu0
      %v8729 = vadd.f32 0.0, %v8728
      %v8730 = vpop.f32.mrb[0].mxu0
      %8731 = vmatprep.mubr.f32.mxu0 0.0
      %8732 = vmatmul.mubr.f32.gmra.mrb[0].mxu0 %v8519
      %v8733 = vpop.f32.mrb[0].mxu0
      %v8734 = vadd.f32 0.0, %v8733
      %v8735 = vpop.f32.mrb[0].mxu0
      %8736 = vmatprep.mubr.f32.mxu0 0.0
      %8737 = vmatmul.mubr.f32.gmra.mrb[0].mxu0 %v8521
      %v8738 = vpop.f32.mrb[0].mxu0
      %v8739 = vadd.f32 0.0, %v8738
      %v8740 = vpop.f32.mrb[0].mxu0
      %8741 = vmatprep.mubr.f32.mxu0 0.0
      %8742 = vmatmul.mubr.f32.gmra.mrb[0].mxu0 %v8523
      %v8743 = vpop.f32.mrb[0].mxu0
      %v8744 = vadd.f32 0.0, %v8743
      %v8745 = vpop.f32.mrb[0].mxu0
      %8746 = vmatprep.mubr.f32.mxu0 0.0
      %8747 = vmatmul.mubr.f32.gmra.mrb[0].mxu0 %v8525
      %v8748 = vpop.f32.mrb[0].mxu0
      %v8749 = vadd.f32 0.0, %v8748
      %v8750 = vpop.f32.mrb[0].mxu0
      %8751 = vmatprep.mubr.f32.mxu0 0.0
      %8752 = vmatmul.mubr.f32.gmra.mrb[0].mxu0 %v8527
      %v8753 = vpop.f32.mrb[0].mxu0
      %v8754 = vadd.f32 0.0, %v8753
      %v8755 = vpop.f32.mrb[0].mxu0
      %8756 = vmatprep.mubr.f32.mxu0 0.0
      %8757 = vmatmul.mubr.f32.gmra.mrb[0].mxu0 %v8529
      %v8758 = vpop.f32.mrb[0].mxu0
      %v8759 = vadd.f32 0.0, %v8758
      %v8760 = vpop.f32.mrb[0].mxu0
      %8761 = vmatprep.mubr.f32.mxu0 0.0
      %8762 = vmatmul.mubr.f32.gmra.mrb[0].mxu0 %v8531
      %v8763 = vpop.f32.mrb[0].mxu0
      %v8764 = vadd.f32 0.0, %v8763
      %v8765 = vpop.f32.mrb[0].mxu0
      %8766 = vmatprep.mubr.f32.mxu0 0.0
      %8767 = vmatmul.mubr.f32.gmra.mrb[0].mxu0 %v8533
      %v8768 = vpop.f32.mrb[0].mxu0
      %v8769 = vadd.f32 0.0, %v8768
      %v8770 = vpop.f32.mrb[0].mxu0
      %8771 = vmatprep.mubr.f32.mxu0 0.0
      %8772 = vmatmul.mubr.f32.gmra.mrb[0].mxu0 %v8535
      %v8773 = vpop.f32.mrb[0].mxu0
      %v8774 = vadd.f32 0.0, %v8773
      %v8775 = vpop.f32.mrb[0].mxu0
      %8776 = vmatprep.mubr.f32.mxu0 0.0
      %8777 = vmatmul.mubr.f32.gmra.mrb[0].mxu0 %v8537
      %v8778 = vpop.f32.mrb[0].mxu0
      %v8779 = vadd.f32 0.0, %v8778
      %v8780 = vpop.f32.mrb[0].mxu0
      %8781 = vmatprep.mubr.f32.mxu0 0.0
      %8782 = vmatmul.mubr.f32.gmra.mrb[0].mxu0 %v8539
      %v8783 = vpop.f32.mrb[0].mxu0
      %v8784 = vadd.f32 0.0, %v8783
      %v8785 = vpop.f32.mrb[0].mxu0
      %8786 = vmatprep.mubr.f32.mxu0 0.0
      %8787 = vmatmul.mubr.f32.gmra.mrb[0].mxu0 %v8541
      %v8788 = vpop.f32.mrb[0].mxu0
      %v8789 = vadd.f32 0.0, %v8788
      %v8790 = vpop.f32.mrb[0].mxu0
      %8791 = vmatprep.mubr.f32.mxu0 0.0
      %8792 = vmatmul.mubr.f32.gmra.mrb[0].mxu0 %v8543
      %v8793 = vpop.f32.mrb[0].mxu0
      %v8794 = vadd.f32 0.0, %v8793
      %v8795 = vpop.f32.mrb[0].mxu0
      %8796 = vmatprep.mubr.f32.mxu0 0.0
      %8797 = vmatmul.mubr.f32.gmra.mrb[0].mxu0 %v8545
      %v8798 = vpop.f32.mrb[0].mxu0
      %v8799 = vadd.f32 0.0, %v8798
      %v8800 = vpop.f32.mrb[0].mxu0
      %8801 = vmatprep.mubr.f32.mxu0 0.0
      %8802 = vmatmul.mubr.f32.gmra.mrb[0].mxu0 %v8547
      %v8803 = vpop.f32.mrb[0].mxu0
      %v8804 = vadd.f32 0.0, %v8803
      %v8805 = vpop.f32.mrb[0].mxu0
      %8806 = vmatprep.mubr.f32.mxu0 0.0
      %8807 = vmatmul.mubr.f32.gmra.mrb[0].mxu0 %v8549
      %v8808 = vpop.f32.mrb[0].mxu0
      %v8809 = vadd.f32 0.0, %v8808
      %v8810 = vpop.f32.mrb[0].mxu0
      %8811 = vmatprep.mubr.f32.mxu0 0.0
      %8812 = vmatmul.mubr.f32.gmra.mrb[0].mxu0 %v8551
      %v8813 = vpop.f32.mrb[0].mxu0
      %v8814 = vadd.f32 0.0, %v8813
      %v8815 = vpop.f32.mrb[0].mxu0
      %8816 = vmatprep.mubr.f32.mxu0 0.0
      %8817 = vmatmul.mubr.f32.gmra.mrb[0].mxu0 %v8553
      %v8818 = vpop.f32.mrb[0].mxu0
      %v8819 = vadd.f32 0.0, %v8818
      %v8820 = vpop.f32.mrb[0].mxu0
      %8821 = vmatprep.mubr.f32.mxu0 0.0
      %8822 = vmatmul.mubr.f32.gmra.mrb[0].mxu0 %v8555
      %v8823 = vpop.f32.mrb[0].mxu0
      %v8824 = vadd.f32 0.0, %v8823
      %v8825 = vpop.f32.mrb[0].mxu0
      %8826 = vmatprep.mubr.f32.mxu0 0.0
      %8827 = vmatmul.mubr.f32.gmra.mrb[0].mxu0 %v8557
      %v8828 = vpop.f32.mrb[0].mxu0
      %v8829 = vadd.f32 0.0, %v8828
      %v8830 = vpop.f32.mrb[0].mxu0
      %8831 = vdwg.mxu0
      %v8832 = vadd.f32 %v8351, %v8629
      %v8833 = vadd.f32 %v8352, %v8634
      %v8834 = vadd.f32 %v8353, %v8639
      %v8835 = vadd.f32 %v8354, %v8644
      %v8836 = vadd.f32 %v8355, %v8649
      %v8837 = vadd.f32 %v8356, %v8654
      %v8838 = vadd.f32 %v8357, %v8659
      %v8839 = vadd.f32 %v8358, %v8664
      %v8840 = vadd.f32 %v8359, %v8669
      %v8841 = vadd.f32 %v8360, %v8674
      %v8842 = vadd.f32 %v8361, %v8679
      %v8843 = vadd.f32 %v8362, %v8684
      %v8844 = vadd.f32 %v8363, %v8689
      %v8845 = vadd.f32 %v8364, %v8694
      %v8846 = vadd.f32 %v8365, %v8699
      %v8847 = vadd.f32 %v8366, %v8704
      %v8848 = vadd.f32 %v8367, %v8709
      %v8849 = vadd.f32 %v8368, %v8714
      %v8850 = vadd.f32 %v8369, %v8719
      %v8851 = vadd.f32 %v8370, %v8724
      %v8852 = vadd.f32 %v8371, %v8729
      %v8853 = vadd.f32 %v8372, %v8734
      %v8854 = vadd.f32 %v8373, %v8739
      %v8855 = vadd.f32 %v8374, %v8744
      %v8856 = vadd.f32 %v8375, %v8749
      %v8857 = vadd.f32 %v8376, %v8754
      %v8858 = vadd.f32 %v8377, %v8759
      %v8859 = vadd.f32 %v8378, %v8764
      %v8860 = vadd.f32 %v8379, %v8769
      %v8861 = vadd.f32 %v8380, %v8774
      %v8862 = vadd.f32 %v8381, %v8779
      %v8863 = vadd.f32 %v8382, %v8784
      %v8864 = vadd.f32 %v8383, %v8789
      %v8865 = vadd.f32 %v8384, %v8794
      %v8866 = vadd.f32 %v8385, %v8799
      %v8867 = vadd.f32 %v8386, %v8804
      %v8868 = vadd.f32 %v8387, %v8809
      %v8869 = vadd.f32 %v8388, %v8814
      %v8870 = vadd.f32 %v8389, %v8819
      %v8871 = vadd.f32 %v8390, %v8824
      %v8872 = vadd.f32 %v8391, %v8829
      %v8873 = vld [vmem:[%s3 + $0x1] sm:$0x1]
      %v8874 = vlaneseq
      %v8875 = vshrl.u32 %v8874, 7
      %v8876 = vsub.s32 0, %v8875
      %v8877 = vrot.slane %v8873, %v8876
      %v8878 = vadd.f32 %v8832, %v8877
      %v8879 = vadd.f32 %v8833, %v8877
      %v8880 = vadd.f32 %v8834, %v8877
      %v8881 = vadd.f32 %v8835, %v8877
      %v8882 = vadd.f32 %v8836, %v8877
      %v8883 = vadd.f32 %v8837, %v8877
      %v8884 = vadd.f32 %v8838, %v8877
      %v8885 = vadd.f32 %v8839, %v8877
      %v8886 = vadd.f32 %v8840, %v8877
      %v8887 = vadd.f32 %v8841, %v8877
      %v8888 = vadd.f32 %v8842, %v8877
      %v8889 = vadd.f32 %v8843, %v8877
      %v8890 = vadd.f32 %v8844, %v8877
      %v8891 = vadd.f32 %v8845, %v8877
      %v8892 = vadd.f32 %v8846, %v8877
      %v8893 = vadd.f32 %v8847, %v8877
      %v8894 = vadd.f32 %v8848, %v8877
      %v8895 = vadd.f32 %v8849, %v8877
      %v8896 = vadd.f32 %v8850, %v8877
      %v8897 = vadd.f32 %v8851, %v8877
      %v8898 = vadd.f32 %v8852, %v8877
      %v8899 = vadd.f32 %v8853, %v8877
      %v8900 = vadd.f32 %v8854, %v8877
      %v8901 = vadd.f32 %v8855, %v8877
      %v8902 = vadd.f32 %v8856, %v8877
      %v8903 = vadd.f32 %v8857, %v8877
      %v8904 = vadd.f32 %v8858, %v8877
      %v8905 = vadd.f32 %v8859, %v8877
      %v8906 = vadd.f32 %v8860, %v8877
      %v8907 = vadd.f32 %v8861, %v8877
      %v8908 = vadd.f32 %v8862, %v8877
      %v8909 = vadd.f32 %v8863, %v8877
      %v8910 = vadd.f32 %v8864, %v8877
      %v8911 = vadd.f32 %v8865, %v8877
      %v8912 = vadd.f32 %v8866, %v8877
      %v8913 = vadd.f32 %v8867, %v8877
      %v8914 = vadd.f32 %v8868, %v8877
      %v8915 = vadd.f32 %v8869, %v8877
      %v8916 = vadd.f32 %v8870, %v8877
      %v8917 = vadd.f32 %v8871, %v8877
      %v8918 = vadd.f32 %v8872, %v8877
      %v8960 = vadd.f32 %v8878, %v4038
      %v8961 = vadd.f32 %v8879, %v4040
      %v8962 = vadd.f32 %v8880, %v4042
      %v8963 = vadd.f32 %v8881, %v4044
      %v8964 = vadd.f32 %v8882, %v4046
      %v8965 = vadd.f32 %v8883, %v4048
      %v8966 = vadd.f32 %v8884, %v4050
      %v8967 = vadd.f32 %v8885, %v4052
      %v8968 = vadd.f32 %v8886, %v4054
      %v8969 = vadd.f32 %v8887, %v4056
      %v8970 = vadd.f32 %v8888, %v4058
      %v8971 = vadd.f32 %v8889, %v4060
      %v8972 = vadd.f32 %v8890, %v4062
      %v8973 = vadd.f32 %v8891, %v4064
      %v8974 = vadd.f32 %v8892, %v4066
      %v8975 = vadd.f32 %v8893, %v4068
      %v8976 = vadd.f32 %v8894, %v4070
      %v8977 = vadd.f32 %v8895, %v4072
      %v8978 = vadd.f32 %v8896, %v4074
      %v8979 = vadd.f32 %v8897, %v4076
      %v8980 = vadd.f32 %v8898, %v4078
      %v8981 = vadd.f32 %v8899, %v4080
      %v8982 = vadd.f32 %v8900, %v4082
      %v8983 = vadd.f32 %v8901, %v4084
      %v8984 = vadd.f32 %v8902, %v4086
      %v8985 = vadd.f32 %v8903, %v4088
      %v8986 = vadd.f32 %v8904, %v4090
      %v8987 = vadd.f32 %v8905, %v4092
      %v8988 = vadd.f32 %v8906, %v4094
      %v8989 = vadd.f32 %v8907, %v4096
      %v8990 = vadd.f32 %v8908, %v4098
      %v8991 = vadd.f32 %v8909, %v4100
      %v8992 = vadd.f32 %v8910, %v4102
      %v8993 = vadd.f32 %v8911, %v4104
      %v8994 = vadd.f32 %v8912, %v4106
      %v8995 = vadd.f32 %v8913, %v4108
      %v8996 = vadd.f32 %v8914, %v4110
      %v8997 = vadd.f32 %v8915, %v4112
      %v8998 = vadd.f32 %v8916, %v4114
      %v8999 = vadd.f32 %v8917, %v4116
      %v9000 = vadd.f32 %v8918, %v4118
      %v9001 = vmax.f32 %v8960, 0.0
      %v9002 = vmax.f32 %v8961, 0.0
      %v9003 = vmax.f32 %v8962, 0.0
      %v9004 = vmax.f32 %v8963, 0.0
      %v9005 = vmax.f32 %v8964, 0.0
      %v9006 = vmax.f32 %v8965, 0.0
      %v9007 = vmax.f32 %v8966, 0.0
      %v9008 = vmax.f32 %v8967, 0.0
      %v9009 = vmax.f32 %v8968, 0.0
      %v9010 = vmax.f32 %v8969, 0.0
      %v9011 = vmax.f32 %v8970, 0.0
      %v9012 = vmax.f32 %v8971, 0.0
      %v9013 = vmax.f32 %v8972, 0.0
      %v9014 = vmax.f32 %v8973, 0.0
      %v9015 = vmax.f32 %v8974, 0.0
      %v9016 = vmax.f32 %v8975, 0.0
      %v9017 = vmax.f32 %v8976, 0.0
      %v9018 = vmax.f32 %v8977, 0.0
      %v9019 = vmax.f32 %v8978, 0.0
      %v9020 = vmax.f32 %v8979, 0.0
      %v9021 = vmax.f32 %v8980, 0.0
      %v9022 = vmax.f32 %v8981, 0.0
      %v9023 = vmax.f32 %v8982, 0.0
      %v9024 = vmax.f32 %v8983, 0.0
      %v9025 = vmax.f32 %v8984, 0.0
      %v9026 = vmax.f32 %v8985, 0.0
      %v9027 = vmax.f32 %v8986, 0.0
      %v9028 = vmax.f32 %v8987, 0.0
      %v9029 = vmax.f32 %v8988, 0.0
      %v9030 = vmax.f32 %v8989, 0.0
      %v9031 = vmax.f32 %v8990, 0.0
      %v9032 = vmax.f32 %v8991, 0.0
      %v9033 = vmax.f32 %v8992, 0.0
      %v9034 = vmax.f32 %v8993, 0.0
      %v9035 = vmax.f32 %v8994, 0.0
      %v9036 = vmax.f32 %v8995, 0.0
      %v9037 = vmax.f32 %v8996, 0.0
      %v9038 = vmax.f32 %v8997, 0.0
      %v9039 = vmax.f32 %v8998, 0.0
      %v9040 = vmax.f32 %v8999, 0.0
      %v9041 = vmax.f32 %v9000, 0.0
      %9042 = vst.msk [vmem:[%s224] sm:$0xff] %vm416, %v9001
      %9043 = vst.msk [vmem:[%s224 + $0x8] sm:$0xff] %vm416, %v9002
      %9044 = vst.msk [vmem:[%s224 + $0x10] sm:$0xff] %vm416, %v9003
      %9045 = vst.msk [vmem:[%s224 + $0x18] sm:$0xff] %vm416, %v9004
      %9046 = vst.msk [vmem:[%s224 + $0x20] sm:$0xff] %vm416, %v9005
      %9047 = vst.msk [vmem:[%s224 + $0x28] sm:$0xff] %vm416, %v9006
      %9048 = vst.msk [vmem:[%s224 + $0x30] sm:$0xff] %vm416, %v9007
      %9049 = vst.msk [vmem:[%s224 + $0x38] sm:$0xff] %vm416, %v9008
      %9050 = vst.msk [vmem:[%s224 + $0x40] sm:$0xff] %vm416, %v9009
      %9051 = vst.msk [vmem:[%s224 + $0x48] sm:$0xff] %vm416, %v9010
      %9052 = vst.msk [vmem:[%s224 + $0x50] sm:$0xff] %vm416, %v9011
      %9053 = vst.msk [vmem:[%s224 + $0x58] sm:$0xff] %vm416, %v9012
      %9054 = vst.msk [vmem:[%s224 + $0x60] sm:$0xff] %vm416, %v9013
      %9055 = vst.msk [vmem:[%s224 + $0x68] sm:$0xff] %vm416, %v9014
      %9056 = vst.msk [vmem:[%s224 + $0x70] sm:$0xff] %vm416, %v9015
      %9057 = vst.msk [vmem:[%s224 + $0x78] sm:$0xff] %vm416, %v9016
      %9058 = vst.msk [vmem:[%s224 + $0x80] sm:$0xff] %vm416, %v9017
      %9059 = vst.msk [vmem:[%s224 + $0x88] sm:$0xff] %vm416, %v9018
      %9060 = vst.msk [vmem:[%s224 + $0x90] sm:$0xff] %vm416, %v9019
      %9061 = vst.msk [vmem:[%s224 + $0x98] sm:$0xff] %vm416, %v9020
      %9062 = vst.msk [vmem:[%s224 + $0xa0] sm:$0xff] %vm416, %v9021
      %9063 = vst.msk [vmem:[%s224 + $0xa8] sm:$0xff] %vm416, %v9022
      %9064 = vst.msk [vmem:[%s224 + $0xb0] sm:$0xff] %vm416, %v9023
      %9065 = vst.msk [vmem:[%s224 + $0xb8] sm:$0xff] %vm416, %v9024
      %9066 = vst.msk [vmem:[%s224 + $0xc0] sm:$0xff] %vm416, %v9025
      %9067 = vst.msk [vmem:[%s224 + $0xc8] sm:$0xff] %vm416, %v9026
      %9068 = vst.msk [vmem:[%s224 + $0xd0] sm:$0xff] %vm416, %v9027
      %9069 = vst.msk [vmem:[%s224 + $0xd8] sm:$0xff] %vm416, %v9028
      %9070 = vst.msk [vmem:[%s224 + $0xe0] sm:$0xff] %vm416, %v9029
      %9071 = vst.msk [vmem:[%s224 + $0xe8] sm:$0xff] %vm416, %v9030
      %9072 = vst.msk [vmem:[%s224 + $0xf0] sm:$0xff] %vm416, %v9031
      %9073 = vst.msk [vmem:[%s224 + $0xf8] sm:$0xff] %vm416, %v9032
      %9074 = vst.msk [vmem:[%s224 + $0x100] sm:$0xff] %vm416, %v9033
      %9075 = vst.msk [vmem:[%s224 + $0x108] sm:$0xff] %vm416, %v9034
      %9076 = vst.msk [vmem:[%s224 + $0x110] sm:$0xff] %vm416, %v9035
      %9077 = vst.msk [vmem:[%s224 + $0x118] sm:$0xff] %vm416, %v9036
      %9078 = vst.msk [vmem:[%s224 + $0x120] sm:$0xff] %vm416, %v9037
      %9079 = vst.msk [vmem:[%s224 + $0x128] sm:$0xff] %vm416, %v9038
      %9080 = vst.msk [vmem:[%s224 + $0x130] sm:$0xff] %vm416, %v9039
      %9081 = vst.msk [vmem:[%s224 + $0x138] sm:$0xff] %vm416, %v9040
      %vm9082 = vcmask 27648
      %9083 = vst.msk [vmem:[%s224 + $0x140] sm:$0xf] %vm9082, %v9041
      %p9084 = scmp.lt.s32.totalorder %s16, 1
      %s9085 = scalar_select %p9084, %s16, 1
      %s9086 = smul.addr %s9085, 41
      %s9087 = smul.addr %s9086, 8
      %s9088 = scalar_lea.vmem %s5, %s9087
      // Predicated region
      $region41: #{basic_ds_block1.1} parent=39 // pred_check
        %p9089 = pneg %p144
      $region42: #{basic_ds_block1.1} parent=39 // pred_check_branch
        %9091 = sbr.rel (%p9089) target = $region44
      $region43: #{basic_ds_block1.1} parent=39 // pred_region
        _
      $region44: #{basic_ds_block1.1} parent=39 // pred_fallthru
        _
    $region40: #{basic_ds_block1.1} parent=5 // pred_fallthru
      _
    %p9092 = scmp.le.s32.totalorder 2, %s11
    // Predicated region
    $region45: #{basic_ds_block1.1} parent=5 // pred_check
      %p9093 = pneg %p9092
    $region46: #{basic_ds_block1.1} parent=5 // pred_check_branch
      %9095 = sbr.rel (%p9093) target = $region48
    $region47: #{basic_ds_block1.1} parent=5 // pred_region
      %s9096 = ssub.s32 %s11, 2
      // Predicated region
      $region49: #{basic_ds_block1.1} parent=47 // pred_check
        %p9097 = pneg %p150
      $region50: #{basic_ds_block1.1} parent=47 // pred_check_branch
        %9099 = sbr.rel (%p9097) target = $region52
      $region51: #{basic_ds_block1.1} parent=47 // pred_region
        %p9100 = scmp.lt.s32.totalorder %s17, 1
        %s9101 = scalar_select %p9100, %s17, 1
        %s9102 = smul.addr %s9101, 41
        %s9103 = smul.addr %s9102, 8
        %s9104 = scalar_lea.vmem %s5, %s9103
      $region52: #{basic_ds_block1.1} parent=47 // pred_fallthru
        _
    $region48: #{basic_ds_block1.1} parent=5 // pred_fallthru
      _
  $region6: #{basic_ds_block1.1} parent=0 // loop_footer
    %s15 = sadd.s32 1, %s11
  $region7: #{basic_ds_block1.1} parent=0 // loop_footer_branch
    %10 = sbr.rel target = $region3
  $region8: #{basic_ds_block1.1} parent=0 // loop_exit
    _

</llo_original>
